<compile_context>
chip_gen: v6e
topology: v6e:2x2x1
jax: 0.10.0
libtpu: 0.0.40
codegen_flags: <defaults>
</compile_context>

<pallas_src>
import functools

import jax
import jax.numpy as jnp
from jax.experimental import pallas as pl
from jax.experimental.pallas import tpu as pltpu


def _round_up(x, m):
    return ((x + m - 1) // m) * m


# ---------------------------------------------------------------------------
# Pallas kernels
# ---------------------------------------------------------------------------

def _matmul_bias_act_kernel(a_ref, w_ref, b_ref, o_ref, *, relu):
    """out = act(a @ w + bias); single K/N block, so no accumulator scratch."""
    acc = jnp.dot(a_ref[...], w_ref[...], preferred_element_type=jnp.float32)
    out = acc + b_ref[...]
    if relu:
        out = jnp.maximum(out, 0.0)
    o_ref[...] = out.astype(o_ref.dtype)


def _pick_m_tile(M, Kp, *, max_tm=1024, bytes_per_elt=2, budget=2 * 1024 * 1024):
    """Largest M tile (multiple of 8, <= max_tm) whose A block fits ~budget."""
    Mp8 = _round_up(M, 8)
    rows_budget = max(8, (budget // (Kp * bytes_per_elt)) // 8 * 8)
    tm = min(Mp8, max_tm, rows_budget)
    tm = max(8, (tm // 8) * 8)
    if Mp8 <= tm:
        return Mp8, Mp8
    return tm, _round_up(M, tm)


def matmul_bias_act(a, w, bias, *, relu, out_dtype):
    """a:(M,K), w:(K,N), bias:(N,) -> (M,N).

    bf16 operands, f32 MXU accumulation.  K and N are small for this network,
    so they live in a single block each; the grid only tiles M.
    """
    M, K = a.shape
    _, N = w.shape
    Kp = _round_up(K, 128)
    Np = _round_up(N, 128)
    tm, Mp = _pick_m_tile(M, Kp)

    a_p = jnp.pad(a.astype(jnp.bfloat16), ((0, Mp - M), (0, Kp - K)))
    w_p = jnp.pad(w.astype(jnp.bfloat16), ((0, Kp - K), (0, Np - N)))
    b_p = jnp.pad(bias.astype(jnp.float32), (0, Np - N)).reshape(1, Np)

    out = pl.pallas_call(
        functools.partial(_matmul_bias_act_kernel, relu=relu),
        out_shape=jax.ShapeDtypeStruct((Mp, Np), out_dtype),
        grid_spec=pltpu.PrefetchScalarGridSpec(
            num_scalar_prefetch=0,
            grid=(Mp // tm,),
            in_specs=[
                pl.BlockSpec((tm, Kp), lambda i: (i, 0)),
                pl.BlockSpec((Kp, Np), lambda i: (0, 0)),   # weights resident
                pl.BlockSpec((1, Np), lambda i: (0, 0)),    # bias resident
            ],
            out_specs=pl.BlockSpec((tm, Np), lambda i: (i, 0)),
        ),
        compiler_params=pltpu.CompilerParams(
            dimension_semantics=("parallel",)),
    )(a_p, w_p, b_p)
    return out[:M, :N]


def _max4_kernel(a_ref, b_ref, c_ref, d_ref, o_ref):
    o_ref[...] = jnp.maximum(jnp.maximum(a_ref[...], b_ref[...]),
                             jnp.maximum(c_ref[...], d_ref[...]))


def maxpool2x2(x):
    """2x2 / stride-2 max pool on NHWC via a Pallas max-of-4-taps kernel.

    Taps are presented as (N*Ho, Wo*C) so the kernel's lane axis is Wo*C
    (mostly lane-dense) rather than a narrow channel count.  Shapes in this
    net are tiny (<< VMEM), so each tap lives as a single VMEM block.
    """
    N, H, W, C = x.shape
    Ho, Wo = H // 2, W // 2
    taps = []
    for dy in range(2):
        for dx in range(2):
            t = x[:, dy:dy + 2 * Ho:2, dx:dx + 2 * Wo:2, :]
            taps.append(t.reshape(N * Ho, Wo * C))
    out = pl.pallas_call(
        _max4_kernel,
        out_shape=jax.ShapeDtypeStruct((N * Ho, Wo * C), x.dtype),
        in_specs=[pl.BlockSpec(memory_space=pltpu.MemorySpace.VMEM)] * 4,
        out_specs=pl.BlockSpec(memory_space=pltpu.MemorySpace.VMEM),
    )(*taps)
    return out.reshape(N, Ho, Wo, C)


# ---------------------------------------------------------------------------
# Plain-JAX glue: im2col, conv wrapper, parameters, forward
# ---------------------------------------------------------------------------

def _im2col(x, kh, kw):
    """x:(N,H,W,C) -> (N*Ho*Wo, kh*kw*C); stride 1, no padding, C fastest."""
    N, H, W, C = x.shape
    Ho, Wo = H - kh + 1, W - kw + 1
    taps = []
    for i in range(kh):
        for j in range(kw):
            taps.append(x[:, i:i + Ho, j:j + Wo, :])
    patches = jnp.stack(taps, axis=3)            # (N, Ho, Wo, kh*kw, C)
    return patches.reshape(N * Ho * Wo, kh * kw * C), (N, Ho, Wo)


def conv2d_bias(x, w_oihw, bias, *, relu, out_dtype=jnp.bfloat16):
    """Conv2d (stride 1, no padding) + bias + optional ReLU via Pallas matmul."""
    cout, cin, kh, kw = w_oihw.shape
    a, (N, Ho, Wo) = _im2col(x.astype(jnp.bfloat16), kh, kw)
    # (cout,cin,kh,kw) -> (kh*kw*cin, cout), matching im2col tap/channel order.
    w_mat = jnp.transpose(w_oihw, (2, 3, 1, 0)).reshape(kh * kw * cin, cout)
    out = matmul_bias_act(a, w_mat, bias, relu=relu, out_dtype=out_dtype)
    return out.reshape(N, Ho, Wo, cout)


def init_params(key, in_ch=1, num_classes=10):
    keys = jax.random.split(key, 10)

    def conv_init(kw_key, kb_key, cout, cin, ksz):
        fan_in = cin * ksz * ksz
        w = (jax.random.normal(kw_key, (cout, cin, ksz, ksz), jnp.float32)
             / jnp.sqrt(jnp.float32(fan_in)))
        b = 0.01 * jax.random.normal(kb_key, (cout,), jnp.float32)
        return w, b

    return dict(
        conv1=conv_init(keys[0], keys[1], 16, in_ch, 5),
        conv2=conv_init(keys[2], keys[3], 32, 16, 5),
        conv3=conv_init(keys[4], keys[5], 64, 32, 6),
        conv4=conv_init(keys[6], keys[7], 128, 64, 5),
        conv5=conv_init(keys[8], keys[9], num_classes, 128, 3),
    )


def a_convnet_forward(params, x_nchw):
    """Mirrors A_ConvNet.forward (dropout is defined but unused in forward)."""
    x = jnp.transpose(x_nchw, (0, 2, 3, 1)).astype(jnp.bfloat16)   # NCHW -> NHWC

    w, b = params['conv1']
    x = conv2d_bias(x, w, b, relu=True)
    x = maxpool2x2(x)

    w, b = params['conv2']
    x = conv2d_bias(x, w, b, relu=True)
    x = maxpool2x2(x)

    w, b = params['conv3']
    x = conv2d_bias(x, w, b, relu=True)
    x = maxpool2x2(x)

    w, b = params['conv4']
    x = conv2d_bias(x, w, b, relu=True)

    w, b = params['conv5']
    x = conv2d_bias(x, w, b, relu=False, out_dtype=jnp.float32)

    out = jnp.transpose(x, (0, 3, 1, 2))   # back to NCHW to match torch squeeze
    return jnp.squeeze(out)


if __name__ == "__main__":
    key = jax.random.PRNGKey(0)
    pkey, xkey = jax.random.split(key)
    params = init_params(pkey, in_ch=1, num_classes=10)
    # Canonical (and minimal) A_ConvNet input size: 88x88 single-channel, so
    # conv5 output is 1x1 and .squeeze() yields (N, num_classes).
    x = jax.random.normal(xkey, (2, 1, 88, 88), jnp.float32)

    fwd = jax.jit(a_convnet_forward)
    logits = fwd(params, x)
    jax.block_until_ready(logits)

    assert logits.shape == (2, 10), logits.shape
    assert logits.dtype == jnp.float32, logits.dtype
    assert bool(jnp.all(jnp.isfinite(logits)))
    print("KERNEL_OK")
</pallas_src>

<mosaic_0001>
module attributes {stable_mosaic.version = 11 : i64} {
  func.func @_matmul_bias_act_kernel(%arg0: i32, %arg1: memref<1024x128xbf16, #tpu.memory_space<vmem>>, %arg2: memref<128x128xbf16, #tpu.memory_space<vmem>>, %arg3: memref<1x128xf32, #tpu.memory_space<vmem>>, %arg4: memref<1024x128xbf16, #tpu.memory_space<vmem>>) attributes {dimension_semantics = [#tpu.dimension_semantics<parallel>], iteration_bounds = array<i64: 14>, scalar_prefetch = 0 : i64, scratch_operands = 0 : i64, tpu.core_type = #tpu.core_type<tc>, window_params = [{transform_indices = @transform_0, window_bounds = array<i64: 1024, 128>}, {pipeline_mode = #tpu.pipeline_mode<synchronous>, transform_indices = @transform_1, window_bounds = array<i64: 128, 128>}, {pipeline_mode = #tpu.pipeline_mode<synchronous>, transform_indices = @transform_2, window_bounds = array<i64: 1, 128>}, {transform_indices = @transform_3, window_bounds = array<i64: 1024, 128>}]} {
    %c0 = arith.constant 0 : index
    %c0_0 = arith.constant 0 : index
    %0 = vector.load %arg1[%c0, %c0_0] : memref<1024x128xbf16, #tpu.memory_space<vmem>>, vector<1024x128xbf16>
    %c0_1 = arith.constant 0 : index
    %c0_2 = arith.constant 0 : index
    %1 = vector.load %arg2[%c0_1, %c0_2] : memref<128x128xbf16, #tpu.memory_space<vmem>>, vector<128x128xbf16>
    %cst = arith.constant dense<0.000000e+00> : vector<1024x128xf32>
    %2 = tpu.matmul %0, %1, %cst {dimension_numbers = #tpu.dot_dimension_numbers<[1], [0], [0], [1], [0, 0, 1, 1], [], []>} : vector<1024x128xbf16>, vector<128x128xbf16>, vector<1024x128xf32> -> vector<1024x128xf32>
    %c0_3 = arith.constant 0 : index
    %c0_4 = arith.constant 0 : index
    %3 = vector.load %arg3[%c0_3, %c0_4] : memref<1x128xf32, #tpu.memory_space<vmem>>, vector<1x128xf32>
    %4 = vector.broadcast %3 : vector<1x128xf32> to vector<1024x128xf32>
    %5 = arith.addf %2, %4 : vector<1024x128xf32>
    %cst_5 = arith.constant 0.000000e+00 : f32
    %6 = vector.broadcast %cst_5 : f32 to vector<1024x128xf32>
    %7 = arith.maximumf %5, %6 : vector<1024x128xf32>
    %8 = arith.truncf %7 : vector<1024x128xf32> to vector<1024x128xbf16>
    %c0_6 = arith.constant 0 : index
    %c0_7 = arith.constant 0 : index
    %9 = vector.load %arg4[%c0_6, %c0_7] : memref<1024x128xbf16, #tpu.memory_space<vmem>>, vector<1024x128xbf16>
    tpu.vector_store %arg4[%c0_6, %c0_7], %8 {strides = array<i32>} : memref<1024x128xbf16, #tpu.memory_space<vmem>>, vector<1024x128xbf16>,
    return
  }
  func.func @transform_0(%arg0: i32) -> (i32, i32) {
    %c0_i32 = arith.constant 0 : i32
    %c0_i32_0 = arith.constant 0 : i32
    return %arg0, %c0_i32 : i32, i32
  }
  func.func @transform_1(%arg0: i32) -> (i32, i32) {
    %c0_i32 = arith.constant 0 : i32
    %c0_i32_0 = arith.constant 0 : i32
    %c0_i32_1 = arith.constant 0 : i32
    return %c0_i32, %c0_i32_0 : i32, i32
  }
  func.func @transform_2(%arg0: i32) -> (i32, i32) {
    %c0_i32 = arith.constant 0 : i32
    %c0_i32_0 = arith.constant 0 : i32
    %c0_i32_1 = arith.constant 0 : i32
    return %c0_i32, %c0_i32_0 : i32, i32
  }
  func.func @transform_3(%arg0: i32) -> (i32, i32) {
    %c0_i32 = arith.constant 0 : i32
    %c0_i32_0 = arith.constant 0 : i32
    return %arg0, %c0_i32 : i32, i32
  }
}

module attributes {stable_mosaic.version = 11 : i64} {
  func.func @_max4_kernel(%arg0: memref<84x672xbf16, #tpu.memory_space<vmem>>, %arg1: memref<84x672xbf16, #tpu.memory_space<vmem>>, %arg2: memref<84x672xbf16, #tpu.memory_space<vmem>>, %arg3: memref<84x672xbf16, #tpu.memory_space<vmem>>, %arg4: memref<84x672xbf16, #tpu.memory_space<vmem>>) attributes {dimension_semantics = [], scalar_prefetch = 0 : i64, scratch_operands = 0 : i64, tpu.core_type = #tpu.core_type<tc>} {
    %c0 = arith.constant 0 : index
    %c0_0 = arith.constant 0 : index
    %0 = vector.load %arg0[%c0, %c0_0] : memref<84x672xbf16, #tpu.memory_space<vmem>>, vector<84x672xbf16>
    %c0_1 = arith.constant 0 : index
    %c0_2 = arith.constant 0 : index
    %1 = vector.load %arg1[%c0_1, %c0_2] : memref<84x672xbf16, #tpu.memory_space<vmem>>, vector<84x672xbf16>
    %2 = arith.maximumf %0, %1 : vector<84x672xbf16>
    %c0_3 = arith.constant 0 : index
    %c0_4 = arith.constant 0 : index
    %3 = vector.load %arg2[%c0_3, %c0_4] : memref<84x672xbf16, #tpu.memory_space<vmem>>, vector<84x672xbf16>
    %c0_5 = arith.constant 0 : index
    %c0_6 = arith.constant 0 : index
    %4 = vector.load %arg3[%c0_5, %c0_6] : memref<84x672xbf16, #tpu.memory_space<vmem>>, vector<84x672xbf16>
    %5 = arith.maximumf %3, %4 : vector<84x672xbf16>
    %6 = arith.maximumf %2, %5 : vector<84x672xbf16>
    %c0_7 = arith.constant 0 : index
    %c0_8 = arith.constant 0 : index
    %7 = vector.load %arg4[%c0_7, %c0_8] : memref<84x672xbf16, #tpu.memory_space<vmem>>, vector<84x672xbf16>
    tpu.vector_store %arg4[%c0_7, %c0_8], %6 {strides = array<i32>} : memref<84x672xbf16, #tpu.memory_space<vmem>>, vector<84x672xbf16>,
    return
  }
}

module attributes {stable_mosaic.version = 11 : i64} {
  func.func @_matmul_bias_act_kernel(%arg0: i32, %arg1: memref<1024x512xbf16, #tpu.memory_space<vmem>>, %arg2: memref<512x128xbf16, #tpu.memory_space<vmem>>, %arg3: memref<1x128xf32, #tpu.memory_space<vmem>>, %arg4: memref<1024x128xbf16, #tpu.memory_space<vmem>>) attributes {dimension_semantics = [#tpu.dimension_semantics<parallel>], iteration_bounds = array<i64: 3>, scalar_prefetch = 0 : i64, scratch_operands = 0 : i64, tpu.core_type = #tpu.core_type<tc>, window_params = [{transform_indices = @transform_0, window_bounds = array<i64: 1024, 512>}, {pipeline_mode = #tpu.pipeline_mode<synchronous>, transform_indices = @transform_1, window_bounds = array<i64: 512, 128>}, {pipeline_mode = #tpu.pipeline_mode<synchronous>, transform_indices = @transform_2, window_bounds = array<i64: 1, 128>}, {transform_indices = @transform_3, window_bounds = array<i64: 1024, 128>}]} {
    %c0 = arith.constant 0 : index
    %c0_0 = arith.constant 0 : index
    %0 = vector.load %arg1[%c0, %c0_0] : memref<1024x512xbf16, #tpu.memory_space<vmem>>, vector<1024x512xbf16>
    %c0_1 = arith.constant 0 : index
    %c0_2 = arith.constant 0 : index
    %1 = vector.load %arg2[%c0_1, %c0_2] : memref<512x128xbf16, #tpu.memory_space<vmem>>, vector<512x128xbf16>
    %cst = arith.constant dense<0.000000e+00> : vector<1024x128xf32>
    %2 = tpu.matmul %0, %1, %cst {dimension_numbers = #tpu.dot_dimension_numbers<[1], [0], [0], [1], [0, 0, 1, 1], [], []>} : vector<1024x512xbf16>, vector<512x128xbf16>, vector<1024x128xf32> -> vector<1024x128xf32>
    %c0_3 = arith.constant 0 : index
    %c0_4 = arith.constant 0 : index
    %3 = vector.load %arg3[%c0_3, %c0_4] : memref<1x128xf32, #tpu.memory_space<vmem>>, vector<1x128xf32>
    %4 = vector.broadcast %3 : vector<1x128xf32> to vector<1024x128xf32>
    %5 = arith.addf %2, %4 : vector<1024x128xf32>
    %cst_5 = arith.constant 0.000000e+00 : f32
    %6 = vector.broadcast %cst_5 : f32 to vector<1024x128xf32>
    %7 = arith.maximumf %5, %6 : vector<1024x128xf32>
    %8 = arith.truncf %7 : vector<1024x128xf32> to vector<1024x128xbf16>
    %c0_6 = arith.constant 0 : index
    %c0_7 = arith.constant 0 : index
    %9 = vector.load %arg4[%c0_6, %c0_7] : memref<1024x128xbf16, #tpu.memory_space<vmem>>, vector<1024x128xbf16>
    tpu.vector_store %arg4[%c0_6, %c0_7], %8 {strides = array<i32>} : memref<1024x128xbf16, #tpu.memory_space<vmem>>, vector<1024x128xbf16>,
    return
  }
  func.func @transform_0(%arg0: i32) -> (i32, i32) {
    %c0_i32 = arith.constant 0 : i32
    %c0_i32_0 = arith.constant 0 : i32
    return %arg0, %c0_i32 : i32, i32
  }
  func.func @transform_1(%arg0: i32) -> (i32, i32) {
    %c0_i32 = arith.constant 0 : i32
    %c0_i32_0 = arith.constant 0 : i32
    %c0_i32_1 = arith.constant 0 : i32
    return %c0_i32, %c0_i32_0 : i32, i32
  }
  func.func @transform_2(%arg0: i32) -> (i32, i32) {
    %c0_i32 = arith.constant 0 : i32
    %c0_i32_0 = arith.constant 0 : i32
    %c0_i32_1 = arith.constant 0 : i32
    return %c0_i32, %c0_i32_0 : i32, i32
  }
  func.func @transform_3(%arg0: i32) -> (i32, i32) {
    %c0_i32 = arith.constant 0 : i32
    %c0_i32_0 = arith.constant 0 : i32
    return %arg0, %c0_i32 : i32, i32
  }
}

module attributes {stable_mosaic.version = 11 : i64} {
  func.func @_max4_kernel(%arg0: memref<38x608xbf16, #tpu.memory_space<vmem>>, %arg1: memref<38x608xbf16, #tpu.memory_space<vmem>>, %arg2: memref<38x608xbf16, #tpu.memory_space<vmem>>, %arg3: memref<38x608xbf16, #tpu.memory_space<vmem>>, %arg4: memref<38x608xbf16, #tpu.memory_space<vmem>>) attributes {dimension_semantics = [], scalar_prefetch = 0 : i64, scratch_operands = 0 : i64, tpu.core_type = #tpu.core_type<tc>} {
    %c0 = arith.constant 0 : index
    %c0_0 = arith.constant 0 : index
    %0 = vector.load %arg0[%c0, %c0_0] : memref<38x608xbf16, #tpu.memory_space<vmem>>, vector<38x608xbf16>
    %c0_1 = arith.constant 0 : index
    %c0_2 = arith.constant 0 : index
    %1 = vector.load %arg1[%c0_1, %c0_2] : memref<38x608xbf16, #tpu.memory_space<vmem>>, vector<38x608xbf16>
    %2 = arith.maximumf %0, %1 : vector<38x608xbf16>
    %c0_3 = arith.constant 0 : index
    %c0_4 = arith.constant 0 : index
    %3 = vector.load %arg2[%c0_3, %c0_4] : memref<38x608xbf16, #tpu.memory_space<vmem>>, vector<38x608xbf16>
    %c0_5 = arith.constant 0 : index
    %c0_6 = arith.constant 0 : index
    %4 = vector.load %arg3[%c0_5, %c0_6] : memref<38x608xbf16, #tpu.memory_space<vmem>>, vector<38x608xbf16>
    %5 = arith.maximumf %3, %4 : vector<38x608xbf16>
    %6 = arith.maximumf %2, %5 : vector<38x608xbf16>
    %c0_7 = arith.constant 0 : index
    %c0_8 = arith.constant 0 : index
    %7 = vector.load %arg4[%c0_7, %c0_8] : memref<38x608xbf16, #tpu.memory_space<vmem>>, vector<38x608xbf16>
    tpu.vector_store %arg4[%c0_7, %c0_8], %6 {strides = array<i32>} : memref<38x608xbf16, #tpu.memory_space<vmem>>, vector<38x608xbf16>,
    return
  }
}

module attributes {stable_mosaic.version = 11 : i64} {
  func.func @_matmul_bias_act_kernel(%arg0: i32, %arg1: memref<392x1152xbf16, #tpu.memory_space<vmem>>, %arg2: memref<1152x128xbf16, #tpu.memory_space<vmem>>, %arg3: memref<1x128xf32, #tpu.memory_space<vmem>>, %arg4: memref<392x128xbf16, #tpu.memory_space<vmem>>) attributes {dimension_semantics = [#tpu.dimension_semantics<parallel>], iteration_bounds = array<i64: 1>, scalar_prefetch = 0 : i64, scratch_operands = 0 : i64, tpu.core_type = #tpu.core_type<tc>, window_params = [{transform_indices = @transform_0, window_bounds = array<i64: 392, 1152>}, {pipeline_mode = #tpu.pipeline_mode<synchronous>, transform_indices = @transform_1, window_bounds = array<i64: 1152, 128>}, {pipeline_mode = #tpu.pipeline_mode<synchronous>, transform_indices = @transform_2, window_bounds = array<i64: 1, 128>}, {transform_indices = @transform_3, window_bounds = array<i64: 392, 128>}]} {
    %c0 = arith.constant 0 : index
    %c0_0 = arith.constant 0 : index
    %0 = vector.load %arg1[%c0, %c0_0] : memref<392x1152xbf16, #tpu.memory_space<vmem>>, vector<392x1152xbf16>
    %c0_1 = arith.constant 0 : index
    %c0_2 = arith.constant 0 : index
    %1 = vector.load %arg2[%c0_1, %c0_2] : memref<1152x128xbf16, #tpu.memory_space<vmem>>, vector<1152x128xbf16>
    %cst = arith.constant dense<0.000000e+00> : vector<392x128xf32>
    %2 = tpu.matmul %0, %1, %cst {dimension_numbers = #tpu.dot_dimension_numbers<[1], [0], [0], [1], [0, 0, 1, 1], [], []>} : vector<392x1152xbf16>, vector<1152x128xbf16>, vector<392x128xf32> -> vector<392x128xf32>
    %c0_3 = arith.constant 0 : index
    %c0_4 = arith.constant 0 : index
    %3 = vector.load %arg3[%c0_3, %c0_4] : memref<1x128xf32, #tpu.memory_space<vmem>>, vector<1x128xf32>
    %4 = vector.broadcast %3 : vector<1x128xf32> to vector<392x128xf32>
    %5 = arith.addf %2, %4 : vector<392x128xf32>
    %cst_5 = arith.constant 0.000000e+00 : f32
    %6 = vector.broadcast %cst_5 : f32 to vector<392x128xf32>
    %7 = arith.maximumf %5, %6 : vector<392x128xf32>
    %8 = arith.truncf %7 : vector<392x128xf32> to vector<392x128xbf16>
    %c0_6 = arith.constant 0 : index
    %c0_7 = arith.constant 0 : index
    %9 = vector.load %arg4[%c0_6, %c0_7] : memref<392x128xbf16, #tpu.memory_space<vmem>>, vector<392x128xbf16>
    tpu.vector_store %arg4[%c0_6, %c0_7], %8 {strides = array<i32>} : memref<392x128xbf16, #tpu.memory_space<vmem>>, vector<392x128xbf16>,
    return
  }
  func.func @transform_0(%arg0: i32) -> (i32, i32) {
    %c0_i32 = arith.constant 0 : i32
    %c0_i32_0 = arith.constant 0 : i32
    return %arg0, %c0_i32 : i32, i32
  }
  func.func @transform_1(%arg0: i32) -> (i32, i32) {
    %c0_i32 = arith.constant 0 : i32
    %c0_i32_0 = arith.constant 0 : i32
    %c0_i32_1 = arith.constant 0 : i32
    return %c0_i32, %c0_i32_0 : i32, i32
  }
  func.func @transform_2(%arg0: i32) -> (i32, i32) {
    %c0_i32 = arith.constant 0 : i32
    %c0_i32_0 = arith.constant 0 : i32
    %c0_i32_1 = arith.constant 0 : i32
    return %c0_i32, %c0_i32_0 : i32, i32
  }
  func.func @transform_3(%arg0: i32) -> (i32, i32) {
    %c0_i32 = arith.constant 0 : i32
    %c0_i32_0 = arith.constant 0 : i32
    return %arg0, %c0_i32 : i32, i32
  }
}

module attributes {stable_mosaic.version = 11 : i64} {
  func.func @_max4_kernel(%arg0: memref<14x448xbf16, #tpu.memory_space<vmem>>, %arg1: memref<14x448xbf16, #tpu.memory_space<vmem>>, %arg2: memref<14x448xbf16, #tpu.memory_space<vmem>>, %arg3: memref<14x448xbf16, #tpu.memory_space<vmem>>, %arg4: memref<14x448xbf16, #tpu.memory_space<vmem>>) attributes {dimension_semantics = [], scalar_prefetch = 0 : i64, scratch_operands = 0 : i64, tpu.core_type = #tpu.core_type<tc>} {
    %c0 = arith.constant 0 : index
    %c0_0 = arith.constant 0 : index
    %0 = vector.load %arg0[%c0, %c0_0] : memref<14x448xbf16, #tpu.memory_space<vmem>>, vector<14x448xbf16>
    %c0_1 = arith.constant 0 : index
    %c0_2 = arith.constant 0 : index
    %1 = vector.load %arg1[%c0_1, %c0_2] : memref<14x448xbf16, #tpu.memory_space<vmem>>, vector<14x448xbf16>
    %2 = arith.maximumf %0, %1 : vector<14x448xbf16>
    %c0_3 = arith.constant 0 : index
    %c0_4 = arith.constant 0 : index
    %3 = vector.load %arg2[%c0_3, %c0_4] : memref<14x448xbf16, #tpu.memory_space<vmem>>, vector<14x448xbf16>
    %c0_5 = arith.constant 0 : index
    %c0_6 = arith.constant 0 : index
    %4 = vector.load %arg3[%c0_5, %c0_6] : memref<14x448xbf16, #tpu.memory_space<vmem>>, vector<14x448xbf16>
    %5 = arith.maximumf %3, %4 : vector<14x448xbf16>
    %6 = arith.maximumf %2, %5 : vector<14x448xbf16>
    %c0_7 = arith.constant 0 : index
    %c0_8 = arith.constant 0 : index
    %7 = vector.load %arg4[%c0_7, %c0_8] : memref<14x448xbf16, #tpu.memory_space<vmem>>, vector<14x448xbf16>
    tpu.vector_store %arg4[%c0_7, %c0_8], %6 {strides = array<i32>} : memref<14x448xbf16, #tpu.memory_space<vmem>>, vector<14x448xbf16>,
    return
  }
}

module attributes {stable_mosaic.version = 11 : i64} {
  func.func @_matmul_bias_act_kernel(%arg0: i32, %arg1: memref<24x1664xbf16, #tpu.memory_space<vmem>>, %arg2: memref<1664x128xbf16, #tpu.memory_space<vmem>>, %arg3: memref<1x128xf32, #tpu.memory_space<vmem>>, %arg4: memref<24x128xbf16, #tpu.memory_space<vmem>>) attributes {dimension_semantics = [#tpu.dimension_semantics<parallel>], iteration_bounds = array<i64: 1>, scalar_prefetch = 0 : i64, scratch_operands = 0 : i64, tpu.core_type = #tpu.core_type<tc>, window_params = [{transform_indices = @transform_0, window_bounds = array<i64: 24, 1664>}, {pipeline_mode = #tpu.pipeline_mode<synchronous>, transform_indices = @transform_1, window_bounds = array<i64: 1664, 128>}, {pipeline_mode = #tpu.pipeline_mode<synchronous>, transform_indices = @transform_2, window_bounds = array<i64: 1, 128>}, {transform_indices = @transform_3, window_bounds = array<i64: 24, 128>}]} {
    %c0 = arith.constant 0 : index
    %c0_0 = arith.constant 0 : index
    %0 = vector.load %arg1[%c0, %c0_0] : memref<24x1664xbf16, #tpu.memory_space<vmem>>, vector<24x1664xbf16>
    %c0_1 = arith.constant 0 : index
    %c0_2 = arith.constant 0 : index
    %1 = vector.load %arg2[%c0_1, %c0_2] : memref<1664x128xbf16, #tpu.memory_space<vmem>>, vector<1664x128xbf16>
    %cst = arith.constant dense<0.000000e+00> : vector<24x128xf32>
    %2 = tpu.matmul %0, %1, %cst {dimension_numbers = #tpu.dot_dimension_numbers<[1], [0], [0], [1], [0, 0, 1, 1], [], []>} : vector<24x1664xbf16>, vector<1664x128xbf16>, vector<24x128xf32> -> vector<24x128xf32>
    %c0_3 = arith.constant 0 : index
    %c0_4 = arith.constant 0 : index
    %3 = vector.load %arg3[%c0_3, %c0_4] : memref<1x128xf32, #tpu.memory_space<vmem>>, vector<1x128xf32>
    %4 = vector.broadcast %3 : vector<1x128xf32> to vector<24x128xf32>
    %5 = arith.addf %2, %4 : vector<24x128xf32>
    %cst_5 = arith.constant 0.000000e+00 : f32
    %6 = vector.broadcast %cst_5 : f32 to vector<24x128xf32>
    %7 = arith.maximumf %5, %6 : vector<24x128xf32>
    %8 = arith.truncf %7 : vector<24x128xf32> to vector<24x128xbf16>
    %c0_6 = arith.constant 0 : index
    %c0_7 = arith.constant 0 : index
    %9 = vector.load %arg4[%c0_6, %c0_7] : memref<24x128xbf16, #tpu.memory_space<vmem>>, vector<24x128xbf16>
    tpu.vector_store %arg4[%c0_6, %c0_7], %8 {strides = array<i32>} : memref<24x128xbf16, #tpu.memory_space<vmem>>, vector<24x128xbf16>,
    return
  }
  func.func @transform_0(%arg0: i32) -> (i32, i32) {
    %c0_i32 = arith.constant 0 : i32
    %c0_i32_0 = arith.constant 0 : i32
    return %arg0, %c0_i32 : i32, i32
  }
  func.func @transform_1(%arg0: i32) -> (i32, i32) {
    %c0_i32 = arith.constant 0 : i32
    %c0_i32_0 = arith.constant 0 : i32
    %c0_i32_1 = arith.constant 0 : i32
    return %c0_i32, %c0_i32_0 : i32, i32
  }
  func.func @transform_2(%arg0: i32) -> (i32, i32) {
    %c0_i32 = arith.constant 0 : i32
    %c0_i32_0 = arith.constant 0 : i32
    %c0_i32_1 = arith.constant 0 : i32
    return %c0_i32, %c0_i32_0 : i32, i32
  }
  func.func @transform_3(%arg0: i32) -> (i32, i32) {
    %c0_i32 = arith.constant 0 : i32
    %c0_i32_0 = arith.constant 0 : i32
    return %arg0, %c0_i32 : i32, i32
  }
}

module attributes {stable_mosaic.version = 11 : i64} {
  func.func @_matmul_bias_act_kernel(%arg0: i32, %arg1: memref<8x1152xbf16, #tpu.memory_space<vmem>>, %arg2: memref<1152x128xbf16, #tpu.memory_space<vmem>>, %arg3: memref<1x128xf32, #tpu.memory_space<vmem>>, %arg4: memref<8x128xf32, #tpu.memory_space<vmem>>) attributes {dimension_semantics = [#tpu.dimension_semantics<parallel>], iteration_bounds = array<i64: 1>, scalar_prefetch = 0 : i64, scratch_operands = 0 : i64, tpu.core_type = #tpu.core_type<tc>, window_params = [{transform_indices = @transform_0, window_bounds = array<i64: 8, 1152>}, {pipeline_mode = #tpu.pipeline_mode<synchronous>, transform_indices = @transform_1, window_bounds = array<i64: 1152, 128>}, {pipeline_mode = #tpu.pipeline_mode<synchronous>, transform_indices = @transform_2, window_bounds = array<i64: 1, 128>}, {transform_indices = @transform_3, window_bounds = array<i64: 8, 128>}]} {
    %c0 = arith.constant 0 : index
    %c0_0 = arith.constant 0 : index
    %0 = vector.load %arg1[%c0, %c0_0] : memref<8x1152xbf16, #tpu.memory_space<vmem>>, vector<8x1152xbf16>
    %c0_1 = arith.constant 0 : index
    %c0_2 = arith.constant 0 : index
    %1 = vector.load %arg2[%c0_1, %c0_2] : memref<1152x128xbf16, #tpu.memory_space<vmem>>, vector<1152x128xbf16>
    %cst = arith.constant dense<0.000000e+00> : vector<8x128xf32>
    %2 = tpu.matmul %0, %1, %cst {dimension_numbers = #tpu.dot_dimension_numbers<[1], [0], [0], [1], [0, 0, 1, 1], [], []>} : vector<8x1152xbf16>, vector<1152x128xbf16>, vector<8x128xf32> -> vector<8x128xf32>
    %c0_3 = arith.constant 0 : index
    %c0_4 = arith.constant 0 : index
    %3 = vector.load %arg3[%c0_3, %c0_4] : memref<1x128xf32, #tpu.memory_space<vmem>>, vector<1x128xf32>
    %4 = vector.broadcast %3 : vector<1x128xf32> to vector<8x128xf32>
    %5 = arith.addf %2, %4 : vector<8x128xf32>
    %c0_5 = arith.constant 0 : index
    %c0_6 = arith.constant 0 : index
    %6 = vector.load %arg4[%c0_5, %c0_6] : memref<8x128xf32, #tpu.memory_space<vmem>>, vector<8x128xf32>
    tpu.vector_store %arg4[%c0_5, %c0_6], %5 {strides = array<i32>} : memref<8x128xf32, #tpu.memory_space<vmem>>, vector<8x128xf32>,
    return
  }
  func.func @transform_0(%arg0: i32) -> (i32, i32) {
    %c0_i32 = arith.constant 0 : i32
    %c0_i32_0 = arith.constant 0 : i32
    return %arg0, %c0_i32 : i32, i32
  }
  func.func @transform_1(%arg0: i32) -> (i32, i32) {
    %c0_i32 = arith.constant 0 : i32
    %c0_i32_0 = arith.constant 0 : i32
    %c0_i32_1 = arith.constant 0 : i32
    return %c0_i32, %c0_i32_0 : i32, i32
  }
  func.func @transform_2(%arg0: i32) -> (i32, i32) {
    %c0_i32 = arith.constant 0 : i32
    %c0_i32_0 = arith.constant 0 : i32
    %c0_i32_1 = arith.constant 0 : i32
    return %c0_i32, %c0_i32_0 : i32, i32
  }
  func.func @transform_3(%arg0: i32) -> (i32, i32) {
    %c0_i32 = arith.constant 0 : i32
    %c0_i32_0 = arith.constant 0 : i32
    return %arg0, %c0_i32 : i32, i32
  }
}

</mosaic_0001>

<llo_original>
// kernel: a_convnet_forward.8
$region0: #{a_convnet_forward.8}
  #allocation0 [shape = 'u32[]', space=smem, size = 0x4, offset = 0x4, fixed_abs, tag = 'smem constant byte address 0x4 - core index']
  #allocation1 [shape = 'u32[144,128]{1,0:T(1,128)}', space=vmem, size = 0x12000, scoped, tag = 'internal scratch']
  %s0 = inlined_call_operand.vmem [shape: bf16[14336,128], index: 0, kind: input, shape index: {}]
  %s1 = inlined_call_operand.vmem [shape: bf16[128,128], index: 1, kind: input, shape index: {}]
  %s2 = inlined_call_operand.vmem [shape: f32[1,128], index: 2, kind: input, shape index: {}]
  %s3 = inlined_call_operand.vmem [shape: bf16[14336,128], index: 3, kind: output, shape index: {}]
  %s4 = sld [smem:[#allocation0]]
  $region45: #{a_convnet_forward.8} parent=0
    _
  %s6 = ssub.s32 1, %s4
  %s7 = scalar_select 0, %s6, %s4
  loop: start=0, step=1, limit=16
  $region2: #{a_convnet_forward.8} parent=0 // loop_pre_header
    _
  $region3: #{a_convnet_forward.8} parent=0 // loop_header
    %s9 = sphi 0, %s13
    %p10 = scmp.ge.s32.totalorder %s9, 16
    %s19 = sphi 0, %s21
    %s22 = sphi 0, %s19
    %s23 = sphi 0, %s22
    %s39 = sphi 0, %s23
    %s43 = sphi 0, %s43
    %s45 = sphi 0, %s43
    %s46 = sphi 0, %s45
    %s60 = sphi 0, %s46
    %s64 = sphi 0, %s64
    %s66 = sphi 0, %s64
    %s67 = sphi 0, %s66
    %s81 = sphi 0, %s67
    %s87 = sphi 0, %s89
    %s90 = sphi 0, %s87
    %s91 = sphi 0, %s90
    %s107 = sphi 0, %s91
  $region4: #{a_convnet_forward.8} parent=0 // loop_header_branch
    %12 = sbr.rel (%p10) target = $region8
  $region5: #{a_convnet_forward.8} parent=0 // loop_body
    %s14 = ssub.s32 %s9, 1
    %s15 = ssub.s32 %s9, 2
    %s16 = sadd.s32 %s9, 1
    %s17 = ssub.s32 %s9, %s16
    %p18 = scmp.eq.s32.totalorder %s17, 0
    %s20 = sadd.s32 %s19, 1
    %s21 = scalar_select %p18, %s19, %s20
    %p24 = pneg %p18
    %p25 = scmp.eq.s32.totalorder %s9, 13
    %p26 = por %p24, %p25
    %p27 = scmp.ne.s32.totalorder %s19, %s22
    %p28 = scmp.eq.s32.totalorder %s9, 0
    %p29 = por %p27, %p28
    %p30 = scmp.ne.s32.totalorder %s19, %s22
    %p31 = scmp.eq.s32.totalorder %s14, 13
    %p32 = por %p30, %p31
    %p33 = scmp.ne.s32.totalorder %s22, %s23
    %p34 = scmp.eq.s32.totalorder %s14, 0
    %p35 = por %p33, %p34
    %p36 = scmp.ne.s32.totalorder %s22, %s23
    %p37 = scmp.eq.s32.totalorder %s15, 13
    %p38 = por %p36, %p37
    %p40 = scmp.ne.s32.totalorder %s23, %s39
    %p41 = scmp.eq.s32.totalorder %s15, 0
    %p42 = por %p40, %p41
    %s44 = sadd.s32 %s43, 1
    %p47 = scmp.eq.s32.totalorder %s9, 13
    %p48 = scmp.ne.s32.totalorder %s43, %s45
    %p49 = scmp.eq.s32.totalorder %s9, 0
    %p50 = por %p48, %p49
    %p51 = scmp.ne.s32.totalorder %s43, %s45
    %p52 = scmp.eq.s32.totalorder %s14, 13
    %p53 = por %p51, %p52
    %p54 = scmp.ne.s32.totalorder %s45, %s46
    %p55 = scmp.eq.s32.totalorder %s14, 0
    %p56 = por %p54, %p55
    %p57 = scmp.ne.s32.totalorder %s45, %s46
    %p58 = scmp.eq.s32.totalorder %s15, 13
    %p59 = por %p57, %p58
    %p61 = scmp.ne.s32.totalorder %s46, %s60
    %p62 = scmp.eq.s32.totalorder %s15, 0
    %p63 = por %p61, %p62
    %s65 = sadd.s32 %s64, 1
    %p68 = scmp.eq.s32.totalorder %s9, 13
    %p69 = scmp.ne.s32.totalorder %s64, %s66
    %p70 = scmp.eq.s32.totalorder %s9, 0
    %p71 = por %p69, %p70
    %p72 = scmp.ne.s32.totalorder %s64, %s66
    %p73 = scmp.eq.s32.totalorder %s14, 13
    %p74 = por %p72, %p73
    %p75 = scmp.ne.s32.totalorder %s66, %s67
    %p76 = scmp.eq.s32.totalorder %s14, 0
    %p77 = por %p75, %p76
    %p78 = scmp.ne.s32.totalorder %s66, %s67
    %p79 = scmp.eq.s32.totalorder %s15, 13
    %p80 = por %p78, %p79
    %p82 = scmp.ne.s32.totalorder %s67, %s81
    %p83 = scmp.eq.s32.totalorder %s15, 0
    %p84 = por %p82, %p83
    %s85 = ssub.s32 %s9, %s16
    %p86 = scmp.eq.s32.totalorder %s85, 0
    %s88 = sadd.s32 %s87, 1
    %s89 = scalar_select %p86, %s87, %s88
    %p92 = pneg %p86
    %p93 = scmp.eq.s32.totalorder %s9, 13
    %p94 = por %p92, %p93
    %p95 = scmp.ne.s32.totalorder %s87, %s90
    %p96 = scmp.eq.s32.totalorder %s9, 0
    %p97 = por %p95, %p96
    %p98 = scmp.ne.s32.totalorder %s87, %s90
    %p99 = scmp.eq.s32.totalorder %s14, 13
    %p100 = por %p98, %p99
    %p101 = scmp.ne.s32.totalorder %s90, %s91
    %p102 = scmp.eq.s32.totalorder %s14, 0
    %p103 = por %p101, %p102
    %p104 = scmp.ne.s32.totalorder %s90, %s91
    %p105 = scmp.eq.s32.totalorder %s15, 13
    %p106 = por %p104, %p105
    %p108 = scmp.ne.s32.totalorder %s91, %s107
    %p109 = scmp.eq.s32.totalorder %s15, 0
    %p110 = por %p108, %p109
    %p111 = scmp.le.s32.totalorder 1, %s9
    %p112 = scmp.lt.s32.totalorder %s9, 15
    %p113 = pnand %p111, %p112
    %p114 = pneg %p113
    // Predicated region
    $region9: #{a_convnet_forward.8} parent=5 // pred_check
      _
    $region10: #{a_convnet_forward.8} parent=5 // pred_check_branch
      %116 = sbr.rel (%p113) target = $region12
    $region11: #{a_convnet_forward.8} parent=5 // pred_region
      %s117 = ssub.s32 %s9, 1
      // Predicated region
      $region13: #{a_convnet_forward.8} parent=11 // pred_check
        %p118 = pneg %p56
      $region14: #{a_convnet_forward.8} parent=11 // pred_check_branch
        %120 = sbr.rel (%p118) target = $region16
      $region15: #{a_convnet_forward.8} parent=11 // pred_region
        _
      $region16: #{a_convnet_forward.8} parent=11 // pred_fallthru
        _
      // Predicated region
      $region17: #{a_convnet_forward.8} parent=11 // pred_check
        %p121 = pneg %p77
      $region18: #{a_convnet_forward.8} parent=11 // pred_check_branch
        %123 = sbr.rel (%p121) target = $region20
      $region19: #{a_convnet_forward.8} parent=11 // pred_region
        _
      $region20: #{a_convnet_forward.8} parent=11 // pred_fallthru
        _
    $region12: #{a_convnet_forward.8} parent=5 // pred_fallthru
      _
    %p124 = scmp.lt.s32.totalorder %s9, 14
    // Predicated region
    $region21: #{a_convnet_forward.8} parent=5 // pred_check
      %p125 = pneg %p124
    $region22: #{a_convnet_forward.8} parent=5 // pred_check_branch
      %127 = sbr.rel (%p125) target = $region24
    $region23: #{a_convnet_forward.8} parent=5 // pred_region
      // Predicated region
      $region25: #{a_convnet_forward.8} parent=23 // pred_check
        %p128 = pneg %p29
      $region26: #{a_convnet_forward.8} parent=23 // pred_check_branch
        %130 = sbr.rel (%p128) target = $region28
      $region27: #{a_convnet_forward.8} parent=23 // pred_region
        %s131 = smul.u32 128, %s9
        %p132 = scmp.lt.s32.totalorder %s131, 1791
        %s133 = scalar_select %p132, %s131, 1791
        %s134 = smul.addr %s133, 4
        %s135 = scalar_lea.vmem %s0, %s134
        %s136 = smul.u32 128, %s9
      $region28: #{a_convnet_forward.8} parent=23 // pred_fallthru
        _
    $region24: #{a_convnet_forward.8} parent=5 // pred_fallthru
      _
    %p137 = scmp.le.s32.totalorder 1, %s9
    %p138 = scmp.lt.s32.totalorder %s9, 15
    %p139 = pnand %p137, %p138
    %p140 = pneg %p139
    // Predicated region
    $region29: #{a_convnet_forward.8} parent=5 // pred_check
      _
    $region30: #{a_convnet_forward.8} parent=5 // pred_check_branch
      %142 = sbr.rel (%p139) target = $region32
    $region31: #{a_convnet_forward.8} parent=5 // pred_region
      %s143 = ssub.s32 %s9, 1
      %s144 = smul.u32 128, %s14
      %p145 = scmp.lt.s32.totalorder %s144, 1791
      %s146 = scalar_select %p145, %s144, 1791
      %s147 = smul.addr %s146, 4
      %s148 = scalar_lea.vmem %s0, %s147
      %p149 = pneg %p35
      %p150 = pneg %p32
      %p151 = pneg %p56
      %p152 = pneg %p53
      %p153 = pneg %p77
      %p154 = pneg %p74
      %p155 = pneg %p103
      %p156 = pneg %p100
      %s157 = smul.u32 128, %s14
      %p158 = scmp.lt.s32.totalorder %s157, 1791
      %s159 = scalar_select %p158, %s157, 1791
      %s160 = smul.addr %s159, 4
      %s161 = scalar_lea.vmem %s3, %s160
      %s162 = smul.u32 128, %s14
      %p163 = scmp.lt.s32.totalorder %s162, 1791
      %s164 = scalar_select %p163, %s162, 1791
      %s165 = smul.addr %s164, 4
      %s166 = scalar_lea.vmem %s0, %s165
      %s167 = smul.u32 128, %s14
      %s168 = smul.u32 128, %s14
      %p169 = scmp.lt.s32.totalorder %s168, 1791
      %s170 = scalar_select %p169, %s168, 1791
      %s171 = smul.addr %s170, 4
      %s172 = scalar_lea.vmem %s3, %s171
      %s173 = smul.u32 128, %s14
      %v175 = vld [vmem:[%s166] sm:$0xf]
      %v176 = vld [vmem:[%s166 + $0x4] sm:$0xf]
      %v177 = vld [vmem:[%s166 + $0x8] sm:$0xf]
      %v178 = vld [vmem:[%s166 + $0xc] sm:$0xf]
      %v179 = vld [vmem:[%s166 + $0x10] sm:$0xf]
      %v180 = vld [vmem:[%s166 + $0x14] sm:$0xf]
      %v181 = vld [vmem:[%s166 + $0x18] sm:$0xf]
      %v182 = vld [vmem:[%s166 + $0x1c] sm:$0xf]
      %v183 = vld [vmem:[%s166 + $0x20] sm:$0xf]
      %v184 = vld [vmem:[%s166 + $0x24] sm:$0xf]
      %v185 = vld [vmem:[%s166 + $0x28] sm:$0xf]
      %v186 = vld [vmem:[%s166 + $0x2c] sm:$0xf]
      %v187 = vld [vmem:[%s166 + $0x30] sm:$0xf]
      %v188 = vld [vmem:[%s166 + $0x34] sm:$0xf]
      %v189 = vld [vmem:[%s166 + $0x38] sm:$0xf]
      %v190 = vld [vmem:[%s166 + $0x3c] sm:$0xf]
      %v191 = vld [vmem:[%s166 + $0x40] sm:$0xf]
      %v192 = vld [vmem:[%s166 + $0x44] sm:$0xf]
      %v193 = vld [vmem:[%s166 + $0x48] sm:$0xf]
      %v194 = vld [vmem:[%s166 + $0x4c] sm:$0xf]
      %v195 = vld [vmem:[%s166 + $0x50] sm:$0xf]
      %v196 = vld [vmem:[%s166 + $0x54] sm:$0xf]
      %v197 = vld [vmem:[%s166 + $0x58] sm:$0xf]
      %v198 = vld [vmem:[%s166 + $0x5c] sm:$0xf]
      %v199 = vld [vmem:[%s166 + $0x60] sm:$0xf]
      %v200 = vld [vmem:[%s166 + $0x64] sm:$0xf]
      %v201 = vld [vmem:[%s166 + $0x68] sm:$0xf]
      %v202 = vld [vmem:[%s166 + $0x6c] sm:$0xf]
      %v203 = vld [vmem:[%s166 + $0x70] sm:$0xf]
      %v204 = vld [vmem:[%s166 + $0x74] sm:$0xf]
      %v205 = vld [vmem:[%s166 + $0x78] sm:$0xf]
      %v206 = vld [vmem:[%s166 + $0x7c] sm:$0xf]
      %v207 = vld [vmem:[%s166 + $0x80] sm:$0xf]
      %v208 = vld [vmem:[%s166 + $0x84] sm:$0xf]
      %v209 = vld [vmem:[%s166 + $0x88] sm:$0xf]
      %v210 = vld [vmem:[%s166 + $0x8c] sm:$0xf]
      %v211 = vld [vmem:[%s166 + $0x90] sm:$0xf]
      %v212 = vld [vmem:[%s166 + $0x94] sm:$0xf]
      %v213 = vld [vmem:[%s166 + $0x98] sm:$0xf]
      %v214 = vld [vmem:[%s166 + $0x9c] sm:$0xf]
      %v215 = vld [vmem:[%s166 + $0xa0] sm:$0xf]
      %v216 = vld [vmem:[%s166 + $0xa4] sm:$0xf]
      %v217 = vld [vmem:[%s166 + $0xa8] sm:$0xf]
      %v218 = vld [vmem:[%s166 + $0xac] sm:$0xf]
      %v219 = vld [vmem:[%s166 + $0xb0] sm:$0xf]
      %v220 = vld [vmem:[%s166 + $0xb4] sm:$0xf]
      %v221 = vld [vmem:[%s166 + $0xb8] sm:$0xf]
      %v222 = vld [vmem:[%s166 + $0xbc] sm:$0xf]
      %v223 = vld [vmem:[%s166 + $0xc0] sm:$0xf]
      %v224 = vld [vmem:[%s166 + $0xc4] sm:$0xf]
      %v225 = vld [vmem:[%s166 + $0xc8] sm:$0xf]
      %v226 = vld [vmem:[%s166 + $0xcc] sm:$0xf]
      %v227 = vld [vmem:[%s166 + $0xd0] sm:$0xf]
      %v228 = vld [vmem:[%s166 + $0xd4] sm:$0xf]
      %v229 = vld [vmem:[%s166 + $0xd8] sm:$0xf]
      %v230 = vld [vmem:[%s166 + $0xdc] sm:$0xf]
      %v231 = vld [vmem:[%s166 + $0xe0] sm:$0xf]
      %v232 = vld [vmem:[%s166 + $0xe4] sm:$0xf]
      %v233 = vld [vmem:[%s166 + $0xe8] sm:$0xf]
      %v234 = vld [vmem:[%s166 + $0xec] sm:$0xf]
      %v235 = vld [vmem:[%s166 + $0xf0] sm:$0xf]
      %v236 = vld [vmem:[%s166 + $0xf4] sm:$0xf]
      %v237 = vld [vmem:[%s166 + $0xf8] sm:$0xf]
      %v238 = vld [vmem:[%s166 + $0xfc] sm:$0xf]
      %v239 = vld [vmem:[%s166 + $0x100] sm:$0xf]
      %v240 = vld [vmem:[%s166 + $0x104] sm:$0xf]
      %v241 = vld [vmem:[%s166 + $0x108] sm:$0xf]
      %v242 = vld [vmem:[%s166 + $0x10c] sm:$0xf]
      %v243 = vld [vmem:[%s166 + $0x110] sm:$0xf]
      %v244 = vld [vmem:[%s166 + $0x114] sm:$0xf]
      %v245 = vld [vmem:[%s166 + $0x118] sm:$0xf]
      %v246 = vld [vmem:[%s166 + $0x11c] sm:$0xf]
      %v247 = vld [vmem:[%s166 + $0x120] sm:$0xf]
      %v248 = vld [vmem:[%s166 + $0x124] sm:$0xf]
      %v249 = vld [vmem:[%s166 + $0x128] sm:$0xf]
      %v250 = vld [vmem:[%s166 + $0x12c] sm:$0xf]
      %v251 = vld [vmem:[%s166 + $0x130] sm:$0xf]
      %v252 = vld [vmem:[%s166 + $0x134] sm:$0xf]
      %v253 = vld [vmem:[%s166 + $0x138] sm:$0xf]
      %v254 = vld [vmem:[%s166 + $0x13c] sm:$0xf]
      %v255 = vld [vmem:[%s166 + $0x140] sm:$0xf]
      %v256 = vld [vmem:[%s166 + $0x144] sm:$0xf]
      %v257 = vld [vmem:[%s166 + $0x148] sm:$0xf]
      %v258 = vld [vmem:[%s166 + $0x14c] sm:$0xf]
      %v259 = vld [vmem:[%s166 + $0x150] sm:$0xf]
      %v260 = vld [vmem:[%s166 + $0x154] sm:$0xf]
      %v261 = vld [vmem:[%s166 + $0x158] sm:$0xf]
      %v262 = vld [vmem:[%s166 + $0x15c] sm:$0xf]
      %v263 = vld [vmem:[%s166 + $0x160] sm:$0xf]
      %v264 = vld [vmem:[%s166 + $0x164] sm:$0xf]
      %v265 = vld [vmem:[%s166 + $0x168] sm:$0xf]
      %v266 = vld [vmem:[%s166 + $0x16c] sm:$0xf]
      %v267 = vld [vmem:[%s166 + $0x170] sm:$0xf]
      %v268 = vld [vmem:[%s166 + $0x174] sm:$0xf]
      %v269 = vld [vmem:[%s166 + $0x178] sm:$0xf]
      %v270 = vld [vmem:[%s166 + $0x17c] sm:$0xf]
      %v271 = vld [vmem:[%s166 + $0x180] sm:$0xf]
      %v272 = vld [vmem:[%s166 + $0x184] sm:$0xf]
      %v273 = vld [vmem:[%s166 + $0x188] sm:$0xf]
      %v274 = vld [vmem:[%s166 + $0x18c] sm:$0xf]
      %v275 = vld [vmem:[%s166 + $0x190] sm:$0xf]
      %v276 = vld [vmem:[%s166 + $0x194] sm:$0xf]
      %v277 = vld [vmem:[%s166 + $0x198] sm:$0xf]
      %v278 = vld [vmem:[%s166 + $0x19c] sm:$0xf]
      %v279 = vld [vmem:[%s166 + $0x1a0] sm:$0xf]
      %v280 = vld [vmem:[%s166 + $0x1a4] sm:$0xf]
      %v281 = vld [vmem:[%s166 + $0x1a8] sm:$0xf]
      %v282 = vld [vmem:[%s166 + $0x1ac] sm:$0xf]
      %v283 = vld [vmem:[%s166 + $0x1b0] sm:$0xf]
      %v284 = vld [vmem:[%s166 + $0x1b4] sm:$0xf]
      %v285 = vld [vmem:[%s166 + $0x1b8] sm:$0xf]
      %v286 = vld [vmem:[%s166 + $0x1bc] sm:$0xf]
      %v287 = vld [vmem:[%s166 + $0x1c0] sm:$0xf]
      %v288 = vld [vmem:[%s166 + $0x1c4] sm:$0xf]
      %v289 = vld [vmem:[%s166 + $0x1c8] sm:$0xf]
      %v290 = vld [vmem:[%s166 + $0x1cc] sm:$0xf]
      %v291 = vld [vmem:[%s166 + $0x1d0] sm:$0xf]
      %v292 = vld [vmem:[%s166 + $0x1d4] sm:$0xf]
      %v293 = vld [vmem:[%s166 + $0x1d8] sm:$0xf]
      %v294 = vld [vmem:[%s166 + $0x1dc] sm:$0xf]
      %v295 = vld [vmem:[%s166 + $0x1e0] sm:$0xf]
      %v296 = vld [vmem:[%s166 + $0x1e4] sm:$0xf]
      %v297 = vld [vmem:[%s166 + $0x1e8] sm:$0xf]
      %v298 = vld [vmem:[%s166 + $0x1ec] sm:$0xf]
      %v299 = vld [vmem:[%s166 + $0x1f0] sm:$0xf]
      %v300 = vld [vmem:[%s166 + $0x1f4] sm:$0xf]
      %v301 = vld [vmem:[%s166 + $0x1f8] sm:$0xf]
      %v302 = vld [vmem:[%s166 + $0x1fc] sm:$0xf]
      %v303 = vld [vmem:[%s1] sm:$0xf]
      %v304 = vld [vmem:[%s1 + $0x4] sm:$0xf]
      %v305 = vld [vmem:[%s1 + $0x8] sm:$0xf]
      %v306 = vld [vmem:[%s1 + $0xc] sm:$0xf]
      %v307 = vld [vmem:[%s1 + $0x10] sm:$0xf]
      %v308 = vld [vmem:[%s1 + $0x14] sm:$0xf]
      %v309 = vld [vmem:[%s1 + $0x18] sm:$0xf]
      %v310 = vld [vmem:[%s1 + $0x1c] sm:$0xf]
      %v311 = vld [vmem:[%s1 + $0x20] sm:$0xf]
      %v312 = vld [vmem:[%s1 + $0x24] sm:$0xf]
      %v313 = vld [vmem:[%s1 + $0x28] sm:$0xf]
      %v314 = vld [vmem:[%s1 + $0x2c] sm:$0xf]
      %v315 = vld [vmem:[%s1 + $0x30] sm:$0xf]
      %v316 = vld [vmem:[%s1 + $0x34] sm:$0xf]
      %v317 = vld [vmem:[%s1 + $0x38] sm:$0xf]
      %v318 = vld [vmem:[%s1 + $0x3c] sm:$0xf]
      %v319 = vld [vmem:[%s2] sm:$0x1]
      %v321 = vlaneseq
      %v322 = vshrl.u32 %v321, 7
      %v323 = vsub.s32 0, %v322
      %v324 = vrot.slane %v319, %v323
      %v454 = vunpack.c.l.b16 %v175
      %v455 = vunpack.c.l.b16 %v176
      %v456 = vunpack.c.l.b16 %v177
      %v457 = vunpack.c.l.b16 %v178
      %v458 = vunpack.c.l.b16 %v179
      %v459 = vunpack.c.l.b16 %v180
      %v460 = vunpack.c.l.b16 %v181
      %v461 = vunpack.c.l.b16 %v182
      %v462 = vunpack.c.l.b16 %v183
      %v463 = vunpack.c.l.b16 %v184
      %v464 = vunpack.c.l.b16 %v185
      %v465 = vunpack.c.l.b16 %v186
      %v466 = vunpack.c.l.b16 %v187
      %v467 = vunpack.c.l.b16 %v188
      %v468 = vunpack.c.l.b16 %v189
      %v469 = vunpack.c.l.b16 %v190
      %v470 = vunpack.c.l.b16 %v191
      %v471 = vunpack.c.l.b16 %v192
      %v472 = vunpack.c.l.b16 %v193
      %v473 = vunpack.c.l.b16 %v194
      %v474 = vunpack.c.l.b16 %v195
      %v475 = vunpack.c.l.b16 %v196
      %v476 = vunpack.c.l.b16 %v197
      %v477 = vunpack.c.l.b16 %v198
      %v478 = vunpack.c.l.b16 %v199
      %v479 = vunpack.c.l.b16 %v200
      %v480 = vunpack.c.l.b16 %v201
      %v481 = vunpack.c.l.b16 %v202
      %v482 = vunpack.c.l.b16 %v203
      %v483 = vunpack.c.l.b16 %v204
      %v484 = vunpack.c.l.b16 %v205
      %v485 = vunpack.c.l.b16 %v206
      %v486 = vunpack.c.l.b16 %v207
      %v487 = vunpack.c.l.b16 %v208
      %v488 = vunpack.c.l.b16 %v209
      %v489 = vunpack.c.l.b16 %v210
      %v490 = vunpack.c.l.b16 %v211
      %v491 = vunpack.c.l.b16 %v212
      %v492 = vunpack.c.l.b16 %v213
      %v493 = vunpack.c.l.b16 %v214
      %v494 = vunpack.c.l.b16 %v215
      %v495 = vunpack.c.l.b16 %v216
      %v496 = vunpack.c.l.b16 %v217
      %v497 = vunpack.c.l.b16 %v218
      %v498 = vunpack.c.l.b16 %v219
      %v499 = vunpack.c.l.b16 %v220
      %v500 = vunpack.c.l.b16 %v221
      %v501 = vunpack.c.l.b16 %v222
      %v502 = vunpack.c.l.b16 %v223
      %v503 = vunpack.c.l.b16 %v224
      %v504 = vunpack.c.l.b16 %v225
      %v505 = vunpack.c.l.b16 %v226
      %v506 = vunpack.c.l.b16 %v227
      %v507 = vunpack.c.l.b16 %v228
      %v508 = vunpack.c.l.b16 %v229
      %v509 = vunpack.c.l.b16 %v230
      %v510 = vunpack.c.l.b16 %v231
      %v511 = vunpack.c.l.b16 %v232
      %v512 = vunpack.c.l.b16 %v233
      %v513 = vunpack.c.l.b16 %v234
      %v514 = vunpack.c.l.b16 %v235
      %v515 = vunpack.c.l.b16 %v236
      %v516 = vunpack.c.l.b16 %v237
      %v517 = vunpack.c.l.b16 %v238
      %v518 = vunpack.c.l.b16 %v239
      %v519 = vunpack.c.l.b16 %v240
      %v520 = vunpack.c.l.b16 %v241
      %v521 = vunpack.c.l.b16 %v242
      %v522 = vunpack.c.l.b16 %v243
      %v523 = vunpack.c.l.b16 %v244
      %v524 = vunpack.c.l.b16 %v245
      %v525 = vunpack.c.l.b16 %v246
      %v526 = vunpack.c.l.b16 %v247
      %v527 = vunpack.c.l.b16 %v248
      %v528 = vunpack.c.l.b16 %v249
      %v529 = vunpack.c.l.b16 %v250
      %v530 = vunpack.c.l.b16 %v251
      %v531 = vunpack.c.l.b16 %v252
      %v532 = vunpack.c.l.b16 %v253
      %v533 = vunpack.c.l.b16 %v254
      %v534 = vunpack.c.l.b16 %v255
      %v535 = vunpack.c.l.b16 %v256
      %v536 = vunpack.c.l.b16 %v257
      %v537 = vunpack.c.l.b16 %v258
      %v538 = vunpack.c.l.b16 %v259
      %v539 = vunpack.c.l.b16 %v260
      %v540 = vunpack.c.l.b16 %v261
      %v541 = vunpack.c.l.b16 %v262
      %v542 = vunpack.c.l.b16 %v263
      %v543 = vunpack.c.l.b16 %v264
      %v544 = vunpack.c.l.b16 %v265
      %v545 = vunpack.c.l.b16 %v266
      %v546 = vunpack.c.l.b16 %v267
      %v547 = vunpack.c.l.b16 %v268
      %v548 = vunpack.c.l.b16 %v269
      %v549 = vunpack.c.l.b16 %v270
      %v550 = vunpack.c.l.b16 %v271
      %v551 = vunpack.c.l.b16 %v272
      %v552 = vunpack.c.l.b16 %v273
      %v553 = vunpack.c.l.b16 %v274
      %v554 = vunpack.c.l.b16 %v275
      %v555 = vunpack.c.l.b16 %v276
      %v556 = vunpack.c.l.b16 %v277
      %v557 = vunpack.c.l.b16 %v278
      %v558 = vunpack.c.l.b16 %v279
      %v559 = vunpack.c.l.b16 %v280
      %v560 = vunpack.c.l.b16 %v281
      %v561 = vunpack.c.l.b16 %v282
      %v562 = vunpack.c.l.b16 %v283
      %v563 = vunpack.c.l.b16 %v284
      %v564 = vunpack.c.l.b16 %v285
      %v565 = vunpack.c.l.b16 %v286
      %v566 = vunpack.c.l.b16 %v287
      %v567 = vunpack.c.l.b16 %v288
      %v568 = vunpack.c.l.b16 %v289
      %v569 = vunpack.c.l.b16 %v290
      %v570 = vunpack.c.l.b16 %v291
      %v571 = vunpack.c.l.b16 %v292
      %v572 = vunpack.c.l.b16 %v293
      %v573 = vunpack.c.l.b16 %v294
      %v574 = vunpack.c.l.b16 %v295
      %v575 = vunpack.c.l.b16 %v296
      %v576 = vunpack.c.l.b16 %v297
      %v577 = vunpack.c.l.b16 %v298
      %v578 = vunpack.c.l.b16 %v299
      %v579 = vunpack.c.l.b16 %v300
      %v580 = vunpack.c.l.b16 %v301
      %v581 = vunpack.c.l.b16 %v302
      %v582 = vpack.c.b16 %v455, %v454
      %v583 = vpack.c.b16 %v457, %v456
      %v584 = vpack.c.b16 %v459, %v458
      %v585 = vpack.c.b16 %v461, %v460
      %v586 = vpack.c.b16 %v463, %v462
      %v587 = vpack.c.b16 %v465, %v464
      %v588 = vpack.c.b16 %v467, %v466
      %v589 = vpack.c.b16 %v469, %v468
      %v590 = vpack.c.b16 %v471, %v470
      %v591 = vpack.c.b16 %v473, %v472
      %v592 = vpack.c.b16 %v475, %v474
      %v593 = vpack.c.b16 %v477, %v476
      %v594 = vpack.c.b16 %v479, %v478
      %v595 = vpack.c.b16 %v481, %v480
      %v596 = vpack.c.b16 %v483, %v482
      %v597 = vpack.c.b16 %v485, %v484
      %v598 = vpack.c.b16 %v487, %v486
      %v599 = vpack.c.b16 %v489, %v488
      %v600 = vpack.c.b16 %v491, %v490
      %v601 = vpack.c.b16 %v493, %v492
      %v602 = vpack.c.b16 %v495, %v494
      %v603 = vpack.c.b16 %v497, %v496
      %v604 = vpack.c.b16 %v499, %v498
      %v605 = vpack.c.b16 %v501, %v500
      %v606 = vpack.c.b16 %v503, %v502
      %v607 = vpack.c.b16 %v505, %v504
      %v608 = vpack.c.b16 %v507, %v506
      %v609 = vpack.c.b16 %v509, %v508
      %v610 = vpack.c.b16 %v511, %v510
      %v611 = vpack.c.b16 %v513, %v512
      %v612 = vpack.c.b16 %v515, %v514
      %v613 = vpack.c.b16 %v517, %v516
      %v614 = vpack.c.b16 %v519, %v518
      %v615 = vpack.c.b16 %v521, %v520
      %v616 = vpack.c.b16 %v523, %v522
      %v617 = vpack.c.b16 %v525, %v524
      %v618 = vpack.c.b16 %v527, %v526
      %v619 = vpack.c.b16 %v529, %v528
      %v620 = vpack.c.b16 %v531, %v530
      %v621 = vpack.c.b16 %v533, %v532
      %v622 = vpack.c.b16 %v535, %v534
      %v623 = vpack.c.b16 %v537, %v536
      %v624 = vpack.c.b16 %v539, %v538
      %v625 = vpack.c.b16 %v541, %v540
      %v626 = vpack.c.b16 %v543, %v542
      %v627 = vpack.c.b16 %v545, %v544
      %v628 = vpack.c.b16 %v547, %v546
      %v629 = vpack.c.b16 %v549, %v548
      %v630 = vpack.c.b16 %v551, %v550
      %v631 = vpack.c.b16 %v553, %v552
      %v632 = vpack.c.b16 %v555, %v554
      %v633 = vpack.c.b16 %v557, %v556
      %v634 = vpack.c.b16 %v559, %v558
      %v635 = vpack.c.b16 %v561, %v560
      %v636 = vpack.c.b16 %v563, %v562
      %v637 = vpack.c.b16 %v565, %v564
      %v638 = vpack.c.b16 %v567, %v566
      %v639 = vpack.c.b16 %v569, %v568
      %v640 = vpack.c.b16 %v571, %v570
      %v641 = vpack.c.b16 %v573, %v572
      %v642 = vpack.c.b16 %v575, %v574
      %v643 = vpack.c.b16 %v577, %v576
      %v644 = vpack.c.b16 %v579, %v578
      %v645 = vpack.c.b16 %v581, %v580
      %v726 = vunpack.c.l.b16 %v303
      %v727 = vunpack.c.l.b16 %v304
      %v728 = vunpack.c.l.b16 %v305
      %v729 = vunpack.c.l.b16 %v306
      %v730 = vunpack.c.l.b16 %v307
      %v731 = vunpack.c.l.b16 %v308
      %v732 = vunpack.c.l.b16 %v309
      %v733 = vunpack.c.l.b16 %v310
      %v734 = vunpack.c.l.b16 %v311
      %v735 = vunpack.c.l.b16 %v312
      %v736 = vunpack.c.l.b16 %v313
      %v737 = vunpack.c.l.b16 %v314
      %v738 = vunpack.c.l.b16 %v315
      %v739 = vunpack.c.l.b16 %v316
      %v740 = vunpack.c.l.b16 %v317
      %v741 = vunpack.c.l.b16 %v318
      %v742 = vpack.c.b16 %v727, %v726
      %v743 = vpack.c.b16 %v729, %v728
      %v744 = vpack.c.b16 %v731, %v730
      %v745 = vpack.c.b16 %v733, %v732
      %v746 = vpack.c.b16 %v735, %v734
      %v747 = vpack.c.b16 %v737, %v736
      %v748 = vpack.c.b16 %v739, %v738
      %v749 = vpack.c.b16 %v741, %v740
      %758 = vmatprep.subr.bf16.mxu0 0
      %759 = vmatpush1.bf16.msra.mxu0 %v749
      %760 = vmatprep.subr.bf16.mxu0 0
      %761 = vmatpush1.bf16.msra.mxu0 %v748
      %762 = vmatprep.subr.bf16.mxu0 0
      %763 = vmatpush1.bf16.msra.mxu0 %v747
      %764 = vmatprep.subr.bf16.mxu0 0
      %765 = vmatpush1.bf16.msra.mxu0 %v746
      %766 = vmatprep.subr.bf16.mxu0 0
      %767 = vmatpush1.bf16.msra.mxu0 %v745
      %768 = vmatprep.subr.bf16.mxu0 0
      %769 = vmatpush1.bf16.msra.mxu0 %v744
      %770 = vmatprep.subr.bf16.mxu0 0
      %771 = vmatpush1.bf16.msra.mxu0 %v743
      %772 = vmatprep.subr.bf16.mxu0 0
      %773 = vmatpush1.bf16.msra.mxu0 %v742
      %774 = vmatprep.subr.bf16.mxu0 0
      %775 = vmatpush2.bf16.msra.mxu0 0
      %776 = vmatprep.subr.bf16.mxu0 0
      %777 = vmatpush2.bf16.msra.mxu0 0
      %778 = vmatprep.subr.bf16.mxu0 0
      %779 = vmatpush2.bf16.msra.mxu0 0
      %780 = vmatprep.subr.bf16.mxu0 0
      %781 = vmatpush2.bf16.msra.mxu0 0
      %782 = vmatprep.subr.bf16.mxu0 0
      %783 = vmatpush2.bf16.msra.mxu0 0
      %784 = vmatprep.subr.bf16.mxu0 0
      %785 = vmatpush2.bf16.msra.mxu0 0
      %786 = vmatprep.subr.bf16.mxu0 0
      %787 = vmatpush2.bf16.msra.mxu0 0
      %788 = vmatprep.subr.bf16.mxu0 0
      %789 = vmatpush2.bf16.msra.mxu0 0
      %790 = vmatprep.mubr.bf16.mxu0 0
      %791 = vmatmul.mubr.bf16.gmra.mxu0 %v582
      %v792 = vpop.f32.mrf.mxu0
      %v793 = vadd.f32 %v324, %v792
      %v794 = vpop.f32.mrf.mxu0
      %v795 = vpop.f32.mrf.mxu0
      %v796 = vadd.f32 %v324, %v795
      %v797 = vpop.f32.mrf.mxu0
      %798 = vmatprep.mubr.bf16.mxu0 0
      %799 = vmatmul.mubr.bf16.gmra.mxu0 %v583
      %v800 = vpop.f32.mrf.mxu0
      %v801 = vadd.f32 %v324, %v800
      %v802 = vpop.f32.mrf.mxu0
      %v803 = vpop.f32.mrf.mxu0
      %v804 = vadd.f32 %v324, %v803
      %v805 = vpop.f32.mrf.mxu0
      %806 = vmatprep.mubr.bf16.mxu0 0
      %807 = vmatmul.mubr.bf16.gmra.mxu0 %v584
      %v808 = vpop.f32.mrf.mxu0
      %v809 = vadd.f32 %v324, %v808
      %v810 = vpop.f32.mrf.mxu0
      %v811 = vpop.f32.mrf.mxu0
      %v812 = vadd.f32 %v324, %v811
      %v813 = vpop.f32.mrf.mxu0
      %814 = vmatprep.mubr.bf16.mxu0 0
      %815 = vmatmul.mubr.bf16.gmra.mxu0 %v585
      %v816 = vpop.f32.mrf.mxu0
      %v817 = vadd.f32 %v324, %v816
      %v818 = vpop.f32.mrf.mxu0
      %v819 = vpop.f32.mrf.mxu0
      %v820 = vadd.f32 %v324, %v819
      %v821 = vpop.f32.mrf.mxu0
      %822 = vmatprep.mubr.bf16.mxu0 0
      %823 = vmatmul.mubr.bf16.gmra.mxu0 %v586
      %v824 = vpop.f32.mrf.mxu0
      %v825 = vadd.f32 %v324, %v824
      %v826 = vpop.f32.mrf.mxu0
      %v827 = vpop.f32.mrf.mxu0
      %v828 = vadd.f32 %v324, %v827
      %v829 = vpop.f32.mrf.mxu0
      %830 = vmatprep.mubr.bf16.mxu0 0
      %831 = vmatmul.mubr.bf16.gmra.mxu0 %v587
      %v832 = vpop.f32.mrf.mxu0
      %v833 = vadd.f32 %v324, %v832
      %v834 = vpop.f32.mrf.mxu0
      %v835 = vpop.f32.mrf.mxu0
      %v836 = vadd.f32 %v324, %v835
      %v837 = vpop.f32.mrf.mxu0
      %838 = vmatprep.mubr.bf16.mxu0 0
      %839 = vmatmul.mubr.bf16.gmra.mxu0 %v588
      %v840 = vpop.f32.mrf.mxu0
      %v841 = vadd.f32 %v324, %v840
      %v842 = vpop.f32.mrf.mxu0
      %v843 = vpop.f32.mrf.mxu0
      %v844 = vadd.f32 %v324, %v843
      %v845 = vpop.f32.mrf.mxu0
      %846 = vmatprep.mubr.bf16.mxu0 0
      %847 = vmatmul.mubr.bf16.gmra.mxu0 %v589
      %v848 = vpop.f32.mrf.mxu0
      %v849 = vadd.f32 %v324, %v848
      %v850 = vpop.f32.mrf.mxu0
      %v851 = vpop.f32.mrf.mxu0
      %v852 = vadd.f32 %v324, %v851
      %v853 = vpop.f32.mrf.mxu0
      %854 = vmatprep.mubr.bf16.mxu0 0
      %855 = vmatmul.mubr.bf16.gmra.mxu0 %v590
      %v856 = vpop.f32.mrf.mxu0
      %v857 = vadd.f32 %v324, %v856
      %v858 = vpop.f32.mrf.mxu0
      %v859 = vpop.f32.mrf.mxu0
      %v860 = vadd.f32 %v324, %v859
      %v861 = vpop.f32.mrf.mxu0
      %862 = vmatprep.mubr.bf16.mxu0 0
      %863 = vmatmul.mubr.bf16.gmra.mxu0 %v591
      %v864 = vpop.f32.mrf.mxu0
      %v865 = vadd.f32 %v324, %v864
      %v866 = vpop.f32.mrf.mxu0
      %v867 = vpop.f32.mrf.mxu0
      %v868 = vadd.f32 %v324, %v867
      %v869 = vpop.f32.mrf.mxu0
      %870 = vmatprep.mubr.bf16.mxu0 0
      %871 = vmatmul.mubr.bf16.gmra.mxu0 %v592
      %v872 = vpop.f32.mrf.mxu0
      %v873 = vadd.f32 %v324, %v872
      %v874 = vpop.f32.mrf.mxu0
      %v875 = vpop.f32.mrf.mxu0
      %v876 = vadd.f32 %v324, %v875
      %v877 = vpop.f32.mrf.mxu0
      %878 = vmatprep.mubr.bf16.mxu0 0
      %879 = vmatmul.mubr.bf16.gmra.mxu0 %v593
      %v880 = vpop.f32.mrf.mxu0
      %v881 = vadd.f32 %v324, %v880
      %v882 = vpop.f32.mrf.mxu0
      %v883 = vpop.f32.mrf.mxu0
      %v884 = vadd.f32 %v324, %v883
      %v885 = vpop.f32.mrf.mxu0
      %886 = vmatprep.mubr.bf16.mxu0 0
      %887 = vmatmul.mubr.bf16.gmra.mxu0 %v594
      %v888 = vpop.f32.mrf.mxu0
      %v889 = vadd.f32 %v324, %v888
      %v890 = vpop.f32.mrf.mxu0
      %v891 = vpop.f32.mrf.mxu0
      %v892 = vadd.f32 %v324, %v891
      %v893 = vpop.f32.mrf.mxu0
      %894 = vmatprep.mubr.bf16.mxu0 0
      %895 = vmatmul.mubr.bf16.gmra.mxu0 %v595
      %v896 = vpop.f32.mrf.mxu0
      %v897 = vadd.f32 %v324, %v896
      %v898 = vpop.f32.mrf.mxu0
      %v899 = vpop.f32.mrf.mxu0
      %v900 = vadd.f32 %v324, %v899
      %v901 = vpop.f32.mrf.mxu0
      %902 = vmatprep.mubr.bf16.mxu0 0
      %903 = vmatmul.mubr.bf16.gmra.mxu0 %v596
      %v904 = vpop.f32.mrf.mxu0
      %v905 = vadd.f32 %v324, %v904
      %v906 = vpop.f32.mrf.mxu0
      %v907 = vpop.f32.mrf.mxu0
      %v908 = vadd.f32 %v324, %v907
      %v909 = vpop.f32.mrf.mxu0
      %910 = vmatprep.mubr.bf16.mxu0 0
      %911 = vmatmul.mubr.bf16.gmra.mxu0 %v597
      %v912 = vpop.f32.mrf.mxu0
      %v913 = vadd.f32 %v324, %v912
      %v914 = vpop.f32.mrf.mxu0
      %v915 = vpop.f32.mrf.mxu0
      %v916 = vadd.f32 %v324, %v915
      %v917 = vpop.f32.mrf.mxu0
      %918 = vmatprep.mubr.bf16.mxu0 0
      %919 = vmatmul.mubr.bf16.gmra.mxu0 %v598
      %v920 = vpop.f32.mrf.mxu0
      %v921 = vadd.f32 %v324, %v920
      %v922 = vpop.f32.mrf.mxu0
      %v923 = vpop.f32.mrf.mxu0
      %v924 = vadd.f32 %v324, %v923
      %v925 = vpop.f32.mrf.mxu0
      %926 = vmatprep.mubr.bf16.mxu0 0
      %927 = vmatmul.mubr.bf16.gmra.mxu0 %v599
      %v928 = vpop.f32.mrf.mxu0
      %v929 = vadd.f32 %v324, %v928
      %v930 = vpop.f32.mrf.mxu0
      %v931 = vpop.f32.mrf.mxu0
      %v932 = vadd.f32 %v324, %v931
      %v933 = vpop.f32.mrf.mxu0
      %934 = vmatprep.mubr.bf16.mxu0 0
      %935 = vmatmul.mubr.bf16.gmra.mxu0 %v600
      %v936 = vpop.f32.mrf.mxu0
      %v937 = vadd.f32 %v324, %v936
      %v938 = vpop.f32.mrf.mxu0
      %v939 = vpop.f32.mrf.mxu0
      %v940 = vadd.f32 %v324, %v939
      %v941 = vpop.f32.mrf.mxu0
      %942 = vmatprep.mubr.bf16.mxu0 0
      %943 = vmatmul.mubr.bf16.gmra.mxu0 %v601
      %v944 = vpop.f32.mrf.mxu0
      %v945 = vadd.f32 %v324, %v944
      %v946 = vpop.f32.mrf.mxu0
      %v947 = vpop.f32.mrf.mxu0
      %v948 = vadd.f32 %v324, %v947
      %v949 = vpop.f32.mrf.mxu0
      %950 = vmatprep.mubr.bf16.mxu0 0
      %951 = vmatmul.mubr.bf16.gmra.mxu0 %v602
      %v952 = vpop.f32.mrf.mxu0
      %v953 = vadd.f32 %v324, %v952
      %v954 = vpop.f32.mrf.mxu0
      %v955 = vpop.f32.mrf.mxu0
      %v956 = vadd.f32 %v324, %v955
      %v957 = vpop.f32.mrf.mxu0
      %958 = vmatprep.mubr.bf16.mxu0 0
      %959 = vmatmul.mubr.bf16.gmra.mxu0 %v603
      %v960 = vpop.f32.mrf.mxu0
      %v961 = vadd.f32 %v324, %v960
      %v962 = vpop.f32.mrf.mxu0
      %v963 = vpop.f32.mrf.mxu0
      %v964 = vadd.f32 %v324, %v963
      %v965 = vpop.f32.mrf.mxu0
      %966 = vmatprep.mubr.bf16.mxu0 0
      %967 = vmatmul.mubr.bf16.gmra.mxu0 %v604
      %v968 = vpop.f32.mrf.mxu0
      %v969 = vadd.f32 %v324, %v968
      %v970 = vpop.f32.mrf.mxu0
      %v971 = vpop.f32.mrf.mxu0
      %v972 = vadd.f32 %v324, %v971
      %v973 = vpop.f32.mrf.mxu0
      %974 = vmatprep.mubr.bf16.mxu0 0
      %975 = vmatmul.mubr.bf16.gmra.mxu0 %v605
      %v976 = vpop.f32.mrf.mxu0
      %v977 = vadd.f32 %v324, %v976
      %v978 = vpop.f32.mrf.mxu0
      %v979 = vpop.f32.mrf.mxu0
      %v980 = vadd.f32 %v324, %v979
      %v981 = vpop.f32.mrf.mxu0
      %982 = vmatprep.mubr.bf16.mxu0 0
      %983 = vmatmul.mubr.bf16.gmra.mxu0 %v606
      %v984 = vpop.f32.mrf.mxu0
      %v985 = vadd.f32 %v324, %v984
      %v986 = vpop.f32.mrf.mxu0
      %v987 = vpop.f32.mrf.mxu0
      %v988 = vadd.f32 %v324, %v987
      %v989 = vpop.f32.mrf.mxu0
      %990 = vmatprep.mubr.bf16.mxu0 0
      %991 = vmatmul.mubr.bf16.gmra.mxu0 %v607
      %v992 = vpop.f32.mrf.mxu0
      %v993 = vadd.f32 %v324, %v992
      %v994 = vpop.f32.mrf.mxu0
      %v995 = vpop.f32.mrf.mxu0
      %v996 = vadd.f32 %v324, %v995
      %v997 = vpop.f32.mrf.mxu0
      %998 = vmatprep.mubr.bf16.mxu0 0
      %999 = vmatmul.mubr.bf16.gmra.mxu0 %v608
      %v1000 = vpop.f32.mrf.mxu0
      %v1001 = vadd.f32 %v324, %v1000
      %v1002 = vpop.f32.mrf.mxu0
      %v1003 = vpop.f32.mrf.mxu0
      %v1004 = vadd.f32 %v324, %v1003
      %v1005 = vpop.f32.mrf.mxu0
      %1006 = vmatprep.mubr.bf16.mxu0 0
      %1007 = vmatmul.mubr.bf16.gmra.mxu0 %v609
      %v1008 = vpop.f32.mrf.mxu0
      %v1009 = vadd.f32 %v324, %v1008
      %v1010 = vpop.f32.mrf.mxu0
      %v1011 = vpop.f32.mrf.mxu0
      %v1012 = vadd.f32 %v324, %v1011
      %v1013 = vpop.f32.mrf.mxu0
      %1014 = vmatprep.mubr.bf16.mxu0 0
      %1015 = vmatmul.mubr.bf16.gmra.mxu0 %v610
      %v1016 = vpop.f32.mrf.mxu0
      %v1017 = vadd.f32 %v324, %v1016
      %v1018 = vpop.f32.mrf.mxu0
      %v1019 = vpop.f32.mrf.mxu0
      %v1020 = vadd.f32 %v324, %v1019
      %v1021 = vpop.f32.mrf.mxu0
      %1022 = vmatprep.mubr.bf16.mxu0 0
      %1023 = vmatmul.mubr.bf16.gmra.mxu0 %v611
      %v1024 = vpop.f32.mrf.mxu0
      %v1025 = vadd.f32 %v324, %v1024
      %v1026 = vpop.f32.mrf.mxu0
      %v1027 = vpop.f32.mrf.mxu0
      %v1028 = vadd.f32 %v324, %v1027
      %v1029 = vpop.f32.mrf.mxu0
      %1030 = vmatprep.mubr.bf16.mxu0 0
      %1031 = vmatmul.mubr.bf16.gmra.mxu0 %v612
      %v1032 = vpop.f32.mrf.mxu0
      %v1033 = vadd.f32 %v324, %v1032
      %v1034 = vpop.f32.mrf.mxu0
      %v1035 = vpop.f32.mrf.mxu0
      %v1036 = vadd.f32 %v324, %v1035
      %v1037 = vpop.f32.mrf.mxu0
      %1038 = vmatprep.mubr.bf16.mxu0 0
      %1039 = vmatmul.mubr.bf16.gmra.mxu0 %v613
      %v1040 = vpop.f32.mrf.mxu0
      %v1041 = vadd.f32 %v324, %v1040
      %v1042 = vpop.f32.mrf.mxu0
      %v1043 = vpop.f32.mrf.mxu0
      %v1044 = vadd.f32 %v324, %v1043
      %v1045 = vpop.f32.mrf.mxu0
      %1046 = vmatprep.mubr.bf16.mxu0 0
      %1047 = vmatmul.mubr.bf16.gmra.mxu0 %v614
      %v1048 = vpop.f32.mrf.mxu0
      %v1049 = vadd.f32 %v324, %v1048
      %v1050 = vpop.f32.mrf.mxu0
      %v1051 = vpop.f32.mrf.mxu0
      %v1052 = vadd.f32 %v324, %v1051
      %v1053 = vpop.f32.mrf.mxu0
      %1054 = vmatprep.mubr.bf16.mxu0 0
      %1055 = vmatmul.mubr.bf16.gmra.mxu0 %v615
      %v1056 = vpop.f32.mrf.mxu0
      %v1057 = vadd.f32 %v324, %v1056
      %v1058 = vpop.f32.mrf.mxu0
      %v1059 = vpop.f32.mrf.mxu0
      %v1060 = vadd.f32 %v324, %v1059
      %v1061 = vpop.f32.mrf.mxu0
      %1062 = vmatprep.mubr.bf16.mxu0 0
      %1063 = vmatmul.mubr.bf16.gmra.mxu0 %v616
      %v1064 = vpop.f32.mrf.mxu0
      %v1065 = vadd.f32 %v324, %v1064
      %v1066 = vpop.f32.mrf.mxu0
      %v1067 = vpop.f32.mrf.mxu0
      %v1068 = vadd.f32 %v324, %v1067
      %v1069 = vpop.f32.mrf.mxu0
      %1070 = vmatprep.mubr.bf16.mxu0 0
      %1071 = vmatmul.mubr.bf16.gmra.mxu0 %v617
      %v1072 = vpop.f32.mrf.mxu0
      %v1073 = vadd.f32 %v324, %v1072
      %v1074 = vpop.f32.mrf.mxu0
      %v1075 = vpop.f32.mrf.mxu0
      %v1076 = vadd.f32 %v324, %v1075
      %v1077 = vpop.f32.mrf.mxu0
      %1078 = vmatprep.mubr.bf16.mxu0 0
      %1079 = vmatmul.mubr.bf16.gmra.mxu0 %v618
      %v1080 = vpop.f32.mrf.mxu0
      %v1081 = vadd.f32 %v324, %v1080
      %v1082 = vpop.f32.mrf.mxu0
      %v1083 = vpop.f32.mrf.mxu0
      %v1084 = vadd.f32 %v324, %v1083
      %v1085 = vpop.f32.mrf.mxu0
      %1086 = vmatprep.mubr.bf16.mxu0 0
      %1087 = vmatmul.mubr.bf16.gmra.mxu0 %v619
      %v1088 = vpop.f32.mrf.mxu0
      %v1089 = vadd.f32 %v324, %v1088
      %v1090 = vpop.f32.mrf.mxu0
      %v1091 = vpop.f32.mrf.mxu0
      %v1092 = vadd.f32 %v324, %v1091
      %v1093 = vpop.f32.mrf.mxu0
      %1094 = vmatprep.mubr.bf16.mxu0 0
      %1095 = vmatmul.mubr.bf16.gmra.mxu0 %v620
      %v1096 = vpop.f32.mrf.mxu0
      %v1097 = vadd.f32 %v324, %v1096
      %v1098 = vpop.f32.mrf.mxu0
      %v1099 = vpop.f32.mrf.mxu0
      %v1100 = vadd.f32 %v324, %v1099
      %v1101 = vpop.f32.mrf.mxu0
      %1102 = vmatprep.mubr.bf16.mxu0 0
      %1103 = vmatmul.mubr.bf16.gmra.mxu0 %v621
      %v1104 = vpop.f32.mrf.mxu0
      %v1105 = vadd.f32 %v324, %v1104
      %v1106 = vpop.f32.mrf.mxu0
      %v1107 = vpop.f32.mrf.mxu0
      %v1108 = vadd.f32 %v324, %v1107
      %v1109 = vpop.f32.mrf.mxu0
      %1110 = vmatprep.mubr.bf16.mxu0 0
      %1111 = vmatmul.mubr.bf16.gmra.mxu0 %v622
      %v1112 = vpop.f32.mrf.mxu0
      %v1113 = vadd.f32 %v324, %v1112
      %v1114 = vpop.f32.mrf.mxu0
      %v1115 = vpop.f32.mrf.mxu0
      %v1116 = vadd.f32 %v324, %v1115
      %v1117 = vpop.f32.mrf.mxu0
      %1118 = vmatprep.mubr.bf16.mxu0 0
      %1119 = vmatmul.mubr.bf16.gmra.mxu0 %v623
      %v1120 = vpop.f32.mrf.mxu0
      %v1121 = vadd.f32 %v324, %v1120
      %v1122 = vpop.f32.mrf.mxu0
      %v1123 = vpop.f32.mrf.mxu0
      %v1124 = vadd.f32 %v324, %v1123
      %v1125 = vpop.f32.mrf.mxu0
      %1126 = vmatprep.mubr.bf16.mxu0 0
      %1127 = vmatmul.mubr.bf16.gmra.mxu0 %v624
      %v1128 = vpop.f32.mrf.mxu0
      %v1129 = vadd.f32 %v324, %v1128
      %v1130 = vpop.f32.mrf.mxu0
      %v1131 = vpop.f32.mrf.mxu0
      %v1132 = vadd.f32 %v324, %v1131
      %v1133 = vpop.f32.mrf.mxu0
      %1134 = vmatprep.mubr.bf16.mxu0 0
      %1135 = vmatmul.mubr.bf16.gmra.mxu0 %v625
      %v1136 = vpop.f32.mrf.mxu0
      %v1137 = vadd.f32 %v324, %v1136
      %v1138 = vpop.f32.mrf.mxu0
      %v1139 = vpop.f32.mrf.mxu0
      %v1140 = vadd.f32 %v324, %v1139
      %v1141 = vpop.f32.mrf.mxu0
      %1142 = vmatprep.mubr.bf16.mxu0 0
      %1143 = vmatmul.mubr.bf16.gmra.mxu0 %v626
      %v1144 = vpop.f32.mrf.mxu0
      %v1145 = vadd.f32 %v324, %v1144
      %v1146 = vpop.f32.mrf.mxu0
      %v1147 = vpop.f32.mrf.mxu0
      %v1148 = vadd.f32 %v324, %v1147
      %v1149 = vpop.f32.mrf.mxu0
      %1150 = vmatprep.mubr.bf16.mxu0 0
      %1151 = vmatmul.mubr.bf16.gmra.mxu0 %v627
      %v1152 = vpop.f32.mrf.mxu0
      %v1153 = vadd.f32 %v324, %v1152
      %v1154 = vpop.f32.mrf.mxu0
      %v1155 = vpop.f32.mrf.mxu0
      %v1156 = vadd.f32 %v324, %v1155
      %v1157 = vpop.f32.mrf.mxu0
      %1158 = vmatprep.mubr.bf16.mxu0 0
      %1159 = vmatmul.mubr.bf16.gmra.mxu0 %v628
      %v1160 = vpop.f32.mrf.mxu0
      %v1161 = vadd.f32 %v324, %v1160
      %v1162 = vpop.f32.mrf.mxu0
      %v1163 = vpop.f32.mrf.mxu0
      %v1164 = vadd.f32 %v324, %v1163
      %v1165 = vpop.f32.mrf.mxu0
      %1166 = vmatprep.mubr.bf16.mxu0 0
      %1167 = vmatmul.mubr.bf16.gmra.mxu0 %v629
      %v1168 = vpop.f32.mrf.mxu0
      %v1169 = vadd.f32 %v324, %v1168
      %v1170 = vpop.f32.mrf.mxu0
      %v1171 = vpop.f32.mrf.mxu0
      %v1172 = vadd.f32 %v324, %v1171
      %v1173 = vpop.f32.mrf.mxu0
      %1174 = vmatprep.mubr.bf16.mxu0 0
      %1175 = vmatmul.mubr.bf16.gmra.mxu0 %v630
      %v1176 = vpop.f32.mrf.mxu0
      %v1177 = vadd.f32 %v324, %v1176
      %v1178 = vpop.f32.mrf.mxu0
      %v1179 = vpop.f32.mrf.mxu0
      %v1180 = vadd.f32 %v324, %v1179
      %v1181 = vpop.f32.mrf.mxu0
      %1182 = vmatprep.mubr.bf16.mxu0 0
      %1183 = vmatmul.mubr.bf16.gmra.mxu0 %v631
      %v1184 = vpop.f32.mrf.mxu0
      %v1185 = vadd.f32 %v324, %v1184
      %v1186 = vpop.f32.mrf.mxu0
      %v1187 = vpop.f32.mrf.mxu0
      %v1188 = vadd.f32 %v324, %v1187
      %v1189 = vpop.f32.mrf.mxu0
      %1190 = vmatprep.mubr.bf16.mxu0 0
      %1191 = vmatmul.mubr.bf16.gmra.mxu0 %v632
      %v1192 = vpop.f32.mrf.mxu0
      %v1193 = vadd.f32 %v324, %v1192
      %v1194 = vpop.f32.mrf.mxu0
      %v1195 = vpop.f32.mrf.mxu0
      %v1196 = vadd.f32 %v324, %v1195
      %v1197 = vpop.f32.mrf.mxu0
      %1198 = vmatprep.mubr.bf16.mxu0 0
      %1199 = vmatmul.mubr.bf16.gmra.mxu0 %v633
      %v1200 = vpop.f32.mrf.mxu0
      %v1201 = vadd.f32 %v324, %v1200
      %v1202 = vpop.f32.mrf.mxu0
      %v1203 = vpop.f32.mrf.mxu0
      %v1204 = vadd.f32 %v324, %v1203
      %v1205 = vpop.f32.mrf.mxu0
      %1206 = vmatprep.mubr.bf16.mxu0 0
      %1207 = vmatmul.mubr.bf16.gmra.mxu0 %v634
      %v1208 = vpop.f32.mrf.mxu0
      %v1209 = vadd.f32 %v324, %v1208
      %v1210 = vpop.f32.mrf.mxu0
      %v1211 = vpop.f32.mrf.mxu0
      %v1212 = vadd.f32 %v324, %v1211
      %v1213 = vpop.f32.mrf.mxu0
      %1214 = vmatprep.mubr.bf16.mxu0 0
      %1215 = vmatmul.mubr.bf16.gmra.mxu0 %v635
      %v1216 = vpop.f32.mrf.mxu0
      %v1217 = vadd.f32 %v324, %v1216
      %v1218 = vpop.f32.mrf.mxu0
      %v1219 = vpop.f32.mrf.mxu0
      %v1220 = vadd.f32 %v324, %v1219
      %v1221 = vpop.f32.mrf.mxu0
      %1222 = vmatprep.mubr.bf16.mxu0 0
      %1223 = vmatmul.mubr.bf16.gmra.mxu0 %v636
      %v1224 = vpop.f32.mrf.mxu0
      %v1225 = vadd.f32 %v324, %v1224
      %v1226 = vpop.f32.mrf.mxu0
      %v1227 = vpop.f32.mrf.mxu0
      %v1228 = vadd.f32 %v324, %v1227
      %v1229 = vpop.f32.mrf.mxu0
      %1230 = vmatprep.mubr.bf16.mxu0 0
      %1231 = vmatmul.mubr.bf16.gmra.mxu0 %v637
      %v1232 = vpop.f32.mrf.mxu0
      %v1233 = vadd.f32 %v324, %v1232
      %v1234 = vpop.f32.mrf.mxu0
      %v1235 = vpop.f32.mrf.mxu0
      %v1236 = vadd.f32 %v324, %v1235
      %v1237 = vpop.f32.mrf.mxu0
      %1238 = vmatprep.mubr.bf16.mxu0 0
      %1239 = vmatmul.mubr.bf16.gmra.mxu0 %v638
      %v1240 = vpop.f32.mrf.mxu0
      %v1241 = vadd.f32 %v324, %v1240
      %v1242 = vpop.f32.mrf.mxu0
      %v1243 = vpop.f32.mrf.mxu0
      %v1244 = vadd.f32 %v324, %v1243
      %v1245 = vpop.f32.mrf.mxu0
      %1246 = vmatprep.mubr.bf16.mxu0 0
      %1247 = vmatmul.mubr.bf16.gmra.mxu0 %v639
      %v1248 = vpop.f32.mrf.mxu0
      %v1249 = vadd.f32 %v324, %v1248
      %v1250 = vpop.f32.mrf.mxu0
      %v1251 = vpop.f32.mrf.mxu0
      %v1252 = vadd.f32 %v324, %v1251
      %v1253 = vpop.f32.mrf.mxu0
      %1254 = vmatprep.mubr.bf16.mxu0 0
      %1255 = vmatmul.mubr.bf16.gmra.mxu0 %v640
      %v1256 = vpop.f32.mrf.mxu0
      %v1257 = vadd.f32 %v324, %v1256
      %v1258 = vpop.f32.mrf.mxu0
      %v1259 = vpop.f32.mrf.mxu0
      %v1260 = vadd.f32 %v324, %v1259
      %v1261 = vpop.f32.mrf.mxu0
      %1262 = vmatprep.mubr.bf16.mxu0 0
      %1263 = vmatmul.mubr.bf16.gmra.mxu0 %v641
      %v1264 = vpop.f32.mrf.mxu0
      %v1265 = vadd.f32 %v324, %v1264
      %v1266 = vpop.f32.mrf.mxu0
      %v1267 = vpop.f32.mrf.mxu0
      %v1268 = vadd.f32 %v324, %v1267
      %v1269 = vpop.f32.mrf.mxu0
      %1270 = vmatprep.mubr.bf16.mxu0 0
      %1271 = vmatmul.mubr.bf16.gmra.mxu0 %v642
      %v1272 = vpop.f32.mrf.mxu0
      %v1273 = vadd.f32 %v324, %v1272
      %v1274 = vpop.f32.mrf.mxu0
      %v1275 = vpop.f32.mrf.mxu0
      %v1276 = vadd.f32 %v324, %v1275
      %v1277 = vpop.f32.mrf.mxu0
      %1278 = vmatprep.mubr.bf16.mxu0 0
      %1279 = vmatmul.mubr.bf16.gmra.mxu0 %v643
      %v1280 = vpop.f32.mrf.mxu0
      %v1281 = vadd.f32 %v324, %v1280
      %v1282 = vpop.f32.mrf.mxu0
      %v1283 = vpop.f32.mrf.mxu0
      %v1284 = vadd.f32 %v324, %v1283
      %v1285 = vpop.f32.mrf.mxu0
      %1286 = vmatprep.mubr.bf16.mxu0 0
      %1287 = vmatmul.mubr.bf16.gmra.mxu0 %v644
      %v1288 = vpop.f32.mrf.mxu0
      %v1289 = vadd.f32 %v324, %v1288
      %v1290 = vpop.f32.mrf.mxu0
      %v1291 = vpop.f32.mrf.mxu0
      %v1292 = vadd.f32 %v324, %v1291
      %v1293 = vpop.f32.mrf.mxu0
      %1294 = vmatprep.mubr.bf16.mxu0 0
      %1295 = vmatmul.mubr.bf16.gmra.mxu0 %v645
      %v1296 = vpop.f32.mrf.mxu0
      %v1297 = vadd.f32 %v324, %v1296
      %v1298 = vpop.f32.mrf.mxu0
      %v1299 = vpop.f32.mrf.mxu0
      %v1300 = vadd.f32 %v324, %v1299
      %v1301 = vpop.f32.mrf.mxu0
      %1302 = vdwg.mxu0
      %v1303 = vmax.f32 %v793, 0.0
      %v1304 = vmax.f32 %v796, 0.0
      %v1305 = vmax.f32 %v801, 0.0
      %v1306 = vmax.f32 %v804, 0.0
      %v1307 = vmax.f32 %v809, 0.0
      %v1308 = vmax.f32 %v812, 0.0
      %v1309 = vmax.f32 %v817, 0.0
      %v1310 = vmax.f32 %v820, 0.0
      %v1311 = vmax.f32 %v825, 0.0
      %v1312 = vmax.f32 %v828, 0.0
      %v1313 = vmax.f32 %v833, 0.0
      %v1314 = vmax.f32 %v836, 0.0
      %v1315 = vmax.f32 %v841, 0.0
      %v1316 = vmax.f32 %v844, 0.0
      %v1317 = vmax.f32 %v849, 0.0
      %v1318 = vmax.f32 %v852, 0.0
      %v1319 = vmax.f32 %v857, 0.0
      %v1320 = vmax.f32 %v860, 0.0
      %v1321 = vmax.f32 %v865, 0.0
      %v1322 = vmax.f32 %v868, 0.0
      %v1323 = vmax.f32 %v873, 0.0
      %v1324 = vmax.f32 %v876, 0.0
      %v1325 = vmax.f32 %v881, 0.0
      %v1326 = vmax.f32 %v884, 0.0
      %v1327 = vmax.f32 %v889, 0.0
      %v1328 = vmax.f32 %v892, 0.0
      %v1329 = vmax.f32 %v897, 0.0
      %v1330 = vmax.f32 %v900, 0.0
      %v1331 = vmax.f32 %v905, 0.0
      %v1332 = vmax.f32 %v908, 0.0
      %v1333 = vmax.f32 %v913, 0.0
      %v1334 = vmax.f32 %v916, 0.0
      %v1335 = vmax.f32 %v921, 0.0
      %v1336 = vmax.f32 %v924, 0.0
      %v1337 = vmax.f32 %v929, 0.0
      %v1338 = vmax.f32 %v932, 0.0
      %v1339 = vmax.f32 %v937, 0.0
      %v1340 = vmax.f32 %v940, 0.0
      %v1341 = vmax.f32 %v945, 0.0
      %v1342 = vmax.f32 %v948, 0.0
      %v1343 = vmax.f32 %v953, 0.0
      %v1344 = vmax.f32 %v956, 0.0
      %v1345 = vmax.f32 %v961, 0.0
      %v1346 = vmax.f32 %v964, 0.0
      %v1347 = vmax.f32 %v969, 0.0
      %v1348 = vmax.f32 %v972, 0.0
      %v1349 = vmax.f32 %v977, 0.0
      %v1350 = vmax.f32 %v980, 0.0
      %v1351 = vmax.f32 %v985, 0.0
      %v1352 = vmax.f32 %v988, 0.0
      %v1353 = vmax.f32 %v993, 0.0
      %v1354 = vmax.f32 %v996, 0.0
      %v1355 = vmax.f32 %v1001, 0.0
      %v1356 = vmax.f32 %v1004, 0.0
      %v1357 = vmax.f32 %v1009, 0.0
      %v1358 = vmax.f32 %v1012, 0.0
      %v1359 = vmax.f32 %v1017, 0.0
      %v1360 = vmax.f32 %v1020, 0.0
      %v1361 = vmax.f32 %v1025, 0.0
      %v1362 = vmax.f32 %v1028, 0.0
      %v1363 = vmax.f32 %v1033, 0.0
      %v1364 = vmax.f32 %v1036, 0.0
      %v1365 = vmax.f32 %v1041, 0.0
      %v1366 = vmax.f32 %v1044, 0.0
      %v1367 = vmax.f32 %v1049, 0.0
      %v1368 = vmax.f32 %v1052, 0.0
      %v1369 = vmax.f32 %v1057, 0.0
      %v1370 = vmax.f32 %v1060, 0.0
      %v1371 = vmax.f32 %v1065, 0.0
      %v1372 = vmax.f32 %v1068, 0.0
      %v1373 = vmax.f32 %v1073, 0.0
      %v1374 = vmax.f32 %v1076, 0.0
      %v1375 = vmax.f32 %v1081, 0.0
      %v1376 = vmax.f32 %v1084, 0.0
      %v1377 = vmax.f32 %v1089, 0.0
      %v1378 = vmax.f32 %v1092, 0.0
      %v1379 = vmax.f32 %v1097, 0.0
      %v1380 = vmax.f32 %v1100, 0.0
      %v1381 = vmax.f32 %v1105, 0.0
      %v1382 = vmax.f32 %v1108, 0.0
      %v1383 = vmax.f32 %v1113, 0.0
      %v1384 = vmax.f32 %v1116, 0.0
      %v1385 = vmax.f32 %v1121, 0.0
      %v1386 = vmax.f32 %v1124, 0.0
      %v1387 = vmax.f32 %v1129, 0.0
      %v1388 = vmax.f32 %v1132, 0.0
      %v1389 = vmax.f32 %v1137, 0.0
      %v1390 = vmax.f32 %v1140, 0.0
      %v1391 = vmax.f32 %v1145, 0.0
      %v1392 = vmax.f32 %v1148, 0.0
      %v1393 = vmax.f32 %v1153, 0.0
      %v1394 = vmax.f32 %v1156, 0.0
      %v1395 = vmax.f32 %v1161, 0.0
      %v1396 = vmax.f32 %v1164, 0.0
      %v1397 = vmax.f32 %v1169, 0.0
      %v1398 = vmax.f32 %v1172, 0.0
      %v1399 = vmax.f32 %v1177, 0.0
      %v1400 = vmax.f32 %v1180, 0.0
      %v1401 = vmax.f32 %v1185, 0.0
      %v1402 = vmax.f32 %v1188, 0.0
      %v1403 = vmax.f32 %v1193, 0.0
      %v1404 = vmax.f32 %v1196, 0.0
      %v1405 = vmax.f32 %v1201, 0.0
      %v1406 = vmax.f32 %v1204, 0.0
      %v1407 = vmax.f32 %v1209, 0.0
      %v1408 = vmax.f32 %v1212, 0.0
      %v1409 = vmax.f32 %v1217, 0.0
      %v1410 = vmax.f32 %v1220, 0.0
      %v1411 = vmax.f32 %v1225, 0.0
      %v1412 = vmax.f32 %v1228, 0.0
      %v1413 = vmax.f32 %v1233, 0.0
      %v1414 = vmax.f32 %v1236, 0.0
      %v1415 = vmax.f32 %v1241, 0.0
      %v1416 = vmax.f32 %v1244, 0.0
      %v1417 = vmax.f32 %v1249, 0.0
      %v1418 = vmax.f32 %v1252, 0.0
      %v1419 = vmax.f32 %v1257, 0.0
      %v1420 = vmax.f32 %v1260, 0.0
      %v1421 = vmax.f32 %v1265, 0.0
      %v1422 = vmax.f32 %v1268, 0.0
      %v1423 = vmax.f32 %v1273, 0.0
      %v1424 = vmax.f32 %v1276, 0.0
      %v1425 = vmax.f32 %v1281, 0.0
      %v1426 = vmax.f32 %v1284, 0.0
      %v1427 = vmax.f32 %v1289, 0.0
      %v1428 = vmax.f32 %v1292, 0.0
      %v1429 = vmax.f32 %v1297, 0.0
      %v1430 = vmax.f32 %v1300, 0.0
      %v1431 = vpack.c.bf16 %v1304, %v1303
      %v1432 = vpack.c.bf16 %v1306, %v1305
      %v1433 = vpack.c.bf16 %v1308, %v1307
      %v1434 = vpack.c.bf16 %v1310, %v1309
      %v1435 = vpack.c.bf16 %v1312, %v1311
      %v1436 = vpack.c.bf16 %v1314, %v1313
      %v1437 = vpack.c.bf16 %v1316, %v1315
      %v1438 = vpack.c.bf16 %v1318, %v1317
      %v1439 = vpack.c.bf16 %v1320, %v1319
      %v1440 = vpack.c.bf16 %v1322, %v1321
      %v1441 = vpack.c.bf16 %v1324, %v1323
      %v1442 = vpack.c.bf16 %v1326, %v1325
      %v1443 = vpack.c.bf16 %v1328, %v1327
      %v1444 = vpack.c.bf16 %v1330, %v1329
      %v1445 = vpack.c.bf16 %v1332, %v1331
      %v1446 = vpack.c.bf16 %v1334, %v1333
      %v1447 = vpack.c.bf16 %v1336, %v1335
      %v1448 = vpack.c.bf16 %v1338, %v1337
      %v1449 = vpack.c.bf16 %v1340, %v1339
      %v1450 = vpack.c.bf16 %v1342, %v1341
      %v1451 = vpack.c.bf16 %v1344, %v1343
      %v1452 = vpack.c.bf16 %v1346, %v1345
      %v1453 = vpack.c.bf16 %v1348, %v1347
      %v1454 = vpack.c.bf16 %v1350, %v1349
      %v1455 = vpack.c.bf16 %v1352, %v1351
      %v1456 = vpack.c.bf16 %v1354, %v1353
      %v1457 = vpack.c.bf16 %v1356, %v1355
      %v1458 = vpack.c.bf16 %v1358, %v1357
      %v1459 = vpack.c.bf16 %v1360, %v1359
      %v1460 = vpack.c.bf16 %v1362, %v1361
      %v1461 = vpack.c.bf16 %v1364, %v1363
      %v1462 = vpack.c.bf16 %v1366, %v1365
      %v1463 = vpack.c.bf16 %v1368, %v1367
      %v1464 = vpack.c.bf16 %v1370, %v1369
      %v1465 = vpack.c.bf16 %v1372, %v1371
      %v1466 = vpack.c.bf16 %v1374, %v1373
      %v1467 = vpack.c.bf16 %v1376, %v1375
      %v1468 = vpack.c.bf16 %v1378, %v1377
      %v1469 = vpack.c.bf16 %v1380, %v1379
      %v1470 = vpack.c.bf16 %v1382, %v1381
      %v1471 = vpack.c.bf16 %v1384, %v1383
      %v1472 = vpack.c.bf16 %v1386, %v1385
      %v1473 = vpack.c.bf16 %v1388, %v1387
      %v1474 = vpack.c.bf16 %v1390, %v1389
      %v1475 = vpack.c.bf16 %v1392, %v1391
      %v1476 = vpack.c.bf16 %v1394, %v1393
      %v1477 = vpack.c.bf16 %v1396, %v1395
      %v1478 = vpack.c.bf16 %v1398, %v1397
      %v1479 = vpack.c.bf16 %v1400, %v1399
      %v1480 = vpack.c.bf16 %v1402, %v1401
      %v1481 = vpack.c.bf16 %v1404, %v1403
      %v1482 = vpack.c.bf16 %v1406, %v1405
      %v1483 = vpack.c.bf16 %v1408, %v1407
      %v1484 = vpack.c.bf16 %v1410, %v1409
      %v1485 = vpack.c.bf16 %v1412, %v1411
      %v1486 = vpack.c.bf16 %v1414, %v1413
      %v1487 = vpack.c.bf16 %v1416, %v1415
      %v1488 = vpack.c.bf16 %v1418, %v1417
      %v1489 = vpack.c.bf16 %v1420, %v1419
      %v1490 = vpack.c.bf16 %v1422, %v1421
      %v1491 = vpack.c.bf16 %v1424, %v1423
      %v1492 = vpack.c.bf16 %v1426, %v1425
      %v1493 = vpack.c.bf16 %v1428, %v1427
      %v1494 = vpack.c.bf16 %v1430, %v1429
      %v1559 = vunpack.c.l.b16 %v1431
      %v1560 = vunpack.c.h.b16 %v1431
      %v1561 = vunpack.c.l.b16 %v1432
      %v1562 = vunpack.c.h.b16 %v1432
      %v1563 = vunpack.c.l.b16 %v1433
      %v1564 = vunpack.c.h.b16 %v1433
      %v1565 = vunpack.c.l.b16 %v1434
      %v1566 = vunpack.c.h.b16 %v1434
      %v1567 = vunpack.c.l.b16 %v1435
      %v1568 = vunpack.c.h.b16 %v1435
      %v1569 = vunpack.c.l.b16 %v1436
      %v1570 = vunpack.c.h.b16 %v1436
      %v1571 = vunpack.c.l.b16 %v1437
      %v1572 = vunpack.c.h.b16 %v1437
      %v1573 = vunpack.c.l.b16 %v1438
      %v1574 = vunpack.c.h.b16 %v1438
      %v1575 = vunpack.c.l.b16 %v1439
      %v1576 = vunpack.c.h.b16 %v1439
      %v1577 = vunpack.c.l.b16 %v1440
      %v1578 = vunpack.c.h.b16 %v1440
      %v1579 = vunpack.c.l.b16 %v1441
      %v1580 = vunpack.c.h.b16 %v1441
      %v1581 = vunpack.c.l.b16 %v1442
      %v1582 = vunpack.c.h.b16 %v1442
      %v1583 = vunpack.c.l.b16 %v1443
      %v1584 = vunpack.c.h.b16 %v1443
      %v1585 = vunpack.c.l.b16 %v1444
      %v1586 = vunpack.c.h.b16 %v1444
      %v1587 = vunpack.c.l.b16 %v1445
      %v1588 = vunpack.c.h.b16 %v1445
      %v1589 = vunpack.c.l.b16 %v1446
      %v1590 = vunpack.c.h.b16 %v1446
      %v1591 = vunpack.c.l.b16 %v1447
      %v1592 = vunpack.c.h.b16 %v1447
      %v1593 = vunpack.c.l.b16 %v1448
      %v1594 = vunpack.c.h.b16 %v1448
      %v1595 = vunpack.c.l.b16 %v1449
      %v1596 = vunpack.c.h.b16 %v1449
      %v1597 = vunpack.c.l.b16 %v1450
      %v1598 = vunpack.c.h.b16 %v1450
      %v1599 = vunpack.c.l.b16 %v1451
      %v1600 = vunpack.c.h.b16 %v1451
      %v1601 = vunpack.c.l.b16 %v1452
      %v1602 = vunpack.c.h.b16 %v1452
      %v1603 = vunpack.c.l.b16 %v1453
      %v1604 = vunpack.c.h.b16 %v1453
      %v1605 = vunpack.c.l.b16 %v1454
      %v1606 = vunpack.c.h.b16 %v1454
      %v1607 = vunpack.c.l.b16 %v1455
      %v1608 = vunpack.c.h.b16 %v1455
      %v1609 = vunpack.c.l.b16 %v1456
      %v1610 = vunpack.c.h.b16 %v1456
      %v1611 = vunpack.c.l.b16 %v1457
      %v1612 = vunpack.c.h.b16 %v1457
      %v1613 = vunpack.c.l.b16 %v1458
      %v1614 = vunpack.c.h.b16 %v1458
      %v1615 = vunpack.c.l.b16 %v1459
      %v1616 = vunpack.c.h.b16 %v1459
      %v1617 = vunpack.c.l.b16 %v1460
      %v1618 = vunpack.c.h.b16 %v1460
      %v1619 = vunpack.c.l.b16 %v1461
      %v1620 = vunpack.c.h.b16 %v1461
      %v1621 = vunpack.c.l.b16 %v1462
      %v1622 = vunpack.c.h.b16 %v1462
      %v1623 = vunpack.c.l.b16 %v1463
      %v1624 = vunpack.c.h.b16 %v1463
      %v1625 = vunpack.c.l.b16 %v1464
      %v1626 = vunpack.c.h.b16 %v1464
      %v1627 = vunpack.c.l.b16 %v1465
      %v1628 = vunpack.c.h.b16 %v1465
      %v1629 = vunpack.c.l.b16 %v1466
      %v1630 = vunpack.c.h.b16 %v1466
      %v1631 = vunpack.c.l.b16 %v1467
      %v1632 = vunpack.c.h.b16 %v1467
      %v1633 = vunpack.c.l.b16 %v1468
      %v1634 = vunpack.c.h.b16 %v1468
      %v1635 = vunpack.c.l.b16 %v1469
      %v1636 = vunpack.c.h.b16 %v1469
      %v1637 = vunpack.c.l.b16 %v1470
      %v1638 = vunpack.c.h.b16 %v1470
      %v1639 = vunpack.c.l.b16 %v1471
      %v1640 = vunpack.c.h.b16 %v1471
      %v1641 = vunpack.c.l.b16 %v1472
      %v1642 = vunpack.c.h.b16 %v1472
      %v1643 = vunpack.c.l.b16 %v1473
      %v1644 = vunpack.c.h.b16 %v1473
      %v1645 = vunpack.c.l.b16 %v1474
      %v1646 = vunpack.c.h.b16 %v1474
      %v1647 = vunpack.c.l.b16 %v1475
      %v1648 = vunpack.c.h.b16 %v1475
      %v1649 = vunpack.c.l.b16 %v1476
      %v1650 = vunpack.c.h.b16 %v1476
      %v1651 = vunpack.c.l.b16 %v1477
      %v1652 = vunpack.c.h.b16 %v1477
      %v1653 = vunpack.c.l.b16 %v1478
      %v1654 = vunpack.c.h.b16 %v1478
      %v1655 = vunpack.c.l.b16 %v1479
      %v1656 = vunpack.c.h.b16 %v1479
      %v1657 = vunpack.c.l.b16 %v1480
      %v1658 = vunpack.c.h.b16 %v1480
      %v1659 = vunpack.c.l.b16 %v1481
      %v1660 = vunpack.c.h.b16 %v1481
      %v1661 = vunpack.c.l.b16 %v1482
      %v1662 = vunpack.c.h.b16 %v1482
      %v1663 = vunpack.c.l.b16 %v1483
      %v1664 = vunpack.c.h.b16 %v1483
      %v1665 = vunpack.c.l.b16 %v1484
      %v1666 = vunpack.c.h.b16 %v1484
      %v1667 = vunpack.c.l.b16 %v1485
      %v1668 = vunpack.c.h.b16 %v1485
      %v1669 = vunpack.c.l.b16 %v1486
      %v1670 = vunpack.c.h.b16 %v1486
      %v1671 = vunpack.c.l.b16 %v1487
      %v1672 = vunpack.c.h.b16 %v1487
      %v1673 = vunpack.c.l.b16 %v1488
      %v1674 = vunpack.c.h.b16 %v1488
      %v1675 = vunpack.c.l.b16 %v1489
      %v1676 = vunpack.c.h.b16 %v1489
      %v1677 = vunpack.c.l.b16 %v1490
      %v1678 = vunpack.c.h.b16 %v1490
      %v1679 = vunpack.c.l.b16 %v1491
      %v1680 = vunpack.c.h.b16 %v1491
      %v1681 = vunpack.c.l.b16 %v1492
      %v1682 = vunpack.c.h.b16 %v1492
      %v1683 = vunpack.c.l.b16 %v1493
      %v1684 = vunpack.c.h.b16 %v1493
      %v1685 = vunpack.c.l.b16 %v1494
      %v1686 = vunpack.c.h.b16 %v1494
      %v1687 = vpack.c.b16 %v1559, %v1559
      %v1688 = vpack.c.b16 %v1560, %v1560
      %v1689 = vpack.c.b16 %v1561, %v1561
      %v1690 = vpack.c.b16 %v1562, %v1562
      %v1691 = vpack.c.b16 %v1563, %v1563
      %v1692 = vpack.c.b16 %v1564, %v1564
      %v1693 = vpack.c.b16 %v1565, %v1565
      %v1694 = vpack.c.b16 %v1566, %v1566
      %v1695 = vpack.c.b16 %v1567, %v1567
      %v1696 = vpack.c.b16 %v1568, %v1568
      %v1697 = vpack.c.b16 %v1569, %v1569
      %v1698 = vpack.c.b16 %v1570, %v1570
      %v1699 = vpack.c.b16 %v1571, %v1571
      %v1700 = vpack.c.b16 %v1572, %v1572
      %v1701 = vpack.c.b16 %v1573, %v1573
      %v1702 = vpack.c.b16 %v1574, %v1574
      %v1703 = vpack.c.b16 %v1575, %v1575
      %v1704 = vpack.c.b16 %v1576, %v1576
      %v1705 = vpack.c.b16 %v1577, %v1577
      %v1706 = vpack.c.b16 %v1578, %v1578
      %v1707 = vpack.c.b16 %v1579, %v1579
      %v1708 = vpack.c.b16 %v1580, %v1580
      %v1709 = vpack.c.b16 %v1581, %v1581
      %v1710 = vpack.c.b16 %v1582, %v1582
      %v1711 = vpack.c.b16 %v1583, %v1583
      %v1712 = vpack.c.b16 %v1584, %v1584
      %v1713 = vpack.c.b16 %v1585, %v1585
      %v1714 = vpack.c.b16 %v1586, %v1586
      %v1715 = vpack.c.b16 %v1587, %v1587
      %v1716 = vpack.c.b16 %v1588, %v1588
      %v1717 = vpack.c.b16 %v1589, %v1589
      %v1718 = vpack.c.b16 %v1590, %v1590
      %v1719 = vpack.c.b16 %v1591, %v1591
      %v1720 = vpack.c.b16 %v1592, %v1592
      %v1721 = vpack.c.b16 %v1593, %v1593
      %v1722 = vpack.c.b16 %v1594, %v1594
      %v1723 = vpack.c.b16 %v1595, %v1595
      %v1724 = vpack.c.b16 %v1596, %v1596
      %v1725 = vpack.c.b16 %v1597, %v1597
      %v1726 = vpack.c.b16 %v1598, %v1598
      %v1727 = vpack.c.b16 %v1599, %v1599
      %v1728 = vpack.c.b16 %v1600, %v1600
      %v1729 = vpack.c.b16 %v1601, %v1601
      %v1730 = vpack.c.b16 %v1602, %v1602
      %v1731 = vpack.c.b16 %v1603, %v1603
      %v1732 = vpack.c.b16 %v1604, %v1604
      %v1733 = vpack.c.b16 %v1605, %v1605
      %v1734 = vpack.c.b16 %v1606, %v1606
      %v1735 = vpack.c.b16 %v1607, %v1607
      %v1736 = vpack.c.b16 %v1608, %v1608
      %v1737 = vpack.c.b16 %v1609, %v1609
      %v1738 = vpack.c.b16 %v1610, %v1610
      %v1739 = vpack.c.b16 %v1611, %v1611
      %v1740 = vpack.c.b16 %v1612, %v1612
      %v1741 = vpack.c.b16 %v1613, %v1613
      %v1742 = vpack.c.b16 %v1614, %v1614
      %v1743 = vpack.c.b16 %v1615, %v1615
      %v1744 = vpack.c.b16 %v1616, %v1616
      %v1745 = vpack.c.b16 %v1617, %v1617
      %v1746 = vpack.c.b16 %v1618, %v1618
      %v1747 = vpack.c.b16 %v1619, %v1619
      %v1748 = vpack.c.b16 %v1620, %v1620
      %v1749 = vpack.c.b16 %v1621, %v1621
      %v1750 = vpack.c.b16 %v1622, %v1622
      %v1751 = vpack.c.b16 %v1623, %v1623
      %v1752 = vpack.c.b16 %v1624, %v1624
      %v1753 = vpack.c.b16 %v1625, %v1625
      %v1754 = vpack.c.b16 %v1626, %v1626
      %v1755 = vpack.c.b16 %v1627, %v1627
      %v1756 = vpack.c.b16 %v1628, %v1628
      %v1757 = vpack.c.b16 %v1629, %v1629
      %v1758 = vpack.c.b16 %v1630, %v1630
      %v1759 = vpack.c.b16 %v1631, %v1631
      %v1760 = vpack.c.b16 %v1632, %v1632
      %v1761 = vpack.c.b16 %v1633, %v1633
      %v1762 = vpack.c.b16 %v1634, %v1634
      %v1763 = vpack.c.b16 %v1635, %v1635
      %v1764 = vpack.c.b16 %v1636, %v1636
      %v1765 = vpack.c.b16 %v1637, %v1637
      %v1766 = vpack.c.b16 %v1638, %v1638
      %v1767 = vpack.c.b16 %v1639, %v1639
      %v1768 = vpack.c.b16 %v1640, %v1640
      %v1769 = vpack.c.b16 %v1641, %v1641
      %v1770 = vpack.c.b16 %v1642, %v1642
      %v1771 = vpack.c.b16 %v1643, %v1643
      %v1772 = vpack.c.b16 %v1644, %v1644
      %v1773 = vpack.c.b16 %v1645, %v1645
      %v1774 = vpack.c.b16 %v1646, %v1646
      %v1775 = vpack.c.b16 %v1647, %v1647
      %v1776 = vpack.c.b16 %v1648, %v1648
      %v1777 = vpack.c.b16 %v1649, %v1649
      %v1778 = vpack.c.b16 %v1650, %v1650
      %v1779 = vpack.c.b16 %v1651, %v1651
      %v1780 = vpack.c.b16 %v1652, %v1652
      %v1781 = vpack.c.b16 %v1653, %v1653
      %v1782 = vpack.c.b16 %v1654, %v1654
      %v1783 = vpack.c.b16 %v1655, %v1655
      %v1784 = vpack.c.b16 %v1656, %v1656
      %v1785 = vpack.c.b16 %v1657, %v1657
      %v1786 = vpack.c.b16 %v1658, %v1658
      %v1787 = vpack.c.b16 %v1659, %v1659
      %v1788 = vpack.c.b16 %v1660, %v1660
      %v1789 = vpack.c.b16 %v1661, %v1661
      %v1790 = vpack.c.b16 %v1662, %v1662
      %v1791 = vpack.c.b16 %v1663, %v1663
      %v1792 = vpack.c.b16 %v1664, %v1664
      %v1793 = vpack.c.b16 %v1665, %v1665
      %v1794 = vpack.c.b16 %v1666, %v1666
      %v1795 = vpack.c.b16 %v1667, %v1667
      %v1796 = vpack.c.b16 %v1668, %v1668
      %v1797 = vpack.c.b16 %v1669, %v1669
      %v1798 = vpack.c.b16 %v1670, %v1670
      %v1799 = vpack.c.b16 %v1671, %v1671
      %v1800 = vpack.c.b16 %v1672, %v1672
      %v1801 = vpack.c.b16 %v1673, %v1673
      %v1802 = vpack.c.b16 %v1674, %v1674
      %v1803 = vpack.c.b16 %v1675, %v1675
      %v1804 = vpack.c.b16 %v1676, %v1676
      %v1805 = vpack.c.b16 %v1677, %v1677
      %v1806 = vpack.c.b16 %v1678, %v1678
      %v1807 = vpack.c.b16 %v1679, %v1679
      %v1808 = vpack.c.b16 %v1680, %v1680
      %v1809 = vpack.c.b16 %v1681, %v1681
      %v1810 = vpack.c.b16 %v1682, %v1682
      %v1811 = vpack.c.b16 %v1683, %v1683
      %v1812 = vpack.c.b16 %v1684, %v1684
      %v1813 = vpack.c.b16 %v1685, %v1685
      %v1814 = vpack.c.b16 %v1686, %v1686
      %1943 = vst [vmem:[%s172] sm:$0xf] %v1687
      %1944 = vst [vmem:[%s172 + $0x4] sm:$0xf] %v1688
      %1945 = vst [vmem:[%s172 + $0x8] sm:$0xf] %v1689
      %1946 = vst [vmem:[%s172 + $0xc] sm:$0xf] %v1690
      %1947 = vst [vmem:[%s172 + $0x10] sm:$0xf] %v1691
      %1948 = vst [vmem:[%s172 + $0x14] sm:$0xf] %v1692
      %1949 = vst [vmem:[%s172 + $0x18] sm:$0xf] %v1693
      %1950 = vst [vmem:[%s172 + $0x1c] sm:$0xf] %v1694
      %1951 = vst [vmem:[%s172 + $0x20] sm:$0xf] %v1695
      %1952 = vst [vmem:[%s172 + $0x24] sm:$0xf] %v1696
      %1953 = vst [vmem:[%s172 + $0x28] sm:$0xf] %v1697
      %1954 = vst [vmem:[%s172 + $0x2c] sm:$0xf] %v1698
      %1955 = vst [vmem:[%s172 + $0x30] sm:$0xf] %v1699
      %1956 = vst [vmem:[%s172 + $0x34] sm:$0xf] %v1700
      %1957 = vst [vmem:[%s172 + $0x38] sm:$0xf] %v1701
      %1958 = vst [vmem:[%s172 + $0x3c] sm:$0xf] %v1702
      %1959 = vst [vmem:[%s172 + $0x40] sm:$0xf] %v1703
      %1960 = vst [vmem:[%s172 + $0x44] sm:$0xf] %v1704
      %1961 = vst [vmem:[%s172 + $0x48] sm:$0xf] %v1705
      %1962 = vst [vmem:[%s172 + $0x4c] sm:$0xf] %v1706
      %1963 = vst [vmem:[%s172 + $0x50] sm:$0xf] %v1707
      %1964 = vst [vmem:[%s172 + $0x54] sm:$0xf] %v1708
      %1965 = vst [vmem:[%s172 + $0x58] sm:$0xf] %v1709
      %1966 = vst [vmem:[%s172 + $0x5c] sm:$0xf] %v1710
      %1967 = vst [vmem:[%s172 + $0x60] sm:$0xf] %v1711
      %1968 = vst [vmem:[%s172 + $0x64] sm:$0xf] %v1712
      %1969 = vst [vmem:[%s172 + $0x68] sm:$0xf] %v1713
      %1970 = vst [vmem:[%s172 + $0x6c] sm:$0xf] %v1714
      %1971 = vst [vmem:[%s172 + $0x70] sm:$0xf] %v1715
      %1972 = vst [vmem:[%s172 + $0x74] sm:$0xf] %v1716
      %1973 = vst [vmem:[%s172 + $0x78] sm:$0xf] %v1717
      %1974 = vst [vmem:[%s172 + $0x7c] sm:$0xf] %v1718
      %1975 = vst [vmem:[%s172 + $0x80] sm:$0xf] %v1719
      %1976 = vst [vmem:[%s172 + $0x84] sm:$0xf] %v1720
      %1977 = vst [vmem:[%s172 + $0x88] sm:$0xf] %v1721
      %1978 = vst [vmem:[%s172 + $0x8c] sm:$0xf] %v1722
      %1979 = vst [vmem:[%s172 + $0x90] sm:$0xf] %v1723
      %1980 = vst [vmem:[%s172 + $0x94] sm:$0xf] %v1724
      %1981 = vst [vmem:[%s172 + $0x98] sm:$0xf] %v1725
      %1982 = vst [vmem:[%s172 + $0x9c] sm:$0xf] %v1726
      %1983 = vst [vmem:[%s172 + $0xa0] sm:$0xf] %v1727
      %1984 = vst [vmem:[%s172 + $0xa4] sm:$0xf] %v1728
      %1985 = vst [vmem:[%s172 + $0xa8] sm:$0xf] %v1729
      %1986 = vst [vmem:[%s172 + $0xac] sm:$0xf] %v1730
      %1987 = vst [vmem:[%s172 + $0xb0] sm:$0xf] %v1731
      %1988 = vst [vmem:[%s172 + $0xb4] sm:$0xf] %v1732
      %1989 = vst [vmem:[%s172 + $0xb8] sm:$0xf] %v1733
      %1990 = vst [vmem:[%s172 + $0xbc] sm:$0xf] %v1734
      %1991 = vst [vmem:[%s172 + $0xc0] sm:$0xf] %v1735
      %1992 = vst [vmem:[%s172 + $0xc4] sm:$0xf] %v1736
      %1993 = vst [vmem:[%s172 + $0xc8] sm:$0xf] %v1737
      %1994 = vst [vmem:[%s172 + $0xcc] sm:$0xf] %v1738
      %1995 = vst [vmem:[%s172 + $0xd0] sm:$0xf] %v1739
      %1996 = vst [vmem:[%s172 + $0xd4] sm:$0xf] %v1740
      %1997 = vst [vmem:[%s172 + $0xd8] sm:$0xf] %v1741
      %1998 = vst [vmem:[%s172 + $0xdc] sm:$0xf] %v1742
      %1999 = vst [vmem:[%s172 + $0xe0] sm:$0xf] %v1743
      %2000 = vst [vmem:[%s172 + $0xe4] sm:$0xf] %v1744
      %2001 = vst [vmem:[%s172 + $0xe8] sm:$0xf] %v1745
      %2002 = vst [vmem:[%s172 + $0xec] sm:$0xf] %v1746
      %2003 = vst [vmem:[%s172 + $0xf0] sm:$0xf] %v1747
      %2004 = vst [vmem:[%s172 + $0xf4] sm:$0xf] %v1748
      %2005 = vst [vmem:[%s172 + $0xf8] sm:$0xf] %v1749
      %2006 = vst [vmem:[%s172 + $0xfc] sm:$0xf] %v1750
      %2007 = vst [vmem:[%s172 + $0x100] sm:$0xf] %v1751
      %2008 = vst [vmem:[%s172 + $0x104] sm:$0xf] %v1752
      %2009 = vst [vmem:[%s172 + $0x108] sm:$0xf] %v1753
      %2010 = vst [vmem:[%s172 + $0x10c] sm:$0xf] %v1754
      %2011 = vst [vmem:[%s172 + $0x110] sm:$0xf] %v1755
      %2012 = vst [vmem:[%s172 + $0x114] sm:$0xf] %v1756
      %2013 = vst [vmem:[%s172 + $0x118] sm:$0xf] %v1757
      %2014 = vst [vmem:[%s172 + $0x11c] sm:$0xf] %v1758
      %2015 = vst [vmem:[%s172 + $0x120] sm:$0xf] %v1759
      %2016 = vst [vmem:[%s172 + $0x124] sm:$0xf] %v1760
      %2017 = vst [vmem:[%s172 + $0x128] sm:$0xf] %v1761
      %2018 = vst [vmem:[%s172 + $0x12c] sm:$0xf] %v1762
      %2019 = vst [vmem:[%s172 + $0x130] sm:$0xf] %v1763
      %2020 = vst [vmem:[%s172 + $0x134] sm:$0xf] %v1764
      %2021 = vst [vmem:[%s172 + $0x138] sm:$0xf] %v1765
      %2022 = vst [vmem:[%s172 + $0x13c] sm:$0xf] %v1766
      %2023 = vst [vmem:[%s172 + $0x140] sm:$0xf] %v1767
      %2024 = vst [vmem:[%s172 + $0x144] sm:$0xf] %v1768
      %2025 = vst [vmem:[%s172 + $0x148] sm:$0xf] %v1769
      %2026 = vst [vmem:[%s172 + $0x14c] sm:$0xf] %v1770
      %2027 = vst [vmem:[%s172 + $0x150] sm:$0xf] %v1771
      %2028 = vst [vmem:[%s172 + $0x154] sm:$0xf] %v1772
      %2029 = vst [vmem:[%s172 + $0x158] sm:$0xf] %v1773
      %2030 = vst [vmem:[%s172 + $0x15c] sm:$0xf] %v1774
      %2031 = vst [vmem:[%s172 + $0x160] sm:$0xf] %v1775
      %2032 = vst [vmem:[%s172 + $0x164] sm:$0xf] %v1776
      %2033 = vst [vmem:[%s172 + $0x168] sm:$0xf] %v1777
      %2034 = vst [vmem:[%s172 + $0x16c] sm:$0xf] %v1778
      %2035 = vst [vmem:[%s172 + $0x170] sm:$0xf] %v1779
      %2036 = vst [vmem:[%s172 + $0x174] sm:$0xf] %v1780
      %2037 = vst [vmem:[%s172 + $0x178] sm:$0xf] %v1781
      %2038 = vst [vmem:[%s172 + $0x17c] sm:$0xf] %v1782
      %2039 = vst [vmem:[%s172 + $0x180] sm:$0xf] %v1783
      %2040 = vst [vmem:[%s172 + $0x184] sm:$0xf] %v1784
      %2041 = vst [vmem:[%s172 + $0x188] sm:$0xf] %v1785
      %2042 = vst [vmem:[%s172 + $0x18c] sm:$0xf] %v1786
      %2043 = vst [vmem:[%s172 + $0x190] sm:$0xf] %v1787
      %2044 = vst [vmem:[%s172 + $0x194] sm:$0xf] %v1788
      %2045 = vst [vmem:[%s172 + $0x198] sm:$0xf] %v1789
      %2046 = vst [vmem:[%s172 + $0x19c] sm:$0xf] %v1790
      %2047 = vst [vmem:[%s172 + $0x1a0] sm:$0xf] %v1791
      %2048 = vst [vmem:[%s172 + $0x1a4] sm:$0xf] %v1792
      %2049 = vst [vmem:[%s172 + $0x1a8] sm:$0xf] %v1793
      %2050 = vst [vmem:[%s172 + $0x1ac] sm:$0xf] %v1794
      %2051 = vst [vmem:[%s172 + $0x1b0] sm:$0xf] %v1795
      %2052 = vst [vmem:[%s172 + $0x1b4] sm:$0xf] %v1796
      %2053 = vst [vmem:[%s172 + $0x1b8] sm:$0xf] %v1797
      %2054 = vst [vmem:[%s172 + $0x1bc] sm:$0xf] %v1798
      %2055 = vst [vmem:[%s172 + $0x1c0] sm:$0xf] %v1799
      %2056 = vst [vmem:[%s172 + $0x1c4] sm:$0xf] %v1800
      %2057 = vst [vmem:[%s172 + $0x1c8] sm:$0xf] %v1801
      %2058 = vst [vmem:[%s172 + $0x1cc] sm:$0xf] %v1802
      %2059 = vst [vmem:[%s172 + $0x1d0] sm:$0xf] %v1803
      %2060 = vst [vmem:[%s172 + $0x1d4] sm:$0xf] %v1804
      %2061 = vst [vmem:[%s172 + $0x1d8] sm:$0xf] %v1805
      %2062 = vst [vmem:[%s172 + $0x1dc] sm:$0xf] %v1806
      %2063 = vst [vmem:[%s172 + $0x1e0] sm:$0xf] %v1807
      %2064 = vst [vmem:[%s172 + $0x1e4] sm:$0xf] %v1808
      %2065 = vst [vmem:[%s172 + $0x1e8] sm:$0xf] %v1809
      %2066 = vst [vmem:[%s172 + $0x1ec] sm:$0xf] %v1810
      %2067 = vst [vmem:[%s172 + $0x1f0] sm:$0xf] %v1811
      %2068 = vst [vmem:[%s172 + $0x1f4] sm:$0xf] %v1812
      %2069 = vst [vmem:[%s172 + $0x1f8] sm:$0xf] %v1813
      %2070 = vst [vmem:[%s172 + $0x1fc] sm:$0xf] %v1814
      %s2071 = smul.u32 128, %s14
      %p2072 = scmp.lt.s32.totalorder %s2071, 1791
      %s2073 = scalar_select %p2072, %s2071, 1791
      %s2074 = smul.addr %s2073, 4
      %s2075 = scalar_lea.vmem %s3, %s2074
      // Predicated region
      $region33: #{a_convnet_forward.8} parent=31 // pred_check
        %p2076 = pneg %p100
      $region34: #{a_convnet_forward.8} parent=31 // pred_check_branch
        %2078 = sbr.rel (%p2076) target = $region36
      $region35: #{a_convnet_forward.8} parent=31 // pred_region
        %s2079 = smul.u32 128, %s14
      $region36: #{a_convnet_forward.8} parent=31 // pred_fallthru
        _
    $region32: #{a_convnet_forward.8} parent=5 // pred_fallthru
      _
    %p2080 = scmp.le.s32.totalorder 2, %s9
    // Predicated region
    $region37: #{a_convnet_forward.8} parent=5 // pred_check
      %p2081 = pneg %p2080
    $region38: #{a_convnet_forward.8} parent=5 // pred_check_branch
      %2083 = sbr.rel (%p2081) target = $region40
    $region39: #{a_convnet_forward.8} parent=5 // pred_region
      %s2084 = ssub.s32 %s9, 2
      // Predicated region
      $region41: #{a_convnet_forward.8} parent=39 // pred_check
        %p2085 = pneg %p106
      $region42: #{a_convnet_forward.8} parent=39 // pred_check_branch
        %2087 = sbr.rel (%p2085) target = $region44
      $region43: #{a_convnet_forward.8} parent=39 // pred_region
        %s2088 = smul.u32 128, %s15
        %p2089 = scmp.lt.s32.totalorder %s2088, 1791
        %s2090 = scalar_select %p2089, %s2088, 1791
        %s2091 = smul.addr %s2090, 4
        %s2092 = scalar_lea.vmem %s3, %s2091
      $region44: #{a_convnet_forward.8} parent=39 // pred_fallthru
        _
    $region40: #{a_convnet_forward.8} parent=5 // pred_fallthru
      _
  $region6: #{a_convnet_forward.8} parent=0 // loop_footer
    %s13 = sadd.s32 1, %s9
  $region7: #{a_convnet_forward.8} parent=0 // loop_footer_branch
    %8 = sbr.rel target = $region3
  $region8: #{a_convnet_forward.8} parent=0 // loop_exit
    _

// kernel: a_convnet_forward.9
$region0: #{a_convnet_forward.9}
  #allocation0 [shape = 'u32[]', space=smem, size = 0x4, offset = 0x4, fixed_abs, tag = 'smem constant byte address 0x4 - core index']
  #allocation1 [shape = 'u32[144,128]{1,0:T(1,128)}', space=vmem, size = 0x12000, scoped, tag = 'internal scratch']
  %s0 = inlined_call_operand.vmem [shape: bf16[84,672], index: 0, kind: input, shape index: {}]
  %s1 = inlined_call_operand.vmem [shape: bf16[84,672], index: 1, kind: input, shape index: {}]
  %s2 = inlined_call_operand.vmem [shape: bf16[84,672], index: 2, kind: input, shape index: {}]
  %s3 = inlined_call_operand.vmem [shape: bf16[84,672], index: 3, kind: input, shape index: {}]
  %s4 = inlined_call_operand.vmem [shape: bf16[84,672], index: 4, kind: output, shape index: {}]
  %s5 = sld [smem:[#allocation0]]
  $region26: #{a_convnet_forward.9} parent=0
    _
  %s7 = ssub.s32 1, %s5
  %s8 = scalar_select 0, %s7, %s5
  // Predicated region
  $region2: #{a_convnet_forward.9} parent=0 // pred_check
    _
  $region3: #{a_convnet_forward.9} parent=0 // pred_check_branch
    %10 = sbr.rel (0) target = $region5
  $region4: #{a_convnet_forward.9} parent=0 // pred_region
    _
  $region5: #{a_convnet_forward.9} parent=0 // pred_fallthru
    _
  // Predicated region
  $region6: #{a_convnet_forward.9} parent=0 // pred_check
    _
  $region7: #{a_convnet_forward.9} parent=0 // pred_check_branch
    %12 = sbr.rel (0) target = $region9
  $region8: #{a_convnet_forward.9} parent=0 // pred_region
    _
  $region9: #{a_convnet_forward.9} parent=0 // pred_fallthru
    _
  // Predicated region
  $region10: #{a_convnet_forward.9} parent=0 // pred_check
    _
  $region11: #{a_convnet_forward.9} parent=0 // pred_check_branch
    %14 = sbr.rel (0) target = $region13
  $region12: #{a_convnet_forward.9} parent=0 // pred_region
    _
  $region13: #{a_convnet_forward.9} parent=0 // pred_fallthru
    _
  // Predicated region
  $region14: #{a_convnet_forward.9} parent=0 // pred_check
    _
  $region15: #{a_convnet_forward.9} parent=0 // pred_check_branch
    %16 = sbr.rel (0) target = $region17
  $region16: #{a_convnet_forward.9} parent=0 // pred_region
    _
  $region17: #{a_convnet_forward.9} parent=0 // pred_fallthru
    _
  %v17 = vld [vmem:[%s0] sm:$0xff]
  %v18 = vld [vmem:[%s0 + $0x8] sm:$0xff]
  %v19 = vld [vmem:[%s0 + $0x10] sm:$0xff]
  %v20 = vld [vmem:[%s0 + $0x18] sm:$0xff]
  %v21 = vld [vmem:[%s0 + $0x20] sm:$0xff]
  %v22 = vld [vmem:[%s0 + $0x28] sm:$0xff]
  %v23 = vld [vmem:[%s0 + $0x30] sm:$0xff]
  %v24 = vld [vmem:[%s0 + $0x38] sm:$0xff]
  %v25 = vld [vmem:[%s0 + $0x40] sm:$0xff]
  %v26 = vld [vmem:[%s0 + $0x48] sm:$0xff]
  %v27 = vld [vmem:[%s0 + $0x50] sm:$0xff]
  %v28 = vld [vmem:[%s0 + $0x58] sm:$0xff]
  %v29 = vld [vmem:[%s0 + $0x60] sm:$0xff]
  %v30 = vld [vmem:[%s0 + $0x68] sm:$0xff]
  %v31 = vld [vmem:[%s0 + $0x70] sm:$0xff]
  %v32 = vld [vmem:[%s0 + $0x78] sm:$0xff]
  %v33 = vld [vmem:[%s0 + $0x80] sm:$0xff]
  %v34 = vld [vmem:[%s0 + $0x88] sm:$0xff]
  %v35 = vld [vmem:[%s0 + $0x90] sm:$0xff]
  %v36 = vld [vmem:[%s0 + $0x98] sm:$0xff]
  %v37 = vld [vmem:[%s0 + $0xa0] sm:$0xff]
  %v38 = vld [vmem:[%s0 + $0xa8] sm:$0xff]
  %v39 = vld [vmem:[%s0 + $0xb0] sm:$0xff]
  %v40 = vld [vmem:[%s0 + $0xb8] sm:$0xff]
  %v41 = vld [vmem:[%s0 + $0xc0] sm:$0xff]
  %v42 = vld [vmem:[%s0 + $0xc8] sm:$0xff]
  %v43 = vld [vmem:[%s0 + $0xd0] sm:$0xff]
  %v44 = vld [vmem:[%s0 + $0xd8] sm:$0xff]
  %v45 = vld [vmem:[%s0 + $0xe0] sm:$0xff]
  %v46 = vld [vmem:[%s0 + $0xe8] sm:$0xff]
  %v47 = vld [vmem:[%s0 + $0xf0] sm:$0x33]
  %v48 = vld [vmem:[%s0 + $0xf8] sm:$0x33]
  %v49 = vld [vmem:[%s0 + $0x100] sm:$0x33]
  %v50 = vld [vmem:[%s1] sm:$0xff]
  %v51 = vld [vmem:[%s1 + $0x8] sm:$0xff]
  %v52 = vld [vmem:[%s1 + $0x10] sm:$0xff]
  %v53 = vld [vmem:[%s1 + $0x18] sm:$0xff]
  %v54 = vld [vmem:[%s1 + $0x20] sm:$0xff]
  %v55 = vld [vmem:[%s1 + $0x28] sm:$0xff]
  %v56 = vld [vmem:[%s1 + $0x30] sm:$0xff]
  %v57 = vld [vmem:[%s1 + $0x38] sm:$0xff]
  %v58 = vld [vmem:[%s1 + $0x40] sm:$0xff]
  %v59 = vld [vmem:[%s1 + $0x48] sm:$0xff]
  %v60 = vld [vmem:[%s1 + $0x50] sm:$0xff]
  %v61 = vld [vmem:[%s1 + $0x58] sm:$0xff]
  %v62 = vld [vmem:[%s1 + $0x60] sm:$0xff]
  %v63 = vld [vmem:[%s1 + $0x68] sm:$0xff]
  %v64 = vld [vmem:[%s1 + $0x70] sm:$0xff]
  %v65 = vld [vmem:[%s1 + $0x78] sm:$0xff]
  %v66 = vld [vmem:[%s1 + $0x80] sm:$0xff]
  %v67 = vld [vmem:[%s1 + $0x88] sm:$0xff]
  %v68 = vld [vmem:[%s1 + $0x90] sm:$0xff]
  %v69 = vld [vmem:[%s1 + $0x98] sm:$0xff]
  %v70 = vld [vmem:[%s1 + $0xa0] sm:$0xff]
  %v71 = vld [vmem:[%s1 + $0xa8] sm:$0xff]
  %v72 = vld [vmem:[%s1 + $0xb0] sm:$0xff]
  %v73 = vld [vmem:[%s1 + $0xb8] sm:$0xff]
  %v74 = vld [vmem:[%s1 + $0xc0] sm:$0xff]
  %v75 = vld [vmem:[%s1 + $0xc8] sm:$0xff]
  %v76 = vld [vmem:[%s1 + $0xd0] sm:$0xff]
  %v77 = vld [vmem:[%s1 + $0xd8] sm:$0xff]
  %v78 = vld [vmem:[%s1 + $0xe0] sm:$0xff]
  %v79 = vld [vmem:[%s1 + $0xe8] sm:$0xff]
  %v80 = vld [vmem:[%s1 + $0xf0] sm:$0x33]
  %v81 = vld [vmem:[%s1 + $0xf8] sm:$0x33]
  %v82 = vld [vmem:[%s1 + $0x100] sm:$0x33]
  %v83 = vmax.bf16 %v17, %v50
  %v84 = vmax.bf16 %v18, %v51
  %v85 = vmax.bf16 %v19, %v52
  %v86 = vmax.bf16 %v20, %v53
  %v87 = vmax.bf16 %v21, %v54
  %v88 = vmax.bf16 %v22, %v55
  %v89 = vmax.bf16 %v23, %v56
  %v90 = vmax.bf16 %v24, %v57
  %v91 = vmax.bf16 %v25, %v58
  %v92 = vmax.bf16 %v26, %v59
  %v93 = vmax.bf16 %v27, %v60
  %v94 = vmax.bf16 %v28, %v61
  %v95 = vmax.bf16 %v29, %v62
  %v96 = vmax.bf16 %v30, %v63
  %v97 = vmax.bf16 %v31, %v64
  %v98 = vmax.bf16 %v32, %v65
  %v99 = vmax.bf16 %v33, %v66
  %v100 = vmax.bf16 %v34, %v67
  %v101 = vmax.bf16 %v35, %v68
  %v102 = vmax.bf16 %v36, %v69
  %v103 = vmax.bf16 %v37, %v70
  %v104 = vmax.bf16 %v38, %v71
  %v105 = vmax.bf16 %v39, %v72
  %v106 = vmax.bf16 %v40, %v73
  %v107 = vmax.bf16 %v41, %v74
  %v108 = vmax.bf16 %v42, %v75
  %v109 = vmax.bf16 %v43, %v76
  %v110 = vmax.bf16 %v44, %v77
  %v111 = vmax.bf16 %v45, %v78
  %v112 = vmax.bf16 %v46, %v79
  %v113 = vmax.bf16 %v47, %v80
  %v114 = vmax.bf16 %v48, %v81
  %v115 = vmax.bf16 %v49, %v82
  %v116 = vld [vmem:[%s2] sm:$0xff]
  %v117 = vld [vmem:[%s2 + $0x8] sm:$0xff]
  %v118 = vld [vmem:[%s2 + $0x10] sm:$0xff]
  %v119 = vld [vmem:[%s2 + $0x18] sm:$0xff]
  %v120 = vld [vmem:[%s2 + $0x20] sm:$0xff]
  %v121 = vld [vmem:[%s2 + $0x28] sm:$0xff]
  %v122 = vld [vmem:[%s2 + $0x30] sm:$0xff]
  %v123 = vld [vmem:[%s2 + $0x38] sm:$0xff]
  %v124 = vld [vmem:[%s2 + $0x40] sm:$0xff]
  %v125 = vld [vmem:[%s2 + $0x48] sm:$0xff]
  %v126 = vld [vmem:[%s2 + $0x50] sm:$0xff]
  %v127 = vld [vmem:[%s2 + $0x58] sm:$0xff]
  %v128 = vld [vmem:[%s2 + $0x60] sm:$0xff]
  %v129 = vld [vmem:[%s2 + $0x68] sm:$0xff]
  %v130 = vld [vmem:[%s2 + $0x70] sm:$0xff]
  %v131 = vld [vmem:[%s2 + $0x78] sm:$0xff]
  %v132 = vld [vmem:[%s2 + $0x80] sm:$0xff]
  %v133 = vld [vmem:[%s2 + $0x88] sm:$0xff]
  %v134 = vld [vmem:[%s2 + $0x90] sm:$0xff]
  %v135 = vld [vmem:[%s2 + $0x98] sm:$0xff]
  %v136 = vld [vmem:[%s2 + $0xa0] sm:$0xff]
  %v137 = vld [vmem:[%s2 + $0xa8] sm:$0xff]
  %v138 = vld [vmem:[%s2 + $0xb0] sm:$0xff]
  %v139 = vld [vmem:[%s2 + $0xb8] sm:$0xff]
  %v140 = vld [vmem:[%s2 + $0xc0] sm:$0xff]
  %v141 = vld [vmem:[%s2 + $0xc8] sm:$0xff]
  %v142 = vld [vmem:[%s2 + $0xd0] sm:$0xff]
  %v143 = vld [vmem:[%s2 + $0xd8] sm:$0xff]
  %v144 = vld [vmem:[%s2 + $0xe0] sm:$0xff]
  %v145 = vld [vmem:[%s2 + $0xe8] sm:$0xff]
  %v146 = vld [vmem:[%s2 + $0xf0] sm:$0x33]
  %v147 = vld [vmem:[%s2 + $0xf8] sm:$0x33]
  %v148 = vld [vmem:[%s2 + $0x100] sm:$0x33]
  %v149 = vld [vmem:[%s3] sm:$0xff]
  %v150 = vld [vmem:[%s3 + $0x8] sm:$0xff]
  %v151 = vld [vmem:[%s3 + $0x10] sm:$0xff]
  %v152 = vld [vmem:[%s3 + $0x18] sm:$0xff]
  %v153 = vld [vmem:[%s3 + $0x20] sm:$0xff]
  %v154 = vld [vmem:[%s3 + $0x28] sm:$0xff]
  %v155 = vld [vmem:[%s3 + $0x30] sm:$0xff]
  %v156 = vld [vmem:[%s3 + $0x38] sm:$0xff]
  %v157 = vld [vmem:[%s3 + $0x40] sm:$0xff]
  %v158 = vld [vmem:[%s3 + $0x48] sm:$0xff]
  %v159 = vld [vmem:[%s3 + $0x50] sm:$0xff]
  %v160 = vld [vmem:[%s3 + $0x58] sm:$0xff]
  %v161 = vld [vmem:[%s3 + $0x60] sm:$0xff]
  %v162 = vld [vmem:[%s3 + $0x68] sm:$0xff]
  %v163 = vld [vmem:[%s3 + $0x70] sm:$0xff]
  %v164 = vld [vmem:[%s3 + $0x78] sm:$0xff]
  %v165 = vld [vmem:[%s3 + $0x80] sm:$0xff]
  %v166 = vld [vmem:[%s3 + $0x88] sm:$0xff]
  %v167 = vld [vmem:[%s3 + $0x90] sm:$0xff]
  %v168 = vld [vmem:[%s3 + $0x98] sm:$0xff]
  %v169 = vld [vmem:[%s3 + $0xa0] sm:$0xff]
  %v170 = vld [vmem:[%s3 + $0xa8] sm:$0xff]
  %v171 = vld [vmem:[%s3 + $0xb0] sm:$0xff]
  %v172 = vld [vmem:[%s3 + $0xb8] sm:$0xff]
  %v173 = vld [vmem:[%s3 + $0xc0] sm:$0xff]
  %v174 = vld [vmem:[%s3 + $0xc8] sm:$0xff]
  %v175 = vld [vmem:[%s3 + $0xd0] sm:$0xff]
  %v176 = vld [vmem:[%s3 + $0xd8] sm:$0xff]
  %v177 = vld [vmem:[%s3 + $0xe0] sm:$0xff]
  %v178 = vld [vmem:[%s3 + $0xe8] sm:$0xff]
  %v179 = vld [vmem:[%s3 + $0xf0] sm:$0x33]
  %v180 = vld [vmem:[%s3 + $0xf8] sm:$0x33]
  %v181 = vld [vmem:[%s3 + $0x100] sm:$0x33]
  %v182 = vmax.bf16 %v116, %v149
  %v183 = vmax.bf16 %v117, %v150
  %v184 = vmax.bf16 %v118, %v151
  %v185 = vmax.bf16 %v119, %v152
  %v186 = vmax.bf16 %v120, %v153
  %v187 = vmax.bf16 %v121, %v154
  %v188 = vmax.bf16 %v122, %v155
  %v189 = vmax.bf16 %v123, %v156
  %v190 = vmax.bf16 %v124, %v157
  %v191 = vmax.bf16 %v125, %v158
  %v192 = vmax.bf16 %v126, %v159
  %v193 = vmax.bf16 %v127, %v160
  %v194 = vmax.bf16 %v128, %v161
  %v195 = vmax.bf16 %v129, %v162
  %v196 = vmax.bf16 %v130, %v163
  %v197 = vmax.bf16 %v131, %v164
  %v198 = vmax.bf16 %v132, %v165
  %v199 = vmax.bf16 %v133, %v166
  %v200 = vmax.bf16 %v134, %v167
  %v201 = vmax.bf16 %v135, %v168
  %v202 = vmax.bf16 %v136, %v169
  %v203 = vmax.bf16 %v137, %v170
  %v204 = vmax.bf16 %v138, %v171
  %v205 = vmax.bf16 %v139, %v172
  %v206 = vmax.bf16 %v140, %v173
  %v207 = vmax.bf16 %v141, %v174
  %v208 = vmax.bf16 %v142, %v175
  %v209 = vmax.bf16 %v143, %v176
  %v210 = vmax.bf16 %v144, %v177
  %v211 = vmax.bf16 %v145, %v178
  %v212 = vmax.bf16 %v146, %v179
  %v213 = vmax.bf16 %v147, %v180
  %v214 = vmax.bf16 %v148, %v181
  %v215 = vmax.bf16 %v83, %v182
  %v216 = vmax.bf16 %v84, %v183
  %v217 = vmax.bf16 %v85, %v184
  %v218 = vmax.bf16 %v86, %v185
  %v219 = vmax.bf16 %v87, %v186
  %v220 = vmax.bf16 %v88, %v187
  %v221 = vmax.bf16 %v89, %v188
  %v222 = vmax.bf16 %v90, %v189
  %v223 = vmax.bf16 %v91, %v190
  %v224 = vmax.bf16 %v92, %v191
  %v225 = vmax.bf16 %v93, %v192
  %v226 = vmax.bf16 %v94, %v193
  %v227 = vmax.bf16 %v95, %v194
  %v228 = vmax.bf16 %v96, %v195
  %v229 = vmax.bf16 %v97, %v196
  %v230 = vmax.bf16 %v98, %v197
  %v231 = vmax.bf16 %v99, %v198
  %v232 = vmax.bf16 %v100, %v199
  %v233 = vmax.bf16 %v101, %v200
  %v234 = vmax.bf16 %v102, %v201
  %v235 = vmax.bf16 %v103, %v202
  %v236 = vmax.bf16 %v104, %v203
  %v237 = vmax.bf16 %v105, %v204
  %v238 = vmax.bf16 %v106, %v205
  %v239 = vmax.bf16 %v107, %v206
  %v240 = vmax.bf16 %v108, %v207
  %v241 = vmax.bf16 %v109, %v208
  %v242 = vmax.bf16 %v110, %v209
  %v243 = vmax.bf16 %v111, %v210
  %v244 = vmax.bf16 %v112, %v211
  %v245 = vmax.bf16 %v113, %v212
  %v246 = vmax.bf16 %v114, %v213
  %v247 = vmax.bf16 %v115, %v214
  %248 = vst [vmem:[%s4] sm:$0xff] %v215
  %249 = vst [vmem:[%s4 + $0x8] sm:$0xff] %v216
  %vm250 = vcmask 1043456
  %vm251 = vcmask 261124
  %vm252 = vmor %vm251, %vm250
  %253 = vst.msk [vmem:[%s4 + $0x10] sm:$0xff] %vm252, %v217
  %254 = vst [vmem:[%s4 + $0x18] sm:$0xff] %v218
  %255 = vst [vmem:[%s4 + $0x20] sm:$0xff] %v219
  %256 = vst.msk [vmem:[%s4 + $0x28] sm:$0xff] %vm252, %v220
  %257 = vst [vmem:[%s4 + $0x30] sm:$0xff] %v221
  %258 = vst [vmem:[%s4 + $0x38] sm:$0xff] %v222
  %259 = vst.msk [vmem:[%s4 + $0x40] sm:$0xff] %vm252, %v223
  %260 = vst [vmem:[%s4 + $0x48] sm:$0xff] %v224
  %261 = vst [vmem:[%s4 + $0x50] sm:$0xff] %v225
  %262 = vst.msk [vmem:[%s4 + $0x58] sm:$0xff] %vm252, %v226
  %263 = vst [vmem:[%s4 + $0x60] sm:$0xff] %v227
  %264 = vst [vmem:[%s4 + $0x68] sm:$0xff] %v228
  %265 = vst.msk [vmem:[%s4 + $0x70] sm:$0xff] %vm252, %v229
  %266 = vst [vmem:[%s4 + $0x78] sm:$0xff] %v230
  %267 = vst [vmem:[%s4 + $0x80] sm:$0xff] %v231
  %268 = vst.msk [vmem:[%s4 + $0x88] sm:$0xff] %vm252, %v232
  %269 = vst [vmem:[%s4 + $0x90] sm:$0xff] %v233
  %270 = vst [vmem:[%s4 + $0x98] sm:$0xff] %v234
  %271 = vst.msk [vmem:[%s4 + $0xa0] sm:$0xff] %vm252, %v235
  %272 = vst [vmem:[%s4 + $0xa8] sm:$0xff] %v236
  %273 = vst [vmem:[%s4 + $0xb0] sm:$0xff] %v237
  %274 = vst.msk [vmem:[%s4 + $0xb8] sm:$0xff] %vm252, %v238
  %275 = vst [vmem:[%s4 + $0xc0] sm:$0xff] %v239
  %276 = vst [vmem:[%s4 + $0xc8] sm:$0xff] %v240
  %277 = vst.msk [vmem:[%s4 + $0xd0] sm:$0xff] %vm252, %v241
  %278 = vst [vmem:[%s4 + $0xd8] sm:$0xff] %v242
  %279 = vst [vmem:[%s4 + $0xe0] sm:$0xff] %v243
  %280 = vst.msk [vmem:[%s4 + $0xe8] sm:$0xff] %vm252, %v244
  %281 = vst [vmem:[%s4 + $0xf0] sm:$0x33] %v245
  %282 = vst [vmem:[%s4 + $0xf8] sm:$0x33] %v246
  %vm283 = vcmask 1041408
  %vm284 = vcmask 259076
  %vm285 = vmor %vm284, %vm283
  %286 = vst.msk [vmem:[%s4 + $0x100] sm:$0x33] %vm285, %v247
  // Predicated region
  $region18: #{a_convnet_forward.9} parent=0 // pred_check
    _
  $region19: #{a_convnet_forward.9} parent=0 // pred_check_branch
    %288 = sbr.rel (0) target = $region21
  $region20: #{a_convnet_forward.9} parent=0 // pred_region
    _
  $region21: #{a_convnet_forward.9} parent=0 // pred_fallthru
    _
  // Predicated region
  $region22: #{a_convnet_forward.9} parent=0 // pred_check
    _
  $region23: #{a_convnet_forward.9} parent=0 // pred_check_branch
    %290 = sbr.rel (0) target = $region25
  $region24: #{a_convnet_forward.9} parent=0 // pred_region
    _
  $region25: #{a_convnet_forward.9} parent=0 // pred_fallthru
    _

// kernel: a_convnet_forward.10
$region0: #{a_convnet_forward.10}
  #allocation0 [shape = 'u32[]', space=smem, size = 0x4, offset = 0x4, fixed_abs, tag = 'smem constant byte address 0x4 - core index']
  #allocation1 [shape = 'u32[144,128]{1,0:T(1,128)}', space=vmem, size = 0x12000, scoped, tag = 'internal scratch']
  %s0 = inlined_call_operand.vmem [shape: bf16[3072,512], index: 0, kind: input, shape index: {}]
  %s1 = inlined_call_operand.vmem [shape: bf16[512,128], index: 1, kind: input, shape index: {}]
  %s2 = inlined_call_operand.vmem [shape: f32[1,128], index: 2, kind: input, shape index: {}]
  %s3 = inlined_call_operand.vmem [shape: bf16[3072,128], index: 3, kind: output, shape index: {}]
  %s4 = sld [smem:[#allocation0]]
  $region45: #{a_convnet_forward.10} parent=0
    _
  %s6 = ssub.s32 1, %s4
  %s7 = scalar_select 0, %s6, %s4
  loop: start=0, step=1, limit=5
  $region2: #{a_convnet_forward.10} parent=0 // loop_pre_header
    _
  $region3: #{a_convnet_forward.10} parent=0 // loop_header
    %s9 = sphi 0, %s13
    %p10 = scmp.ge.s32.totalorder %s9, 5
    %s19 = sphi 0, %s21
    %s22 = sphi 0, %s19
    %s23 = sphi 0, %s22
    %s39 = sphi 0, %s23
    %s43 = sphi 0, %s43
    %s45 = sphi 0, %s43
    %s46 = sphi 0, %s45
    %s60 = sphi 0, %s46
    %s64 = sphi 0, %s64
    %s66 = sphi 0, %s64
    %s67 = sphi 0, %s66
    %s81 = sphi 0, %s67
    %s87 = sphi 0, %s89
    %s90 = sphi 0, %s87
    %s91 = sphi 0, %s90
    %s107 = sphi 0, %s91
  $region4: #{a_convnet_forward.10} parent=0 // loop_header_branch
    %12 = sbr.rel (%p10) target = $region8
  $region5: #{a_convnet_forward.10} parent=0 // loop_body
    %s14 = ssub.s32 %s9, 1
    %s15 = ssub.s32 %s9, 2
    %s16 = sadd.s32 %s9, 1
    %s17 = ssub.s32 %s9, %s16
    %p18 = scmp.eq.s32.totalorder %s17, 0
    %s20 = sadd.s32 %s19, 1
    %s21 = scalar_select %p18, %s19, %s20
    %p24 = pneg %p18
    %p25 = scmp.eq.s32.totalorder %s9, 2
    %p26 = por %p24, %p25
    %p27 = scmp.ne.s32.totalorder %s19, %s22
    %p28 = scmp.eq.s32.totalorder %s9, 0
    %p29 = por %p27, %p28
    %p30 = scmp.ne.s32.totalorder %s19, %s22
    %p31 = scmp.eq.s32.totalorder %s14, 2
    %p32 = por %p30, %p31
    %p33 = scmp.ne.s32.totalorder %s22, %s23
    %p34 = scmp.eq.s32.totalorder %s14, 0
    %p35 = por %p33, %p34
    %p36 = scmp.ne.s32.totalorder %s22, %s23
    %p37 = scmp.eq.s32.totalorder %s15, 2
    %p38 = por %p36, %p37
    %p40 = scmp.ne.s32.totalorder %s23, %s39
    %p41 = scmp.eq.s32.totalorder %s15, 0
    %p42 = por %p40, %p41
    %s44 = sadd.s32 %s43, 1
    %p47 = scmp.eq.s32.totalorder %s9, 2
    %p48 = scmp.ne.s32.totalorder %s43, %s45
    %p49 = scmp.eq.s32.totalorder %s9, 0
    %p50 = por %p48, %p49
    %p51 = scmp.ne.s32.totalorder %s43, %s45
    %p52 = scmp.eq.s32.totalorder %s14, 2
    %p53 = por %p51, %p52
    %p54 = scmp.ne.s32.totalorder %s45, %s46
    %p55 = scmp.eq.s32.totalorder %s14, 0
    %p56 = por %p54, %p55
    %p57 = scmp.ne.s32.totalorder %s45, %s46
    %p58 = scmp.eq.s32.totalorder %s15, 2
    %p59 = por %p57, %p58
    %p61 = scmp.ne.s32.totalorder %s46, %s60
    %p62 = scmp.eq.s32.totalorder %s15, 0
    %p63 = por %p61, %p62
    %s65 = sadd.s32 %s64, 1
    %p68 = scmp.eq.s32.totalorder %s9, 2
    %p69 = scmp.ne.s32.totalorder %s64, %s66
    %p70 = scmp.eq.s32.totalorder %s9, 0
    %p71 = por %p69, %p70
    %p72 = scmp.ne.s32.totalorder %s64, %s66
    %p73 = scmp.eq.s32.totalorder %s14, 2
    %p74 = por %p72, %p73
    %p75 = scmp.ne.s32.totalorder %s66, %s67
    %p76 = scmp.eq.s32.totalorder %s14, 0
    %p77 = por %p75, %p76
    %p78 = scmp.ne.s32.totalorder %s66, %s67
    %p79 = scmp.eq.s32.totalorder %s15, 2
    %p80 = por %p78, %p79
    %p82 = scmp.ne.s32.totalorder %s67, %s81
    %p83 = scmp.eq.s32.totalorder %s15, 0
    %p84 = por %p82, %p83
    %s85 = ssub.s32 %s9, %s16
    %p86 = scmp.eq.s32.totalorder %s85, 0
    %s88 = sadd.s32 %s87, 1
    %s89 = scalar_select %p86, %s87, %s88
    %p92 = pneg %p86
    %p93 = scmp.eq.s32.totalorder %s9, 2
    %p94 = por %p92, %p93
    %p95 = scmp.ne.s32.totalorder %s87, %s90
    %p96 = scmp.eq.s32.totalorder %s9, 0
    %p97 = por %p95, %p96
    %p98 = scmp.ne.s32.totalorder %s87, %s90
    %p99 = scmp.eq.s32.totalorder %s14, 2
    %p100 = por %p98, %p99
    %p101 = scmp.ne.s32.totalorder %s90, %s91
    %p102 = scmp.eq.s32.totalorder %s14, 0
    %p103 = por %p101, %p102
    %p104 = scmp.ne.s32.totalorder %s90, %s91
    %p105 = scmp.eq.s32.totalorder %s15, 2
    %p106 = por %p104, %p105
    %p108 = scmp.ne.s32.totalorder %s91, %s107
    %p109 = scmp.eq.s32.totalorder %s15, 0
    %p110 = por %p108, %p109
    %p111 = scmp.le.s32.totalorder 1, %s9
    %p112 = scmp.lt.s32.totalorder %s9, 4
    %p113 = pnand %p111, %p112
    %p114 = pneg %p113
    // Predicated region
    $region9: #{a_convnet_forward.10} parent=5 // pred_check
      _
    $region10: #{a_convnet_forward.10} parent=5 // pred_check_branch
      %116 = sbr.rel (%p113) target = $region12
    $region11: #{a_convnet_forward.10} parent=5 // pred_region
      %s117 = ssub.s32 %s9, 1
      // Predicated region
      $region13: #{a_convnet_forward.10} parent=11 // pred_check
        %p118 = pneg %p56
      $region14: #{a_convnet_forward.10} parent=11 // pred_check_branch
        %120 = sbr.rel (%p118) target = $region16
      $region15: #{a_convnet_forward.10} parent=11 // pred_region
        _
      $region16: #{a_convnet_forward.10} parent=11 // pred_fallthru
        _
      // Predicated region
      $region17: #{a_convnet_forward.10} parent=11 // pred_check
        %p121 = pneg %p77
      $region18: #{a_convnet_forward.10} parent=11 // pred_check_branch
        %123 = sbr.rel (%p121) target = $region20
      $region19: #{a_convnet_forward.10} parent=11 // pred_region
        _
      $region20: #{a_convnet_forward.10} parent=11 // pred_fallthru
        _
    $region12: #{a_convnet_forward.10} parent=5 // pred_fallthru
      _
    %p124 = scmp.lt.s32.totalorder %s9, 3
    // Predicated region
    $region21: #{a_convnet_forward.10} parent=5 // pred_check
      %p125 = pneg %p124
    $region22: #{a_convnet_forward.10} parent=5 // pred_check_branch
      %127 = sbr.rel (%p125) target = $region24
    $region23: #{a_convnet_forward.10} parent=5 // pred_region
      // Predicated region
      $region25: #{a_convnet_forward.10} parent=23 // pred_check
        %p128 = pneg %p29
      $region26: #{a_convnet_forward.10} parent=23 // pred_check_branch
        %130 = sbr.rel (%p128) target = $region28
      $region27: #{a_convnet_forward.10} parent=23 // pred_region
        %s131 = smul.u32 128, %s9
        %p132 = scmp.lt.s32.totalorder %s131, 383
        %s133 = scalar_select %p132, %s131, 383
        %s134 = smul.addr %s133, 4
        %s135 = smul.addr %s134, 4
        %s136 = scalar_lea.vmem %s0, %s135
        %s137 = smul.u32 128, %s9
      $region28: #{a_convnet_forward.10} parent=23 // pred_fallthru
        _
    $region24: #{a_convnet_forward.10} parent=5 // pred_fallthru
      _
    %p138 = scmp.le.s32.totalorder 1, %s9
    %p139 = scmp.lt.s32.totalorder %s9, 4
    %p140 = pnand %p138, %p139
    %p141 = pneg %p140
    // Predicated region
    $region29: #{a_convnet_forward.10} parent=5 // pred_check
      _
    $region30: #{a_convnet_forward.10} parent=5 // pred_check_branch
      %143 = sbr.rel (%p140) target = $region32
    $region31: #{a_convnet_forward.10} parent=5 // pred_region
      %s144 = ssub.s32 %s9, 1
      %s145 = smul.u32 128, %s14
      %p146 = scmp.lt.s32.totalorder %s145, 383
      %s147 = scalar_select %p146, %s145, 383
      %s148 = smul.addr %s147, 4
      %s149 = smul.addr %s148, 4
      %s150 = scalar_lea.vmem %s0, %s149
      %p151 = pneg %p35
      %p152 = pneg %p32
      %p153 = pneg %p56
      %p154 = pneg %p53
      %p155 = pneg %p77
      %p156 = pneg %p74
      %p157 = pneg %p103
      %p158 = pneg %p100
      %s159 = smul.u32 128, %s14
      %p160 = scmp.lt.s32.totalorder %s159, 383
      %s161 = scalar_select %p160, %s159, 383
      %s162 = smul.addr %s161, 4
      %s163 = scalar_lea.vmem %s3, %s162
      %s164 = smul.u32 128, %s14
      %p165 = scmp.lt.s32.totalorder %s164, 383
      %s166 = scalar_select %p165, %s164, 383
      %s167 = smul.addr %s166, 4
      %s168 = smul.addr %s167, 4
      %s169 = scalar_lea.vmem %s0, %s168
      %s170 = smul.u32 128, %s14
      %s171 = smul.u32 128, %s14
      %p172 = scmp.lt.s32.totalorder %s171, 383
      %s173 = scalar_select %p172, %s171, 383
      %s174 = smul.addr %s173, 4
      %s175 = scalar_lea.vmem %s3, %s174
      %s176 = smul.u32 128, %s14
      %v178 = vld [vmem:[%s169] sm:$0xff]
      %v179 = vld [vmem:[%s169 + $0x8] sm:$0xff]
      %v180 = vld [vmem:[%s169 + $0x10] sm:$0xff]
      %v181 = vld [vmem:[%s169 + $0x18] sm:$0xff]
      %v182 = vld [vmem:[%s169 + $0x20] sm:$0xff]
      %v183 = vld [vmem:[%s169 + $0x28] sm:$0xff]
      %v184 = vld [vmem:[%s169 + $0x30] sm:$0xff]
      %v185 = vld [vmem:[%s169 + $0x38] sm:$0xff]
      %v186 = vld [vmem:[%s169 + $0x40] sm:$0xff]
      %v187 = vld [vmem:[%s169 + $0x48] sm:$0xff]
      %v188 = vld [vmem:[%s169 + $0x50] sm:$0xff]
      %v189 = vld [vmem:[%s169 + $0x58] sm:$0xff]
      %v190 = vld [vmem:[%s169 + $0x60] sm:$0xff]
      %v191 = vld [vmem:[%s169 + $0x68] sm:$0xff]
      %v192 = vld [vmem:[%s169 + $0x70] sm:$0xff]
      %v193 = vld [vmem:[%s169 + $0x78] sm:$0xff]
      %v194 = vld [vmem:[%s169 + $0x80] sm:$0xff]
      %v195 = vld [vmem:[%s169 + $0x88] sm:$0xff]
      %v196 = vld [vmem:[%s169 + $0x90] sm:$0xff]
      %v197 = vld [vmem:[%s169 + $0x98] sm:$0xff]
      %v198 = vld [vmem:[%s169 + $0xa0] sm:$0xff]
      %v199 = vld [vmem:[%s169 + $0xa8] sm:$0xff]
      %v200 = vld [vmem:[%s169 + $0xb0] sm:$0xff]
      %v201 = vld [vmem:[%s169 + $0xb8] sm:$0xff]
      %v202 = vld [vmem:[%s169 + $0xc0] sm:$0xff]
      %v203 = vld [vmem:[%s169 + $0xc8] sm:$0xff]
      %v204 = vld [vmem:[%s169 + $0xd0] sm:$0xff]
      %v205 = vld [vmem:[%s169 + $0xd8] sm:$0xff]
      %v206 = vld [vmem:[%s169 + $0xe0] sm:$0xff]
      %v207 = vld [vmem:[%s169 + $0xe8] sm:$0xff]
      %v208 = vld [vmem:[%s169 + $0xf0] sm:$0xff]
      %v209 = vld [vmem:[%s169 + $0xf8] sm:$0xff]
      %v210 = vld [vmem:[%s169 + $0x100] sm:$0xff]
      %v211 = vld [vmem:[%s169 + $0x108] sm:$0xff]
      %v212 = vld [vmem:[%s169 + $0x110] sm:$0xff]
      %v213 = vld [vmem:[%s169 + $0x118] sm:$0xff]
      %v214 = vld [vmem:[%s169 + $0x120] sm:$0xff]
      %v215 = vld [vmem:[%s169 + $0x128] sm:$0xff]
      %v216 = vld [vmem:[%s169 + $0x130] sm:$0xff]
      %v217 = vld [vmem:[%s169 + $0x138] sm:$0xff]
      %v218 = vld [vmem:[%s169 + $0x140] sm:$0xff]
      %v219 = vld [vmem:[%s169 + $0x148] sm:$0xff]
      %v220 = vld [vmem:[%s169 + $0x150] sm:$0xff]
      %v221 = vld [vmem:[%s169 + $0x158] sm:$0xff]
      %v222 = vld [vmem:[%s169 + $0x160] sm:$0xff]
      %v223 = vld [vmem:[%s169 + $0x168] sm:$0xff]
      %v224 = vld [vmem:[%s169 + $0x170] sm:$0xff]
      %v225 = vld [vmem:[%s169 + $0x178] sm:$0xff]
      %v226 = vld [vmem:[%s169 + $0x180] sm:$0xff]
      %v227 = vld [vmem:[%s169 + $0x188] sm:$0xff]
      %v228 = vld [vmem:[%s169 + $0x190] sm:$0xff]
      %v229 = vld [vmem:[%s169 + $0x198] sm:$0xff]
      %v230 = vld [vmem:[%s169 + $0x1a0] sm:$0xff]
      %v231 = vld [vmem:[%s169 + $0x1a8] sm:$0xff]
      %v232 = vld [vmem:[%s169 + $0x1b0] sm:$0xff]
      %v233 = vld [vmem:[%s169 + $0x1b8] sm:$0xff]
      %v234 = vld [vmem:[%s169 + $0x1c0] sm:$0xff]
      %v235 = vld [vmem:[%s169 + $0x1c8] sm:$0xff]
      %v236 = vld [vmem:[%s169 + $0x1d0] sm:$0xff]
      %v237 = vld [vmem:[%s169 + $0x1d8] sm:$0xff]
      %v238 = vld [vmem:[%s169 + $0x1e0] sm:$0xff]
      %v239 = vld [vmem:[%s169 + $0x1e8] sm:$0xff]
      %v240 = vld [vmem:[%s169 + $0x1f0] sm:$0xff]
      %v241 = vld [vmem:[%s169 + $0x1f8] sm:$0xff]
      %v242 = vld [vmem:[%s169 + $0x200] sm:$0xff]
      %v243 = vld [vmem:[%s169 + $0x208] sm:$0xff]
      %v244 = vld [vmem:[%s169 + $0x210] sm:$0xff]
      %v245 = vld [vmem:[%s169 + $0x218] sm:$0xff]
      %v246 = vld [vmem:[%s169 + $0x220] sm:$0xff]
      %v247 = vld [vmem:[%s169 + $0x228] sm:$0xff]
      %v248 = vld [vmem:[%s169 + $0x230] sm:$0xff]
      %v249 = vld [vmem:[%s169 + $0x238] sm:$0xff]
      %v250 = vld [vmem:[%s169 + $0x240] sm:$0xff]
      %v251 = vld [vmem:[%s169 + $0x248] sm:$0xff]
      %v252 = vld [vmem:[%s169 + $0x250] sm:$0xff]
      %v253 = vld [vmem:[%s169 + $0x258] sm:$0xff]
      %v254 = vld [vmem:[%s169 + $0x260] sm:$0xff]
      %v255 = vld [vmem:[%s169 + $0x268] sm:$0xff]
      %v256 = vld [vmem:[%s169 + $0x270] sm:$0xff]
      %v257 = vld [vmem:[%s169 + $0x278] sm:$0xff]
      %v258 = vld [vmem:[%s169 + $0x280] sm:$0xff]
      %v259 = vld [vmem:[%s169 + $0x288] sm:$0xff]
      %v260 = vld [vmem:[%s169 + $0x290] sm:$0xff]
      %v261 = vld [vmem:[%s169 + $0x298] sm:$0xff]
      %v262 = vld [vmem:[%s169 + $0x2a0] sm:$0xff]
      %v263 = vld [vmem:[%s169 + $0x2a8] sm:$0xff]
      %v264 = vld [vmem:[%s169 + $0x2b0] sm:$0xff]
      %v265 = vld [vmem:[%s169 + $0x2b8] sm:$0xff]
      %v266 = vld [vmem:[%s169 + $0x2c0] sm:$0xff]
      %v267 = vld [vmem:[%s169 + $0x2c8] sm:$0xff]
      %v268 = vld [vmem:[%s169 + $0x2d0] sm:$0xff]
      %v269 = vld [vmem:[%s169 + $0x2d8] sm:$0xff]
      %v270 = vld [vmem:[%s169 + $0x2e0] sm:$0xff]
      %v271 = vld [vmem:[%s169 + $0x2e8] sm:$0xff]
      %v272 = vld [vmem:[%s169 + $0x2f0] sm:$0xff]
      %v273 = vld [vmem:[%s169 + $0x2f8] sm:$0xff]
      %v274 = vld [vmem:[%s169 + $0x300] sm:$0xff]
      %v275 = vld [vmem:[%s169 + $0x308] sm:$0xff]
      %v276 = vld [vmem:[%s169 + $0x310] sm:$0xff]
      %v277 = vld [vmem:[%s169 + $0x318] sm:$0xff]
      %v278 = vld [vmem:[%s169 + $0x320] sm:$0xff]
      %v279 = vld [vmem:[%s169 + $0x328] sm:$0xff]
      %v280 = vld [vmem:[%s169 + $0x330] sm:$0xff]
      %v281 = vld [vmem:[%s169 + $0x338] sm:$0xff]
      %v282 = vld [vmem:[%s169 + $0x340] sm:$0xff]
      %v283 = vld [vmem:[%s169 + $0x348] sm:$0xff]
      %v284 = vld [vmem:[%s169 + $0x350] sm:$0xff]
      %v285 = vld [vmem:[%s169 + $0x358] sm:$0xff]
      %v286 = vld [vmem:[%s169 + $0x360] sm:$0xff]
      %v287 = vld [vmem:[%s169 + $0x368] sm:$0xff]
      %v288 = vld [vmem:[%s169 + $0x370] sm:$0xff]
      %v289 = vld [vmem:[%s169 + $0x378] sm:$0xff]
      %v290 = vld [vmem:[%s169 + $0x380] sm:$0xff]
      %v291 = vld [vmem:[%s169 + $0x388] sm:$0xff]
      %v292 = vld [vmem:[%s169 + $0x390] sm:$0xff]
      %v293 = vld [vmem:[%s169 + $0x398] sm:$0xff]
      %v294 = vld [vmem:[%s169 + $0x3a0] sm:$0xff]
      %v295 = vld [vmem:[%s169 + $0x3a8] sm:$0xff]
      %v296 = vld [vmem:[%s169 + $0x3b0] sm:$0xff]
      %v297 = vld [vmem:[%s169 + $0x3b8] sm:$0xff]
      %v298 = vld [vmem:[%s169 + $0x3c0] sm:$0xff]
      %v299 = vld [vmem:[%s169 + $0x3c8] sm:$0xff]
      %v300 = vld [vmem:[%s169 + $0x3d0] sm:$0xff]
      %v301 = vld [vmem:[%s169 + $0x3d8] sm:$0xff]
      %v302 = vld [vmem:[%s169 + $0x3e0] sm:$0xff]
      %v303 = vld [vmem:[%s169 + $0x3e8] sm:$0xff]
      %v304 = vld [vmem:[%s169 + $0x3f0] sm:$0xff]
      %v305 = vld [vmem:[%s169 + $0x3f8] sm:$0xff]
      %v306 = vld [vmem:[%s169 + $0x400] sm:$0xff]
      %v307 = vld [vmem:[%s169 + $0x408] sm:$0xff]
      %v308 = vld [vmem:[%s169 + $0x410] sm:$0xff]
      %v309 = vld [vmem:[%s169 + $0x418] sm:$0xff]
      %v310 = vld [vmem:[%s169 + $0x420] sm:$0xff]
      %v311 = vld [vmem:[%s169 + $0x428] sm:$0xff]
      %v312 = vld [vmem:[%s169 + $0x430] sm:$0xff]
      %v313 = vld [vmem:[%s169 + $0x438] sm:$0xff]
      %v314 = vld [vmem:[%s169 + $0x440] sm:$0xff]
      %v315 = vld [vmem:[%s169 + $0x448] sm:$0xff]
      %v316 = vld [vmem:[%s169 + $0x450] sm:$0xff]
      %v317 = vld [vmem:[%s169 + $0x458] sm:$0xff]
      %v318 = vld [vmem:[%s169 + $0x460] sm:$0xff]
      %v319 = vld [vmem:[%s169 + $0x468] sm:$0xff]
      %v320 = vld [vmem:[%s169 + $0x470] sm:$0xff]
      %v321 = vld [vmem:[%s169 + $0x478] sm:$0xff]
      %v322 = vld [vmem:[%s169 + $0x480] sm:$0xff]
      %v323 = vld [vmem:[%s169 + $0x488] sm:$0xff]
      %v324 = vld [vmem:[%s169 + $0x490] sm:$0xff]
      %v325 = vld [vmem:[%s169 + $0x498] sm:$0xff]
      %v326 = vld [vmem:[%s169 + $0x4a0] sm:$0xff]
      %v327 = vld [vmem:[%s169 + $0x4a8] sm:$0xff]
      %v328 = vld [vmem:[%s169 + $0x4b0] sm:$0xff]
      %v329 = vld [vmem:[%s169 + $0x4b8] sm:$0xff]
      %v330 = vld [vmem:[%s169 + $0x4c0] sm:$0xff]
      %v331 = vld [vmem:[%s169 + $0x4c8] sm:$0xff]
      %v332 = vld [vmem:[%s169 + $0x4d0] sm:$0xff]
      %v333 = vld [vmem:[%s169 + $0x4d8] sm:$0xff]
      %v334 = vld [vmem:[%s169 + $0x4e0] sm:$0xff]
      %v335 = vld [vmem:[%s169 + $0x4e8] sm:$0xff]
      %v336 = vld [vmem:[%s169 + $0x4f0] sm:$0xff]
      %v337 = vld [vmem:[%s169 + $0x4f8] sm:$0xff]
      %v338 = vld [vmem:[%s169 + $0x500] sm:$0xff]
      %v339 = vld [vmem:[%s169 + $0x508] sm:$0xff]
      %v340 = vld [vmem:[%s169 + $0x510] sm:$0xff]
      %v341 = vld [vmem:[%s169 + $0x518] sm:$0xff]
      %v342 = vld [vmem:[%s169 + $0x520] sm:$0xff]
      %v343 = vld [vmem:[%s169 + $0x528] sm:$0xff]
      %v344 = vld [vmem:[%s169 + $0x530] sm:$0xff]
      %v345 = vld [vmem:[%s169 + $0x538] sm:$0xff]
      %v346 = vld [vmem:[%s169 + $0x540] sm:$0xff]
      %v347 = vld [vmem:[%s169 + $0x548] sm:$0xff]
      %v348 = vld [vmem:[%s169 + $0x550] sm:$0xff]
      %v349 = vld [vmem:[%s169 + $0x558] sm:$0xff]
      %v350 = vld [vmem:[%s169 + $0x560] sm:$0xff]
      %v351 = vld [vmem:[%s169 + $0x568] sm:$0xff]
      %v352 = vld [vmem:[%s169 + $0x570] sm:$0xff]
      %v353 = vld [vmem:[%s169 + $0x578] sm:$0xff]
      %v354 = vld [vmem:[%s169 + $0x580] sm:$0xff]
      %v355 = vld [vmem:[%s169 + $0x588] sm:$0xff]
      %v356 = vld [vmem:[%s169 + $0x590] sm:$0xff]
      %v357 = vld [vmem:[%s169 + $0x598] sm:$0xff]
      %v358 = vld [vmem:[%s169 + $0x5a0] sm:$0xff]
      %v359 = vld [vmem:[%s169 + $0x5a8] sm:$0xff]
      %v360 = vld [vmem:[%s169 + $0x5b0] sm:$0xff]
      %v361 = vld [vmem:[%s169 + $0x5b8] sm:$0xff]
      %v362 = vld [vmem:[%s169 + $0x5c0] sm:$0xff]
      %v363 = vld [vmem:[%s169 + $0x5c8] sm:$0xff]
      %v364 = vld [vmem:[%s169 + $0x5d0] sm:$0xff]
      %v365 = vld [vmem:[%s169 + $0x5d8] sm:$0xff]
      %v366 = vld [vmem:[%s169 + $0x5e0] sm:$0xff]
      %v367 = vld [vmem:[%s169 + $0x5e8] sm:$0xff]
      %v368 = vld [vmem:[%s169 + $0x5f0] sm:$0xff]
      %v369 = vld [vmem:[%s169 + $0x5f8] sm:$0xff]
      %v370 = vld [vmem:[%s169 + $0x600] sm:$0xff]
      %v371 = vld [vmem:[%s169 + $0x608] sm:$0xff]
      %v372 = vld [vmem:[%s169 + $0x610] sm:$0xff]
      %v373 = vld [vmem:[%s169 + $0x618] sm:$0xff]
      %v374 = vld [vmem:[%s169 + $0x620] sm:$0xff]
      %v375 = vld [vmem:[%s169 + $0x628] sm:$0xff]
      %v376 = vld [vmem:[%s169 + $0x630] sm:$0xff]
      %v377 = vld [vmem:[%s169 + $0x638] sm:$0xff]
      %v378 = vld [vmem:[%s169 + $0x640] sm:$0xff]
      %v379 = vld [vmem:[%s169 + $0x648] sm:$0xff]
      %v380 = vld [vmem:[%s169 + $0x650] sm:$0xff]
      %v381 = vld [vmem:[%s169 + $0x658] sm:$0xff]
      %v382 = vld [vmem:[%s169 + $0x660] sm:$0xff]
      %v383 = vld [vmem:[%s169 + $0x668] sm:$0xff]
      %v384 = vld [vmem:[%s169 + $0x670] sm:$0xff]
      %v385 = vld [vmem:[%s169 + $0x678] sm:$0xff]
      %v386 = vld [vmem:[%s169 + $0x680] sm:$0xff]
      %v387 = vld [vmem:[%s169 + $0x688] sm:$0xff]
      %v388 = vld [vmem:[%s169 + $0x690] sm:$0xff]
      %v389 = vld [vmem:[%s169 + $0x698] sm:$0xff]
      %v390 = vld [vmem:[%s169 + $0x6a0] sm:$0xff]
      %v391 = vld [vmem:[%s169 + $0x6a8] sm:$0xff]
      %v392 = vld [vmem:[%s169 + $0x6b0] sm:$0xff]
      %v393 = vld [vmem:[%s169 + $0x6b8] sm:$0xff]
      %v394 = vld [vmem:[%s169 + $0x6c0] sm:$0xff]
      %v395 = vld [vmem:[%s169 + $0x6c8] sm:$0xff]
      %v396 = vld [vmem:[%s169 + $0x6d0] sm:$0xff]
      %v397 = vld [vmem:[%s169 + $0x6d8] sm:$0xff]
      %v398 = vld [vmem:[%s169 + $0x6e0] sm:$0xff]
      %v399 = vld [vmem:[%s169 + $0x6e8] sm:$0xff]
      %v400 = vld [vmem:[%s169 + $0x6f0] sm:$0xff]
      %v401 = vld [vmem:[%s169 + $0x6f8] sm:$0xff]
      %v402 = vld [vmem:[%s169 + $0x700] sm:$0xff]
      %v403 = vld [vmem:[%s169 + $0x708] sm:$0xff]
      %v404 = vld [vmem:[%s169 + $0x710] sm:$0xff]
      %v405 = vld [vmem:[%s169 + $0x718] sm:$0xff]
      %v406 = vld [vmem:[%s169 + $0x720] sm:$0xff]
      %v407 = vld [vmem:[%s169 + $0x728] sm:$0xff]
      %v408 = vld [vmem:[%s169 + $0x730] sm:$0xff]
      %v409 = vld [vmem:[%s169 + $0x738] sm:$0xff]
      %v410 = vld [vmem:[%s169 + $0x740] sm:$0xff]
      %v411 = vld [vmem:[%s169 + $0x748] sm:$0xff]
      %v412 = vld [vmem:[%s169 + $0x750] sm:$0xff]
      %v413 = vld [vmem:[%s169 + $0x758] sm:$0xff]
      %v414 = vld [vmem:[%s169 + $0x760] sm:$0xff]
      %v415 = vld [vmem:[%s169 + $0x768] sm:$0xff]
      %v416 = vld [vmem:[%s169 + $0x770] sm:$0xff]
      %v417 = vld [vmem:[%s169 + $0x778] sm:$0xff]
      %v418 = vld [vmem:[%s169 + $0x780] sm:$0xff]
      %v419 = vld [vmem:[%s169 + $0x788] sm:$0xff]
      %v420 = vld [vmem:[%s169 + $0x790] sm:$0xff]
      %v421 = vld [vmem:[%s169 + $0x798] sm:$0xff]
      %v422 = vld [vmem:[%s169 + $0x7a0] sm:$0xff]
      %v423 = vld [vmem:[%s169 + $0x7a8] sm:$0xff]
      %v424 = vld [vmem:[%s169 + $0x7b0] sm:$0xff]
      %v425 = vld [vmem:[%s169 + $0x7b8] sm:$0xff]
      %v426 = vld [vmem:[%s169 + $0x7c0] sm:$0xff]
      %v427 = vld [vmem:[%s169 + $0x7c8] sm:$0xff]
      %v428 = vld [vmem:[%s169 + $0x7d0] sm:$0xff]
      %v429 = vld [vmem:[%s169 + $0x7d8] sm:$0xff]
      %v430 = vld [vmem:[%s169 + $0x7e0] sm:$0xff]
      %v431 = vld [vmem:[%s169 + $0x7e8] sm:$0xff]
      %v432 = vld [vmem:[%s169 + $0x7f0] sm:$0xff]
      %v433 = vld [vmem:[%s169 + $0x7f8] sm:$0xff]
      %v434 = vld [vmem:[%s1] sm:$0xf]
      %v435 = vld [vmem:[%s1 + $0x4] sm:$0xf]
      %v436 = vld [vmem:[%s1 + $0x8] sm:$0xf]
      %v437 = vld [vmem:[%s1 + $0xc] sm:$0xf]
      %v438 = vld [vmem:[%s1 + $0x10] sm:$0xf]
      %v439 = vld [vmem:[%s1 + $0x14] sm:$0xf]
      %v440 = vld [vmem:[%s1 + $0x18] sm:$0xf]
      %v441 = vld [vmem:[%s1 + $0x1c] sm:$0xf]
      %v442 = vld [vmem:[%s1 + $0x20] sm:$0xf]
      %v443 = vld [vmem:[%s1 + $0x24] sm:$0xf]
      %v444 = vld [vmem:[%s1 + $0x28] sm:$0xf]
      %v445 = vld [vmem:[%s1 + $0x2c] sm:$0xf]
      %v446 = vld [vmem:[%s1 + $0x30] sm:$0xf]
      %v447 = vld [vmem:[%s1 + $0x34] sm:$0xf]
      %v448 = vld [vmem:[%s1 + $0x38] sm:$0xf]
      %v449 = vld [vmem:[%s1 + $0x3c] sm:$0xf]
      %v450 = vld [vmem:[%s1 + $0x40] sm:$0xf]
      %v451 = vld [vmem:[%s1 + $0x44] sm:$0xf]
      %v452 = vld [vmem:[%s1 + $0x48] sm:$0xf]
      %v453 = vld [vmem:[%s1 + $0x4c] sm:$0xf]
      %v454 = vld [vmem:[%s1 + $0x50] sm:$0xf]
      %v455 = vld [vmem:[%s1 + $0x54] sm:$0xf]
      %v456 = vld [vmem:[%s1 + $0x58] sm:$0xf]
      %v457 = vld [vmem:[%s1 + $0x5c] sm:$0xf]
      %v458 = vld [vmem:[%s1 + $0x60] sm:$0xf]
      %v459 = vld [vmem:[%s1 + $0x64] sm:$0xf]
      %v460 = vld [vmem:[%s1 + $0x68] sm:$0xf]
      %v461 = vld [vmem:[%s1 + $0x6c] sm:$0xf]
      %v462 = vld [vmem:[%s1 + $0x70] sm:$0xf]
      %v463 = vld [vmem:[%s1 + $0x74] sm:$0xf]
      %v464 = vld [vmem:[%s1 + $0x78] sm:$0xf]
      %v465 = vld [vmem:[%s1 + $0x7c] sm:$0xf]
      %v466 = vld [vmem:[%s1 + $0x80] sm:$0xf]
      %v467 = vld [vmem:[%s1 + $0x84] sm:$0xf]
      %v468 = vld [vmem:[%s1 + $0x88] sm:$0xf]
      %v469 = vld [vmem:[%s1 + $0x8c] sm:$0xf]
      %v470 = vld [vmem:[%s1 + $0x90] sm:$0xf]
      %v471 = vld [vmem:[%s1 + $0x94] sm:$0xf]
      %v472 = vld [vmem:[%s1 + $0x98] sm:$0xf]
      %v473 = vld [vmem:[%s1 + $0x9c] sm:$0xf]
      %v474 = vld [vmem:[%s1 + $0xa0] sm:$0xf]
      %v475 = vld [vmem:[%s1 + $0xa4] sm:$0xf]
      %v476 = vld [vmem:[%s1 + $0xa8] sm:$0xf]
      %v477 = vld [vmem:[%s1 + $0xac] sm:$0xf]
      %v478 = vld [vmem:[%s1 + $0xb0] sm:$0xf]
      %v479 = vld [vmem:[%s1 + $0xb4] sm:$0xf]
      %v480 = vld [vmem:[%s1 + $0xb8] sm:$0xf]
      %v481 = vld [vmem:[%s1 + $0xbc] sm:$0xf]
      %v482 = vld [vmem:[%s1 + $0xc0] sm:$0xf]
      %v483 = vld [vmem:[%s1 + $0xc4] sm:$0xf]
      %v484 = vld [vmem:[%s1 + $0xc8] sm:$0xf]
      %v485 = vld [vmem:[%s1 + $0xcc] sm:$0xf]
      %v486 = vld [vmem:[%s1 + $0xd0] sm:$0xf]
      %v487 = vld [vmem:[%s1 + $0xd4] sm:$0xf]
      %v488 = vld [vmem:[%s1 + $0xd8] sm:$0xf]
      %v489 = vld [vmem:[%s1 + $0xdc] sm:$0xf]
      %v490 = vld [vmem:[%s1 + $0xe0] sm:$0xf]
      %v491 = vld [vmem:[%s1 + $0xe4] sm:$0xf]
      %v492 = vld [vmem:[%s1 + $0xe8] sm:$0xf]
      %v493 = vld [vmem:[%s1 + $0xec] sm:$0xf]
      %v494 = vld [vmem:[%s1 + $0xf0] sm:$0xf]
      %v495 = vld [vmem:[%s1 + $0xf4] sm:$0xf]
      %v496 = vld [vmem:[%s1 + $0xf8] sm:$0xf]
      %v497 = vld [vmem:[%s1 + $0xfc] sm:$0xf]
      %v498 = vld [vmem:[%s2] sm:$0x1]
      %v500 = vlaneseq
      %v501 = vshrl.u32 %v500, 7
      %v502 = vsub.s32 0, %v501
      %v503 = vrot.slane %v498, %v502
      %v761 = vunpack.c.l.b16 %v178
      %v762 = vunpack.c.h.b16 %v178
      %v763 = vunpack.c.l.b16 %v179
      %v764 = vunpack.c.h.b16 %v179
      %v765 = vunpack.c.l.b16 %v180
      %v766 = vunpack.c.h.b16 %v180
      %v767 = vunpack.c.l.b16 %v181
      %v768 = vunpack.c.h.b16 %v181
      %v769 = vunpack.c.l.b16 %v182
      %v770 = vunpack.c.h.b16 %v182
      %v771 = vunpack.c.l.b16 %v183
      %v772 = vunpack.c.h.b16 %v183
      %v773 = vunpack.c.l.b16 %v184
      %v774 = vunpack.c.h.b16 %v184
      %v775 = vunpack.c.l.b16 %v185
      %v776 = vunpack.c.h.b16 %v185
      %v777 = vunpack.c.l.b16 %v186
      %v778 = vunpack.c.h.b16 %v186
      %v779 = vunpack.c.l.b16 %v187
      %v780 = vunpack.c.h.b16 %v187
      %v781 = vunpack.c.l.b16 %v188
      %v782 = vunpack.c.h.b16 %v188
      %v783 = vunpack.c.l.b16 %v189
      %v784 = vunpack.c.h.b16 %v189
      %v785 = vunpack.c.l.b16 %v190
      %v786 = vunpack.c.h.b16 %v190
      %v787 = vunpack.c.l.b16 %v191
      %v788 = vunpack.c.h.b16 %v191
      %v789 = vunpack.c.l.b16 %v192
      %v790 = vunpack.c.h.b16 %v192
      %v791 = vunpack.c.l.b16 %v193
      %v792 = vunpack.c.h.b16 %v193
      %v793 = vunpack.c.l.b16 %v194
      %v794 = vunpack.c.h.b16 %v194
      %v795 = vunpack.c.l.b16 %v195
      %v796 = vunpack.c.h.b16 %v195
      %v797 = vunpack.c.l.b16 %v196
      %v798 = vunpack.c.h.b16 %v196
      %v799 = vunpack.c.l.b16 %v197
      %v800 = vunpack.c.h.b16 %v197
      %v801 = vunpack.c.l.b16 %v198
      %v802 = vunpack.c.h.b16 %v198
      %v803 = vunpack.c.l.b16 %v199
      %v804 = vunpack.c.h.b16 %v199
      %v805 = vunpack.c.l.b16 %v200
      %v806 = vunpack.c.h.b16 %v200
      %v807 = vunpack.c.l.b16 %v201
      %v808 = vunpack.c.h.b16 %v201
      %v809 = vunpack.c.l.b16 %v202
      %v810 = vunpack.c.h.b16 %v202
      %v811 = vunpack.c.l.b16 %v203
      %v812 = vunpack.c.h.b16 %v203
      %v813 = vunpack.c.l.b16 %v204
      %v814 = vunpack.c.h.b16 %v204
      %v815 = vunpack.c.l.b16 %v205
      %v816 = vunpack.c.h.b16 %v205
      %v817 = vunpack.c.l.b16 %v206
      %v818 = vunpack.c.h.b16 %v206
      %v819 = vunpack.c.l.b16 %v207
      %v820 = vunpack.c.h.b16 %v207
      %v821 = vunpack.c.l.b16 %v208
      %v822 = vunpack.c.h.b16 %v208
      %v823 = vunpack.c.l.b16 %v209
      %v824 = vunpack.c.h.b16 %v209
      %v825 = vunpack.c.l.b16 %v210
      %v826 = vunpack.c.h.b16 %v210
      %v827 = vunpack.c.l.b16 %v211
      %v828 = vunpack.c.h.b16 %v211
      %v829 = vunpack.c.l.b16 %v212
      %v830 = vunpack.c.h.b16 %v212
      %v831 = vunpack.c.l.b16 %v213
      %v832 = vunpack.c.h.b16 %v213
      %v833 = vunpack.c.l.b16 %v214
      %v834 = vunpack.c.h.b16 %v214
      %v835 = vunpack.c.l.b16 %v215
      %v836 = vunpack.c.h.b16 %v215
      %v837 = vunpack.c.l.b16 %v216
      %v838 = vunpack.c.h.b16 %v216
      %v839 = vunpack.c.l.b16 %v217
      %v840 = vunpack.c.h.b16 %v217
      %v841 = vunpack.c.l.b16 %v218
      %v842 = vunpack.c.h.b16 %v218
      %v843 = vunpack.c.l.b16 %v219
      %v844 = vunpack.c.h.b16 %v219
      %v845 = vunpack.c.l.b16 %v220
      %v846 = vunpack.c.h.b16 %v220
      %v847 = vunpack.c.l.b16 %v221
      %v848 = vunpack.c.h.b16 %v221
      %v849 = vunpack.c.l.b16 %v222
      %v850 = vunpack.c.h.b16 %v222
      %v851 = vunpack.c.l.b16 %v223
      %v852 = vunpack.c.h.b16 %v223
      %v853 = vunpack.c.l.b16 %v224
      %v854 = vunpack.c.h.b16 %v224
      %v855 = vunpack.c.l.b16 %v225
      %v856 = vunpack.c.h.b16 %v225
      %v857 = vunpack.c.l.b16 %v226
      %v858 = vunpack.c.h.b16 %v226
      %v859 = vunpack.c.l.b16 %v227
      %v860 = vunpack.c.h.b16 %v227
      %v861 = vunpack.c.l.b16 %v228
      %v862 = vunpack.c.h.b16 %v228
      %v863 = vunpack.c.l.b16 %v229
      %v864 = vunpack.c.h.b16 %v229
      %v865 = vunpack.c.l.b16 %v230
      %v866 = vunpack.c.h.b16 %v230
      %v867 = vunpack.c.l.b16 %v231
      %v868 = vunpack.c.h.b16 %v231
      %v869 = vunpack.c.l.b16 %v232
      %v870 = vunpack.c.h.b16 %v232
      %v871 = vunpack.c.l.b16 %v233
      %v872 = vunpack.c.h.b16 %v233
      %v873 = vunpack.c.l.b16 %v234
      %v874 = vunpack.c.h.b16 %v234
      %v875 = vunpack.c.l.b16 %v235
      %v876 = vunpack.c.h.b16 %v235
      %v877 = vunpack.c.l.b16 %v236
      %v878 = vunpack.c.h.b16 %v236
      %v879 = vunpack.c.l.b16 %v237
      %v880 = vunpack.c.h.b16 %v237
      %v881 = vunpack.c.l.b16 %v238
      %v882 = vunpack.c.h.b16 %v238
      %v883 = vunpack.c.l.b16 %v239
      %v884 = vunpack.c.h.b16 %v239
      %v885 = vunpack.c.l.b16 %v240
      %v886 = vunpack.c.h.b16 %v240
      %v887 = vunpack.c.l.b16 %v241
      %v888 = vunpack.c.h.b16 %v241
      %v889 = vunpack.c.l.b16 %v242
      %v890 = vunpack.c.h.b16 %v242
      %v891 = vunpack.c.l.b16 %v243
      %v892 = vunpack.c.h.b16 %v243
      %v893 = vunpack.c.l.b16 %v244
      %v894 = vunpack.c.h.b16 %v244
      %v895 = vunpack.c.l.b16 %v245
      %v896 = vunpack.c.h.b16 %v245
      %v897 = vunpack.c.l.b16 %v246
      %v898 = vunpack.c.h.b16 %v246
      %v899 = vunpack.c.l.b16 %v247
      %v900 = vunpack.c.h.b16 %v247
      %v901 = vunpack.c.l.b16 %v248
      %v902 = vunpack.c.h.b16 %v248
      %v903 = vunpack.c.l.b16 %v249
      %v904 = vunpack.c.h.b16 %v249
      %v905 = vunpack.c.l.b16 %v250
      %v906 = vunpack.c.h.b16 %v250
      %v907 = vunpack.c.l.b16 %v251
      %v908 = vunpack.c.h.b16 %v251
      %v909 = vunpack.c.l.b16 %v252
      %v910 = vunpack.c.h.b16 %v252
      %v911 = vunpack.c.l.b16 %v253
      %v912 = vunpack.c.h.b16 %v253
      %v913 = vunpack.c.l.b16 %v254
      %v914 = vunpack.c.h.b16 %v254
      %v915 = vunpack.c.l.b16 %v255
      %v916 = vunpack.c.h.b16 %v255
      %v917 = vunpack.c.l.b16 %v256
      %v918 = vunpack.c.h.b16 %v256
      %v919 = vunpack.c.l.b16 %v257
      %v920 = vunpack.c.h.b16 %v257
      %v921 = vunpack.c.l.b16 %v258
      %v922 = vunpack.c.h.b16 %v258
      %v923 = vunpack.c.l.b16 %v259
      %v924 = vunpack.c.h.b16 %v259
      %v925 = vunpack.c.l.b16 %v260
      %v926 = vunpack.c.h.b16 %v260
      %v927 = vunpack.c.l.b16 %v261
      %v928 = vunpack.c.h.b16 %v261
      %v929 = vunpack.c.l.b16 %v262
      %v930 = vunpack.c.h.b16 %v262
      %v931 = vunpack.c.l.b16 %v263
      %v932 = vunpack.c.h.b16 %v263
      %v933 = vunpack.c.l.b16 %v264
      %v934 = vunpack.c.h.b16 %v264
      %v935 = vunpack.c.l.b16 %v265
      %v936 = vunpack.c.h.b16 %v265
      %v937 = vunpack.c.l.b16 %v266
      %v938 = vunpack.c.h.b16 %v266
      %v939 = vunpack.c.l.b16 %v267
      %v940 = vunpack.c.h.b16 %v267
      %v941 = vunpack.c.l.b16 %v268
      %v942 = vunpack.c.h.b16 %v268
      %v943 = vunpack.c.l.b16 %v269
      %v944 = vunpack.c.h.b16 %v269
      %v945 = vunpack.c.l.b16 %v270
      %v946 = vunpack.c.h.b16 %v270
      %v947 = vunpack.c.l.b16 %v271
      %v948 = vunpack.c.h.b16 %v271
      %v949 = vunpack.c.l.b16 %v272
      %v950 = vunpack.c.h.b16 %v272
      %v951 = vunpack.c.l.b16 %v273
      %v952 = vunpack.c.h.b16 %v273
      %v953 = vunpack.c.l.b16 %v274
      %v954 = vunpack.c.h.b16 %v274
      %v955 = vunpack.c.l.b16 %v275
      %v956 = vunpack.c.h.b16 %v275
      %v957 = vunpack.c.l.b16 %v276
      %v958 = vunpack.c.h.b16 %v276
      %v959 = vunpack.c.l.b16 %v277
      %v960 = vunpack.c.h.b16 %v277
      %v961 = vunpack.c.l.b16 %v278
      %v962 = vunpack.c.h.b16 %v278
      %v963 = vunpack.c.l.b16 %v279
      %v964 = vunpack.c.h.b16 %v279
      %v965 = vunpack.c.l.b16 %v280
      %v966 = vunpack.c.h.b16 %v280
      %v967 = vunpack.c.l.b16 %v281
      %v968 = vunpack.c.h.b16 %v281
      %v969 = vunpack.c.l.b16 %v282
      %v970 = vunpack.c.h.b16 %v282
      %v971 = vunpack.c.l.b16 %v283
      %v972 = vunpack.c.h.b16 %v283
      %v973 = vunpack.c.l.b16 %v284
      %v974 = vunpack.c.h.b16 %v284
      %v975 = vunpack.c.l.b16 %v285
      %v976 = vunpack.c.h.b16 %v285
      %v977 = vunpack.c.l.b16 %v286
      %v978 = vunpack.c.h.b16 %v286
      %v979 = vunpack.c.l.b16 %v287
      %v980 = vunpack.c.h.b16 %v287
      %v981 = vunpack.c.l.b16 %v288
      %v982 = vunpack.c.h.b16 %v288
      %v983 = vunpack.c.l.b16 %v289
      %v984 = vunpack.c.h.b16 %v289
      %v985 = vunpack.c.l.b16 %v290
      %v986 = vunpack.c.h.b16 %v290
      %v987 = vunpack.c.l.b16 %v291
      %v988 = vunpack.c.h.b16 %v291
      %v989 = vunpack.c.l.b16 %v292
      %v990 = vunpack.c.h.b16 %v292
      %v991 = vunpack.c.l.b16 %v293
      %v992 = vunpack.c.h.b16 %v293
      %v993 = vunpack.c.l.b16 %v294
      %v994 = vunpack.c.h.b16 %v294
      %v995 = vunpack.c.l.b16 %v295
      %v996 = vunpack.c.h.b16 %v295
      %v997 = vunpack.c.l.b16 %v296
      %v998 = vunpack.c.h.b16 %v296
      %v999 = vunpack.c.l.b16 %v297
      %v1000 = vunpack.c.h.b16 %v297
      %v1001 = vunpack.c.l.b16 %v298
      %v1002 = vunpack.c.h.b16 %v298
      %v1003 = vunpack.c.l.b16 %v299
      %v1004 = vunpack.c.h.b16 %v299
      %v1005 = vunpack.c.l.b16 %v300
      %v1006 = vunpack.c.h.b16 %v300
      %v1007 = vunpack.c.l.b16 %v301
      %v1008 = vunpack.c.h.b16 %v301
      %v1009 = vunpack.c.l.b16 %v302
      %v1010 = vunpack.c.h.b16 %v302
      %v1011 = vunpack.c.l.b16 %v303
      %v1012 = vunpack.c.h.b16 %v303
      %v1013 = vunpack.c.l.b16 %v304
      %v1014 = vunpack.c.h.b16 %v304
      %v1015 = vunpack.c.l.b16 %v305
      %v1016 = vunpack.c.h.b16 %v305
      %v1017 = vunpack.c.l.b16 %v306
      %v1018 = vunpack.c.h.b16 %v306
      %v1019 = vunpack.c.l.b16 %v307
      %v1020 = vunpack.c.h.b16 %v307
      %v1021 = vunpack.c.l.b16 %v308
      %v1022 = vunpack.c.h.b16 %v308
      %v1023 = vunpack.c.l.b16 %v309
      %v1024 = vunpack.c.h.b16 %v309
      %v1025 = vunpack.c.l.b16 %v310
      %v1026 = vunpack.c.h.b16 %v310
      %v1027 = vunpack.c.l.b16 %v311
      %v1028 = vunpack.c.h.b16 %v311
      %v1029 = vunpack.c.l.b16 %v312
      %v1030 = vunpack.c.h.b16 %v312
      %v1031 = vunpack.c.l.b16 %v313
      %v1032 = vunpack.c.h.b16 %v313
      %v1033 = vunpack.c.l.b16 %v314
      %v1034 = vunpack.c.h.b16 %v314
      %v1035 = vunpack.c.l.b16 %v315
      %v1036 = vunpack.c.h.b16 %v315
      %v1037 = vunpack.c.l.b16 %v316
      %v1038 = vunpack.c.h.b16 %v316
      %v1039 = vunpack.c.l.b16 %v317
      %v1040 = vunpack.c.h.b16 %v317
      %v1041 = vunpack.c.l.b16 %v318
      %v1042 = vunpack.c.h.b16 %v318
      %v1043 = vunpack.c.l.b16 %v319
      %v1044 = vunpack.c.h.b16 %v319
      %v1045 = vunpack.c.l.b16 %v320
      %v1046 = vunpack.c.h.b16 %v320
      %v1047 = vunpack.c.l.b16 %v321
      %v1048 = vunpack.c.h.b16 %v321
      %v1049 = vunpack.c.l.b16 %v322
      %v1050 = vunpack.c.h.b16 %v322
      %v1051 = vunpack.c.l.b16 %v323
      %v1052 = vunpack.c.h.b16 %v323
      %v1053 = vunpack.c.l.b16 %v324
      %v1054 = vunpack.c.h.b16 %v324
      %v1055 = vunpack.c.l.b16 %v325
      %v1056 = vunpack.c.h.b16 %v325
      %v1057 = vunpack.c.l.b16 %v326
      %v1058 = vunpack.c.h.b16 %v326
      %v1059 = vunpack.c.l.b16 %v327
      %v1060 = vunpack.c.h.b16 %v327
      %v1061 = vunpack.c.l.b16 %v328
      %v1062 = vunpack.c.h.b16 %v328
      %v1063 = vunpack.c.l.b16 %v329
      %v1064 = vunpack.c.h.b16 %v329
      %v1065 = vunpack.c.l.b16 %v330
      %v1066 = vunpack.c.h.b16 %v330
      %v1067 = vunpack.c.l.b16 %v331
      %v1068 = vunpack.c.h.b16 %v331
      %v1069 = vunpack.c.l.b16 %v332
      %v1070 = vunpack.c.h.b16 %v332
      %v1071 = vunpack.c.l.b16 %v333
      %v1072 = vunpack.c.h.b16 %v333
      %v1073 = vunpack.c.l.b16 %v334
      %v1074 = vunpack.c.h.b16 %v334
      %v1075 = vunpack.c.l.b16 %v335
      %v1076 = vunpack.c.h.b16 %v335
      %v1077 = vunpack.c.l.b16 %v336
      %v1078 = vunpack.c.h.b16 %v336
      %v1079 = vunpack.c.l.b16 %v337
      %v1080 = vunpack.c.h.b16 %v337
      %v1081 = vunpack.c.l.b16 %v338
      %v1082 = vunpack.c.h.b16 %v338
      %v1083 = vunpack.c.l.b16 %v339
      %v1084 = vunpack.c.h.b16 %v339
      %v1085 = vunpack.c.l.b16 %v340
      %v1086 = vunpack.c.h.b16 %v340
      %v1087 = vunpack.c.l.b16 %v341
      %v1088 = vunpack.c.h.b16 %v341
      %v1089 = vunpack.c.l.b16 %v342
      %v1090 = vunpack.c.h.b16 %v342
      %v1091 = vunpack.c.l.b16 %v343
      %v1092 = vunpack.c.h.b16 %v343
      %v1093 = vunpack.c.l.b16 %v344
      %v1094 = vunpack.c.h.b16 %v344
      %v1095 = vunpack.c.l.b16 %v345
      %v1096 = vunpack.c.h.b16 %v345
      %v1097 = vunpack.c.l.b16 %v346
      %v1098 = vunpack.c.h.b16 %v346
      %v1099 = vunpack.c.l.b16 %v347
      %v1100 = vunpack.c.h.b16 %v347
      %v1101 = vunpack.c.l.b16 %v348
      %v1102 = vunpack.c.h.b16 %v348
      %v1103 = vunpack.c.l.b16 %v349
      %v1104 = vunpack.c.h.b16 %v349
      %v1105 = vunpack.c.l.b16 %v350
      %v1106 = vunpack.c.h.b16 %v350
      %v1107 = vunpack.c.l.b16 %v351
      %v1108 = vunpack.c.h.b16 %v351
      %v1109 = vunpack.c.l.b16 %v352
      %v1110 = vunpack.c.h.b16 %v352
      %v1111 = vunpack.c.l.b16 %v353
      %v1112 = vunpack.c.h.b16 %v353
      %v1113 = vunpack.c.l.b16 %v354
      %v1114 = vunpack.c.h.b16 %v354
      %v1115 = vunpack.c.l.b16 %v355
      %v1116 = vunpack.c.h.b16 %v355
      %v1117 = vunpack.c.l.b16 %v356
      %v1118 = vunpack.c.h.b16 %v356
      %v1119 = vunpack.c.l.b16 %v357
      %v1120 = vunpack.c.h.b16 %v357
      %v1121 = vunpack.c.l.b16 %v358
      %v1122 = vunpack.c.h.b16 %v358
      %v1123 = vunpack.c.l.b16 %v359
      %v1124 = vunpack.c.h.b16 %v359
      %v1125 = vunpack.c.l.b16 %v360
      %v1126 = vunpack.c.h.b16 %v360
      %v1127 = vunpack.c.l.b16 %v361
      %v1128 = vunpack.c.h.b16 %v361
      %v1129 = vunpack.c.l.b16 %v362
      %v1130 = vunpack.c.h.b16 %v362
      %v1131 = vunpack.c.l.b16 %v363
      %v1132 = vunpack.c.h.b16 %v363
      %v1133 = vunpack.c.l.b16 %v364
      %v1134 = vunpack.c.h.b16 %v364
      %v1135 = vunpack.c.l.b16 %v365
      %v1136 = vunpack.c.h.b16 %v365
      %v1137 = vunpack.c.l.b16 %v366
      %v1138 = vunpack.c.h.b16 %v366
      %v1139 = vunpack.c.l.b16 %v367
      %v1140 = vunpack.c.h.b16 %v367
      %v1141 = vunpack.c.l.b16 %v368
      %v1142 = vunpack.c.h.b16 %v368
      %v1143 = vunpack.c.l.b16 %v369
      %v1144 = vunpack.c.h.b16 %v369
      %v1145 = vunpack.c.l.b16 %v370
      %v1146 = vunpack.c.h.b16 %v370
      %v1147 = vunpack.c.l.b16 %v371
      %v1148 = vunpack.c.h.b16 %v371
      %v1149 = vunpack.c.l.b16 %v372
      %v1150 = vunpack.c.h.b16 %v372
      %v1151 = vunpack.c.l.b16 %v373
      %v1152 = vunpack.c.h.b16 %v373
      %v1153 = vunpack.c.l.b16 %v374
      %v1154 = vunpack.c.h.b16 %v374
      %v1155 = vunpack.c.l.b16 %v375
      %v1156 = vunpack.c.h.b16 %v375
      %v1157 = vunpack.c.l.b16 %v376
      %v1158 = vunpack.c.h.b16 %v376
      %v1159 = vunpack.c.l.b16 %v377
      %v1160 = vunpack.c.h.b16 %v377
      %v1161 = vunpack.c.l.b16 %v378
      %v1162 = vunpack.c.h.b16 %v378
      %v1163 = vunpack.c.l.b16 %v379
      %v1164 = vunpack.c.h.b16 %v379
      %v1165 = vunpack.c.l.b16 %v380
      %v1166 = vunpack.c.h.b16 %v380
      %v1167 = vunpack.c.l.b16 %v381
      %v1168 = vunpack.c.h.b16 %v381
      %v1169 = vunpack.c.l.b16 %v382
      %v1170 = vunpack.c.h.b16 %v382
      %v1171 = vunpack.c.l.b16 %v383
      %v1172 = vunpack.c.h.b16 %v383
      %v1173 = vunpack.c.l.b16 %v384
      %v1174 = vunpack.c.h.b16 %v384
      %v1175 = vunpack.c.l.b16 %v385
      %v1176 = vunpack.c.h.b16 %v385
      %v1177 = vunpack.c.l.b16 %v386
      %v1178 = vunpack.c.h.b16 %v386
      %v1179 = vunpack.c.l.b16 %v387
      %v1180 = vunpack.c.h.b16 %v387
      %v1181 = vunpack.c.l.b16 %v388
      %v1182 = vunpack.c.h.b16 %v388
      %v1183 = vunpack.c.l.b16 %v389
      %v1184 = vunpack.c.h.b16 %v389
      %v1185 = vunpack.c.l.b16 %v390
      %v1186 = vunpack.c.h.b16 %v390
      %v1187 = vunpack.c.l.b16 %v391
      %v1188 = vunpack.c.h.b16 %v391
      %v1189 = vunpack.c.l.b16 %v392
      %v1190 = vunpack.c.h.b16 %v392
      %v1191 = vunpack.c.l.b16 %v393
      %v1192 = vunpack.c.h.b16 %v393
      %v1193 = vunpack.c.l.b16 %v394
      %v1194 = vunpack.c.h.b16 %v394
      %v1195 = vunpack.c.l.b16 %v395
      %v1196 = vunpack.c.h.b16 %v395
      %v1197 = vunpack.c.l.b16 %v396
      %v1198 = vunpack.c.h.b16 %v396
      %v1199 = vunpack.c.l.b16 %v397
      %v1200 = vunpack.c.h.b16 %v397
      %v1201 = vunpack.c.l.b16 %v398
      %v1202 = vunpack.c.h.b16 %v398
      %v1203 = vunpack.c.l.b16 %v399
      %v1204 = vunpack.c.h.b16 %v399
      %v1205 = vunpack.c.l.b16 %v400
      %v1206 = vunpack.c.h.b16 %v400
      %v1207 = vunpack.c.l.b16 %v401
      %v1208 = vunpack.c.h.b16 %v401
      %v1209 = vunpack.c.l.b16 %v402
      %v1210 = vunpack.c.h.b16 %v402
      %v1211 = vunpack.c.l.b16 %v403
      %v1212 = vunpack.c.h.b16 %v403
      %v1213 = vunpack.c.l.b16 %v404
      %v1214 = vunpack.c.h.b16 %v404
      %v1215 = vunpack.c.l.b16 %v405
      %v1216 = vunpack.c.h.b16 %v405
      %v1217 = vunpack.c.l.b16 %v406
      %v1218 = vunpack.c.h.b16 %v406
      %v1219 = vunpack.c.l.b16 %v407
      %v1220 = vunpack.c.h.b16 %v407
      %v1221 = vunpack.c.l.b16 %v408
      %v1222 = vunpack.c.h.b16 %v408
      %v1223 = vunpack.c.l.b16 %v409
      %v1224 = vunpack.c.h.b16 %v409
      %v1225 = vunpack.c.l.b16 %v410
      %v1226 = vunpack.c.h.b16 %v410
      %v1227 = vunpack.c.l.b16 %v411
      %v1228 = vunpack.c.h.b16 %v411
      %v1229 = vunpack.c.l.b16 %v412
      %v1230 = vunpack.c.h.b16 %v412
      %v1231 = vunpack.c.l.b16 %v413
      %v1232 = vunpack.c.h.b16 %v413
      %v1233 = vunpack.c.l.b16 %v414
      %v1234 = vunpack.c.h.b16 %v414
      %v1235 = vunpack.c.l.b16 %v415
      %v1236 = vunpack.c.h.b16 %v415
      %v1237 = vunpack.c.l.b16 %v416
      %v1238 = vunpack.c.h.b16 %v416
      %v1239 = vunpack.c.l.b16 %v417
      %v1240 = vunpack.c.h.b16 %v417
      %v1241 = vunpack.c.l.b16 %v418
      %v1242 = vunpack.c.h.b16 %v418
      %v1243 = vunpack.c.l.b16 %v419
      %v1244 = vunpack.c.h.b16 %v419
      %v1245 = vunpack.c.l.b16 %v420
      %v1246 = vunpack.c.h.b16 %v420
      %v1247 = vunpack.c.l.b16 %v421
      %v1248 = vunpack.c.h.b16 %v421
      %v1249 = vunpack.c.l.b16 %v422
      %v1250 = vunpack.c.h.b16 %v422
      %v1251 = vunpack.c.l.b16 %v423
      %v1252 = vunpack.c.h.b16 %v423
      %v1253 = vunpack.c.l.b16 %v424
      %v1254 = vunpack.c.h.b16 %v424
      %v1255 = vunpack.c.l.b16 %v425
      %v1256 = vunpack.c.h.b16 %v425
      %v1257 = vunpack.c.l.b16 %v426
      %v1258 = vunpack.c.h.b16 %v426
      %v1259 = vunpack.c.l.b16 %v427
      %v1260 = vunpack.c.h.b16 %v427
      %v1261 = vunpack.c.l.b16 %v428
      %v1262 = vunpack.c.h.b16 %v428
      %v1263 = vunpack.c.l.b16 %v429
      %v1264 = vunpack.c.h.b16 %v429
      %v1265 = vunpack.c.l.b16 %v430
      %v1266 = vunpack.c.h.b16 %v430
      %v1267 = vunpack.c.l.b16 %v431
      %v1268 = vunpack.c.h.b16 %v431
      %v1269 = vunpack.c.l.b16 %v432
      %v1270 = vunpack.c.h.b16 %v432
      %v1271 = vunpack.c.l.b16 %v433
      %v1272 = vunpack.c.h.b16 %v433
      %v1273 = vpack.c.b16 %v765, %v761
      %v1274 = vpack.c.b16 %v766, %v762
      %v1275 = vpack.c.b16 %v767, %v763
      %v1276 = vpack.c.b16 %v768, %v764
      %v1277 = vpack.c.b16 %v773, %v769
      %v1278 = vpack.c.b16 %v774, %v770
      %v1279 = vpack.c.b16 %v775, %v771
      %v1280 = vpack.c.b16 %v776, %v772
      %v1281 = vpack.c.b16 %v781, %v777
      %v1282 = vpack.c.b16 %v782, %v778
      %v1283 = vpack.c.b16 %v783, %v779
      %v1284 = vpack.c.b16 %v784, %v780
      %v1285 = vpack.c.b16 %v789, %v785
      %v1286 = vpack.c.b16 %v790, %v786
      %v1287 = vpack.c.b16 %v791, %v787
      %v1288 = vpack.c.b16 %v792, %v788
      %v1289 = vpack.c.b16 %v797, %v793
      %v1290 = vpack.c.b16 %v798, %v794
      %v1291 = vpack.c.b16 %v799, %v795
      %v1292 = vpack.c.b16 %v800, %v796
      %v1293 = vpack.c.b16 %v805, %v801
      %v1294 = vpack.c.b16 %v806, %v802
      %v1295 = vpack.c.b16 %v807, %v803
      %v1296 = vpack.c.b16 %v808, %v804
      %v1297 = vpack.c.b16 %v813, %v809
      %v1298 = vpack.c.b16 %v814, %v810
      %v1299 = vpack.c.b16 %v815, %v811
      %v1300 = vpack.c.b16 %v816, %v812
      %v1301 = vpack.c.b16 %v821, %v817
      %v1302 = vpack.c.b16 %v822, %v818
      %v1303 = vpack.c.b16 %v823, %v819
      %v1304 = vpack.c.b16 %v824, %v820
      %v1305 = vpack.c.b16 %v829, %v825
      %v1306 = vpack.c.b16 %v830, %v826
      %v1307 = vpack.c.b16 %v831, %v827
      %v1308 = vpack.c.b16 %v832, %v828
      %v1309 = vpack.c.b16 %v837, %v833
      %v1310 = vpack.c.b16 %v838, %v834
      %v1311 = vpack.c.b16 %v839, %v835
      %v1312 = vpack.c.b16 %v840, %v836
      %v1313 = vpack.c.b16 %v845, %v841
      %v1314 = vpack.c.b16 %v846, %v842
      %v1315 = vpack.c.b16 %v847, %v843
      %v1316 = vpack.c.b16 %v848, %v844
      %v1317 = vpack.c.b16 %v853, %v849
      %v1318 = vpack.c.b16 %v854, %v850
      %v1319 = vpack.c.b16 %v855, %v851
      %v1320 = vpack.c.b16 %v856, %v852
      %v1321 = vpack.c.b16 %v861, %v857
      %v1322 = vpack.c.b16 %v862, %v858
      %v1323 = vpack.c.b16 %v863, %v859
      %v1324 = vpack.c.b16 %v864, %v860
      %v1325 = vpack.c.b16 %v869, %v865
      %v1326 = vpack.c.b16 %v870, %v866
      %v1327 = vpack.c.b16 %v871, %v867
      %v1328 = vpack.c.b16 %v872, %v868
      %v1329 = vpack.c.b16 %v877, %v873
      %v1330 = vpack.c.b16 %v878, %v874
      %v1331 = vpack.c.b16 %v879, %v875
      %v1332 = vpack.c.b16 %v880, %v876
      %v1333 = vpack.c.b16 %v885, %v881
      %v1334 = vpack.c.b16 %v886, %v882
      %v1335 = vpack.c.b16 %v887, %v883
      %v1336 = vpack.c.b16 %v888, %v884
      %v1337 = vpack.c.b16 %v893, %v889
      %v1338 = vpack.c.b16 %v894, %v890
      %v1339 = vpack.c.b16 %v895, %v891
      %v1340 = vpack.c.b16 %v896, %v892
      %v1341 = vpack.c.b16 %v901, %v897
      %v1342 = vpack.c.b16 %v902, %v898
      %v1343 = vpack.c.b16 %v903, %v899
      %v1344 = vpack.c.b16 %v904, %v900
      %v1345 = vpack.c.b16 %v909, %v905
      %v1346 = vpack.c.b16 %v910, %v906
      %v1347 = vpack.c.b16 %v911, %v907
      %v1348 = vpack.c.b16 %v912, %v908
      %v1349 = vpack.c.b16 %v917, %v913
      %v1350 = vpack.c.b16 %v918, %v914
      %v1351 = vpack.c.b16 %v919, %v915
      %v1352 = vpack.c.b16 %v920, %v916
      %v1353 = vpack.c.b16 %v925, %v921
      %v1354 = vpack.c.b16 %v926, %v922
      %v1355 = vpack.c.b16 %v927, %v923
      %v1356 = vpack.c.b16 %v928, %v924
      %v1357 = vpack.c.b16 %v933, %v929
      %v1358 = vpack.c.b16 %v934, %v930
      %v1359 = vpack.c.b16 %v935, %v931
      %v1360 = vpack.c.b16 %v936, %v932
      %v1361 = vpack.c.b16 %v941, %v937
      %v1362 = vpack.c.b16 %v942, %v938
      %v1363 = vpack.c.b16 %v943, %v939
      %v1364 = vpack.c.b16 %v944, %v940
      %v1365 = vpack.c.b16 %v949, %v945
      %v1366 = vpack.c.b16 %v950, %v946
      %v1367 = vpack.c.b16 %v951, %v947
      %v1368 = vpack.c.b16 %v952, %v948
      %v1369 = vpack.c.b16 %v957, %v953
      %v1370 = vpack.c.b16 %v958, %v954
      %v1371 = vpack.c.b16 %v959, %v955
      %v1372 = vpack.c.b16 %v960, %v956
      %v1373 = vpack.c.b16 %v965, %v961
      %v1374 = vpack.c.b16 %v966, %v962
      %v1375 = vpack.c.b16 %v967, %v963
      %v1376 = vpack.c.b16 %v968, %v964
      %v1377 = vpack.c.b16 %v973, %v969
      %v1378 = vpack.c.b16 %v974, %v970
      %v1379 = vpack.c.b16 %v975, %v971
      %v1380 = vpack.c.b16 %v976, %v972
      %v1381 = vpack.c.b16 %v981, %v977
      %v1382 = vpack.c.b16 %v982, %v978
      %v1383 = vpack.c.b16 %v983, %v979
      %v1384 = vpack.c.b16 %v984, %v980
      %v1385 = vpack.c.b16 %v989, %v985
      %v1386 = vpack.c.b16 %v990, %v986
      %v1387 = vpack.c.b16 %v991, %v987
      %v1388 = vpack.c.b16 %v992, %v988
      %v1389 = vpack.c.b16 %v997, %v993
      %v1390 = vpack.c.b16 %v998, %v994
      %v1391 = vpack.c.b16 %v999, %v995
      %v1392 = vpack.c.b16 %v1000, %v996
      %v1393 = vpack.c.b16 %v1005, %v1001
      %v1394 = vpack.c.b16 %v1006, %v1002
      %v1395 = vpack.c.b16 %v1007, %v1003
      %v1396 = vpack.c.b16 %v1008, %v1004
      %v1397 = vpack.c.b16 %v1013, %v1009
      %v1398 = vpack.c.b16 %v1014, %v1010
      %v1399 = vpack.c.b16 %v1015, %v1011
      %v1400 = vpack.c.b16 %v1016, %v1012
      %v1401 = vpack.c.b16 %v1021, %v1017
      %v1402 = vpack.c.b16 %v1022, %v1018
      %v1403 = vpack.c.b16 %v1023, %v1019
      %v1404 = vpack.c.b16 %v1024, %v1020
      %v1405 = vpack.c.b16 %v1029, %v1025
      %v1406 = vpack.c.b16 %v1030, %v1026
      %v1407 = vpack.c.b16 %v1031, %v1027
      %v1408 = vpack.c.b16 %v1032, %v1028
      %v1409 = vpack.c.b16 %v1037, %v1033
      %v1410 = vpack.c.b16 %v1038, %v1034
      %v1411 = vpack.c.b16 %v1039, %v1035
      %v1412 = vpack.c.b16 %v1040, %v1036
      %v1413 = vpack.c.b16 %v1045, %v1041
      %v1414 = vpack.c.b16 %v1046, %v1042
      %v1415 = vpack.c.b16 %v1047, %v1043
      %v1416 = vpack.c.b16 %v1048, %v1044
      %v1417 = vpack.c.b16 %v1053, %v1049
      %v1418 = vpack.c.b16 %v1054, %v1050
      %v1419 = vpack.c.b16 %v1055, %v1051
      %v1420 = vpack.c.b16 %v1056, %v1052
      %v1421 = vpack.c.b16 %v1061, %v1057
      %v1422 = vpack.c.b16 %v1062, %v1058
      %v1423 = vpack.c.b16 %v1063, %v1059
      %v1424 = vpack.c.b16 %v1064, %v1060
      %v1425 = vpack.c.b16 %v1069, %v1065
      %v1426 = vpack.c.b16 %v1070, %v1066
      %v1427 = vpack.c.b16 %v1071, %v1067
      %v1428 = vpack.c.b16 %v1072, %v1068
      %v1429 = vpack.c.b16 %v1077, %v1073
      %v1430 = vpack.c.b16 %v1078, %v1074
      %v1431 = vpack.c.b16 %v1079, %v1075
      %v1432 = vpack.c.b16 %v1080, %v1076
      %v1433 = vpack.c.b16 %v1085, %v1081
      %v1434 = vpack.c.b16 %v1086, %v1082
      %v1435 = vpack.c.b16 %v1087, %v1083
      %v1436 = vpack.c.b16 %v1088, %v1084
      %v1437 = vpack.c.b16 %v1093, %v1089
      %v1438 = vpack.c.b16 %v1094, %v1090
      %v1439 = vpack.c.b16 %v1095, %v1091
      %v1440 = vpack.c.b16 %v1096, %v1092
      %v1441 = vpack.c.b16 %v1101, %v1097
      %v1442 = vpack.c.b16 %v1102, %v1098
      %v1443 = vpack.c.b16 %v1103, %v1099
      %v1444 = vpack.c.b16 %v1104, %v1100
      %v1445 = vpack.c.b16 %v1109, %v1105
      %v1446 = vpack.c.b16 %v1110, %v1106
      %v1447 = vpack.c.b16 %v1111, %v1107
      %v1448 = vpack.c.b16 %v1112, %v1108
      %v1449 = vpack.c.b16 %v1117, %v1113
      %v1450 = vpack.c.b16 %v1118, %v1114
      %v1451 = vpack.c.b16 %v1119, %v1115
      %v1452 = vpack.c.b16 %v1120, %v1116
      %v1453 = vpack.c.b16 %v1125, %v1121
      %v1454 = vpack.c.b16 %v1126, %v1122
      %v1455 = vpack.c.b16 %v1127, %v1123
      %v1456 = vpack.c.b16 %v1128, %v1124
      %v1457 = vpack.c.b16 %v1133, %v1129
      %v1458 = vpack.c.b16 %v1134, %v1130
      %v1459 = vpack.c.b16 %v1135, %v1131
      %v1460 = vpack.c.b16 %v1136, %v1132
      %v1461 = vpack.c.b16 %v1141, %v1137
      %v1462 = vpack.c.b16 %v1142, %v1138
      %v1463 = vpack.c.b16 %v1143, %v1139
      %v1464 = vpack.c.b16 %v1144, %v1140
      %v1465 = vpack.c.b16 %v1149, %v1145
      %v1466 = vpack.c.b16 %v1150, %v1146
      %v1467 = vpack.c.b16 %v1151, %v1147
      %v1468 = vpack.c.b16 %v1152, %v1148
      %v1469 = vpack.c.b16 %v1157, %v1153
      %v1470 = vpack.c.b16 %v1158, %v1154
      %v1471 = vpack.c.b16 %v1159, %v1155
      %v1472 = vpack.c.b16 %v1160, %v1156
      %v1473 = vpack.c.b16 %v1165, %v1161
      %v1474 = vpack.c.b16 %v1166, %v1162
      %v1475 = vpack.c.b16 %v1167, %v1163
      %v1476 = vpack.c.b16 %v1168, %v1164
      %v1477 = vpack.c.b16 %v1173, %v1169
      %v1478 = vpack.c.b16 %v1174, %v1170
      %v1479 = vpack.c.b16 %v1175, %v1171
      %v1480 = vpack.c.b16 %v1176, %v1172
      %v1481 = vpack.c.b16 %v1181, %v1177
      %v1482 = vpack.c.b16 %v1182, %v1178
      %v1483 = vpack.c.b16 %v1183, %v1179
      %v1484 = vpack.c.b16 %v1184, %v1180
      %v1485 = vpack.c.b16 %v1189, %v1185
      %v1486 = vpack.c.b16 %v1190, %v1186
      %v1487 = vpack.c.b16 %v1191, %v1187
      %v1488 = vpack.c.b16 %v1192, %v1188
      %v1489 = vpack.c.b16 %v1197, %v1193
      %v1490 = vpack.c.b16 %v1198, %v1194
      %v1491 = vpack.c.b16 %v1199, %v1195
      %v1492 = vpack.c.b16 %v1200, %v1196
      %v1493 = vpack.c.b16 %v1205, %v1201
      %v1494 = vpack.c.b16 %v1206, %v1202
      %v1495 = vpack.c.b16 %v1207, %v1203
      %v1496 = vpack.c.b16 %v1208, %v1204
      %v1497 = vpack.c.b16 %v1213, %v1209
      %v1498 = vpack.c.b16 %v1214, %v1210
      %v1499 = vpack.c.b16 %v1215, %v1211
      %v1500 = vpack.c.b16 %v1216, %v1212
      %v1501 = vpack.c.b16 %v1221, %v1217
      %v1502 = vpack.c.b16 %v1222, %v1218
      %v1503 = vpack.c.b16 %v1223, %v1219
      %v1504 = vpack.c.b16 %v1224, %v1220
      %v1505 = vpack.c.b16 %v1229, %v1225
      %v1506 = vpack.c.b16 %v1230, %v1226
      %v1507 = vpack.c.b16 %v1231, %v1227
      %v1508 = vpack.c.b16 %v1232, %v1228
      %v1509 = vpack.c.b16 %v1237, %v1233
      %v1510 = vpack.c.b16 %v1238, %v1234
      %v1511 = vpack.c.b16 %v1239, %v1235
      %v1512 = vpack.c.b16 %v1240, %v1236
      %v1513 = vpack.c.b16 %v1245, %v1241
      %v1514 = vpack.c.b16 %v1246, %v1242
      %v1515 = vpack.c.b16 %v1247, %v1243
      %v1516 = vpack.c.b16 %v1248, %v1244
      %v1517 = vpack.c.b16 %v1253, %v1249
      %v1518 = vpack.c.b16 %v1254, %v1250
      %v1519 = vpack.c.b16 %v1255, %v1251
      %v1520 = vpack.c.b16 %v1256, %v1252
      %v1521 = vpack.c.b16 %v1261, %v1257
      %v1522 = vpack.c.b16 %v1262, %v1258
      %v1523 = vpack.c.b16 %v1263, %v1259
      %v1524 = vpack.c.b16 %v1264, %v1260
      %v1525 = vpack.c.b16 %v1269, %v1265
      %v1526 = vpack.c.b16 %v1270, %v1266
      %v1527 = vpack.c.b16 %v1271, %v1267
      %v1528 = vpack.c.b16 %v1272, %v1268
      %v1849 = vunpack.c.l.b16 %v434
      %v1850 = vunpack.c.l.b16 %v435
      %v1851 = vunpack.c.l.b16 %v436
      %v1852 = vunpack.c.l.b16 %v437
      %v1853 = vunpack.c.l.b16 %v438
      %v1854 = vunpack.c.l.b16 %v439
      %v1855 = vunpack.c.l.b16 %v440
      %v1856 = vunpack.c.l.b16 %v441
      %v1857 = vunpack.c.l.b16 %v442
      %v1858 = vunpack.c.l.b16 %v443
      %v1859 = vunpack.c.l.b16 %v444
      %v1860 = vunpack.c.l.b16 %v445
      %v1861 = vunpack.c.l.b16 %v446
      %v1862 = vunpack.c.l.b16 %v447
      %v1863 = vunpack.c.l.b16 %v448
      %v1864 = vunpack.c.l.b16 %v449
      %v1865 = vunpack.c.l.b16 %v450
      %v1866 = vunpack.c.l.b16 %v451
      %v1867 = vunpack.c.l.b16 %v452
      %v1868 = vunpack.c.l.b16 %v453
      %v1869 = vunpack.c.l.b16 %v454
      %v1870 = vunpack.c.l.b16 %v455
      %v1871 = vunpack.c.l.b16 %v456
      %v1872 = vunpack.c.l.b16 %v457
      %v1873 = vunpack.c.l.b16 %v458
      %v1874 = vunpack.c.l.b16 %v459
      %v1875 = vunpack.c.l.b16 %v460
      %v1876 = vunpack.c.l.b16 %v461
      %v1877 = vunpack.c.l.b16 %v462
      %v1878 = vunpack.c.l.b16 %v463
      %v1879 = vunpack.c.l.b16 %v464
      %v1880 = vunpack.c.l.b16 %v465
      %v1881 = vunpack.c.l.b16 %v466
      %v1882 = vunpack.c.l.b16 %v467
      %v1883 = vunpack.c.l.b16 %v468
      %v1884 = vunpack.c.l.b16 %v469
      %v1885 = vunpack.c.l.b16 %v470
      %v1886 = vunpack.c.l.b16 %v471
      %v1887 = vunpack.c.l.b16 %v472
      %v1888 = vunpack.c.l.b16 %v473
      %v1889 = vunpack.c.l.b16 %v474
      %v1890 = vunpack.c.l.b16 %v475
      %v1891 = vunpack.c.l.b16 %v476
      %v1892 = vunpack.c.l.b16 %v477
      %v1893 = vunpack.c.l.b16 %v478
      %v1894 = vunpack.c.l.b16 %v479
      %v1895 = vunpack.c.l.b16 %v480
      %v1896 = vunpack.c.l.b16 %v481
      %v1897 = vunpack.c.l.b16 %v482
      %v1898 = vunpack.c.l.b16 %v483
      %v1899 = vunpack.c.l.b16 %v484
      %v1900 = vunpack.c.l.b16 %v485
      %v1901 = vunpack.c.l.b16 %v486
      %v1902 = vunpack.c.l.b16 %v487
      %v1903 = vunpack.c.l.b16 %v488
      %v1904 = vunpack.c.l.b16 %v489
      %v1905 = vunpack.c.l.b16 %v490
      %v1906 = vunpack.c.l.b16 %v491
      %v1907 = vunpack.c.l.b16 %v492
      %v1908 = vunpack.c.l.b16 %v493
      %v1909 = vunpack.c.l.b16 %v494
      %v1910 = vunpack.c.l.b16 %v495
      %v1911 = vunpack.c.l.b16 %v496
      %v1912 = vunpack.c.l.b16 %v497
      %v1913 = vpack.c.b16 %v1850, %v1849
      %v1914 = vpack.c.b16 %v1852, %v1851
      %v1915 = vpack.c.b16 %v1854, %v1853
      %v1916 = vpack.c.b16 %v1856, %v1855
      %v1917 = vpack.c.b16 %v1858, %v1857
      %v1918 = vpack.c.b16 %v1860, %v1859
      %v1919 = vpack.c.b16 %v1862, %v1861
      %v1920 = vpack.c.b16 %v1864, %v1863
      %v1921 = vpack.c.b16 %v1866, %v1865
      %v1922 = vpack.c.b16 %v1868, %v1867
      %v1923 = vpack.c.b16 %v1870, %v1869
      %v1924 = vpack.c.b16 %v1872, %v1871
      %v1925 = vpack.c.b16 %v1874, %v1873
      %v1926 = vpack.c.b16 %v1876, %v1875
      %v1927 = vpack.c.b16 %v1878, %v1877
      %v1928 = vpack.c.b16 %v1880, %v1879
      %v1929 = vpack.c.b16 %v1882, %v1881
      %v1930 = vpack.c.b16 %v1884, %v1883
      %v1931 = vpack.c.b16 %v1886, %v1885
      %v1932 = vpack.c.b16 %v1888, %v1887
      %v1933 = vpack.c.b16 %v1890, %v1889
      %v1934 = vpack.c.b16 %v1892, %v1891
      %v1935 = vpack.c.b16 %v1894, %v1893
      %v1936 = vpack.c.b16 %v1896, %v1895
      %v1937 = vpack.c.b16 %v1898, %v1897
      %v1938 = vpack.c.b16 %v1900, %v1899
      %v1939 = vpack.c.b16 %v1902, %v1901
      %v1940 = vpack.c.b16 %v1904, %v1903
      %v1941 = vpack.c.b16 %v1906, %v1905
      %v1942 = vpack.c.b16 %v1908, %v1907
      %v1943 = vpack.c.b16 %v1910, %v1909
      %v1944 = vpack.c.b16 %v1912, %v1911
      %1977 = vmatprep.subr.bf16.mxu0 0
      %1978 = vmatpush1.bf16.msra.mxu0 %v1920
      %1979 = vmatprep.subr.bf16.mxu0 0
      %1980 = vmatpush1.bf16.msra.mxu0 %v1919
      %1981 = vmatprep.subr.bf16.mxu0 0
      %1982 = vmatpush1.bf16.msra.mxu0 %v1918
      %1983 = vmatprep.subr.bf16.mxu0 0
      %1984 = vmatpush1.bf16.msra.mxu0 %v1917
      %1985 = vmatprep.subr.bf16.mxu0 0
      %1986 = vmatpush1.bf16.msra.mxu0 %v1916
      %1987 = vmatprep.subr.bf16.mxu0 0
      %1988 = vmatpush1.bf16.msra.mxu0 %v1915
      %1989 = vmatprep.subr.bf16.mxu0 0
      %1990 = vmatpush1.bf16.msra.mxu0 %v1914
      %1991 = vmatprep.subr.bf16.mxu0 0
      %1992 = vmatpush1.bf16.msra.mxu0 %v1913
      %1993 = vmatprep.subr.bf16.mxu0 0
      %1994 = vmatpush2.bf16.msra.mxu0 %v1928
      %1995 = vmatprep.subr.bf16.mxu0 0
      %1996 = vmatpush2.bf16.msra.mxu0 %v1927
      %1997 = vmatprep.subr.bf16.mxu0 0
      %1998 = vmatpush2.bf16.msra.mxu0 %v1926
      %1999 = vmatprep.subr.bf16.mxu0 0
      %2000 = vmatpush2.bf16.msra.mxu0 %v1925
      %2001 = vmatprep.subr.bf16.mxu0 0
      %2002 = vmatpush2.bf16.msra.mxu0 %v1924
      %2003 = vmatprep.subr.bf16.mxu0 0
      %2004 = vmatpush2.bf16.msra.mxu0 %v1923
      %2005 = vmatprep.subr.bf16.mxu0 0
      %2006 = vmatpush2.bf16.msra.mxu0 %v1922
      %2007 = vmatprep.subr.bf16.mxu0 0
      %2008 = vmatpush2.bf16.msra.mxu0 %v1921
      %2009 = vmatprep.mubr.bf16.mxu0 %v1274
      %2010 = vmatmul.mubr.bf16.gmra.mxu0 %v1273
      %v2011 = vpop.f32.mrf.mxu0
      %v2012 = vadd.f32 %v503, %v2011
      %v2013 = vpop.f32.mrf.mxu0
      %v2014 = vpop.f32.mrf.mxu0
      %v2015 = vadd.f32 %v503, %v2014
      %v2016 = vpop.f32.mrf.mxu0
      %2017 = vmatprep.mubr.bf16.mxu0 %v1278
      %2018 = vmatmul.mubr.bf16.gmra.mxu0 %v1277
      %v2019 = vpop.f32.mrf.mxu0
      %v2020 = vadd.f32 %v503, %v2019
      %v2021 = vpop.f32.mrf.mxu0
      %v2022 = vpop.f32.mrf.mxu0
      %v2023 = vadd.f32 %v503, %v2022
      %v2024 = vpop.f32.mrf.mxu0
      %2025 = vmatprep.mubr.bf16.mxu0 %v1282
      %2026 = vmatmul.mubr.bf16.gmra.mxu0 %v1281
      %v2027 = vpop.f32.mrf.mxu0
      %v2028 = vadd.f32 %v503, %v2027
      %v2029 = vpop.f32.mrf.mxu0
      %v2030 = vpop.f32.mrf.mxu0
      %v2031 = vadd.f32 %v503, %v2030
      %v2032 = vpop.f32.mrf.mxu0
      %2033 = vmatprep.mubr.bf16.mxu0 %v1286
      %2034 = vmatmul.mubr.bf16.gmra.mxu0 %v1285
      %v2035 = vpop.f32.mrf.mxu0
      %v2036 = vadd.f32 %v503, %v2035
      %v2037 = vpop.f32.mrf.mxu0
      %v2038 = vpop.f32.mrf.mxu0
      %v2039 = vadd.f32 %v503, %v2038
      %v2040 = vpop.f32.mrf.mxu0
      %2041 = vmatprep.mubr.bf16.mxu0 %v1290
      %2042 = vmatmul.mubr.bf16.gmra.mxu0 %v1289
      %v2043 = vpop.f32.mrf.mxu0
      %v2044 = vadd.f32 %v503, %v2043
      %v2045 = vpop.f32.mrf.mxu0
      %v2046 = vpop.f32.mrf.mxu0
      %v2047 = vadd.f32 %v503, %v2046
      %v2048 = vpop.f32.mrf.mxu0
      %2049 = vmatprep.mubr.bf16.mxu0 %v1294
      %2050 = vmatmul.mubr.bf16.gmra.mxu0 %v1293
      %v2051 = vpop.f32.mrf.mxu0
      %v2052 = vadd.f32 %v503, %v2051
      %v2053 = vpop.f32.mrf.mxu0
      %v2054 = vpop.f32.mrf.mxu0
      %v2055 = vadd.f32 %v503, %v2054
      %v2056 = vpop.f32.mrf.mxu0
      %2057 = vmatprep.mubr.bf16.mxu0 %v1298
      %2058 = vmatmul.mubr.bf16.gmra.mxu0 %v1297
      %v2059 = vpop.f32.mrf.mxu0
      %v2060 = vadd.f32 %v503, %v2059
      %v2061 = vpop.f32.mrf.mxu0
      %v2062 = vpop.f32.mrf.mxu0
      %v2063 = vadd.f32 %v503, %v2062
      %v2064 = vpop.f32.mrf.mxu0
      %2065 = vmatprep.mubr.bf16.mxu0 %v1302
      %2066 = vmatmul.mubr.bf16.gmra.mxu0 %v1301
      %v2067 = vpop.f32.mrf.mxu0
      %v2068 = vadd.f32 %v503, %v2067
      %v2069 = vpop.f32.mrf.mxu0
      %v2070 = vpop.f32.mrf.mxu0
      %v2071 = vadd.f32 %v503, %v2070
      %v2072 = vpop.f32.mrf.mxu0
      %2073 = vmatprep.mubr.bf16.mxu0 %v1306
      %2074 = vmatmul.mubr.bf16.gmra.mxu0 %v1305
      %v2075 = vpop.f32.mrf.mxu0
      %v2076 = vadd.f32 %v503, %v2075
      %v2077 = vpop.f32.mrf.mxu0
      %v2078 = vpop.f32.mrf.mxu0
      %v2079 = vadd.f32 %v503, %v2078
      %v2080 = vpop.f32.mrf.mxu0
      %2081 = vmatprep.mubr.bf16.mxu0 %v1310
      %2082 = vmatmul.mubr.bf16.gmra.mxu0 %v1309
      %v2083 = vpop.f32.mrf.mxu0
      %v2084 = vadd.f32 %v503, %v2083
      %v2085 = vpop.f32.mrf.mxu0
      %v2086 = vpop.f32.mrf.mxu0
      %v2087 = vadd.f32 %v503, %v2086
      %v2088 = vpop.f32.mrf.mxu0
      %2089 = vmatprep.mubr.bf16.mxu0 %v1314
      %2090 = vmatmul.mubr.bf16.gmra.mxu0 %v1313
      %v2091 = vpop.f32.mrf.mxu0
      %v2092 = vadd.f32 %v503, %v2091
      %v2093 = vpop.f32.mrf.mxu0
      %v2094 = vpop.f32.mrf.mxu0
      %v2095 = vadd.f32 %v503, %v2094
      %v2096 = vpop.f32.mrf.mxu0
      %2097 = vmatprep.mubr.bf16.mxu0 %v1318
      %2098 = vmatmul.mubr.bf16.gmra.mxu0 %v1317
      %v2099 = vpop.f32.mrf.mxu0
      %v2100 = vadd.f32 %v503, %v2099
      %v2101 = vpop.f32.mrf.mxu0
      %v2102 = vpop.f32.mrf.mxu0
      %v2103 = vadd.f32 %v503, %v2102
      %v2104 = vpop.f32.mrf.mxu0
      %2105 = vmatprep.mubr.bf16.mxu0 %v1322
      %2106 = vmatmul.mubr.bf16.gmra.mxu0 %v1321
      %v2107 = vpop.f32.mrf.mxu0
      %v2108 = vadd.f32 %v503, %v2107
      %v2109 = vpop.f32.mrf.mxu0
      %v2110 = vpop.f32.mrf.mxu0
      %v2111 = vadd.f32 %v503, %v2110
      %v2112 = vpop.f32.mrf.mxu0
      %2113 = vmatprep.mubr.bf16.mxu0 %v1326
      %2114 = vmatmul.mubr.bf16.gmra.mxu0 %v1325
      %v2115 = vpop.f32.mrf.mxu0
      %v2116 = vadd.f32 %v503, %v2115
      %v2117 = vpop.f32.mrf.mxu0
      %v2118 = vpop.f32.mrf.mxu0
      %v2119 = vadd.f32 %v503, %v2118
      %v2120 = vpop.f32.mrf.mxu0
      %2121 = vmatprep.mubr.bf16.mxu0 %v1330
      %2122 = vmatmul.mubr.bf16.gmra.mxu0 %v1329
      %v2123 = vpop.f32.mrf.mxu0
      %v2124 = vadd.f32 %v503, %v2123
      %v2125 = vpop.f32.mrf.mxu0
      %v2126 = vpop.f32.mrf.mxu0
      %v2127 = vadd.f32 %v503, %v2126
      %v2128 = vpop.f32.mrf.mxu0
      %2129 = vmatprep.mubr.bf16.mxu0 %v1334
      %2130 = vmatmul.mubr.bf16.gmra.mxu0 %v1333
      %v2131 = vpop.f32.mrf.mxu0
      %v2132 = vadd.f32 %v503, %v2131
      %v2133 = vpop.f32.mrf.mxu0
      %v2134 = vpop.f32.mrf.mxu0
      %v2135 = vadd.f32 %v503, %v2134
      %v2136 = vpop.f32.mrf.mxu0
      %2137 = vmatprep.mubr.bf16.mxu0 %v1338
      %2138 = vmatmul.mubr.bf16.gmra.mxu0 %v1337
      %v2139 = vpop.f32.mrf.mxu0
      %v2140 = vadd.f32 %v503, %v2139
      %v2141 = vpop.f32.mrf.mxu0
      %v2142 = vpop.f32.mrf.mxu0
      %v2143 = vadd.f32 %v503, %v2142
      %v2144 = vpop.f32.mrf.mxu0
      %2145 = vmatprep.mubr.bf16.mxu0 %v1342
      %2146 = vmatmul.mubr.bf16.gmra.mxu0 %v1341
      %v2147 = vpop.f32.mrf.mxu0
      %v2148 = vadd.f32 %v503, %v2147
      %v2149 = vpop.f32.mrf.mxu0
      %v2150 = vpop.f32.mrf.mxu0
      %v2151 = vadd.f32 %v503, %v2150
      %v2152 = vpop.f32.mrf.mxu0
      %2153 = vmatprep.mubr.bf16.mxu0 %v1346
      %2154 = vmatmul.mubr.bf16.gmra.mxu0 %v1345
      %v2155 = vpop.f32.mrf.mxu0
      %v2156 = vadd.f32 %v503, %v2155
      %v2157 = vpop.f32.mrf.mxu0
      %v2158 = vpop.f32.mrf.mxu0
      %v2159 = vadd.f32 %v503, %v2158
      %v2160 = vpop.f32.mrf.mxu0
      %2161 = vmatprep.mubr.bf16.mxu0 %v1350
      %2162 = vmatmul.mubr.bf16.gmra.mxu0 %v1349
      %v2163 = vpop.f32.mrf.mxu0
      %v2164 = vadd.f32 %v503, %v2163
      %v2165 = vpop.f32.mrf.mxu0
      %v2166 = vpop.f32.mrf.mxu0
      %v2167 = vadd.f32 %v503, %v2166
      %v2168 = vpop.f32.mrf.mxu0
      %2169 = vmatprep.mubr.bf16.mxu0 %v1354
      %2170 = vmatmul.mubr.bf16.gmra.mxu0 %v1353
      %v2171 = vpop.f32.mrf.mxu0
      %v2172 = vadd.f32 %v503, %v2171
      %v2173 = vpop.f32.mrf.mxu0
      %v2174 = vpop.f32.mrf.mxu0
      %v2175 = vadd.f32 %v503, %v2174
      %v2176 = vpop.f32.mrf.mxu0
      %2177 = vmatprep.mubr.bf16.mxu0 %v1358
      %2178 = vmatmul.mubr.bf16.gmra.mxu0 %v1357
      %v2179 = vpop.f32.mrf.mxu0
      %v2180 = vadd.f32 %v503, %v2179
      %v2181 = vpop.f32.mrf.mxu0
      %v2182 = vpop.f32.mrf.mxu0
      %v2183 = vadd.f32 %v503, %v2182
      %v2184 = vpop.f32.mrf.mxu0
      %2185 = vmatprep.mubr.bf16.mxu0 %v1362
      %2186 = vmatmul.mubr.bf16.gmra.mxu0 %v1361
      %v2187 = vpop.f32.mrf.mxu0
      %v2188 = vadd.f32 %v503, %v2187
      %v2189 = vpop.f32.mrf.mxu0
      %v2190 = vpop.f32.mrf.mxu0
      %v2191 = vadd.f32 %v503, %v2190
      %v2192 = vpop.f32.mrf.mxu0
      %2193 = vmatprep.mubr.bf16.mxu0 %v1366
      %2194 = vmatmul.mubr.bf16.gmra.mxu0 %v1365
      %v2195 = vpop.f32.mrf.mxu0
      %v2196 = vadd.f32 %v503, %v2195
      %v2197 = vpop.f32.mrf.mxu0
      %v2198 = vpop.f32.mrf.mxu0
      %v2199 = vadd.f32 %v503, %v2198
      %v2200 = vpop.f32.mrf.mxu0
      %2201 = vmatprep.mubr.bf16.mxu0 %v1370
      %2202 = vmatmul.mubr.bf16.gmra.mxu0 %v1369
      %v2203 = vpop.f32.mrf.mxu0
      %v2204 = vadd.f32 %v503, %v2203
      %v2205 = vpop.f32.mrf.mxu0
      %v2206 = vpop.f32.mrf.mxu0
      %v2207 = vadd.f32 %v503, %v2206
      %v2208 = vpop.f32.mrf.mxu0
      %2209 = vmatprep.mubr.bf16.mxu0 %v1374
      %2210 = vmatmul.mubr.bf16.gmra.mxu0 %v1373
      %v2211 = vpop.f32.mrf.mxu0
      %v2212 = vadd.f32 %v503, %v2211
      %v2213 = vpop.f32.mrf.mxu0
      %v2214 = vpop.f32.mrf.mxu0
      %v2215 = vadd.f32 %v503, %v2214
      %v2216 = vpop.f32.mrf.mxu0
      %2217 = vmatprep.mubr.bf16.mxu0 %v1378
      %2218 = vmatmul.mubr.bf16.gmra.mxu0 %v1377
      %v2219 = vpop.f32.mrf.mxu0
      %v2220 = vadd.f32 %v503, %v2219
      %v2221 = vpop.f32.mrf.mxu0
      %v2222 = vpop.f32.mrf.mxu0
      %v2223 = vadd.f32 %v503, %v2222
      %v2224 = vpop.f32.mrf.mxu0
      %2225 = vmatprep.mubr.bf16.mxu0 %v1382
      %2226 = vmatmul.mubr.bf16.gmra.mxu0 %v1381
      %v2227 = vpop.f32.mrf.mxu0
      %v2228 = vadd.f32 %v503, %v2227
      %v2229 = vpop.f32.mrf.mxu0
      %v2230 = vpop.f32.mrf.mxu0
      %v2231 = vadd.f32 %v503, %v2230
      %v2232 = vpop.f32.mrf.mxu0
      %2233 = vmatprep.mubr.bf16.mxu0 %v1386
      %2234 = vmatmul.mubr.bf16.gmra.mxu0 %v1385
      %v2235 = vpop.f32.mrf.mxu0
      %v2236 = vadd.f32 %v503, %v2235
      %v2237 = vpop.f32.mrf.mxu0
      %v2238 = vpop.f32.mrf.mxu0
      %v2239 = vadd.f32 %v503, %v2238
      %v2240 = vpop.f32.mrf.mxu0
      %2241 = vmatprep.mubr.bf16.mxu0 %v1390
      %2242 = vmatmul.mubr.bf16.gmra.mxu0 %v1389
      %v2243 = vpop.f32.mrf.mxu0
      %v2244 = vadd.f32 %v503, %v2243
      %v2245 = vpop.f32.mrf.mxu0
      %v2246 = vpop.f32.mrf.mxu0
      %v2247 = vadd.f32 %v503, %v2246
      %v2248 = vpop.f32.mrf.mxu0
      %2249 = vmatprep.mubr.bf16.mxu0 %v1394
      %2250 = vmatmul.mubr.bf16.gmra.mxu0 %v1393
      %v2251 = vpop.f32.mrf.mxu0
      %v2252 = vadd.f32 %v503, %v2251
      %v2253 = vpop.f32.mrf.mxu0
      %v2254 = vpop.f32.mrf.mxu0
      %v2255 = vadd.f32 %v503, %v2254
      %v2256 = vpop.f32.mrf.mxu0
      %2257 = vmatprep.mubr.bf16.mxu0 %v1398
      %2258 = vmatmul.mubr.bf16.gmra.mxu0 %v1397
      %v2259 = vpop.f32.mrf.mxu0
      %v2260 = vadd.f32 %v503, %v2259
      %v2261 = vpop.f32.mrf.mxu0
      %v2262 = vpop.f32.mrf.mxu0
      %v2263 = vadd.f32 %v503, %v2262
      %v2264 = vpop.f32.mrf.mxu0
      %2265 = vmatprep.mubr.bf16.mxu0 %v1402
      %2266 = vmatmul.mubr.bf16.gmra.mxu0 %v1401
      %v2267 = vpop.f32.mrf.mxu0
      %v2268 = vadd.f32 %v503, %v2267
      %v2269 = vpop.f32.mrf.mxu0
      %v2270 = vpop.f32.mrf.mxu0
      %v2271 = vadd.f32 %v503, %v2270
      %v2272 = vpop.f32.mrf.mxu0
      %2273 = vmatprep.mubr.bf16.mxu0 %v1406
      %2274 = vmatmul.mubr.bf16.gmra.mxu0 %v1405
      %v2275 = vpop.f32.mrf.mxu0
      %v2276 = vadd.f32 %v503, %v2275
      %v2277 = vpop.f32.mrf.mxu0
      %v2278 = vpop.f32.mrf.mxu0
      %v2279 = vadd.f32 %v503, %v2278
      %v2280 = vpop.f32.mrf.mxu0
      %2281 = vmatprep.mubr.bf16.mxu0 %v1410
      %2282 = vmatmul.mubr.bf16.gmra.mxu0 %v1409
      %v2283 = vpop.f32.mrf.mxu0
      %v2284 = vadd.f32 %v503, %v2283
      %v2285 = vpop.f32.mrf.mxu0
      %v2286 = vpop.f32.mrf.mxu0
      %v2287 = vadd.f32 %v503, %v2286
      %v2288 = vpop.f32.mrf.mxu0
      %2289 = vmatprep.mubr.bf16.mxu0 %v1414
      %2290 = vmatmul.mubr.bf16.gmra.mxu0 %v1413
      %v2291 = vpop.f32.mrf.mxu0
      %v2292 = vadd.f32 %v503, %v2291
      %v2293 = vpop.f32.mrf.mxu0
      %v2294 = vpop.f32.mrf.mxu0
      %v2295 = vadd.f32 %v503, %v2294
      %v2296 = vpop.f32.mrf.mxu0
      %2297 = vmatprep.mubr.bf16.mxu0 %v1418
      %2298 = vmatmul.mubr.bf16.gmra.mxu0 %v1417
      %v2299 = vpop.f32.mrf.mxu0
      %v2300 = vadd.f32 %v503, %v2299
      %v2301 = vpop.f32.mrf.mxu0
      %v2302 = vpop.f32.mrf.mxu0
      %v2303 = vadd.f32 %v503, %v2302
      %v2304 = vpop.f32.mrf.mxu0
      %2305 = vmatprep.mubr.bf16.mxu0 %v1422
      %2306 = vmatmul.mubr.bf16.gmra.mxu0 %v1421
      %v2307 = vpop.f32.mrf.mxu0
      %v2308 = vadd.f32 %v503, %v2307
      %v2309 = vpop.f32.mrf.mxu0
      %v2310 = vpop.f32.mrf.mxu0
      %v2311 = vadd.f32 %v503, %v2310
      %v2312 = vpop.f32.mrf.mxu0
      %2313 = vmatprep.mubr.bf16.mxu0 %v1426
      %2314 = vmatmul.mubr.bf16.gmra.mxu0 %v1425
      %v2315 = vpop.f32.mrf.mxu0
      %v2316 = vadd.f32 %v503, %v2315
      %v2317 = vpop.f32.mrf.mxu0
      %v2318 = vpop.f32.mrf.mxu0
      %v2319 = vadd.f32 %v503, %v2318
      %v2320 = vpop.f32.mrf.mxu0
      %2321 = vmatprep.mubr.bf16.mxu0 %v1430
      %2322 = vmatmul.mubr.bf16.gmra.mxu0 %v1429
      %v2323 = vpop.f32.mrf.mxu0
      %v2324 = vadd.f32 %v503, %v2323
      %v2325 = vpop.f32.mrf.mxu0
      %v2326 = vpop.f32.mrf.mxu0
      %v2327 = vadd.f32 %v503, %v2326
      %v2328 = vpop.f32.mrf.mxu0
      %2329 = vmatprep.mubr.bf16.mxu0 %v1434
      %2330 = vmatmul.mubr.bf16.gmra.mxu0 %v1433
      %v2331 = vpop.f32.mrf.mxu0
      %v2332 = vadd.f32 %v503, %v2331
      %v2333 = vpop.f32.mrf.mxu0
      %v2334 = vpop.f32.mrf.mxu0
      %v2335 = vadd.f32 %v503, %v2334
      %v2336 = vpop.f32.mrf.mxu0
      %2337 = vmatprep.mubr.bf16.mxu0 %v1438
      %2338 = vmatmul.mubr.bf16.gmra.mxu0 %v1437
      %v2339 = vpop.f32.mrf.mxu0
      %v2340 = vadd.f32 %v503, %v2339
      %v2341 = vpop.f32.mrf.mxu0
      %v2342 = vpop.f32.mrf.mxu0
      %v2343 = vadd.f32 %v503, %v2342
      %v2344 = vpop.f32.mrf.mxu0
      %2345 = vmatprep.mubr.bf16.mxu0 %v1442
      %2346 = vmatmul.mubr.bf16.gmra.mxu0 %v1441
      %v2347 = vpop.f32.mrf.mxu0
      %v2348 = vadd.f32 %v503, %v2347
      %v2349 = vpop.f32.mrf.mxu0
      %v2350 = vpop.f32.mrf.mxu0
      %v2351 = vadd.f32 %v503, %v2350
      %v2352 = vpop.f32.mrf.mxu0
      %2353 = vmatprep.mubr.bf16.mxu0 %v1446
      %2354 = vmatmul.mubr.bf16.gmra.mxu0 %v1445
      %v2355 = vpop.f32.mrf.mxu0
      %v2356 = vadd.f32 %v503, %v2355
      %v2357 = vpop.f32.mrf.mxu0
      %v2358 = vpop.f32.mrf.mxu0
      %v2359 = vadd.f32 %v503, %v2358
      %v2360 = vpop.f32.mrf.mxu0
      %2361 = vmatprep.mubr.bf16.mxu0 %v1450
      %2362 = vmatmul.mubr.bf16.gmra.mxu0 %v1449
      %v2363 = vpop.f32.mrf.mxu0
      %v2364 = vadd.f32 %v503, %v2363
      %v2365 = vpop.f32.mrf.mxu0
      %v2366 = vpop.f32.mrf.mxu0
      %v2367 = vadd.f32 %v503, %v2366
      %v2368 = vpop.f32.mrf.mxu0
      %2369 = vmatprep.mubr.bf16.mxu0 %v1454
      %2370 = vmatmul.mubr.bf16.gmra.mxu0 %v1453
      %v2371 = vpop.f32.mrf.mxu0
      %v2372 = vadd.f32 %v503, %v2371
      %v2373 = vpop.f32.mrf.mxu0
      %v2374 = vpop.f32.mrf.mxu0
      %v2375 = vadd.f32 %v503, %v2374
      %v2376 = vpop.f32.mrf.mxu0
      %2377 = vmatprep.mubr.bf16.mxu0 %v1458
      %2378 = vmatmul.mubr.bf16.gmra.mxu0 %v1457
      %v2379 = vpop.f32.mrf.mxu0
      %v2380 = vadd.f32 %v503, %v2379
      %v2381 = vpop.f32.mrf.mxu0
      %v2382 = vpop.f32.mrf.mxu0
      %v2383 = vadd.f32 %v503, %v2382
      %v2384 = vpop.f32.mrf.mxu0
      %2385 = vmatprep.mubr.bf16.mxu0 %v1462
      %2386 = vmatmul.mubr.bf16.gmra.mxu0 %v1461
      %v2387 = vpop.f32.mrf.mxu0
      %v2388 = vadd.f32 %v503, %v2387
      %v2389 = vpop.f32.mrf.mxu0
      %v2390 = vpop.f32.mrf.mxu0
      %v2391 = vadd.f32 %v503, %v2390
      %v2392 = vpop.f32.mrf.mxu0
      %2393 = vmatprep.mubr.bf16.mxu0 %v1466
      %2394 = vmatmul.mubr.bf16.gmra.mxu0 %v1465
      %v2395 = vpop.f32.mrf.mxu0
      %v2396 = vadd.f32 %v503, %v2395
      %v2397 = vpop.f32.mrf.mxu0
      %v2398 = vpop.f32.mrf.mxu0
      %v2399 = vadd.f32 %v503, %v2398
      %v2400 = vpop.f32.mrf.mxu0
      %2401 = vmatprep.mubr.bf16.mxu0 %v1470
      %2402 = vmatmul.mubr.bf16.gmra.mxu0 %v1469
      %v2403 = vpop.f32.mrf.mxu0
      %v2404 = vadd.f32 %v503, %v2403
      %v2405 = vpop.f32.mrf.mxu0
      %v2406 = vpop.f32.mrf.mxu0
      %v2407 = vadd.f32 %v503, %v2406
      %v2408 = vpop.f32.mrf.mxu0
      %2409 = vmatprep.mubr.bf16.mxu0 %v1474
      %2410 = vmatmul.mubr.bf16.gmra.mxu0 %v1473
      %v2411 = vpop.f32.mrf.mxu0
      %v2412 = vadd.f32 %v503, %v2411
      %v2413 = vpop.f32.mrf.mxu0
      %v2414 = vpop.f32.mrf.mxu0
      %v2415 = vadd.f32 %v503, %v2414
      %v2416 = vpop.f32.mrf.mxu0
      %2417 = vmatprep.mubr.bf16.mxu0 %v1478
      %2418 = vmatmul.mubr.bf16.gmra.mxu0 %v1477
      %v2419 = vpop.f32.mrf.mxu0
      %v2420 = vadd.f32 %v503, %v2419
      %v2421 = vpop.f32.mrf.mxu0
      %v2422 = vpop.f32.mrf.mxu0
      %v2423 = vadd.f32 %v503, %v2422
      %v2424 = vpop.f32.mrf.mxu0
      %2425 = vmatprep.mubr.bf16.mxu0 %v1482
      %2426 = vmatmul.mubr.bf16.gmra.mxu0 %v1481
      %v2427 = vpop.f32.mrf.mxu0
      %v2428 = vadd.f32 %v503, %v2427
      %v2429 = vpop.f32.mrf.mxu0
      %v2430 = vpop.f32.mrf.mxu0
      %v2431 = vadd.f32 %v503, %v2430
      %v2432 = vpop.f32.mrf.mxu0
      %2433 = vmatprep.mubr.bf16.mxu0 %v1486
      %2434 = vmatmul.mubr.bf16.gmra.mxu0 %v1485
      %v2435 = vpop.f32.mrf.mxu0
      %v2436 = vadd.f32 %v503, %v2435
      %v2437 = vpop.f32.mrf.mxu0
      %v2438 = vpop.f32.mrf.mxu0
      %v2439 = vadd.f32 %v503, %v2438
      %v2440 = vpop.f32.mrf.mxu0
      %2441 = vmatprep.mubr.bf16.mxu0 %v1490
      %2442 = vmatmul.mubr.bf16.gmra.mxu0 %v1489
      %v2443 = vpop.f32.mrf.mxu0
      %v2444 = vadd.f32 %v503, %v2443
      %v2445 = vpop.f32.mrf.mxu0
      %v2446 = vpop.f32.mrf.mxu0
      %v2447 = vadd.f32 %v503, %v2446
      %v2448 = vpop.f32.mrf.mxu0
      %2449 = vmatprep.mubr.bf16.mxu0 %v1494
      %2450 = vmatmul.mubr.bf16.gmra.mxu0 %v1493
      %v2451 = vpop.f32.mrf.mxu0
      %v2452 = vadd.f32 %v503, %v2451
      %v2453 = vpop.f32.mrf.mxu0
      %v2454 = vpop.f32.mrf.mxu0
      %v2455 = vadd.f32 %v503, %v2454
      %v2456 = vpop.f32.mrf.mxu0
      %2457 = vmatprep.mubr.bf16.mxu0 %v1498
      %2458 = vmatmul.mubr.bf16.gmra.mxu0 %v1497
      %v2459 = vpop.f32.mrf.mxu0
      %v2460 = vadd.f32 %v503, %v2459
      %v2461 = vpop.f32.mrf.mxu0
      %v2462 = vpop.f32.mrf.mxu0
      %v2463 = vadd.f32 %v503, %v2462
      %v2464 = vpop.f32.mrf.mxu0
      %2465 = vmatprep.mubr.bf16.mxu0 %v1502
      %2466 = vmatmul.mubr.bf16.gmra.mxu0 %v1501
      %v2467 = vpop.f32.mrf.mxu0
      %v2468 = vadd.f32 %v503, %v2467
      %v2469 = vpop.f32.mrf.mxu0
      %v2470 = vpop.f32.mrf.mxu0
      %v2471 = vadd.f32 %v503, %v2470
      %v2472 = vpop.f32.mrf.mxu0
      %2473 = vmatprep.mubr.bf16.mxu0 %v1506
      %2474 = vmatmul.mubr.bf16.gmra.mxu0 %v1505
      %v2475 = vpop.f32.mrf.mxu0
      %v2476 = vadd.f32 %v503, %v2475
      %v2477 = vpop.f32.mrf.mxu0
      %v2478 = vpop.f32.mrf.mxu0
      %v2479 = vadd.f32 %v503, %v2478
      %v2480 = vpop.f32.mrf.mxu0
      %2481 = vmatprep.mubr.bf16.mxu0 %v1510
      %2482 = vmatmul.mubr.bf16.gmra.mxu0 %v1509
      %v2483 = vpop.f32.mrf.mxu0
      %v2484 = vadd.f32 %v503, %v2483
      %v2485 = vpop.f32.mrf.mxu0
      %v2486 = vpop.f32.mrf.mxu0
      %v2487 = vadd.f32 %v503, %v2486
      %v2488 = vpop.f32.mrf.mxu0
      %2489 = vmatprep.mubr.bf16.mxu0 %v1514
      %2490 = vmatmul.mubr.bf16.gmra.mxu0 %v1513
      %v2491 = vpop.f32.mrf.mxu0
      %v2492 = vadd.f32 %v503, %v2491
      %v2493 = vpop.f32.mrf.mxu0
      %v2494 = vpop.f32.mrf.mxu0
      %v2495 = vadd.f32 %v503, %v2494
      %v2496 = vpop.f32.mrf.mxu0
      %2497 = vmatprep.mubr.bf16.mxu0 %v1518
      %2498 = vmatmul.mubr.bf16.gmra.mxu0 %v1517
      %v2499 = vpop.f32.mrf.mxu0
      %v2500 = vadd.f32 %v503, %v2499
      %v2501 = vpop.f32.mrf.mxu0
      %v2502 = vpop.f32.mrf.mxu0
      %v2503 = vadd.f32 %v503, %v2502
      %v2504 = vpop.f32.mrf.mxu0
      %2505 = vmatprep.mubr.bf16.mxu0 %v1522
      %2506 = vmatmul.mubr.bf16.gmra.mxu0 %v1521
      %v2507 = vpop.f32.mrf.mxu0
      %v2508 = vadd.f32 %v503, %v2507
      %v2509 = vpop.f32.mrf.mxu0
      %v2510 = vpop.f32.mrf.mxu0
      %v2511 = vadd.f32 %v503, %v2510
      %v2512 = vpop.f32.mrf.mxu0
      %2513 = vmatprep.mubr.bf16.mxu0 %v1526
      %2514 = vmatmul.mubr.bf16.gmra.mxu0 %v1525
      %v2515 = vpop.f32.mrf.mxu0
      %v2516 = vadd.f32 %v503, %v2515
      %v2517 = vpop.f32.mrf.mxu0
      %v2518 = vpop.f32.mrf.mxu0
      %v2519 = vadd.f32 %v503, %v2518
      %v2520 = vpop.f32.mrf.mxu0
      %2521 = vdwg.mxu0
      %2522 = vmatprep.subr.bf16.mxu0 0
      %2523 = vmatpush1.bf16.msra.mxu0 %v1936
      %2524 = vmatprep.subr.bf16.mxu0 0
      %2525 = vmatpush1.bf16.msra.mxu0 %v1935
      %2526 = vmatprep.subr.bf16.mxu0 0
      %2527 = vmatpush1.bf16.msra.mxu0 %v1934
      %2528 = vmatprep.subr.bf16.mxu0 0
      %2529 = vmatpush1.bf16.msra.mxu0 %v1933
      %2530 = vmatprep.subr.bf16.mxu0 0
      %2531 = vmatpush1.bf16.msra.mxu0 %v1932
      %2532 = vmatprep.subr.bf16.mxu0 0
      %2533 = vmatpush1.bf16.msra.mxu0 %v1931
      %2534 = vmatprep.subr.bf16.mxu0 0
      %2535 = vmatpush1.bf16.msra.mxu0 %v1930
      %2536 = vmatprep.subr.bf16.mxu0 0
      %2537 = vmatpush1.bf16.msra.mxu0 %v1929
      %2538 = vmatprep.subr.bf16.mxu0 0
      %2539 = vmatpush2.bf16.msra.mxu0 %v1944
      %2540 = vmatprep.subr.bf16.mxu0 0
      %2541 = vmatpush2.bf16.msra.mxu0 %v1943
      %2542 = vmatprep.subr.bf16.mxu0 0
      %2543 = vmatpush2.bf16.msra.mxu0 %v1942
      %2544 = vmatprep.subr.bf16.mxu0 0
      %2545 = vmatpush2.bf16.msra.mxu0 %v1941
      %2546 = vmatprep.subr.bf16.mxu0 0
      %2547 = vmatpush2.bf16.msra.mxu0 %v1940
      %2548 = vmatprep.subr.bf16.mxu0 0
      %2549 = vmatpush2.bf16.msra.mxu0 %v1939
      %2550 = vmatprep.subr.bf16.mxu0 0
      %2551 = vmatpush2.bf16.msra.mxu0 %v1938
      %2552 = vmatprep.subr.bf16.mxu0 0
      %2553 = vmatpush2.bf16.msra.mxu0 %v1937
      %2554 = vmatprep.mubr.bf16.mxu0 %v1276
      %2555 = vmatmul.mubr.bf16.gmra.mxu0 %v1275
      %v2556 = vpop.f32.mrf.mxu0
      %v2557 = vadd.f32 %v2012, %v2556
      %v2558 = vpop.f32.mrf.mxu0
      %v2559 = vpop.f32.mrf.mxu0
      %v2560 = vadd.f32 %v2015, %v2559
      %v2561 = vpop.f32.mrf.mxu0
      %2562 = vmatprep.mubr.bf16.mxu0 %v1280
      %2563 = vmatmul.mubr.bf16.gmra.mxu0 %v1279
      %v2564 = vpop.f32.mrf.mxu0
      %v2565 = vadd.f32 %v2020, %v2564
      %v2566 = vpop.f32.mrf.mxu0
      %v2567 = vpop.f32.mrf.mxu0
      %v2568 = vadd.f32 %v2023, %v2567
      %v2569 = vpop.f32.mrf.mxu0
      %2570 = vmatprep.mubr.bf16.mxu0 %v1284
      %2571 = vmatmul.mubr.bf16.gmra.mxu0 %v1283
      %v2572 = vpop.f32.mrf.mxu0
      %v2573 = vadd.f32 %v2028, %v2572
      %v2574 = vpop.f32.mrf.mxu0
      %v2575 = vpop.f32.mrf.mxu0
      %v2576 = vadd.f32 %v2031, %v2575
      %v2577 = vpop.f32.mrf.mxu0
      %2578 = vmatprep.mubr.bf16.mxu0 %v1288
      %2579 = vmatmul.mubr.bf16.gmra.mxu0 %v1287
      %v2580 = vpop.f32.mrf.mxu0
      %v2581 = vadd.f32 %v2036, %v2580
      %v2582 = vpop.f32.mrf.mxu0
      %v2583 = vpop.f32.mrf.mxu0
      %v2584 = vadd.f32 %v2039, %v2583
      %v2585 = vpop.f32.mrf.mxu0
      %2586 = vmatprep.mubr.bf16.mxu0 %v1292
      %2587 = vmatmul.mubr.bf16.gmra.mxu0 %v1291
      %v2588 = vpop.f32.mrf.mxu0
      %v2589 = vadd.f32 %v2044, %v2588
      %v2590 = vpop.f32.mrf.mxu0
      %v2591 = vpop.f32.mrf.mxu0
      %v2592 = vadd.f32 %v2047, %v2591
      %v2593 = vpop.f32.mrf.mxu0
      %2594 = vmatprep.mubr.bf16.mxu0 %v1296
      %2595 = vmatmul.mubr.bf16.gmra.mxu0 %v1295
      %v2596 = vpop.f32.mrf.mxu0
      %v2597 = vadd.f32 %v2052, %v2596
      %v2598 = vpop.f32.mrf.mxu0
      %v2599 = vpop.f32.mrf.mxu0
      %v2600 = vadd.f32 %v2055, %v2599
      %v2601 = vpop.f32.mrf.mxu0
      %2602 = vmatprep.mubr.bf16.mxu0 %v1300
      %2603 = vmatmul.mubr.bf16.gmra.mxu0 %v1299
      %v2604 = vpop.f32.mrf.mxu0
      %v2605 = vadd.f32 %v2060, %v2604
      %v2606 = vpop.f32.mrf.mxu0
      %v2607 = vpop.f32.mrf.mxu0
      %v2608 = vadd.f32 %v2063, %v2607
      %v2609 = vpop.f32.mrf.mxu0
      %2610 = vmatprep.mubr.bf16.mxu0 %v1304
      %2611 = vmatmul.mubr.bf16.gmra.mxu0 %v1303
      %v2612 = vpop.f32.mrf.mxu0
      %v2613 = vadd.f32 %v2068, %v2612
      %v2614 = vpop.f32.mrf.mxu0
      %v2615 = vpop.f32.mrf.mxu0
      %v2616 = vadd.f32 %v2071, %v2615
      %v2617 = vpop.f32.mrf.mxu0
      %2618 = vmatprep.mubr.bf16.mxu0 %v1308
      %2619 = vmatmul.mubr.bf16.gmra.mxu0 %v1307
      %v2620 = vpop.f32.mrf.mxu0
      %v2621 = vadd.f32 %v2076, %v2620
      %v2622 = vpop.f32.mrf.mxu0
      %v2623 = vpop.f32.mrf.mxu0
      %v2624 = vadd.f32 %v2079, %v2623
      %v2625 = vpop.f32.mrf.mxu0
      %2626 = vmatprep.mubr.bf16.mxu0 %v1312
      %2627 = vmatmul.mubr.bf16.gmra.mxu0 %v1311
      %v2628 = vpop.f32.mrf.mxu0
      %v2629 = vadd.f32 %v2084, %v2628
      %v2630 = vpop.f32.mrf.mxu0
      %v2631 = vpop.f32.mrf.mxu0
      %v2632 = vadd.f32 %v2087, %v2631
      %v2633 = vpop.f32.mrf.mxu0
      %2634 = vmatprep.mubr.bf16.mxu0 %v1316
      %2635 = vmatmul.mubr.bf16.gmra.mxu0 %v1315
      %v2636 = vpop.f32.mrf.mxu0
      %v2637 = vadd.f32 %v2092, %v2636
      %v2638 = vpop.f32.mrf.mxu0
      %v2639 = vpop.f32.mrf.mxu0
      %v2640 = vadd.f32 %v2095, %v2639
      %v2641 = vpop.f32.mrf.mxu0
      %2642 = vmatprep.mubr.bf16.mxu0 %v1320
      %2643 = vmatmul.mubr.bf16.gmra.mxu0 %v1319
      %v2644 = vpop.f32.mrf.mxu0
      %v2645 = vadd.f32 %v2100, %v2644
      %v2646 = vpop.f32.mrf.mxu0
      %v2647 = vpop.f32.mrf.mxu0
      %v2648 = vadd.f32 %v2103, %v2647
      %v2649 = vpop.f32.mrf.mxu0
      %2650 = vmatprep.mubr.bf16.mxu0 %v1324
      %2651 = vmatmul.mubr.bf16.gmra.mxu0 %v1323
      %v2652 = vpop.f32.mrf.mxu0
      %v2653 = vadd.f32 %v2108, %v2652
      %v2654 = vpop.f32.mrf.mxu0
      %v2655 = vpop.f32.mrf.mxu0
      %v2656 = vadd.f32 %v2111, %v2655
      %v2657 = vpop.f32.mrf.mxu0
      %2658 = vmatprep.mubr.bf16.mxu0 %v1328
      %2659 = vmatmul.mubr.bf16.gmra.mxu0 %v1327
      %v2660 = vpop.f32.mrf.mxu0
      %v2661 = vadd.f32 %v2116, %v2660
      %v2662 = vpop.f32.mrf.mxu0
      %v2663 = vpop.f32.mrf.mxu0
      %v2664 = vadd.f32 %v2119, %v2663
      %v2665 = vpop.f32.mrf.mxu0
      %2666 = vmatprep.mubr.bf16.mxu0 %v1332
      %2667 = vmatmul.mubr.bf16.gmra.mxu0 %v1331
      %v2668 = vpop.f32.mrf.mxu0
      %v2669 = vadd.f32 %v2124, %v2668
      %v2670 = vpop.f32.mrf.mxu0
      %v2671 = vpop.f32.mrf.mxu0
      %v2672 = vadd.f32 %v2127, %v2671
      %v2673 = vpop.f32.mrf.mxu0
      %2674 = vmatprep.mubr.bf16.mxu0 %v1336
      %2675 = vmatmul.mubr.bf16.gmra.mxu0 %v1335
      %v2676 = vpop.f32.mrf.mxu0
      %v2677 = vadd.f32 %v2132, %v2676
      %v2678 = vpop.f32.mrf.mxu0
      %v2679 = vpop.f32.mrf.mxu0
      %v2680 = vadd.f32 %v2135, %v2679
      %v2681 = vpop.f32.mrf.mxu0
      %2682 = vmatprep.mubr.bf16.mxu0 %v1340
      %2683 = vmatmul.mubr.bf16.gmra.mxu0 %v1339
      %v2684 = vpop.f32.mrf.mxu0
      %v2685 = vadd.f32 %v2140, %v2684
      %v2686 = vpop.f32.mrf.mxu0
      %v2687 = vpop.f32.mrf.mxu0
      %v2688 = vadd.f32 %v2143, %v2687
      %v2689 = vpop.f32.mrf.mxu0
      %2690 = vmatprep.mubr.bf16.mxu0 %v1344
      %2691 = vmatmul.mubr.bf16.gmra.mxu0 %v1343
      %v2692 = vpop.f32.mrf.mxu0
      %v2693 = vadd.f32 %v2148, %v2692
      %v2694 = vpop.f32.mrf.mxu0
      %v2695 = vpop.f32.mrf.mxu0
      %v2696 = vadd.f32 %v2151, %v2695
      %v2697 = vpop.f32.mrf.mxu0
      %2698 = vmatprep.mubr.bf16.mxu0 %v1348
      %2699 = vmatmul.mubr.bf16.gmra.mxu0 %v1347
      %v2700 = vpop.f32.mrf.mxu0
      %v2701 = vadd.f32 %v2156, %v2700
      %v2702 = vpop.f32.mrf.mxu0
      %v2703 = vpop.f32.mrf.mxu0
      %v2704 = vadd.f32 %v2159, %v2703
      %v2705 = vpop.f32.mrf.mxu0
      %2706 = vmatprep.mubr.bf16.mxu0 %v1352
      %2707 = vmatmul.mubr.bf16.gmra.mxu0 %v1351
      %v2708 = vpop.f32.mrf.mxu0
      %v2709 = vadd.f32 %v2164, %v2708
      %v2710 = vpop.f32.mrf.mxu0
      %v2711 = vpop.f32.mrf.mxu0
      %v2712 = vadd.f32 %v2167, %v2711
      %v2713 = vpop.f32.mrf.mxu0
      %2714 = vmatprep.mubr.bf16.mxu0 %v1356
      %2715 = vmatmul.mubr.bf16.gmra.mxu0 %v1355
      %v2716 = vpop.f32.mrf.mxu0
      %v2717 = vadd.f32 %v2172, %v2716
      %v2718 = vpop.f32.mrf.mxu0
      %v2719 = vpop.f32.mrf.mxu0
      %v2720 = vadd.f32 %v2175, %v2719
      %v2721 = vpop.f32.mrf.mxu0
      %2722 = vmatprep.mubr.bf16.mxu0 %v1360
      %2723 = vmatmul.mubr.bf16.gmra.mxu0 %v1359
      %v2724 = vpop.f32.mrf.mxu0
      %v2725 = vadd.f32 %v2180, %v2724
      %v2726 = vpop.f32.mrf.mxu0
      %v2727 = vpop.f32.mrf.mxu0
      %v2728 = vadd.f32 %v2183, %v2727
      %v2729 = vpop.f32.mrf.mxu0
      %2730 = vmatprep.mubr.bf16.mxu0 %v1364
      %2731 = vmatmul.mubr.bf16.gmra.mxu0 %v1363
      %v2732 = vpop.f32.mrf.mxu0
      %v2733 = vadd.f32 %v2188, %v2732
      %v2734 = vpop.f32.mrf.mxu0
      %v2735 = vpop.f32.mrf.mxu0
      %v2736 = vadd.f32 %v2191, %v2735
      %v2737 = vpop.f32.mrf.mxu0
      %2738 = vmatprep.mubr.bf16.mxu0 %v1368
      %2739 = vmatmul.mubr.bf16.gmra.mxu0 %v1367
      %v2740 = vpop.f32.mrf.mxu0
      %v2741 = vadd.f32 %v2196, %v2740
      %v2742 = vpop.f32.mrf.mxu0
      %v2743 = vpop.f32.mrf.mxu0
      %v2744 = vadd.f32 %v2199, %v2743
      %v2745 = vpop.f32.mrf.mxu0
      %2746 = vmatprep.mubr.bf16.mxu0 %v1372
      %2747 = vmatmul.mubr.bf16.gmra.mxu0 %v1371
      %v2748 = vpop.f32.mrf.mxu0
      %v2749 = vadd.f32 %v2204, %v2748
      %v2750 = vpop.f32.mrf.mxu0
      %v2751 = vpop.f32.mrf.mxu0
      %v2752 = vadd.f32 %v2207, %v2751
      %v2753 = vpop.f32.mrf.mxu0
      %2754 = vmatprep.mubr.bf16.mxu0 %v1376
      %2755 = vmatmul.mubr.bf16.gmra.mxu0 %v1375
      %v2756 = vpop.f32.mrf.mxu0
      %v2757 = vadd.f32 %v2212, %v2756
      %v2758 = vpop.f32.mrf.mxu0
      %v2759 = vpop.f32.mrf.mxu0
      %v2760 = vadd.f32 %v2215, %v2759
      %v2761 = vpop.f32.mrf.mxu0
      %2762 = vmatprep.mubr.bf16.mxu0 %v1380
      %2763 = vmatmul.mubr.bf16.gmra.mxu0 %v1379
      %v2764 = vpop.f32.mrf.mxu0
      %v2765 = vadd.f32 %v2220, %v2764
      %v2766 = vpop.f32.mrf.mxu0
      %v2767 = vpop.f32.mrf.mxu0
      %v2768 = vadd.f32 %v2223, %v2767
      %v2769 = vpop.f32.mrf.mxu0
      %2770 = vmatprep.mubr.bf16.mxu0 %v1384
      %2771 = vmatmul.mubr.bf16.gmra.mxu0 %v1383
      %v2772 = vpop.f32.mrf.mxu0
      %v2773 = vadd.f32 %v2228, %v2772
      %v2774 = vpop.f32.mrf.mxu0
      %v2775 = vpop.f32.mrf.mxu0
      %v2776 = vadd.f32 %v2231, %v2775
      %v2777 = vpop.f32.mrf.mxu0
      %2778 = vmatprep.mubr.bf16.mxu0 %v1388
      %2779 = vmatmul.mubr.bf16.gmra.mxu0 %v1387
      %v2780 = vpop.f32.mrf.mxu0
      %v2781 = vadd.f32 %v2236, %v2780
      %v2782 = vpop.f32.mrf.mxu0
      %v2783 = vpop.f32.mrf.mxu0
      %v2784 = vadd.f32 %v2239, %v2783
      %v2785 = vpop.f32.mrf.mxu0
      %2786 = vmatprep.mubr.bf16.mxu0 %v1392
      %2787 = vmatmul.mubr.bf16.gmra.mxu0 %v1391
      %v2788 = vpop.f32.mrf.mxu0
      %v2789 = vadd.f32 %v2244, %v2788
      %v2790 = vpop.f32.mrf.mxu0
      %v2791 = vpop.f32.mrf.mxu0
      %v2792 = vadd.f32 %v2247, %v2791
      %v2793 = vpop.f32.mrf.mxu0
      %2794 = vmatprep.mubr.bf16.mxu0 %v1396
      %2795 = vmatmul.mubr.bf16.gmra.mxu0 %v1395
      %v2796 = vpop.f32.mrf.mxu0
      %v2797 = vadd.f32 %v2252, %v2796
      %v2798 = vpop.f32.mrf.mxu0
      %v2799 = vpop.f32.mrf.mxu0
      %v2800 = vadd.f32 %v2255, %v2799
      %v2801 = vpop.f32.mrf.mxu0
      %2802 = vmatprep.mubr.bf16.mxu0 %v1400
      %2803 = vmatmul.mubr.bf16.gmra.mxu0 %v1399
      %v2804 = vpop.f32.mrf.mxu0
      %v2805 = vadd.f32 %v2260, %v2804
      %v2806 = vpop.f32.mrf.mxu0
      %v2807 = vpop.f32.mrf.mxu0
      %v2808 = vadd.f32 %v2263, %v2807
      %v2809 = vpop.f32.mrf.mxu0
      %2810 = vmatprep.mubr.bf16.mxu0 %v1404
      %2811 = vmatmul.mubr.bf16.gmra.mxu0 %v1403
      %v2812 = vpop.f32.mrf.mxu0
      %v2813 = vadd.f32 %v2268, %v2812
      %v2814 = vpop.f32.mrf.mxu0
      %v2815 = vpop.f32.mrf.mxu0
      %v2816 = vadd.f32 %v2271, %v2815
      %v2817 = vpop.f32.mrf.mxu0
      %2818 = vmatprep.mubr.bf16.mxu0 %v1408
      %2819 = vmatmul.mubr.bf16.gmra.mxu0 %v1407
      %v2820 = vpop.f32.mrf.mxu0
      %v2821 = vadd.f32 %v2276, %v2820
      %v2822 = vpop.f32.mrf.mxu0
      %v2823 = vpop.f32.mrf.mxu0
      %v2824 = vadd.f32 %v2279, %v2823
      %v2825 = vpop.f32.mrf.mxu0
      %2826 = vmatprep.mubr.bf16.mxu0 %v1412
      %2827 = vmatmul.mubr.bf16.gmra.mxu0 %v1411
      %v2828 = vpop.f32.mrf.mxu0
      %v2829 = vadd.f32 %v2284, %v2828
      %v2830 = vpop.f32.mrf.mxu0
      %v2831 = vpop.f32.mrf.mxu0
      %v2832 = vadd.f32 %v2287, %v2831
      %v2833 = vpop.f32.mrf.mxu0
      %2834 = vmatprep.mubr.bf16.mxu0 %v1416
      %2835 = vmatmul.mubr.bf16.gmra.mxu0 %v1415
      %v2836 = vpop.f32.mrf.mxu0
      %v2837 = vadd.f32 %v2292, %v2836
      %v2838 = vpop.f32.mrf.mxu0
      %v2839 = vpop.f32.mrf.mxu0
      %v2840 = vadd.f32 %v2295, %v2839
      %v2841 = vpop.f32.mrf.mxu0
      %2842 = vmatprep.mubr.bf16.mxu0 %v1420
      %2843 = vmatmul.mubr.bf16.gmra.mxu0 %v1419
      %v2844 = vpop.f32.mrf.mxu0
      %v2845 = vadd.f32 %v2300, %v2844
      %v2846 = vpop.f32.mrf.mxu0
      %v2847 = vpop.f32.mrf.mxu0
      %v2848 = vadd.f32 %v2303, %v2847
      %v2849 = vpop.f32.mrf.mxu0
      %2850 = vmatprep.mubr.bf16.mxu0 %v1424
      %2851 = vmatmul.mubr.bf16.gmra.mxu0 %v1423
      %v2852 = vpop.f32.mrf.mxu0
      %v2853 = vadd.f32 %v2308, %v2852
      %v2854 = vpop.f32.mrf.mxu0
      %v2855 = vpop.f32.mrf.mxu0
      %v2856 = vadd.f32 %v2311, %v2855
      %v2857 = vpop.f32.mrf.mxu0
      %2858 = vmatprep.mubr.bf16.mxu0 %v1428
      %2859 = vmatmul.mubr.bf16.gmra.mxu0 %v1427
      %v2860 = vpop.f32.mrf.mxu0
      %v2861 = vadd.f32 %v2316, %v2860
      %v2862 = vpop.f32.mrf.mxu0
      %v2863 = vpop.f32.mrf.mxu0
      %v2864 = vadd.f32 %v2319, %v2863
      %v2865 = vpop.f32.mrf.mxu0
      %2866 = vmatprep.mubr.bf16.mxu0 %v1432
      %2867 = vmatmul.mubr.bf16.gmra.mxu0 %v1431
      %v2868 = vpop.f32.mrf.mxu0
      %v2869 = vadd.f32 %v2324, %v2868
      %v2870 = vpop.f32.mrf.mxu0
      %v2871 = vpop.f32.mrf.mxu0
      %v2872 = vadd.f32 %v2327, %v2871
      %v2873 = vpop.f32.mrf.mxu0
      %2874 = vmatprep.mubr.bf16.mxu0 %v1436
      %2875 = vmatmul.mubr.bf16.gmra.mxu0 %v1435
      %v2876 = vpop.f32.mrf.mxu0
      %v2877 = vadd.f32 %v2332, %v2876
      %v2878 = vpop.f32.mrf.mxu0
      %v2879 = vpop.f32.mrf.mxu0
      %v2880 = vadd.f32 %v2335, %v2879
      %v2881 = vpop.f32.mrf.mxu0
      %2882 = vmatprep.mubr.bf16.mxu0 %v1440
      %2883 = vmatmul.mubr.bf16.gmra.mxu0 %v1439
      %v2884 = vpop.f32.mrf.mxu0
      %v2885 = vadd.f32 %v2340, %v2884
      %v2886 = vpop.f32.mrf.mxu0
      %v2887 = vpop.f32.mrf.mxu0
      %v2888 = vadd.f32 %v2343, %v2887
      %v2889 = vpop.f32.mrf.mxu0
      %2890 = vmatprep.mubr.bf16.mxu0 %v1444
      %2891 = vmatmul.mubr.bf16.gmra.mxu0 %v1443
      %v2892 = vpop.f32.mrf.mxu0
      %v2893 = vadd.f32 %v2348, %v2892
      %v2894 = vpop.f32.mrf.mxu0
      %v2895 = vpop.f32.mrf.mxu0
      %v2896 = vadd.f32 %v2351, %v2895
      %v2897 = vpop.f32.mrf.mxu0
      %2898 = vmatprep.mubr.bf16.mxu0 %v1448
      %2899 = vmatmul.mubr.bf16.gmra.mxu0 %v1447
      %v2900 = vpop.f32.mrf.mxu0
      %v2901 = vadd.f32 %v2356, %v2900
      %v2902 = vpop.f32.mrf.mxu0
      %v2903 = vpop.f32.mrf.mxu0
      %v2904 = vadd.f32 %v2359, %v2903
      %v2905 = vpop.f32.mrf.mxu0
      %2906 = vmatprep.mubr.bf16.mxu0 %v1452
      %2907 = vmatmul.mubr.bf16.gmra.mxu0 %v1451
      %v2908 = vpop.f32.mrf.mxu0
      %v2909 = vadd.f32 %v2364, %v2908
      %v2910 = vpop.f32.mrf.mxu0
      %v2911 = vpop.f32.mrf.mxu0
      %v2912 = vadd.f32 %v2367, %v2911
      %v2913 = vpop.f32.mrf.mxu0
      %2914 = vmatprep.mubr.bf16.mxu0 %v1456
      %2915 = vmatmul.mubr.bf16.gmra.mxu0 %v1455
      %v2916 = vpop.f32.mrf.mxu0
      %v2917 = vadd.f32 %v2372, %v2916
      %v2918 = vpop.f32.mrf.mxu0
      %v2919 = vpop.f32.mrf.mxu0
      %v2920 = vadd.f32 %v2375, %v2919
      %v2921 = vpop.f32.mrf.mxu0
      %2922 = vmatprep.mubr.bf16.mxu0 %v1460
      %2923 = vmatmul.mubr.bf16.gmra.mxu0 %v1459
      %v2924 = vpop.f32.mrf.mxu0
      %v2925 = vadd.f32 %v2380, %v2924
      %v2926 = vpop.f32.mrf.mxu0
      %v2927 = vpop.f32.mrf.mxu0
      %v2928 = vadd.f32 %v2383, %v2927
      %v2929 = vpop.f32.mrf.mxu0
      %2930 = vmatprep.mubr.bf16.mxu0 %v1464
      %2931 = vmatmul.mubr.bf16.gmra.mxu0 %v1463
      %v2932 = vpop.f32.mrf.mxu0
      %v2933 = vadd.f32 %v2388, %v2932
      %v2934 = vpop.f32.mrf.mxu0
      %v2935 = vpop.f32.mrf.mxu0
      %v2936 = vadd.f32 %v2391, %v2935
      %v2937 = vpop.f32.mrf.mxu0
      %2938 = vmatprep.mubr.bf16.mxu0 %v1468
      %2939 = vmatmul.mubr.bf16.gmra.mxu0 %v1467
      %v2940 = vpop.f32.mrf.mxu0
      %v2941 = vadd.f32 %v2396, %v2940
      %v2942 = vpop.f32.mrf.mxu0
      %v2943 = vpop.f32.mrf.mxu0
      %v2944 = vadd.f32 %v2399, %v2943
      %v2945 = vpop.f32.mrf.mxu0
      %2946 = vmatprep.mubr.bf16.mxu0 %v1472
      %2947 = vmatmul.mubr.bf16.gmra.mxu0 %v1471
      %v2948 = vpop.f32.mrf.mxu0
      %v2949 = vadd.f32 %v2404, %v2948
      %v2950 = vpop.f32.mrf.mxu0
      %v2951 = vpop.f32.mrf.mxu0
      %v2952 = vadd.f32 %v2407, %v2951
      %v2953 = vpop.f32.mrf.mxu0
      %2954 = vmatprep.mubr.bf16.mxu0 %v1476
      %2955 = vmatmul.mubr.bf16.gmra.mxu0 %v1475
      %v2956 = vpop.f32.mrf.mxu0
      %v2957 = vadd.f32 %v2412, %v2956
      %v2958 = vpop.f32.mrf.mxu0
      %v2959 = vpop.f32.mrf.mxu0
      %v2960 = vadd.f32 %v2415, %v2959
      %v2961 = vpop.f32.mrf.mxu0
      %2962 = vmatprep.mubr.bf16.mxu0 %v1480
      %2963 = vmatmul.mubr.bf16.gmra.mxu0 %v1479
      %v2964 = vpop.f32.mrf.mxu0
      %v2965 = vadd.f32 %v2420, %v2964
      %v2966 = vpop.f32.mrf.mxu0
      %v2967 = vpop.f32.mrf.mxu0
      %v2968 = vadd.f32 %v2423, %v2967
      %v2969 = vpop.f32.mrf.mxu0
      %2970 = vmatprep.mubr.bf16.mxu0 %v1484
      %2971 = vmatmul.mubr.bf16.gmra.mxu0 %v1483
      %v2972 = vpop.f32.mrf.mxu0
      %v2973 = vadd.f32 %v2428, %v2972
      %v2974 = vpop.f32.mrf.mxu0
      %v2975 = vpop.f32.mrf.mxu0
      %v2976 = vadd.f32 %v2431, %v2975
      %v2977 = vpop.f32.mrf.mxu0
      %2978 = vmatprep.mubr.bf16.mxu0 %v1488
      %2979 = vmatmul.mubr.bf16.gmra.mxu0 %v1487
      %v2980 = vpop.f32.mrf.mxu0
      %v2981 = vadd.f32 %v2436, %v2980
      %v2982 = vpop.f32.mrf.mxu0
      %v2983 = vpop.f32.mrf.mxu0
      %v2984 = vadd.f32 %v2439, %v2983
      %v2985 = vpop.f32.mrf.mxu0
      %2986 = vmatprep.mubr.bf16.mxu0 %v1492
      %2987 = vmatmul.mubr.bf16.gmra.mxu0 %v1491
      %v2988 = vpop.f32.mrf.mxu0
      %v2989 = vadd.f32 %v2444, %v2988
      %v2990 = vpop.f32.mrf.mxu0
      %v2991 = vpop.f32.mrf.mxu0
      %v2992 = vadd.f32 %v2447, %v2991
      %v2993 = vpop.f32.mrf.mxu0
      %2994 = vmatprep.mubr.bf16.mxu0 %v1496
      %2995 = vmatmul.mubr.bf16.gmra.mxu0 %v1495
      %v2996 = vpop.f32.mrf.mxu0
      %v2997 = vadd.f32 %v2452, %v2996
      %v2998 = vpop.f32.mrf.mxu0
      %v2999 = vpop.f32.mrf.mxu0
      %v3000 = vadd.f32 %v2455, %v2999
      %v3001 = vpop.f32.mrf.mxu0
      %3002 = vmatprep.mubr.bf16.mxu0 %v1500
      %3003 = vmatmul.mubr.bf16.gmra.mxu0 %v1499
      %v3004 = vpop.f32.mrf.mxu0
      %v3005 = vadd.f32 %v2460, %v3004
      %v3006 = vpop.f32.mrf.mxu0
      %v3007 = vpop.f32.mrf.mxu0
      %v3008 = vadd.f32 %v2463, %v3007
      %v3009 = vpop.f32.mrf.mxu0
      %3010 = vmatprep.mubr.bf16.mxu0 %v1504
      %3011 = vmatmul.mubr.bf16.gmra.mxu0 %v1503
      %v3012 = vpop.f32.mrf.mxu0
      %v3013 = vadd.f32 %v2468, %v3012
      %v3014 = vpop.f32.mrf.mxu0
      %v3015 = vpop.f32.mrf.mxu0
      %v3016 = vadd.f32 %v2471, %v3015
      %v3017 = vpop.f32.mrf.mxu0
      %3018 = vmatprep.mubr.bf16.mxu0 %v1508
      %3019 = vmatmul.mubr.bf16.gmra.mxu0 %v1507
      %v3020 = vpop.f32.mrf.mxu0
      %v3021 = vadd.f32 %v2476, %v3020
      %v3022 = vpop.f32.mrf.mxu0
      %v3023 = vpop.f32.mrf.mxu0
      %v3024 = vadd.f32 %v2479, %v3023
      %v3025 = vpop.f32.mrf.mxu0
      %3026 = vmatprep.mubr.bf16.mxu0 %v1512
      %3027 = vmatmul.mubr.bf16.gmra.mxu0 %v1511
      %v3028 = vpop.f32.mrf.mxu0
      %v3029 = vadd.f32 %v2484, %v3028
      %v3030 = vpop.f32.mrf.mxu0
      %v3031 = vpop.f32.mrf.mxu0
      %v3032 = vadd.f32 %v2487, %v3031
      %v3033 = vpop.f32.mrf.mxu0
      %3034 = vmatprep.mubr.bf16.mxu0 %v1516
      %3035 = vmatmul.mubr.bf16.gmra.mxu0 %v1515
      %v3036 = vpop.f32.mrf.mxu0
      %v3037 = vadd.f32 %v2492, %v3036
      %v3038 = vpop.f32.mrf.mxu0
      %v3039 = vpop.f32.mrf.mxu0
      %v3040 = vadd.f32 %v2495, %v3039
      %v3041 = vpop.f32.mrf.mxu0
      %3042 = vmatprep.mubr.bf16.mxu0 %v1520
      %3043 = vmatmul.mubr.bf16.gmra.mxu0 %v1519
      %v3044 = vpop.f32.mrf.mxu0
      %v3045 = vadd.f32 %v2500, %v3044
      %v3046 = vpop.f32.mrf.mxu0
      %v3047 = vpop.f32.mrf.mxu0
      %v3048 = vadd.f32 %v2503, %v3047
      %v3049 = vpop.f32.mrf.mxu0
      %3050 = vmatprep.mubr.bf16.mxu0 %v1524
      %3051 = vmatmul.mubr.bf16.gmra.mxu0 %v1523
      %v3052 = vpop.f32.mrf.mxu0
      %v3053 = vadd.f32 %v2508, %v3052
      %v3054 = vpop.f32.mrf.mxu0
      %v3055 = vpop.f32.mrf.mxu0
      %v3056 = vadd.f32 %v2511, %v3055
      %v3057 = vpop.f32.mrf.mxu0
      %3058 = vmatprep.mubr.bf16.mxu0 %v1528
      %3059 = vmatmul.mubr.bf16.gmra.mxu0 %v1527
      %v3060 = vpop.f32.mrf.mxu0
      %v3061 = vadd.f32 %v2516, %v3060
      %v3062 = vpop.f32.mrf.mxu0
      %v3063 = vpop.f32.mrf.mxu0
      %v3064 = vadd.f32 %v2519, %v3063
      %v3065 = vpop.f32.mrf.mxu0
      %3066 = vdwg.mxu0
      %v3067 = vmax.f32 %v2557, 0.0
      %v3068 = vmax.f32 %v2560, 0.0
      %v3069 = vmax.f32 %v2565, 0.0
      %v3070 = vmax.f32 %v2568, 0.0
      %v3071 = vmax.f32 %v2573, 0.0
      %v3072 = vmax.f32 %v2576, 0.0
      %v3073 = vmax.f32 %v2581, 0.0
      %v3074 = vmax.f32 %v2584, 0.0
      %v3075 = vmax.f32 %v2589, 0.0
      %v3076 = vmax.f32 %v2592, 0.0
      %v3077 = vmax.f32 %v2597, 0.0
      %v3078 = vmax.f32 %v2600, 0.0
      %v3079 = vmax.f32 %v2605, 0.0
      %v3080 = vmax.f32 %v2608, 0.0
      %v3081 = vmax.f32 %v2613, 0.0
      %v3082 = vmax.f32 %v2616, 0.0
      %v3083 = vmax.f32 %v2621, 0.0
      %v3084 = vmax.f32 %v2624, 0.0
      %v3085 = vmax.f32 %v2629, 0.0
      %v3086 = vmax.f32 %v2632, 0.0
      %v3087 = vmax.f32 %v2637, 0.0
      %v3088 = vmax.f32 %v2640, 0.0
      %v3089 = vmax.f32 %v2645, 0.0
      %v3090 = vmax.f32 %v2648, 0.0
      %v3091 = vmax.f32 %v2653, 0.0
      %v3092 = vmax.f32 %v2656, 0.0
      %v3093 = vmax.f32 %v2661, 0.0
      %v3094 = vmax.f32 %v2664, 0.0
      %v3095 = vmax.f32 %v2669, 0.0
      %v3096 = vmax.f32 %v2672, 0.0
      %v3097 = vmax.f32 %v2677, 0.0
      %v3098 = vmax.f32 %v2680, 0.0
      %v3099 = vmax.f32 %v2685, 0.0
      %v3100 = vmax.f32 %v2688, 0.0
      %v3101 = vmax.f32 %v2693, 0.0
      %v3102 = vmax.f32 %v2696, 0.0
      %v3103 = vmax.f32 %v2701, 0.0
      %v3104 = vmax.f32 %v2704, 0.0
      %v3105 = vmax.f32 %v2709, 0.0
      %v3106 = vmax.f32 %v2712, 0.0
      %v3107 = vmax.f32 %v2717, 0.0
      %v3108 = vmax.f32 %v2720, 0.0
      %v3109 = vmax.f32 %v2725, 0.0
      %v3110 = vmax.f32 %v2728, 0.0
      %v3111 = vmax.f32 %v2733, 0.0
      %v3112 = vmax.f32 %v2736, 0.0
      %v3113 = vmax.f32 %v2741, 0.0
      %v3114 = vmax.f32 %v2744, 0.0
      %v3115 = vmax.f32 %v2749, 0.0
      %v3116 = vmax.f32 %v2752, 0.0
      %v3117 = vmax.f32 %v2757, 0.0
      %v3118 = vmax.f32 %v2760, 0.0
      %v3119 = vmax.f32 %v2765, 0.0
      %v3120 = vmax.f32 %v2768, 0.0
      %v3121 = vmax.f32 %v2773, 0.0
      %v3122 = vmax.f32 %v2776, 0.0
      %v3123 = vmax.f32 %v2781, 0.0
      %v3124 = vmax.f32 %v2784, 0.0
      %v3125 = vmax.f32 %v2789, 0.0
      %v3126 = vmax.f32 %v2792, 0.0
      %v3127 = vmax.f32 %v2797, 0.0
      %v3128 = vmax.f32 %v2800, 0.0
      %v3129 = vmax.f32 %v2805, 0.0
      %v3130 = vmax.f32 %v2808, 0.0
      %v3131 = vmax.f32 %v2813, 0.0
      %v3132 = vmax.f32 %v2816, 0.0
      %v3133 = vmax.f32 %v2821, 0.0
      %v3134 = vmax.f32 %v2824, 0.0
      %v3135 = vmax.f32 %v2829, 0.0
      %v3136 = vmax.f32 %v2832, 0.0
      %v3137 = vmax.f32 %v2837, 0.0
      %v3138 = vmax.f32 %v2840, 0.0
      %v3139 = vmax.f32 %v2845, 0.0
      %v3140 = vmax.f32 %v2848, 0.0
      %v3141 = vmax.f32 %v2853, 0.0
      %v3142 = vmax.f32 %v2856, 0.0
      %v3143 = vmax.f32 %v2861, 0.0
      %v3144 = vmax.f32 %v2864, 0.0
      %v3145 = vmax.f32 %v2869, 0.0
      %v3146 = vmax.f32 %v2872, 0.0
      %v3147 = vmax.f32 %v2877, 0.0
      %v3148 = vmax.f32 %v2880, 0.0
      %v3149 = vmax.f32 %v2885, 0.0
      %v3150 = vmax.f32 %v2888, 0.0
      %v3151 = vmax.f32 %v2893, 0.0
      %v3152 = vmax.f32 %v2896, 0.0
      %v3153 = vmax.f32 %v2901, 0.0
      %v3154 = vmax.f32 %v2904, 0.0
      %v3155 = vmax.f32 %v2909, 0.0
      %v3156 = vmax.f32 %v2912, 0.0
      %v3157 = vmax.f32 %v2917, 0.0
      %v3158 = vmax.f32 %v2920, 0.0
      %v3159 = vmax.f32 %v2925, 0.0
      %v3160 = vmax.f32 %v2928, 0.0
      %v3161 = vmax.f32 %v2933, 0.0
      %v3162 = vmax.f32 %v2936, 0.0
      %v3163 = vmax.f32 %v2941, 0.0
      %v3164 = vmax.f32 %v2944, 0.0
      %v3165 = vmax.f32 %v2949, 0.0
      %v3166 = vmax.f32 %v2952, 0.0
      %v3167 = vmax.f32 %v2957, 0.0
      %v3168 = vmax.f32 %v2960, 0.0
      %v3169 = vmax.f32 %v2965, 0.0
      %v3170 = vmax.f32 %v2968, 0.0
      %v3171 = vmax.f32 %v2973, 0.0
      %v3172 = vmax.f32 %v2976, 0.0
      %v3173 = vmax.f32 %v2981, 0.0
      %v3174 = vmax.f32 %v2984, 0.0
      %v3175 = vmax.f32 %v2989, 0.0
      %v3176 = vmax.f32 %v2992, 0.0
      %v3177 = vmax.f32 %v2997, 0.0
      %v3178 = vmax.f32 %v3000, 0.0
      %v3179 = vmax.f32 %v3005, 0.0
      %v3180 = vmax.f32 %v3008, 0.0
      %v3181 = vmax.f32 %v3013, 0.0
      %v3182 = vmax.f32 %v3016, 0.0
      %v3183 = vmax.f32 %v3021, 0.0
      %v3184 = vmax.f32 %v3024, 0.0
      %v3185 = vmax.f32 %v3029, 0.0
      %v3186 = vmax.f32 %v3032, 0.0
      %v3187 = vmax.f32 %v3037, 0.0
      %v3188 = vmax.f32 %v3040, 0.0
      %v3189 = vmax.f32 %v3045, 0.0
      %v3190 = vmax.f32 %v3048, 0.0
      %v3191 = vmax.f32 %v3053, 0.0
      %v3192 = vmax.f32 %v3056, 0.0
      %v3193 = vmax.f32 %v3061, 0.0
      %v3194 = vmax.f32 %v3064, 0.0
      %v3195 = vpack.c.bf16 %v3068, %v3067
      %v3196 = vpack.c.bf16 %v3070, %v3069
      %v3197 = vpack.c.bf16 %v3072, %v3071
      %v3198 = vpack.c.bf16 %v3074, %v3073
      %v3199 = vpack.c.bf16 %v3076, %v3075
      %v3200 = vpack.c.bf16 %v3078, %v3077
      %v3201 = vpack.c.bf16 %v3080, %v3079
      %v3202 = vpack.c.bf16 %v3082, %v3081
      %v3203 = vpack.c.bf16 %v3084, %v3083
      %v3204 = vpack.c.bf16 %v3086, %v3085
      %v3205 = vpack.c.bf16 %v3088, %v3087
      %v3206 = vpack.c.bf16 %v3090, %v3089
      %v3207 = vpack.c.bf16 %v3092, %v3091
      %v3208 = vpack.c.bf16 %v3094, %v3093
      %v3209 = vpack.c.bf16 %v3096, %v3095
      %v3210 = vpack.c.bf16 %v3098, %v3097
      %v3211 = vpack.c.bf16 %v3100, %v3099
      %v3212 = vpack.c.bf16 %v3102, %v3101
      %v3213 = vpack.c.bf16 %v3104, %v3103
      %v3214 = vpack.c.bf16 %v3106, %v3105
      %v3215 = vpack.c.bf16 %v3108, %v3107
      %v3216 = vpack.c.bf16 %v3110, %v3109
      %v3217 = vpack.c.bf16 %v3112, %v3111
      %v3218 = vpack.c.bf16 %v3114, %v3113
      %v3219 = vpack.c.bf16 %v3116, %v3115
      %v3220 = vpack.c.bf16 %v3118, %v3117
      %v3221 = vpack.c.bf16 %v3120, %v3119
      %v3222 = vpack.c.bf16 %v3122, %v3121
      %v3223 = vpack.c.bf16 %v3124, %v3123
      %v3224 = vpack.c.bf16 %v3126, %v3125
      %v3225 = vpack.c.bf16 %v3128, %v3127
      %v3226 = vpack.c.bf16 %v3130, %v3129
      %v3227 = vpack.c.bf16 %v3132, %v3131
      %v3228 = vpack.c.bf16 %v3134, %v3133
      %v3229 = vpack.c.bf16 %v3136, %v3135
      %v3230 = vpack.c.bf16 %v3138, %v3137
      %v3231 = vpack.c.bf16 %v3140, %v3139
      %v3232 = vpack.c.bf16 %v3142, %v3141
      %v3233 = vpack.c.bf16 %v3144, %v3143
      %v3234 = vpack.c.bf16 %v3146, %v3145
      %v3235 = vpack.c.bf16 %v3148, %v3147
      %v3236 = vpack.c.bf16 %v3150, %v3149
      %v3237 = vpack.c.bf16 %v3152, %v3151
      %v3238 = vpack.c.bf16 %v3154, %v3153
      %v3239 = vpack.c.bf16 %v3156, %v3155
      %v3240 = vpack.c.bf16 %v3158, %v3157
      %v3241 = vpack.c.bf16 %v3160, %v3159
      %v3242 = vpack.c.bf16 %v3162, %v3161
      %v3243 = vpack.c.bf16 %v3164, %v3163
      %v3244 = vpack.c.bf16 %v3166, %v3165
      %v3245 = vpack.c.bf16 %v3168, %v3167
      %v3246 = vpack.c.bf16 %v3170, %v3169
      %v3247 = vpack.c.bf16 %v3172, %v3171
      %v3248 = vpack.c.bf16 %v3174, %v3173
      %v3249 = vpack.c.bf16 %v3176, %v3175
      %v3250 = vpack.c.bf16 %v3178, %v3177
      %v3251 = vpack.c.bf16 %v3180, %v3179
      %v3252 = vpack.c.bf16 %v3182, %v3181
      %v3253 = vpack.c.bf16 %v3184, %v3183
      %v3254 = vpack.c.bf16 %v3186, %v3185
      %v3255 = vpack.c.bf16 %v3188, %v3187
      %v3256 = vpack.c.bf16 %v3190, %v3189
      %v3257 = vpack.c.bf16 %v3192, %v3191
      %v3258 = vpack.c.bf16 %v3194, %v3193
      %v3323 = vunpack.c.l.b16 %v3195
      %v3324 = vunpack.c.h.b16 %v3195
      %v3325 = vunpack.c.l.b16 %v3196
      %v3326 = vunpack.c.h.b16 %v3196
      %v3327 = vunpack.c.l.b16 %v3197
      %v3328 = vunpack.c.h.b16 %v3197
      %v3329 = vunpack.c.l.b16 %v3198
      %v3330 = vunpack.c.h.b16 %v3198
      %v3331 = vunpack.c.l.b16 %v3199
      %v3332 = vunpack.c.h.b16 %v3199
      %v3333 = vunpack.c.l.b16 %v3200
      %v3334 = vunpack.c.h.b16 %v3200
      %v3335 = vunpack.c.l.b16 %v3201
      %v3336 = vunpack.c.h.b16 %v3201
      %v3337 = vunpack.c.l.b16 %v3202
      %v3338 = vunpack.c.h.b16 %v3202
      %v3339 = vunpack.c.l.b16 %v3203
      %v3340 = vunpack.c.h.b16 %v3203
      %v3341 = vunpack.c.l.b16 %v3204
      %v3342 = vunpack.c.h.b16 %v3204
      %v3343 = vunpack.c.l.b16 %v3205
      %v3344 = vunpack.c.h.b16 %v3205
      %v3345 = vunpack.c.l.b16 %v3206
      %v3346 = vunpack.c.h.b16 %v3206
      %v3347 = vunpack.c.l.b16 %v3207
      %v3348 = vunpack.c.h.b16 %v3207
      %v3349 = vunpack.c.l.b16 %v3208
      %v3350 = vunpack.c.h.b16 %v3208
      %v3351 = vunpack.c.l.b16 %v3209
      %v3352 = vunpack.c.h.b16 %v3209
      %v3353 = vunpack.c.l.b16 %v3210
      %v3354 = vunpack.c.h.b16 %v3210
      %v3355 = vunpack.c.l.b16 %v3211
      %v3356 = vunpack.c.h.b16 %v3211
      %v3357 = vunpack.c.l.b16 %v3212
      %v3358 = vunpack.c.h.b16 %v3212
      %v3359 = vunpack.c.l.b16 %v3213
      %v3360 = vunpack.c.h.b16 %v3213
      %v3361 = vunpack.c.l.b16 %v3214
      %v3362 = vunpack.c.h.b16 %v3214
      %v3363 = vunpack.c.l.b16 %v3215
      %v3364 = vunpack.c.h.b16 %v3215
      %v3365 = vunpack.c.l.b16 %v3216
      %v3366 = vunpack.c.h.b16 %v3216
      %v3367 = vunpack.c.l.b16 %v3217
      %v3368 = vunpack.c.h.b16 %v3217
      %v3369 = vunpack.c.l.b16 %v3218
      %v3370 = vunpack.c.h.b16 %v3218
      %v3371 = vunpack.c.l.b16 %v3219
      %v3372 = vunpack.c.h.b16 %v3219
      %v3373 = vunpack.c.l.b16 %v3220
      %v3374 = vunpack.c.h.b16 %v3220
      %v3375 = vunpack.c.l.b16 %v3221
      %v3376 = vunpack.c.h.b16 %v3221
      %v3377 = vunpack.c.l.b16 %v3222
      %v3378 = vunpack.c.h.b16 %v3222
      %v3379 = vunpack.c.l.b16 %v3223
      %v3380 = vunpack.c.h.b16 %v3223
      %v3381 = vunpack.c.l.b16 %v3224
      %v3382 = vunpack.c.h.b16 %v3224
      %v3383 = vunpack.c.l.b16 %v3225
      %v3384 = vunpack.c.h.b16 %v3225
      %v3385 = vunpack.c.l.b16 %v3226
      %v3386 = vunpack.c.h.b16 %v3226
      %v3387 = vunpack.c.l.b16 %v3227
      %v3388 = vunpack.c.h.b16 %v3227
      %v3389 = vunpack.c.l.b16 %v3228
      %v3390 = vunpack.c.h.b16 %v3228
      %v3391 = vunpack.c.l.b16 %v3229
      %v3392 = vunpack.c.h.b16 %v3229
      %v3393 = vunpack.c.l.b16 %v3230
      %v3394 = vunpack.c.h.b16 %v3230
      %v3395 = vunpack.c.l.b16 %v3231
      %v3396 = vunpack.c.h.b16 %v3231
      %v3397 = vunpack.c.l.b16 %v3232
      %v3398 = vunpack.c.h.b16 %v3232
      %v3399 = vunpack.c.l.b16 %v3233
      %v3400 = vunpack.c.h.b16 %v3233
      %v3401 = vunpack.c.l.b16 %v3234
      %v3402 = vunpack.c.h.b16 %v3234
      %v3403 = vunpack.c.l.b16 %v3235
      %v3404 = vunpack.c.h.b16 %v3235
      %v3405 = vunpack.c.l.b16 %v3236
      %v3406 = vunpack.c.h.b16 %v3236
      %v3407 = vunpack.c.l.b16 %v3237
      %v3408 = vunpack.c.h.b16 %v3237
      %v3409 = vunpack.c.l.b16 %v3238
      %v3410 = vunpack.c.h.b16 %v3238
      %v3411 = vunpack.c.l.b16 %v3239
      %v3412 = vunpack.c.h.b16 %v3239
      %v3413 = vunpack.c.l.b16 %v3240
      %v3414 = vunpack.c.h.b16 %v3240
      %v3415 = vunpack.c.l.b16 %v3241
      %v3416 = vunpack.c.h.b16 %v3241
      %v3417 = vunpack.c.l.b16 %v3242
      %v3418 = vunpack.c.h.b16 %v3242
      %v3419 = vunpack.c.l.b16 %v3243
      %v3420 = vunpack.c.h.b16 %v3243
      %v3421 = vunpack.c.l.b16 %v3244
      %v3422 = vunpack.c.h.b16 %v3244
      %v3423 = vunpack.c.l.b16 %v3245
      %v3424 = vunpack.c.h.b16 %v3245
      %v3425 = vunpack.c.l.b16 %v3246
      %v3426 = vunpack.c.h.b16 %v3246
      %v3427 = vunpack.c.l.b16 %v3247
      %v3428 = vunpack.c.h.b16 %v3247
      %v3429 = vunpack.c.l.b16 %v3248
      %v3430 = vunpack.c.h.b16 %v3248
      %v3431 = vunpack.c.l.b16 %v3249
      %v3432 = vunpack.c.h.b16 %v3249
      %v3433 = vunpack.c.l.b16 %v3250
      %v3434 = vunpack.c.h.b16 %v3250
      %v3435 = vunpack.c.l.b16 %v3251
      %v3436 = vunpack.c.h.b16 %v3251
      %v3437 = vunpack.c.l.b16 %v3252
      %v3438 = vunpack.c.h.b16 %v3252
      %v3439 = vunpack.c.l.b16 %v3253
      %v3440 = vunpack.c.h.b16 %v3253
      %v3441 = vunpack.c.l.b16 %v3254
      %v3442 = vunpack.c.h.b16 %v3254
      %v3443 = vunpack.c.l.b16 %v3255
      %v3444 = vunpack.c.h.b16 %v3255
      %v3445 = vunpack.c.l.b16 %v3256
      %v3446 = vunpack.c.h.b16 %v3256
      %v3447 = vunpack.c.l.b16 %v3257
      %v3448 = vunpack.c.h.b16 %v3257
      %v3449 = vunpack.c.l.b16 %v3258
      %v3450 = vunpack.c.h.b16 %v3258
      %v3451 = vpack.c.b16 %v3323, %v3323
      %v3452 = vpack.c.b16 %v3324, %v3324
      %v3453 = vpack.c.b16 %v3325, %v3325
      %v3454 = vpack.c.b16 %v3326, %v3326
      %v3455 = vpack.c.b16 %v3327, %v3327
      %v3456 = vpack.c.b16 %v3328, %v3328
      %v3457 = vpack.c.b16 %v3329, %v3329
      %v3458 = vpack.c.b16 %v3330, %v3330
      %v3459 = vpack.c.b16 %v3331, %v3331
      %v3460 = vpack.c.b16 %v3332, %v3332
      %v3461 = vpack.c.b16 %v3333, %v3333
      %v3462 = vpack.c.b16 %v3334, %v3334
      %v3463 = vpack.c.b16 %v3335, %v3335
      %v3464 = vpack.c.b16 %v3336, %v3336
      %v3465 = vpack.c.b16 %v3337, %v3337
      %v3466 = vpack.c.b16 %v3338, %v3338
      %v3467 = vpack.c.b16 %v3339, %v3339
      %v3468 = vpack.c.b16 %v3340, %v3340
      %v3469 = vpack.c.b16 %v3341, %v3341
      %v3470 = vpack.c.b16 %v3342, %v3342
      %v3471 = vpack.c.b16 %v3343, %v3343
      %v3472 = vpack.c.b16 %v3344, %v3344
      %v3473 = vpack.c.b16 %v3345, %v3345
      %v3474 = vpack.c.b16 %v3346, %v3346
      %v3475 = vpack.c.b16 %v3347, %v3347
      %v3476 = vpack.c.b16 %v3348, %v3348
      %v3477 = vpack.c.b16 %v3349, %v3349
      %v3478 = vpack.c.b16 %v3350, %v3350
      %v3479 = vpack.c.b16 %v3351, %v3351
      %v3480 = vpack.c.b16 %v3352, %v3352
      %v3481 = vpack.c.b16 %v3353, %v3353
      %v3482 = vpack.c.b16 %v3354, %v3354
      %v3483 = vpack.c.b16 %v3355, %v3355
      %v3484 = vpack.c.b16 %v3356, %v3356
      %v3485 = vpack.c.b16 %v3357, %v3357
      %v3486 = vpack.c.b16 %v3358, %v3358
      %v3487 = vpack.c.b16 %v3359, %v3359
      %v3488 = vpack.c.b16 %v3360, %v3360
      %v3489 = vpack.c.b16 %v3361, %v3361
      %v3490 = vpack.c.b16 %v3362, %v3362
      %v3491 = vpack.c.b16 %v3363, %v3363
      %v3492 = vpack.c.b16 %v3364, %v3364
      %v3493 = vpack.c.b16 %v3365, %v3365
      %v3494 = vpack.c.b16 %v3366, %v3366
      %v3495 = vpack.c.b16 %v3367, %v3367
      %v3496 = vpack.c.b16 %v3368, %v3368
      %v3497 = vpack.c.b16 %v3369, %v3369
      %v3498 = vpack.c.b16 %v3370, %v3370
      %v3499 = vpack.c.b16 %v3371, %v3371
      %v3500 = vpack.c.b16 %v3372, %v3372
      %v3501 = vpack.c.b16 %v3373, %v3373
      %v3502 = vpack.c.b16 %v3374, %v3374
      %v3503 = vpack.c.b16 %v3375, %v3375
      %v3504 = vpack.c.b16 %v3376, %v3376
      %v3505 = vpack.c.b16 %v3377, %v3377
      %v3506 = vpack.c.b16 %v3378, %v3378
      %v3507 = vpack.c.b16 %v3379, %v3379
      %v3508 = vpack.c.b16 %v3380, %v3380
      %v3509 = vpack.c.b16 %v3381, %v3381
      %v3510 = vpack.c.b16 %v3382, %v3382
      %v3511 = vpack.c.b16 %v3383, %v3383
      %v3512 = vpack.c.b16 %v3384, %v3384
      %v3513 = vpack.c.b16 %v3385, %v3385
      %v3514 = vpack.c.b16 %v3386, %v3386
      %v3515 = vpack.c.b16 %v3387, %v3387
      %v3516 = vpack.c.b16 %v3388, %v3388
      %v3517 = vpack.c.b16 %v3389, %v3389
      %v3518 = vpack.c.b16 %v3390, %v3390
      %v3519 = vpack.c.b16 %v3391, %v3391
      %v3520 = vpack.c.b16 %v3392, %v3392
      %v3521 = vpack.c.b16 %v3393, %v3393
      %v3522 = vpack.c.b16 %v3394, %v3394
      %v3523 = vpack.c.b16 %v3395, %v3395
      %v3524 = vpack.c.b16 %v3396, %v3396
      %v3525 = vpack.c.b16 %v3397, %v3397
      %v3526 = vpack.c.b16 %v3398, %v3398
      %v3527 = vpack.c.b16 %v3399, %v3399
      %v3528 = vpack.c.b16 %v3400, %v3400
      %v3529 = vpack.c.b16 %v3401, %v3401
      %v3530 = vpack.c.b16 %v3402, %v3402
      %v3531 = vpack.c.b16 %v3403, %v3403
      %v3532 = vpack.c.b16 %v3404, %v3404
      %v3533 = vpack.c.b16 %v3405, %v3405
      %v3534 = vpack.c.b16 %v3406, %v3406
      %v3535 = vpack.c.b16 %v3407, %v3407
      %v3536 = vpack.c.b16 %v3408, %v3408
      %v3537 = vpack.c.b16 %v3409, %v3409
      %v3538 = vpack.c.b16 %v3410, %v3410
      %v3539 = vpack.c.b16 %v3411, %v3411
      %v3540 = vpack.c.b16 %v3412, %v3412
      %v3541 = vpack.c.b16 %v3413, %v3413
      %v3542 = vpack.c.b16 %v3414, %v3414
      %v3543 = vpack.c.b16 %v3415, %v3415
      %v3544 = vpack.c.b16 %v3416, %v3416
      %v3545 = vpack.c.b16 %v3417, %v3417
      %v3546 = vpack.c.b16 %v3418, %v3418
      %v3547 = vpack.c.b16 %v3419, %v3419
      %v3548 = vpack.c.b16 %v3420, %v3420
      %v3549 = vpack.c.b16 %v3421, %v3421
      %v3550 = vpack.c.b16 %v3422, %v3422
      %v3551 = vpack.c.b16 %v3423, %v3423
      %v3552 = vpack.c.b16 %v3424, %v3424
      %v3553 = vpack.c.b16 %v3425, %v3425
      %v3554 = vpack.c.b16 %v3426, %v3426
      %v3555 = vpack.c.b16 %v3427, %v3427
      %v3556 = vpack.c.b16 %v3428, %v3428
      %v3557 = vpack.c.b16 %v3429, %v3429
      %v3558 = vpack.c.b16 %v3430, %v3430
      %v3559 = vpack.c.b16 %v3431, %v3431
      %v3560 = vpack.c.b16 %v3432, %v3432
      %v3561 = vpack.c.b16 %v3433, %v3433
      %v3562 = vpack.c.b16 %v3434, %v3434
      %v3563 = vpack.c.b16 %v3435, %v3435
      %v3564 = vpack.c.b16 %v3436, %v3436
      %v3565 = vpack.c.b16 %v3437, %v3437
      %v3566 = vpack.c.b16 %v3438, %v3438
      %v3567 = vpack.c.b16 %v3439, %v3439
      %v3568 = vpack.c.b16 %v3440, %v3440
      %v3569 = vpack.c.b16 %v3441, %v3441
      %v3570 = vpack.c.b16 %v3442, %v3442
      %v3571 = vpack.c.b16 %v3443, %v3443
      %v3572 = vpack.c.b16 %v3444, %v3444
      %v3573 = vpack.c.b16 %v3445, %v3445
      %v3574 = vpack.c.b16 %v3446, %v3446
      %v3575 = vpack.c.b16 %v3447, %v3447
      %v3576 = vpack.c.b16 %v3448, %v3448
      %v3577 = vpack.c.b16 %v3449, %v3449
      %v3578 = vpack.c.b16 %v3450, %v3450
      %3707 = vst [vmem:[%s175] sm:$0xf] %v3451
      %3708 = vst [vmem:[%s175 + $0x4] sm:$0xf] %v3452
      %3709 = vst [vmem:[%s175 + $0x8] sm:$0xf] %v3453
      %3710 = vst [vmem:[%s175 + $0xc] sm:$0xf] %v3454
      %3711 = vst [vmem:[%s175 + $0x10] sm:$0xf] %v3455
      %3712 = vst [vmem:[%s175 + $0x14] sm:$0xf] %v3456
      %3713 = vst [vmem:[%s175 + $0x18] sm:$0xf] %v3457
      %3714 = vst [vmem:[%s175 + $0x1c] sm:$0xf] %v3458
      %3715 = vst [vmem:[%s175 + $0x20] sm:$0xf] %v3459
      %3716 = vst [vmem:[%s175 + $0x24] sm:$0xf] %v3460
      %3717 = vst [vmem:[%s175 + $0x28] sm:$0xf] %v3461
      %3718 = vst [vmem:[%s175 + $0x2c] sm:$0xf] %v3462
      %3719 = vst [vmem:[%s175 + $0x30] sm:$0xf] %v3463
      %3720 = vst [vmem:[%s175 + $0x34] sm:$0xf] %v3464
      %3721 = vst [vmem:[%s175 + $0x38] sm:$0xf] %v3465
      %3722 = vst [vmem:[%s175 + $0x3c] sm:$0xf] %v3466
      %3723 = vst [vmem:[%s175 + $0x40] sm:$0xf] %v3467
      %3724 = vst [vmem:[%s175 + $0x44] sm:$0xf] %v3468
      %3725 = vst [vmem:[%s175 + $0x48] sm:$0xf] %v3469
      %3726 = vst [vmem:[%s175 + $0x4c] sm:$0xf] %v3470
      %3727 = vst [vmem:[%s175 + $0x50] sm:$0xf] %v3471
      %3728 = vst [vmem:[%s175 + $0x54] sm:$0xf] %v3472
      %3729 = vst [vmem:[%s175 + $0x58] sm:$0xf] %v3473
      %3730 = vst [vmem:[%s175 + $0x5c] sm:$0xf] %v3474
      %3731 = vst [vmem:[%s175 + $0x60] sm:$0xf] %v3475
      %3732 = vst [vmem:[%s175 + $0x64] sm:$0xf] %v3476
      %3733 = vst [vmem:[%s175 + $0x68] sm:$0xf] %v3477
      %3734 = vst [vmem:[%s175 + $0x6c] sm:$0xf] %v3478
      %3735 = vst [vmem:[%s175 + $0x70] sm:$0xf] %v3479
      %3736 = vst [vmem:[%s175 + $0x74] sm:$0xf] %v3480
      %3737 = vst [vmem:[%s175 + $0x78] sm:$0xf] %v3481
      %3738 = vst [vmem:[%s175 + $0x7c] sm:$0xf] %v3482
      %3739 = vst [vmem:[%s175 + $0x80] sm:$0xf] %v3483
      %3740 = vst [vmem:[%s175 + $0x84] sm:$0xf] %v3484
      %3741 = vst [vmem:[%s175 + $0x88] sm:$0xf] %v3485
      %3742 = vst [vmem:[%s175 + $0x8c] sm:$0xf] %v3486
      %3743 = vst [vmem:[%s175 + $0x90] sm:$0xf] %v3487
      %3744 = vst [vmem:[%s175 + $0x94] sm:$0xf] %v3488
      %3745 = vst [vmem:[%s175 + $0x98] sm:$0xf] %v3489
      %3746 = vst [vmem:[%s175 + $0x9c] sm:$0xf] %v3490
      %3747 = vst [vmem:[%s175 + $0xa0] sm:$0xf] %v3491
      %3748 = vst [vmem:[%s175 + $0xa4] sm:$0xf] %v3492
      %3749 = vst [vmem:[%s175 + $0xa8] sm:$0xf] %v3493
      %3750 = vst [vmem:[%s175 + $0xac] sm:$0xf] %v3494
      %3751 = vst [vmem:[%s175 + $0xb0] sm:$0xf] %v3495
      %3752 = vst [vmem:[%s175 + $0xb4] sm:$0xf] %v3496
      %3753 = vst [vmem:[%s175 + $0xb8] sm:$0xf] %v3497
      %3754 = vst [vmem:[%s175 + $0xbc] sm:$0xf] %v3498
      %3755 = vst [vmem:[%s175 + $0xc0] sm:$0xf] %v3499
      %3756 = vst [vmem:[%s175 + $0xc4] sm:$0xf] %v3500
      %3757 = vst [vmem:[%s175 + $0xc8] sm:$0xf] %v3501
      %3758 = vst [vmem:[%s175 + $0xcc] sm:$0xf] %v3502
      %3759 = vst [vmem:[%s175 + $0xd0] sm:$0xf] %v3503
      %3760 = vst [vmem:[%s175 + $0xd4] sm:$0xf] %v3504
      %3761 = vst [vmem:[%s175 + $0xd8] sm:$0xf] %v3505
      %3762 = vst [vmem:[%s175 + $0xdc] sm:$0xf] %v3506
      %3763 = vst [vmem:[%s175 + $0xe0] sm:$0xf] %v3507
      %3764 = vst [vmem:[%s175 + $0xe4] sm:$0xf] %v3508
      %3765 = vst [vmem:[%s175 + $0xe8] sm:$0xf] %v3509
      %3766 = vst [vmem:[%s175 + $0xec] sm:$0xf] %v3510
      %3767 = vst [vmem:[%s175 + $0xf0] sm:$0xf] %v3511
      %3768 = vst [vmem:[%s175 + $0xf4] sm:$0xf] %v3512
      %3769 = vst [vmem:[%s175 + $0xf8] sm:$0xf] %v3513
      %3770 = vst [vmem:[%s175 + $0xfc] sm:$0xf] %v3514
      %3771 = vst [vmem:[%s175 + $0x100] sm:$0xf] %v3515
      %3772 = vst [vmem:[%s175 + $0x104] sm:$0xf] %v3516
      %3773 = vst [vmem:[%s175 + $0x108] sm:$0xf] %v3517
      %3774 = vst [vmem:[%s175 + $0x10c] sm:$0xf] %v3518
      %3775 = vst [vmem:[%s175 + $0x110] sm:$0xf] %v3519
      %3776 = vst [vmem:[%s175 + $0x114] sm:$0xf] %v3520
      %3777 = vst [vmem:[%s175 + $0x118] sm:$0xf] %v3521
      %3778 = vst [vmem:[%s175 + $0x11c] sm:$0xf] %v3522
      %3779 = vst [vmem:[%s175 + $0x120] sm:$0xf] %v3523
      %3780 = vst [vmem:[%s175 + $0x124] sm:$0xf] %v3524
      %3781 = vst [vmem:[%s175 + $0x128] sm:$0xf] %v3525
      %3782 = vst [vmem:[%s175 + $0x12c] sm:$0xf] %v3526
      %3783 = vst [vmem:[%s175 + $0x130] sm:$0xf] %v3527
      %3784 = vst [vmem:[%s175 + $0x134] sm:$0xf] %v3528
      %3785 = vst [vmem:[%s175 + $0x138] sm:$0xf] %v3529
      %3786 = vst [vmem:[%s175 + $0x13c] sm:$0xf] %v3530
      %3787 = vst [vmem:[%s175 + $0x140] sm:$0xf] %v3531
      %3788 = vst [vmem:[%s175 + $0x144] sm:$0xf] %v3532
      %3789 = vst [vmem:[%s175 + $0x148] sm:$0xf] %v3533
      %3790 = vst [vmem:[%s175 + $0x14c] sm:$0xf] %v3534
      %3791 = vst [vmem:[%s175 + $0x150] sm:$0xf] %v3535
      %3792 = vst [vmem:[%s175 + $0x154] sm:$0xf] %v3536
      %3793 = vst [vmem:[%s175 + $0x158] sm:$0xf] %v3537
      %3794 = vst [vmem:[%s175 + $0x15c] sm:$0xf] %v3538
      %3795 = vst [vmem:[%s175 + $0x160] sm:$0xf] %v3539
      %3796 = vst [vmem:[%s175 + $0x164] sm:$0xf] %v3540
      %3797 = vst [vmem:[%s175 + $0x168] sm:$0xf] %v3541
      %3798 = vst [vmem:[%s175 + $0x16c] sm:$0xf] %v3542
      %3799 = vst [vmem:[%s175 + $0x170] sm:$0xf] %v3543
      %3800 = vst [vmem:[%s175 + $0x174] sm:$0xf] %v3544
      %3801 = vst [vmem:[%s175 + $0x178] sm:$0xf] %v3545
      %3802 = vst [vmem:[%s175 + $0x17c] sm:$0xf] %v3546
      %3803 = vst [vmem:[%s175 + $0x180] sm:$0xf] %v3547
      %3804 = vst [vmem:[%s175 + $0x184] sm:$0xf] %v3548
      %3805 = vst [vmem:[%s175 + $0x188] sm:$0xf] %v3549
      %3806 = vst [vmem:[%s175 + $0x18c] sm:$0xf] %v3550
      %3807 = vst [vmem:[%s175 + $0x190] sm:$0xf] %v3551
      %3808 = vst [vmem:[%s175 + $0x194] sm:$0xf] %v3552
      %3809 = vst [vmem:[%s175 + $0x198] sm:$0xf] %v3553
      %3810 = vst [vmem:[%s175 + $0x19c] sm:$0xf] %v3554
      %3811 = vst [vmem:[%s175 + $0x1a0] sm:$0xf] %v3555
      %3812 = vst [vmem:[%s175 + $0x1a4] sm:$0xf] %v3556
      %3813 = vst [vmem:[%s175 + $0x1a8] sm:$0xf] %v3557
      %3814 = vst [vmem:[%s175 + $0x1ac] sm:$0xf] %v3558
      %3815 = vst [vmem:[%s175 + $0x1b0] sm:$0xf] %v3559
      %3816 = vst [vmem:[%s175 + $0x1b4] sm:$0xf] %v3560
      %3817 = vst [vmem:[%s175 + $0x1b8] sm:$0xf] %v3561
      %3818 = vst [vmem:[%s175 + $0x1bc] sm:$0xf] %v3562
      %3819 = vst [vmem:[%s175 + $0x1c0] sm:$0xf] %v3563
      %3820 = vst [vmem:[%s175 + $0x1c4] sm:$0xf] %v3564
      %3821 = vst [vmem:[%s175 + $0x1c8] sm:$0xf] %v3565
      %3822 = vst [vmem:[%s175 + $0x1cc] sm:$0xf] %v3566
      %3823 = vst [vmem:[%s175 + $0x1d0] sm:$0xf] %v3567
      %3824 = vst [vmem:[%s175 + $0x1d4] sm:$0xf] %v3568
      %3825 = vst [vmem:[%s175 + $0x1d8] sm:$0xf] %v3569
      %3826 = vst [vmem:[%s175 + $0x1dc] sm:$0xf] %v3570
      %3827 = vst [vmem:[%s175 + $0x1e0] sm:$0xf] %v3571
      %3828 = vst [vmem:[%s175 + $0x1e4] sm:$0xf] %v3572
      %3829 = vst [vmem:[%s175 + $0x1e8] sm:$0xf] %v3573
      %3830 = vst [vmem:[%s175 + $0x1ec] sm:$0xf] %v3574
      %3831 = vst [vmem:[%s175 + $0x1f0] sm:$0xf] %v3575
      %3832 = vst [vmem:[%s175 + $0x1f4] sm:$0xf] %v3576
      %3833 = vst [vmem:[%s175 + $0x1f8] sm:$0xf] %v3577
      %3834 = vst [vmem:[%s175 + $0x1fc] sm:$0xf] %v3578
      %s3835 = smul.u32 128, %s14
      %p3836 = scmp.lt.s32.totalorder %s3835, 383
      %s3837 = scalar_select %p3836, %s3835, 383
      %s3838 = smul.addr %s3837, 4
      %s3839 = scalar_lea.vmem %s3, %s3838
      // Predicated region
      $region33: #{a_convnet_forward.10} parent=31 // pred_check
        %p3840 = pneg %p100
      $region34: #{a_convnet_forward.10} parent=31 // pred_check_branch
        %3842 = sbr.rel (%p3840) target = $region36
      $region35: #{a_convnet_forward.10} parent=31 // pred_region
        %s3843 = smul.u32 128, %s14
      $region36: #{a_convnet_forward.10} parent=31 // pred_fallthru
        _
    $region32: #{a_convnet_forward.10} parent=5 // pred_fallthru
      _
    %p3844 = scmp.le.s32.totalorder 2, %s9
    // Predicated region
    $region37: #{a_convnet_forward.10} parent=5 // pred_check
      %p3845 = pneg %p3844
    $region38: #{a_convnet_forward.10} parent=5 // pred_check_branch
      %3847 = sbr.rel (%p3845) target = $region40
    $region39: #{a_convnet_forward.10} parent=5 // pred_region
      %s3848 = ssub.s32 %s9, 2
      // Predicated region
      $region41: #{a_convnet_forward.10} parent=39 // pred_check
        %p3849 = pneg %p106
      $region42: #{a_convnet_forward.10} parent=39 // pred_check_branch
        %3851 = sbr.rel (%p3849) target = $region44
      $region43: #{a_convnet_forward.10} parent=39 // pred_region
        %s3852 = smul.u32 128, %s15
        %p3853 = scmp.lt.s32.totalorder %s3852, 383
        %s3854 = scalar_select %p3853, %s3852, 383
        %s3855 = smul.addr %s3854, 4
        %s3856 = scalar_lea.vmem %s3, %s3855
      $region44: #{a_convnet_forward.10} parent=39 // pred_fallthru
        _
    $region40: #{a_convnet_forward.10} parent=5 // pred_fallthru
      _
  $region6: #{a_convnet_forward.10} parent=0 // loop_footer
    %s13 = sadd.s32 1, %s9
  $region7: #{a_convnet_forward.10} parent=0 // loop_footer_branch
    %8 = sbr.rel target = $region3
  $region8: #{a_convnet_forward.10} parent=0 // loop_exit
    _

// kernel: a_convnet_forward.11
$region0: #{a_convnet_forward.11}
  #allocation0 [shape = 'u32[]', space=smem, size = 0x4, offset = 0x4, fixed_abs, tag = 'smem constant byte address 0x4 - core index']
  #allocation1 [shape = 'u32[144,128]{1,0:T(1,128)}', space=vmem, size = 0x12000, scoped, tag = 'internal scratch']
  %s0 = inlined_call_operand.vmem [shape: bf16[38,608], index: 0, kind: input, shape index: {}]
  %s1 = inlined_call_operand.vmem [shape: bf16[38,608], index: 1, kind: input, shape index: {}]
  %s2 = inlined_call_operand.vmem [shape: bf16[38,608], index: 2, kind: input, shape index: {}]
  %s3 = inlined_call_operand.vmem [shape: bf16[38,608], index: 3, kind: input, shape index: {}]
  %s4 = inlined_call_operand.vmem [shape: bf16[38,608], index: 4, kind: output, shape index: {}]
  %s5 = sld [smem:[#allocation0]]
  $region26: #{a_convnet_forward.11} parent=0
    _
  %s7 = ssub.s32 1, %s5
  %s8 = scalar_select 0, %s7, %s5
  // Predicated region
  $region2: #{a_convnet_forward.11} parent=0 // pred_check
    _
  $region3: #{a_convnet_forward.11} parent=0 // pred_check_branch
    %10 = sbr.rel (0) target = $region5
  $region4: #{a_convnet_forward.11} parent=0 // pred_region
    _
  $region5: #{a_convnet_forward.11} parent=0 // pred_fallthru
    _
  // Predicated region
  $region6: #{a_convnet_forward.11} parent=0 // pred_check
    _
  $region7: #{a_convnet_forward.11} parent=0 // pred_check_branch
    %12 = sbr.rel (0) target = $region9
  $region8: #{a_convnet_forward.11} parent=0 // pred_region
    _
  $region9: #{a_convnet_forward.11} parent=0 // pred_fallthru
    _
  // Predicated region
  $region10: #{a_convnet_forward.11} parent=0 // pred_check
    _
  $region11: #{a_convnet_forward.11} parent=0 // pred_check_branch
    %14 = sbr.rel (0) target = $region13
  $region12: #{a_convnet_forward.11} parent=0 // pred_region
    _
  $region13: #{a_convnet_forward.11} parent=0 // pred_fallthru
    _
  // Predicated region
  $region14: #{a_convnet_forward.11} parent=0 // pred_check
    _
  $region15: #{a_convnet_forward.11} parent=0 // pred_check_branch
    %16 = sbr.rel (0) target = $region17
  $region16: #{a_convnet_forward.11} parent=0 // pred_region
    _
  $region17: #{a_convnet_forward.11} parent=0 // pred_fallthru
    _
  %v17 = vld [vmem:[%s0] sm:$0xff]
  %v18 = vld [vmem:[%s0 + $0x8] sm:$0xff]
  %v19 = vld [vmem:[%s0 + $0x10] sm:$0xf]
  %v20 = vld [vmem:[%s0 + $0x14] sm:$0xff]
  %v21 = vld [vmem:[%s0 + $0x1c] sm:$0xff]
  %v22 = vld [vmem:[%s0 + $0x24] sm:$0xf]
  %v23 = vld [vmem:[%s0 + $0x28] sm:$0xff]
  %v24 = vld [vmem:[%s0 + $0x30] sm:$0xff]
  %v25 = vld [vmem:[%s0 + $0x38] sm:$0xf]
  %v26 = vld [vmem:[%s0 + $0x3c] sm:$0xff]
  %v27 = vld [vmem:[%s0 + $0x44] sm:$0xff]
  %v28 = vld [vmem:[%s0 + $0x4c] sm:$0xf]
  %v29 = vld [vmem:[%s0 + $0x50] sm:$0x77]
  %v30 = vld [vmem:[%s0 + $0x58] sm:$0x77]
  %v31 = vld [vmem:[%s0 + $0x60] sm:$0x7]
  %v32 = vld [vmem:[%s1] sm:$0xff]
  %v33 = vld [vmem:[%s1 + $0x8] sm:$0xff]
  %v34 = vld [vmem:[%s1 + $0x10] sm:$0xf]
  %v35 = vld [vmem:[%s1 + $0x14] sm:$0xff]
  %v36 = vld [vmem:[%s1 + $0x1c] sm:$0xff]
  %v37 = vld [vmem:[%s1 + $0x24] sm:$0xf]
  %v38 = vld [vmem:[%s1 + $0x28] sm:$0xff]
  %v39 = vld [vmem:[%s1 + $0x30] sm:$0xff]
  %v40 = vld [vmem:[%s1 + $0x38] sm:$0xf]
  %v41 = vld [vmem:[%s1 + $0x3c] sm:$0xff]
  %v42 = vld [vmem:[%s1 + $0x44] sm:$0xff]
  %v43 = vld [vmem:[%s1 + $0x4c] sm:$0xf]
  %v44 = vld [vmem:[%s1 + $0x50] sm:$0x77]
  %v45 = vld [vmem:[%s1 + $0x58] sm:$0x77]
  %v46 = vld [vmem:[%s1 + $0x60] sm:$0x7]
  %v47 = vmax.bf16 %v17, %v32
  %v48 = vmax.bf16 %v18, %v33
  %v49 = vmax.bf16 %v19, %v34
  %v50 = vmax.bf16 %v20, %v35
  %v51 = vmax.bf16 %v21, %v36
  %v52 = vmax.bf16 %v22, %v37
  %v53 = vmax.bf16 %v23, %v38
  %v54 = vmax.bf16 %v24, %v39
  %v55 = vmax.bf16 %v25, %v40
  %v56 = vmax.bf16 %v26, %v41
  %v57 = vmax.bf16 %v27, %v42
  %v58 = vmax.bf16 %v28, %v43
  %v59 = vmax.bf16 %v29, %v44
  %v60 = vmax.bf16 %v30, %v45
  %v61 = vmax.bf16 %v31, %v46
  %v62 = vld [vmem:[%s2] sm:$0xff]
  %v63 = vld [vmem:[%s2 + $0x8] sm:$0xff]
  %v64 = vld [vmem:[%s2 + $0x10] sm:$0xf]
  %v65 = vld [vmem:[%s2 + $0x14] sm:$0xff]
  %v66 = vld [vmem:[%s2 + $0x1c] sm:$0xff]
  %v67 = vld [vmem:[%s2 + $0x24] sm:$0xf]
  %v68 = vld [vmem:[%s2 + $0x28] sm:$0xff]
  %v69 = vld [vmem:[%s2 + $0x30] sm:$0xff]
  %v70 = vld [vmem:[%s2 + $0x38] sm:$0xf]
  %v71 = vld [vmem:[%s2 + $0x3c] sm:$0xff]
  %v72 = vld [vmem:[%s2 + $0x44] sm:$0xff]
  %v73 = vld [vmem:[%s2 + $0x4c] sm:$0xf]
  %v74 = vld [vmem:[%s2 + $0x50] sm:$0x77]
  %v75 = vld [vmem:[%s2 + $0x58] sm:$0x77]
  %v76 = vld [vmem:[%s2 + $0x60] sm:$0x7]
  %v77 = vld [vmem:[%s3] sm:$0xff]
  %v78 = vld [vmem:[%s3 + $0x8] sm:$0xff]
  %v79 = vld [vmem:[%s3 + $0x10] sm:$0xf]
  %v80 = vld [vmem:[%s3 + $0x14] sm:$0xff]
  %v81 = vld [vmem:[%s3 + $0x1c] sm:$0xff]
  %v82 = vld [vmem:[%s3 + $0x24] sm:$0xf]
  %v83 = vld [vmem:[%s3 + $0x28] sm:$0xff]
  %v84 = vld [vmem:[%s3 + $0x30] sm:$0xff]
  %v85 = vld [vmem:[%s3 + $0x38] sm:$0xf]
  %v86 = vld [vmem:[%s3 + $0x3c] sm:$0xff]
  %v87 = vld [vmem:[%s3 + $0x44] sm:$0xff]
  %v88 = vld [vmem:[%s3 + $0x4c] sm:$0xf]
  %v89 = vld [vmem:[%s3 + $0x50] sm:$0x77]
  %v90 = vld [vmem:[%s3 + $0x58] sm:$0x77]
  %v91 = vld [vmem:[%s3 + $0x60] sm:$0x7]
  %v92 = vmax.bf16 %v62, %v77
  %v93 = vmax.bf16 %v63, %v78
  %v94 = vmax.bf16 %v64, %v79
  %v95 = vmax.bf16 %v65, %v80
  %v96 = vmax.bf16 %v66, %v81
  %v97 = vmax.bf16 %v67, %v82
  %v98 = vmax.bf16 %v68, %v83
  %v99 = vmax.bf16 %v69, %v84
  %v100 = vmax.bf16 %v70, %v85
  %v101 = vmax.bf16 %v71, %v86
  %v102 = vmax.bf16 %v72, %v87
  %v103 = vmax.bf16 %v73, %v88
  %v104 = vmax.bf16 %v74, %v89
  %v105 = vmax.bf16 %v75, %v90
  %v106 = vmax.bf16 %v76, %v91
  %v107 = vmax.bf16 %v47, %v92
  %v108 = vmax.bf16 %v48, %v93
  %v109 = vmax.bf16 %v49, %v94
  %v110 = vmax.bf16 %v50, %v95
  %v111 = vmax.bf16 %v51, %v96
  %v112 = vmax.bf16 %v52, %v97
  %v113 = vmax.bf16 %v53, %v98
  %v114 = vmax.bf16 %v54, %v99
  %v115 = vmax.bf16 %v55, %v100
  %v116 = vmax.bf16 %v56, %v101
  %v117 = vmax.bf16 %v57, %v102
  %v118 = vmax.bf16 %v58, %v103
  %v119 = vmax.bf16 %v59, %v104
  %v120 = vmax.bf16 %v60, %v105
  %v121 = vmax.bf16 %v61, %v106
  %122 = vst [vmem:[%s4] sm:$0xff] %v107
  %123 = vst [vmem:[%s4 + $0x8] sm:$0xff] %v108
  %vm124 = vcmask 781312
  %125 = vst.msk [vmem:[%s4 + $0x10] sm:$0xf] %vm124, %v109
  %126 = vst [vmem:[%s4 + $0x14] sm:$0xff] %v110
  %127 = vst [vmem:[%s4 + $0x1c] sm:$0xff] %v111
  %128 = vst.msk [vmem:[%s4 + $0x24] sm:$0xf] %vm124, %v112
  %129 = vst [vmem:[%s4 + $0x28] sm:$0xff] %v113
  %130 = vst [vmem:[%s4 + $0x30] sm:$0xff] %v114
  %131 = vst.msk [vmem:[%s4 + $0x38] sm:$0xf] %vm124, %v115
  %132 = vst [vmem:[%s4 + $0x3c] sm:$0xff] %v116
  %133 = vst [vmem:[%s4 + $0x44] sm:$0xff] %v117
  %134 = vst.msk [vmem:[%s4 + $0x4c] sm:$0xf] %vm124, %v118
  %135 = vst [vmem:[%s4 + $0x50] sm:$0x77] %v119
  %136 = vst [vmem:[%s4 + $0x58] sm:$0x77] %v120
  %vm137 = vcmask 780288
  %138 = vst.msk [vmem:[%s4 + $0x60] sm:$0x7] %vm137, %v121
  // Predicated region
  $region18: #{a_convnet_forward.11} parent=0 // pred_check
    _
  $region19: #{a_convnet_forward.11} parent=0 // pred_check_branch
    %140 = sbr.rel (0) target = $region21
  $region20: #{a_convnet_forward.11} parent=0 // pred_region
    _
  $region21: #{a_convnet_forward.11} parent=0 // pred_fallthru
    _
  // Predicated region
  $region22: #{a_convnet_forward.11} parent=0 // pred_check
    _
  $region23: #{a_convnet_forward.11} parent=0 // pred_check_branch
    %142 = sbr.rel (0) target = $region25
  $region24: #{a_convnet_forward.11} parent=0 // pred_region
    _
  $region25: #{a_convnet_forward.11} parent=0 // pred_fallthru
    _

// kernel: a_convnet_forward.13
$region0: #{a_convnet_forward.13}
  #allocation0 [shape = 'u32[]', space=smem, size = 0x4, offset = 0x4, fixed_abs, tag = 'smem constant byte address 0x4 - core index']
  #allocation1 [shape = 'u32[144,128]{1,0:T(1,128)}', space=vmem, size = 0x12000, scoped, tag = 'internal scratch']
  %s0 = inlined_call_operand.vmem [shape: bf16[14,448], index: 0, kind: input, shape index: {}]
  %s1 = inlined_call_operand.vmem [shape: bf16[14,448], index: 1, kind: input, shape index: {}]
  %s2 = inlined_call_operand.vmem [shape: bf16[14,448], index: 2, kind: input, shape index: {}]
  %s3 = inlined_call_operand.vmem [shape: bf16[14,448], index: 3, kind: input, shape index: {}]
  %s4 = inlined_call_operand.vmem [shape: bf16[14,448], index: 4, kind: output, shape index: {}]
  %s5 = sld [smem:[#allocation0]]
  $region26: #{a_convnet_forward.13} parent=0
    _
  %s7 = ssub.s32 1, %s5
  %s8 = scalar_select 0, %s7, %s5
  // Predicated region
  $region2: #{a_convnet_forward.13} parent=0 // pred_check
    _
  $region3: #{a_convnet_forward.13} parent=0 // pred_check_branch
    %10 = sbr.rel (0) target = $region5
  $region4: #{a_convnet_forward.13} parent=0 // pred_region
    _
  $region5: #{a_convnet_forward.13} parent=0 // pred_fallthru
    _
  // Predicated region
  $region6: #{a_convnet_forward.13} parent=0 // pred_check
    _
  $region7: #{a_convnet_forward.13} parent=0 // pred_check_branch
    %12 = sbr.rel (0) target = $region9
  $region8: #{a_convnet_forward.13} parent=0 // pred_region
    _
  $region9: #{a_convnet_forward.13} parent=0 // pred_fallthru
    _
  // Predicated region
  $region10: #{a_convnet_forward.13} parent=0 // pred_check
    _
  $region11: #{a_convnet_forward.13} parent=0 // pred_check_branch
    %14 = sbr.rel (0) target = $region13
  $region12: #{a_convnet_forward.13} parent=0 // pred_region
    _
  $region13: #{a_convnet_forward.13} parent=0 // pred_fallthru
    _
  // Predicated region
  $region14: #{a_convnet_forward.13} parent=0 // pred_check
    _
  $region15: #{a_convnet_forward.13} parent=0 // pred_check_branch
    %16 = sbr.rel (0) target = $region17
  $region16: #{a_convnet_forward.13} parent=0 // pred_region
    _
  $region17: #{a_convnet_forward.13} parent=0 // pred_fallthru
    _
  %v17 = vld [vmem:[%s0] sm:$0xff]
  %v18 = vld [vmem:[%s0 + $0x8] sm:$0xff]
  %v19 = vld [vmem:[%s0 + $0x10] sm:$0x77]
  %v20 = vld [vmem:[%s0 + $0x18] sm:$0x77]
  %v21 = vld [vmem:[%s1] sm:$0xff]
  %v22 = vld [vmem:[%s1 + $0x8] sm:$0xff]
  %v23 = vld [vmem:[%s1 + $0x10] sm:$0x77]
  %v24 = vld [vmem:[%s1 + $0x18] sm:$0x77]
  %v25 = vmax.bf16 %v17, %v21
  %v26 = vmax.bf16 %v18, %v22
  %v27 = vmax.bf16 %v19, %v23
  %v28 = vmax.bf16 %v20, %v24
  %v29 = vld [vmem:[%s2] sm:$0xff]
  %v30 = vld [vmem:[%s2 + $0x8] sm:$0xff]
  %v31 = vld [vmem:[%s2 + $0x10] sm:$0x77]
  %v32 = vld [vmem:[%s2 + $0x18] sm:$0x77]
  %v33 = vld [vmem:[%s3] sm:$0xff]
  %v34 = vld [vmem:[%s3 + $0x8] sm:$0xff]
  %v35 = vld [vmem:[%s3 + $0x10] sm:$0x77]
  %v36 = vld [vmem:[%s3 + $0x18] sm:$0x77]
  %v37 = vmax.bf16 %v29, %v33
  %v38 = vmax.bf16 %v30, %v34
  %v39 = vmax.bf16 %v31, %v35
  %v40 = vmax.bf16 %v32, %v36
  %v41 = vmax.bf16 %v25, %v37
  %v42 = vmax.bf16 %v26, %v38
  %v43 = vmax.bf16 %v27, %v39
  %v44 = vmax.bf16 %v28, %v40
  %45 = vst [vmem:[%s4] sm:$0xff] %v41
  %vm46 = vcmask 1043456
  %vm47 = vcmask 523268
  %vm48 = vmor %vm47, %vm46
  %49 = vst.msk [vmem:[%s4 + $0x8] sm:$0xff] %vm48, %v42
  %50 = vst [vmem:[%s4 + $0x10] sm:$0x77] %v43
  %vm51 = vcmask 1042432
  %vm52 = vcmask 522244
  %vm53 = vmor %vm52, %vm51
  %54 = vst.msk [vmem:[%s4 + $0x18] sm:$0x77] %vm53, %v44
  // Predicated region
  $region18: #{a_convnet_forward.13} parent=0 // pred_check
    _
  $region19: #{a_convnet_forward.13} parent=0 // pred_check_branch
    %56 = sbr.rel (0) target = $region21
  $region20: #{a_convnet_forward.13} parent=0 // pred_region
    _
  $region21: #{a_convnet_forward.13} parent=0 // pred_fallthru
    _
  // Predicated region
  $region22: #{a_convnet_forward.13} parent=0 // pred_check
    _
  $region23: #{a_convnet_forward.13} parent=0 // pred_check_branch
    %58 = sbr.rel (0) target = $region25
  $region24: #{a_convnet_forward.13} parent=0 // pred_region
    _
  $region25: #{a_convnet_forward.13} parent=0 // pred_fallthru
    _

// kernel: a_convnet_forward.12
$region0: #{a_convnet_forward.12}
  #allocation0 [shape = 'u32[]', space=smem, size = 0x4, offset = 0x4, fixed_abs, tag = 'smem constant byte address 0x4 - core index']
  #allocation1 [shape = 'u32[144,128]{1,0:T(1,128)}', space=vmem, size = 0x12000, scoped, tag = 'internal scratch']
  %s0 = inlined_call_operand.vmem [shape: bf16[392,1152], index: 0, kind: input, shape index: {}]
  %s1 = inlined_call_operand.vmem [shape: bf16[1152,128], index: 1, kind: input, shape index: {}]
  %s2 = inlined_call_operand.vmem [shape: f32[1,128], index: 2, kind: input, shape index: {}]
  %s3 = inlined_call_operand.vmem [shape: bf16[392,128], index: 3, kind: output, shape index: {}]
  %s4 = sld [smem:[#allocation0]]
  $region22: #{a_convnet_forward.12} parent=0
    _
  %s6 = ssub.s32 1, %s4
  %s7 = scalar_select 0, %s6, %s4
  // Predicated region
  $region2: #{a_convnet_forward.12} parent=0 // pred_check
    _
  $region3: #{a_convnet_forward.12} parent=0 // pred_check_branch
    %9 = sbr.rel (0) target = $region5
  $region4: #{a_convnet_forward.12} parent=0 // pred_region
    _
  $region5: #{a_convnet_forward.12} parent=0 // pred_fallthru
    _
  // Predicated region
  $region6: #{a_convnet_forward.12} parent=0 // pred_check
    _
  $region7: #{a_convnet_forward.12} parent=0 // pred_check_branch
    %11 = sbr.rel (0) target = $region9
  $region8: #{a_convnet_forward.12} parent=0 // pred_region
    _
  $region9: #{a_convnet_forward.12} parent=0 // pred_fallthru
    _
  // Predicated region
  $region10: #{a_convnet_forward.12} parent=0 // pred_check
    _
  $region11: #{a_convnet_forward.12} parent=0 // pred_check_branch
    %13 = sbr.rel (0) target = $region13
  $region12: #{a_convnet_forward.12} parent=0 // pred_region
    _
  $region13: #{a_convnet_forward.12} parent=0 // pred_fallthru
    _
  %v15 = vld [vmem:[%s0] sm:$0xff]
  %v16 = vld [vmem:[%s0 + $0x8] sm:$0xff]
  %v17 = vld [vmem:[%s0 + $0x10] sm:$0xff]
  %v18 = vld [vmem:[%s0 + $0x18] sm:$0xff]
  %v19 = vld [vmem:[%s0 + $0x20] sm:$0xf]
  %v20 = vld [vmem:[%s0 + $0x24] sm:$0xff]
  %v21 = vld [vmem:[%s0 + $0x2c] sm:$0xff]
  %v22 = vld [vmem:[%s0 + $0x34] sm:$0xff]
  %v23 = vld [vmem:[%s0 + $0x3c] sm:$0xff]
  %v24 = vld [vmem:[%s0 + $0x44] sm:$0xf]
  %v25 = vld [vmem:[%s0 + $0x48] sm:$0xff]
  %v26 = vld [vmem:[%s0 + $0x50] sm:$0xff]
  %v27 = vld [vmem:[%s0 + $0x58] sm:$0xff]
  %v28 = vld [vmem:[%s0 + $0x60] sm:$0xff]
  %v29 = vld [vmem:[%s0 + $0x68] sm:$0xf]
  %v30 = vld [vmem:[%s0 + $0x6c] sm:$0xff]
  %v31 = vld [vmem:[%s0 + $0x74] sm:$0xff]
  %v32 = vld [vmem:[%s0 + $0x7c] sm:$0xff]
  %v33 = vld [vmem:[%s0 + $0x84] sm:$0xff]
  %v34 = vld [vmem:[%s0 + $0x8c] sm:$0xf]
  %v35 = vld [vmem:[%s0 + $0x90] sm:$0xff]
  %v36 = vld [vmem:[%s0 + $0x98] sm:$0xff]
  %v37 = vld [vmem:[%s0 + $0xa0] sm:$0xff]
  %v38 = vld [vmem:[%s0 + $0xa8] sm:$0xff]
  %v39 = vld [vmem:[%s0 + $0xb0] sm:$0xf]
  %v40 = vld [vmem:[%s0 + $0xb4] sm:$0xff]
  %v41 = vld [vmem:[%s0 + $0xbc] sm:$0xff]
  %v42 = vld [vmem:[%s0 + $0xc4] sm:$0xff]
  %v43 = vld [vmem:[%s0 + $0xcc] sm:$0xff]
  %v44 = vld [vmem:[%s0 + $0xd4] sm:$0xf]
  %v45 = vld [vmem:[%s0 + $0xd8] sm:$0xff]
  %v46 = vld [vmem:[%s0 + $0xe0] sm:$0xff]
  %v47 = vld [vmem:[%s0 + $0xe8] sm:$0xff]
  %v48 = vld [vmem:[%s0 + $0xf0] sm:$0xff]
  %v49 = vld [vmem:[%s0 + $0xf8] sm:$0xf]
  %v50 = vld [vmem:[%s0 + $0xfc] sm:$0xff]
  %v51 = vld [vmem:[%s0 + $0x104] sm:$0xff]
  %v52 = vld [vmem:[%s0 + $0x10c] sm:$0xff]
  %v53 = vld [vmem:[%s0 + $0x114] sm:$0xff]
  %v54 = vld [vmem:[%s0 + $0x11c] sm:$0xf]
  %v55 = vld [vmem:[%s0 + $0x120] sm:$0xff]
  %v56 = vld [vmem:[%s0 + $0x128] sm:$0xff]
  %v57 = vld [vmem:[%s0 + $0x130] sm:$0xff]
  %v58 = vld [vmem:[%s0 + $0x138] sm:$0xff]
  %v59 = vld [vmem:[%s0 + $0x140] sm:$0xf]
  %v60 = vld [vmem:[%s0 + $0x144] sm:$0xff]
  %v61 = vld [vmem:[%s0 + $0x14c] sm:$0xff]
  %v62 = vld [vmem:[%s0 + $0x154] sm:$0xff]
  %v63 = vld [vmem:[%s0 + $0x15c] sm:$0xff]
  %v64 = vld [vmem:[%s0 + $0x164] sm:$0xf]
  %v65 = vld [vmem:[%s0 + $0x168] sm:$0xff]
  %v66 = vld [vmem:[%s0 + $0x170] sm:$0xff]
  %v67 = vld [vmem:[%s0 + $0x178] sm:$0xff]
  %v68 = vld [vmem:[%s0 + $0x180] sm:$0xff]
  %v69 = vld [vmem:[%s0 + $0x188] sm:$0xf]
  %v70 = vld [vmem:[%s0 + $0x18c] sm:$0xff]
  %v71 = vld [vmem:[%s0 + $0x194] sm:$0xff]
  %v72 = vld [vmem:[%s0 + $0x19c] sm:$0xff]
  %v73 = vld [vmem:[%s0 + $0x1a4] sm:$0xff]
  %v74 = vld [vmem:[%s0 + $0x1ac] sm:$0xf]
  %v75 = vld [vmem:[%s0 + $0x1b0] sm:$0xff]
  %v76 = vld [vmem:[%s0 + $0x1b8] sm:$0xff]
  %v77 = vld [vmem:[%s0 + $0x1c0] sm:$0xff]
  %v78 = vld [vmem:[%s0 + $0x1c8] sm:$0xff]
  %v79 = vld [vmem:[%s0 + $0x1d0] sm:$0xf]
  %v80 = vld [vmem:[%s0 + $0x1d4] sm:$0xff]
  %v81 = vld [vmem:[%s0 + $0x1dc] sm:$0xff]
  %v82 = vld [vmem:[%s0 + $0x1e4] sm:$0xff]
  %v83 = vld [vmem:[%s0 + $0x1ec] sm:$0xff]
  %v84 = vld [vmem:[%s0 + $0x1f4] sm:$0xf]
  %v85 = vld [vmem:[%s0 + $0x1f8] sm:$0xff]
  %v86 = vld [vmem:[%s0 + $0x200] sm:$0xff]
  %v87 = vld [vmem:[%s0 + $0x208] sm:$0xff]
  %v88 = vld [vmem:[%s0 + $0x210] sm:$0xff]
  %v89 = vld [vmem:[%s0 + $0x218] sm:$0xf]
  %v90 = vld [vmem:[%s0 + $0x21c] sm:$0xff]
  %v91 = vld [vmem:[%s0 + $0x224] sm:$0xff]
  %v92 = vld [vmem:[%s0 + $0x22c] sm:$0xff]
  %v93 = vld [vmem:[%s0 + $0x234] sm:$0xff]
  %v94 = vld [vmem:[%s0 + $0x23c] sm:$0xf]
  %v95 = vld [vmem:[%s0 + $0x240] sm:$0xff]
  %v96 = vld [vmem:[%s0 + $0x248] sm:$0xff]
  %v97 = vld [vmem:[%s0 + $0x250] sm:$0xff]
  %v98 = vld [vmem:[%s0 + $0x258] sm:$0xff]
  %v99 = vld [vmem:[%s0 + $0x260] sm:$0xf]
  %v100 = vld [vmem:[%s0 + $0x264] sm:$0xff]
  %v101 = vld [vmem:[%s0 + $0x26c] sm:$0xff]
  %v102 = vld [vmem:[%s0 + $0x274] sm:$0xff]
  %v103 = vld [vmem:[%s0 + $0x27c] sm:$0xff]
  %v104 = vld [vmem:[%s0 + $0x284] sm:$0xf]
  %v105 = vld [vmem:[%s0 + $0x288] sm:$0xff]
  %v106 = vld [vmem:[%s0 + $0x290] sm:$0xff]
  %v107 = vld [vmem:[%s0 + $0x298] sm:$0xff]
  %v108 = vld [vmem:[%s0 + $0x2a0] sm:$0xff]
  %v109 = vld [vmem:[%s0 + $0x2a8] sm:$0xf]
  %v110 = vld [vmem:[%s0 + $0x2ac] sm:$0xff]
  %v111 = vld [vmem:[%s0 + $0x2b4] sm:$0xff]
  %v112 = vld [vmem:[%s0 + $0x2bc] sm:$0xff]
  %v113 = vld [vmem:[%s0 + $0x2c4] sm:$0xff]
  %v114 = vld [vmem:[%s0 + $0x2cc] sm:$0xf]
  %v115 = vld [vmem:[%s0 + $0x2d0] sm:$0xff]
  %v116 = vld [vmem:[%s0 + $0x2d8] sm:$0xff]
  %v117 = vld [vmem:[%s0 + $0x2e0] sm:$0xff]
  %v118 = vld [vmem:[%s0 + $0x2e8] sm:$0xff]
  %v119 = vld [vmem:[%s0 + $0x2f0] sm:$0xf]
  %v120 = vld [vmem:[%s0 + $0x2f4] sm:$0xff]
  %v121 = vld [vmem:[%s0 + $0x2fc] sm:$0xff]
  %v122 = vld [vmem:[%s0 + $0x304] sm:$0xff]
  %v123 = vld [vmem:[%s0 + $0x30c] sm:$0xff]
  %v124 = vld [vmem:[%s0 + $0x314] sm:$0xf]
  %v125 = vld [vmem:[%s0 + $0x318] sm:$0xff]
  %v126 = vld [vmem:[%s0 + $0x320] sm:$0xff]
  %v127 = vld [vmem:[%s0 + $0x328] sm:$0xff]
  %v128 = vld [vmem:[%s0 + $0x330] sm:$0xff]
  %v129 = vld [vmem:[%s0 + $0x338] sm:$0xf]
  %v130 = vld [vmem:[%s0 + $0x33c] sm:$0xff]
  %v131 = vld [vmem:[%s0 + $0x344] sm:$0xff]
  %v132 = vld [vmem:[%s0 + $0x34c] sm:$0xff]
  %v133 = vld [vmem:[%s0 + $0x354] sm:$0xff]
  %v134 = vld [vmem:[%s0 + $0x35c] sm:$0xf]
  %v135 = vld [vmem:[%s0 + $0x360] sm:$0xff]
  %v136 = vld [vmem:[%s0 + $0x368] sm:$0xff]
  %v137 = vld [vmem:[%s0 + $0x370] sm:$0xff]
  %v138 = vld [vmem:[%s0 + $0x378] sm:$0xff]
  %v139 = vld [vmem:[%s0 + $0x380] sm:$0xf]
  %v140 = vld [vmem:[%s0 + $0x384] sm:$0xff]
  %v141 = vld [vmem:[%s0 + $0x38c] sm:$0xff]
  %v142 = vld [vmem:[%s0 + $0x394] sm:$0xff]
  %v143 = vld [vmem:[%s0 + $0x39c] sm:$0xff]
  %v144 = vld [vmem:[%s0 + $0x3a4] sm:$0xf]
  %v145 = vld [vmem:[%s0 + $0x3a8] sm:$0xff]
  %v146 = vld [vmem:[%s0 + $0x3b0] sm:$0xff]
  %v147 = vld [vmem:[%s0 + $0x3b8] sm:$0xff]
  %v148 = vld [vmem:[%s0 + $0x3c0] sm:$0xff]
  %v149 = vld [vmem:[%s0 + $0x3c8] sm:$0xf]
  %v150 = vld [vmem:[%s0 + $0x3cc] sm:$0xff]
  %v151 = vld [vmem:[%s0 + $0x3d4] sm:$0xff]
  %v152 = vld [vmem:[%s0 + $0x3dc] sm:$0xff]
  %v153 = vld [vmem:[%s0 + $0x3e4] sm:$0xff]
  %v154 = vld [vmem:[%s0 + $0x3ec] sm:$0xf]
  %v155 = vld [vmem:[%s0 + $0x3f0] sm:$0xff]
  %v156 = vld [vmem:[%s0 + $0x3f8] sm:$0xff]
  %v157 = vld [vmem:[%s0 + $0x400] sm:$0xff]
  %v158 = vld [vmem:[%s0 + $0x408] sm:$0xff]
  %v159 = vld [vmem:[%s0 + $0x410] sm:$0xf]
  %v160 = vld [vmem:[%s0 + $0x414] sm:$0xff]
  %v161 = vld [vmem:[%s0 + $0x41c] sm:$0xff]
  %v162 = vld [vmem:[%s0 + $0x424] sm:$0xff]
  %v163 = vld [vmem:[%s0 + $0x42c] sm:$0xff]
  %v164 = vld [vmem:[%s0 + $0x434] sm:$0xf]
  %v165 = vld [vmem:[%s0 + $0x438] sm:$0xff]
  %v166 = vld [vmem:[%s0 + $0x440] sm:$0xff]
  %v167 = vld [vmem:[%s0 + $0x448] sm:$0xff]
  %v168 = vld [vmem:[%s0 + $0x450] sm:$0xff]
  %v169 = vld [vmem:[%s0 + $0x458] sm:$0xf]
  %v170 = vld [vmem:[%s0 + $0x45c] sm:$0xff]
  %v171 = vld [vmem:[%s0 + $0x464] sm:$0xff]
  %v172 = vld [vmem:[%s0 + $0x46c] sm:$0xff]
  %v173 = vld [vmem:[%s0 + $0x474] sm:$0xff]
  %v174 = vld [vmem:[%s0 + $0x47c] sm:$0xf]
  %v175 = vld [vmem:[%s0 + $0x480] sm:$0xff]
  %v176 = vld [vmem:[%s0 + $0x488] sm:$0xff]
  %v177 = vld [vmem:[%s0 + $0x490] sm:$0xff]
  %v178 = vld [vmem:[%s0 + $0x498] sm:$0xff]
  %v179 = vld [vmem:[%s0 + $0x4a0] sm:$0xf]
  %v180 = vld [vmem:[%s0 + $0x4a4] sm:$0xff]
  %v181 = vld [vmem:[%s0 + $0x4ac] sm:$0xff]
  %v182 = vld [vmem:[%s0 + $0x4b4] sm:$0xff]
  %v183 = vld [vmem:[%s0 + $0x4bc] sm:$0xff]
  %v184 = vld [vmem:[%s0 + $0x4c4] sm:$0xf]
  %v185 = vld [vmem:[%s0 + $0x4c8] sm:$0xff]
  %v186 = vld [vmem:[%s0 + $0x4d0] sm:$0xff]
  %v187 = vld [vmem:[%s0 + $0x4d8] sm:$0xff]
  %v188 = vld [vmem:[%s0 + $0x4e0] sm:$0xff]
  %v189 = vld [vmem:[%s0 + $0x4e8] sm:$0xf]
  %v190 = vld [vmem:[%s0 + $0x4ec] sm:$0xff]
  %v191 = vld [vmem:[%s0 + $0x4f4] sm:$0xff]
  %v192 = vld [vmem:[%s0 + $0x4fc] sm:$0xff]
  %v193 = vld [vmem:[%s0 + $0x504] sm:$0xff]
  %v194 = vld [vmem:[%s0 + $0x50c] sm:$0xf]
  %v195 = vld [vmem:[%s0 + $0x510] sm:$0xff]
  %v196 = vld [vmem:[%s0 + $0x518] sm:$0xff]
  %v197 = vld [vmem:[%s0 + $0x520] sm:$0xff]
  %v198 = vld [vmem:[%s0 + $0x528] sm:$0xff]
  %v199 = vld [vmem:[%s0 + $0x530] sm:$0xf]
  %v200 = vld [vmem:[%s0 + $0x534] sm:$0xff]
  %v201 = vld [vmem:[%s0 + $0x53c] sm:$0xff]
  %v202 = vld [vmem:[%s0 + $0x544] sm:$0xff]
  %v203 = vld [vmem:[%s0 + $0x54c] sm:$0xff]
  %v204 = vld [vmem:[%s0 + $0x554] sm:$0xf]
  %v205 = vld [vmem:[%s0 + $0x558] sm:$0xff]
  %v206 = vld [vmem:[%s0 + $0x560] sm:$0xff]
  %v207 = vld [vmem:[%s0 + $0x568] sm:$0xff]
  %v208 = vld [vmem:[%s0 + $0x570] sm:$0xff]
  %v209 = vld [vmem:[%s0 + $0x578] sm:$0xf]
  %v210 = vld [vmem:[%s0 + $0x57c] sm:$0xff]
  %v211 = vld [vmem:[%s0 + $0x584] sm:$0xff]
  %v212 = vld [vmem:[%s0 + $0x58c] sm:$0xff]
  %v213 = vld [vmem:[%s0 + $0x594] sm:$0xff]
  %v214 = vld [vmem:[%s0 + $0x59c] sm:$0xf]
  %v215 = vld [vmem:[%s0 + $0x5a0] sm:$0xff]
  %v216 = vld [vmem:[%s0 + $0x5a8] sm:$0xff]
  %v217 = vld [vmem:[%s0 + $0x5b0] sm:$0xff]
  %v218 = vld [vmem:[%s0 + $0x5b8] sm:$0xff]
  %v219 = vld [vmem:[%s0 + $0x5c0] sm:$0xf]
  %v220 = vld [vmem:[%s0 + $0x5c4] sm:$0xff]
  %v221 = vld [vmem:[%s0 + $0x5cc] sm:$0xff]
  %v222 = vld [vmem:[%s0 + $0x5d4] sm:$0xff]
  %v223 = vld [vmem:[%s0 + $0x5dc] sm:$0xff]
  %v224 = vld [vmem:[%s0 + $0x5e4] sm:$0xf]
  %v225 = vld [vmem:[%s0 + $0x5e8] sm:$0xff]
  %v226 = vld [vmem:[%s0 + $0x5f0] sm:$0xff]
  %v227 = vld [vmem:[%s0 + $0x5f8] sm:$0xff]
  %v228 = vld [vmem:[%s0 + $0x600] sm:$0xff]
  %v229 = vld [vmem:[%s0 + $0x608] sm:$0xf]
  %v230 = vld [vmem:[%s0 + $0x60c] sm:$0xff]
  %v231 = vld [vmem:[%s0 + $0x614] sm:$0xff]
  %v232 = vld [vmem:[%s0 + $0x61c] sm:$0xff]
  %v233 = vld [vmem:[%s0 + $0x624] sm:$0xff]
  %v234 = vld [vmem:[%s0 + $0x62c] sm:$0xf]
  %v235 = vld [vmem:[%s0 + $0x630] sm:$0xff]
  %v236 = vld [vmem:[%s0 + $0x638] sm:$0xff]
  %v237 = vld [vmem:[%s0 + $0x640] sm:$0xff]
  %v238 = vld [vmem:[%s0 + $0x648] sm:$0xff]
  %v239 = vld [vmem:[%s0 + $0x650] sm:$0xf]
  %v240 = vld [vmem:[%s0 + $0x654] sm:$0xff]
  %v241 = vld [vmem:[%s0 + $0x65c] sm:$0xff]
  %v242 = vld [vmem:[%s0 + $0x664] sm:$0xff]
  %v243 = vld [vmem:[%s0 + $0x66c] sm:$0xff]
  %v244 = vld [vmem:[%s0 + $0x674] sm:$0xf]
  %v245 = vld [vmem:[%s0 + $0x678] sm:$0xff]
  %v246 = vld [vmem:[%s0 + $0x680] sm:$0xff]
  %v247 = vld [vmem:[%s0 + $0x688] sm:$0xff]
  %v248 = vld [vmem:[%s0 + $0x690] sm:$0xff]
  %v249 = vld [vmem:[%s0 + $0x698] sm:$0xf]
  %v250 = vld [vmem:[%s0 + $0x69c] sm:$0xff]
  %v251 = vld [vmem:[%s0 + $0x6a4] sm:$0xff]
  %v252 = vld [vmem:[%s0 + $0x6ac] sm:$0xff]
  %v253 = vld [vmem:[%s0 + $0x6b4] sm:$0xff]
  %v254 = vld [vmem:[%s0 + $0x6bc] sm:$0xf]
  %v255 = vld [vmem:[%s0 + $0x6c0] sm:$0xff]
  %v256 = vld [vmem:[%s0 + $0x6c8] sm:$0xff]
  %v257 = vld [vmem:[%s0 + $0x6d0] sm:$0xff]
  %v258 = vld [vmem:[%s0 + $0x6d8] sm:$0xff]
  %v259 = vld [vmem:[%s0 + $0x6e0] sm:$0xf]
  %v260 = vld [vmem:[%s1] sm:$0xf]
  %v261 = vld [vmem:[%s1 + $0x4] sm:$0xf]
  %v262 = vld [vmem:[%s1 + $0x8] sm:$0xf]
  %v263 = vld [vmem:[%s1 + $0xc] sm:$0xf]
  %v264 = vld [vmem:[%s1 + $0x10] sm:$0xf]
  %v265 = vld [vmem:[%s1 + $0x14] sm:$0xf]
  %v266 = vld [vmem:[%s1 + $0x18] sm:$0xf]
  %v267 = vld [vmem:[%s1 + $0x1c] sm:$0xf]
  %v268 = vld [vmem:[%s1 + $0x20] sm:$0xf]
  %v269 = vld [vmem:[%s1 + $0x24] sm:$0xf]
  %v270 = vld [vmem:[%s1 + $0x28] sm:$0xf]
  %v271 = vld [vmem:[%s1 + $0x2c] sm:$0xf]
  %v272 = vld [vmem:[%s1 + $0x30] sm:$0xf]
  %v273 = vld [vmem:[%s1 + $0x34] sm:$0xf]
  %v274 = vld [vmem:[%s1 + $0x38] sm:$0xf]
  %v275 = vld [vmem:[%s1 + $0x3c] sm:$0xf]
  %v276 = vld [vmem:[%s1 + $0x40] sm:$0xf]
  %v277 = vld [vmem:[%s1 + $0x44] sm:$0xf]
  %v278 = vld [vmem:[%s1 + $0x48] sm:$0xf]
  %v279 = vld [vmem:[%s1 + $0x4c] sm:$0xf]
  %v280 = vld [vmem:[%s1 + $0x50] sm:$0xf]
  %v281 = vld [vmem:[%s1 + $0x54] sm:$0xf]
  %v282 = vld [vmem:[%s1 + $0x58] sm:$0xf]
  %v283 = vld [vmem:[%s1 + $0x5c] sm:$0xf]
  %v284 = vld [vmem:[%s1 + $0x60] sm:$0xf]
  %v285 = vld [vmem:[%s1 + $0x64] sm:$0xf]
  %v286 = vld [vmem:[%s1 + $0x68] sm:$0xf]
  %v287 = vld [vmem:[%s1 + $0x6c] sm:$0xf]
  %v288 = vld [vmem:[%s1 + $0x70] sm:$0xf]
  %v289 = vld [vmem:[%s1 + $0x74] sm:$0xf]
  %v290 = vld [vmem:[%s1 + $0x78] sm:$0xf]
  %v291 = vld [vmem:[%s1 + $0x7c] sm:$0xf]
  %v292 = vld [vmem:[%s1 + $0x80] sm:$0xf]
  %v293 = vld [vmem:[%s1 + $0x84] sm:$0xf]
  %v294 = vld [vmem:[%s1 + $0x88] sm:$0xf]
  %v295 = vld [vmem:[%s1 + $0x8c] sm:$0xf]
  %v296 = vld [vmem:[%s1 + $0x90] sm:$0xf]
  %v297 = vld [vmem:[%s1 + $0x94] sm:$0xf]
  %v298 = vld [vmem:[%s1 + $0x98] sm:$0xf]
  %v299 = vld [vmem:[%s1 + $0x9c] sm:$0xf]
  %v300 = vld [vmem:[%s1 + $0xa0] sm:$0xf]
  %v301 = vld [vmem:[%s1 + $0xa4] sm:$0xf]
  %v302 = vld [vmem:[%s1 + $0xa8] sm:$0xf]
  %v303 = vld [vmem:[%s1 + $0xac] sm:$0xf]
  %v304 = vld [vmem:[%s1 + $0xb0] sm:$0xf]
  %v305 = vld [vmem:[%s1 + $0xb4] sm:$0xf]
  %v306 = vld [vmem:[%s1 + $0xb8] sm:$0xf]
  %v307 = vld [vmem:[%s1 + $0xbc] sm:$0xf]
  %v308 = vld [vmem:[%s1 + $0xc0] sm:$0xf]
  %v309 = vld [vmem:[%s1 + $0xc4] sm:$0xf]
  %v310 = vld [vmem:[%s1 + $0xc8] sm:$0xf]
  %v311 = vld [vmem:[%s1 + $0xcc] sm:$0xf]
  %v312 = vld [vmem:[%s1 + $0xd0] sm:$0xf]
  %v313 = vld [vmem:[%s1 + $0xd4] sm:$0xf]
  %v314 = vld [vmem:[%s1 + $0xd8] sm:$0xf]
  %v315 = vld [vmem:[%s1 + $0xdc] sm:$0xf]
  %v316 = vld [vmem:[%s1 + $0xe0] sm:$0xf]
  %v317 = vld [vmem:[%s1 + $0xe4] sm:$0xf]
  %v318 = vld [vmem:[%s1 + $0xe8] sm:$0xf]
  %v319 = vld [vmem:[%s1 + $0xec] sm:$0xf]
  %v320 = vld [vmem:[%s1 + $0xf0] sm:$0xf]
  %v321 = vld [vmem:[%s1 + $0xf4] sm:$0xf]
  %v322 = vld [vmem:[%s1 + $0xf8] sm:$0xf]
  %v323 = vld [vmem:[%s1 + $0xfc] sm:$0xf]
  %v324 = vld [vmem:[%s1 + $0x100] sm:$0xf]
  %v325 = vld [vmem:[%s1 + $0x104] sm:$0xf]
  %v326 = vld [vmem:[%s1 + $0x108] sm:$0xf]
  %v327 = vld [vmem:[%s1 + $0x10c] sm:$0xf]
  %v328 = vld [vmem:[%s1 + $0x110] sm:$0xf]
  %v329 = vld [vmem:[%s1 + $0x114] sm:$0xf]
  %v330 = vld [vmem:[%s1 + $0x118] sm:$0xf]
  %v331 = vld [vmem:[%s1 + $0x11c] sm:$0xf]
  %v332 = vld [vmem:[%s1 + $0x120] sm:$0xf]
  %v333 = vld [vmem:[%s1 + $0x124] sm:$0xf]
  %v334 = vld [vmem:[%s1 + $0x128] sm:$0xf]
  %v335 = vld [vmem:[%s1 + $0x12c] sm:$0xf]
  %v336 = vld [vmem:[%s1 + $0x130] sm:$0xf]
  %v337 = vld [vmem:[%s1 + $0x134] sm:$0xf]
  %v338 = vld [vmem:[%s1 + $0x138] sm:$0xf]
  %v339 = vld [vmem:[%s1 + $0x13c] sm:$0xf]
  %v340 = vld [vmem:[%s1 + $0x140] sm:$0xf]
  %v341 = vld [vmem:[%s1 + $0x144] sm:$0xf]
  %v342 = vld [vmem:[%s1 + $0x148] sm:$0xf]
  %v343 = vld [vmem:[%s1 + $0x14c] sm:$0xf]
  %v344 = vld [vmem:[%s1 + $0x150] sm:$0xf]
  %v345 = vld [vmem:[%s1 + $0x154] sm:$0xf]
  %v346 = vld [vmem:[%s1 + $0x158] sm:$0xf]
  %v347 = vld [vmem:[%s1 + $0x15c] sm:$0xf]
  %v348 = vld [vmem:[%s1 + $0x160] sm:$0xf]
  %v349 = vld [vmem:[%s1 + $0x164] sm:$0xf]
  %v350 = vld [vmem:[%s1 + $0x168] sm:$0xf]
  %v351 = vld [vmem:[%s1 + $0x16c] sm:$0xf]
  %v352 = vld [vmem:[%s1 + $0x170] sm:$0xf]
  %v353 = vld [vmem:[%s1 + $0x174] sm:$0xf]
  %v354 = vld [vmem:[%s1 + $0x178] sm:$0xf]
  %v355 = vld [vmem:[%s1 + $0x17c] sm:$0xf]
  %v356 = vld [vmem:[%s1 + $0x180] sm:$0xf]
  %v357 = vld [vmem:[%s1 + $0x184] sm:$0xf]
  %v358 = vld [vmem:[%s1 + $0x188] sm:$0xf]
  %v359 = vld [vmem:[%s1 + $0x18c] sm:$0xf]
  %v360 = vld [vmem:[%s1 + $0x190] sm:$0xf]
  %v361 = vld [vmem:[%s1 + $0x194] sm:$0xf]
  %v362 = vld [vmem:[%s1 + $0x198] sm:$0xf]
  %v363 = vld [vmem:[%s1 + $0x19c] sm:$0xf]
  %v364 = vld [vmem:[%s1 + $0x1a0] sm:$0xf]
  %v365 = vld [vmem:[%s1 + $0x1a4] sm:$0xf]
  %v366 = vld [vmem:[%s1 + $0x1a8] sm:$0xf]
  %v367 = vld [vmem:[%s1 + $0x1ac] sm:$0xf]
  %v368 = vld [vmem:[%s1 + $0x1b0] sm:$0xf]
  %v369 = vld [vmem:[%s1 + $0x1b4] sm:$0xf]
  %v370 = vld [vmem:[%s1 + $0x1b8] sm:$0xf]
  %v371 = vld [vmem:[%s1 + $0x1bc] sm:$0xf]
  %v372 = vld [vmem:[%s1 + $0x1c0] sm:$0xf]
  %v373 = vld [vmem:[%s1 + $0x1c4] sm:$0xf]
  %v374 = vld [vmem:[%s1 + $0x1c8] sm:$0xf]
  %v375 = vld [vmem:[%s1 + $0x1cc] sm:$0xf]
  %v376 = vld [vmem:[%s1 + $0x1d0] sm:$0xf]
  %v377 = vld [vmem:[%s1 + $0x1d4] sm:$0xf]
  %v378 = vld [vmem:[%s1 + $0x1d8] sm:$0xf]
  %v379 = vld [vmem:[%s1 + $0x1dc] sm:$0xf]
  %v380 = vld [vmem:[%s1 + $0x1e0] sm:$0xf]
  %v381 = vld [vmem:[%s1 + $0x1e4] sm:$0xf]
  %v382 = vld [vmem:[%s1 + $0x1e8] sm:$0xf]
  %v383 = vld [vmem:[%s1 + $0x1ec] sm:$0xf]
  %v384 = vld [vmem:[%s1 + $0x1f0] sm:$0xf]
  %v385 = vld [vmem:[%s1 + $0x1f4] sm:$0xf]
  %v386 = vld [vmem:[%s1 + $0x1f8] sm:$0xf]
  %v387 = vld [vmem:[%s1 + $0x1fc] sm:$0xf]
  %v388 = vld [vmem:[%s1 + $0x200] sm:$0xf]
  %v389 = vld [vmem:[%s1 + $0x204] sm:$0xf]
  %v390 = vld [vmem:[%s1 + $0x208] sm:$0xf]
  %v391 = vld [vmem:[%s1 + $0x20c] sm:$0xf]
  %v392 = vld [vmem:[%s1 + $0x210] sm:$0xf]
  %v393 = vld [vmem:[%s1 + $0x214] sm:$0xf]
  %v394 = vld [vmem:[%s1 + $0x218] sm:$0xf]
  %v395 = vld [vmem:[%s1 + $0x21c] sm:$0xf]
  %v396 = vld [vmem:[%s1 + $0x220] sm:$0xf]
  %v397 = vld [vmem:[%s1 + $0x224] sm:$0xf]
  %v398 = vld [vmem:[%s1 + $0x228] sm:$0xf]
  %v399 = vld [vmem:[%s1 + $0x22c] sm:$0xf]
  %v400 = vld [vmem:[%s1 + $0x230] sm:$0xf]
  %v401 = vld [vmem:[%s1 + $0x234] sm:$0xf]
  %v402 = vld [vmem:[%s1 + $0x238] sm:$0xf]
  %v403 = vld [vmem:[%s1 + $0x23c] sm:$0xf]
  %v404 = vld [vmem:[%s2] sm:$0x1]
  %v406 = vlaneseq
  %v407 = vshrl.u32 %v406, 7
  %v408 = vsub.s32 0, %v407
  %v409 = vrot.slane %v404, %v408
  %v656 = vunpack.c.l.b16 %v15
  %v657 = vunpack.c.h.b16 %v15
  %v658 = vunpack.c.l.b16 %v16
  %v659 = vunpack.c.h.b16 %v16
  %v660 = vunpack.c.l.b16 %v17
  %v661 = vunpack.c.h.b16 %v17
  %v662 = vunpack.c.l.b16 %v18
  %v663 = vunpack.c.h.b16 %v18
  %v664 = vunpack.c.l.b16 %v19
  %v665 = vunpack.c.l.b16 %v20
  %v666 = vunpack.c.h.b16 %v20
  %v667 = vunpack.c.l.b16 %v21
  %v668 = vunpack.c.h.b16 %v21
  %v669 = vunpack.c.l.b16 %v22
  %v670 = vunpack.c.h.b16 %v22
  %v671 = vunpack.c.l.b16 %v23
  %v672 = vunpack.c.h.b16 %v23
  %v673 = vunpack.c.l.b16 %v24
  %v674 = vunpack.c.l.b16 %v25
  %v675 = vunpack.c.h.b16 %v25
  %v676 = vunpack.c.l.b16 %v26
  %v677 = vunpack.c.h.b16 %v26
  %v678 = vunpack.c.l.b16 %v27
  %v679 = vunpack.c.h.b16 %v27
  %v680 = vunpack.c.l.b16 %v28
  %v681 = vunpack.c.h.b16 %v28
  %v682 = vunpack.c.l.b16 %v29
  %v683 = vunpack.c.l.b16 %v30
  %v684 = vunpack.c.h.b16 %v30
  %v685 = vunpack.c.l.b16 %v31
  %v686 = vunpack.c.h.b16 %v31
  %v687 = vunpack.c.l.b16 %v32
  %v688 = vunpack.c.h.b16 %v32
  %v689 = vunpack.c.l.b16 %v33
  %v690 = vunpack.c.h.b16 %v33
  %v691 = vunpack.c.l.b16 %v34
  %v692 = vunpack.c.l.b16 %v35
  %v693 = vunpack.c.h.b16 %v35
  %v694 = vunpack.c.l.b16 %v36
  %v695 = vunpack.c.h.b16 %v36
  %v696 = vunpack.c.l.b16 %v37
  %v697 = vunpack.c.h.b16 %v37
  %v698 = vunpack.c.l.b16 %v38
  %v699 = vunpack.c.h.b16 %v38
  %v700 = vunpack.c.l.b16 %v39
  %v701 = vunpack.c.l.b16 %v40
  %v702 = vunpack.c.h.b16 %v40
  %v703 = vunpack.c.l.b16 %v41
  %v704 = vunpack.c.h.b16 %v41
  %v705 = vunpack.c.l.b16 %v42
  %v706 = vunpack.c.h.b16 %v42
  %v707 = vunpack.c.l.b16 %v43
  %v708 = vunpack.c.h.b16 %v43
  %v709 = vunpack.c.l.b16 %v44
  %v710 = vunpack.c.l.b16 %v45
  %v711 = vunpack.c.h.b16 %v45
  %v712 = vunpack.c.l.b16 %v46
  %v713 = vunpack.c.h.b16 %v46
  %v714 = vunpack.c.l.b16 %v47
  %v715 = vunpack.c.h.b16 %v47
  %v716 = vunpack.c.l.b16 %v48
  %v717 = vunpack.c.h.b16 %v48
  %v718 = vunpack.c.l.b16 %v49
  %v719 = vunpack.c.l.b16 %v50
  %v720 = vunpack.c.h.b16 %v50
  %v721 = vunpack.c.l.b16 %v51
  %v722 = vunpack.c.h.b16 %v51
  %v723 = vunpack.c.l.b16 %v52
  %v724 = vunpack.c.h.b16 %v52
  %v725 = vunpack.c.l.b16 %v53
  %v726 = vunpack.c.h.b16 %v53
  %v727 = vunpack.c.l.b16 %v54
  %v728 = vunpack.c.l.b16 %v55
  %v729 = vunpack.c.h.b16 %v55
  %v730 = vunpack.c.l.b16 %v56
  %v731 = vunpack.c.h.b16 %v56
  %v732 = vunpack.c.l.b16 %v57
  %v733 = vunpack.c.h.b16 %v57
  %v734 = vunpack.c.l.b16 %v58
  %v735 = vunpack.c.h.b16 %v58
  %v736 = vunpack.c.l.b16 %v59
  %v737 = vunpack.c.l.b16 %v60
  %v738 = vunpack.c.h.b16 %v60
  %v739 = vunpack.c.l.b16 %v61
  %v740 = vunpack.c.h.b16 %v61
  %v741 = vunpack.c.l.b16 %v62
  %v742 = vunpack.c.h.b16 %v62
  %v743 = vunpack.c.l.b16 %v63
  %v744 = vunpack.c.h.b16 %v63
  %v745 = vunpack.c.l.b16 %v64
  %v746 = vunpack.c.l.b16 %v65
  %v747 = vunpack.c.h.b16 %v65
  %v748 = vunpack.c.l.b16 %v66
  %v749 = vunpack.c.h.b16 %v66
  %v750 = vunpack.c.l.b16 %v67
  %v751 = vunpack.c.h.b16 %v67
  %v752 = vunpack.c.l.b16 %v68
  %v753 = vunpack.c.h.b16 %v68
  %v754 = vunpack.c.l.b16 %v69
  %v755 = vunpack.c.l.b16 %v70
  %v756 = vunpack.c.h.b16 %v70
  %v757 = vunpack.c.l.b16 %v71
  %v758 = vunpack.c.h.b16 %v71
  %v759 = vunpack.c.l.b16 %v72
  %v760 = vunpack.c.h.b16 %v72
  %v761 = vunpack.c.l.b16 %v73
  %v762 = vunpack.c.h.b16 %v73
  %v763 = vunpack.c.l.b16 %v74
  %v764 = vunpack.c.l.b16 %v75
  %v765 = vunpack.c.h.b16 %v75
  %v766 = vunpack.c.l.b16 %v76
  %v767 = vunpack.c.h.b16 %v76
  %v768 = vunpack.c.l.b16 %v77
  %v769 = vunpack.c.h.b16 %v77
  %v770 = vunpack.c.l.b16 %v78
  %v771 = vunpack.c.h.b16 %v78
  %v772 = vunpack.c.l.b16 %v79
  %v773 = vunpack.c.l.b16 %v80
  %v774 = vunpack.c.h.b16 %v80
  %v775 = vunpack.c.l.b16 %v81
  %v776 = vunpack.c.h.b16 %v81
  %v777 = vunpack.c.l.b16 %v82
  %v778 = vunpack.c.h.b16 %v82
  %v779 = vunpack.c.l.b16 %v83
  %v780 = vunpack.c.h.b16 %v83
  %v781 = vunpack.c.l.b16 %v84
  %v782 = vunpack.c.l.b16 %v85
  %v783 = vunpack.c.h.b16 %v85
  %v784 = vunpack.c.l.b16 %v86
  %v785 = vunpack.c.h.b16 %v86
  %v786 = vunpack.c.l.b16 %v87
  %v787 = vunpack.c.h.b16 %v87
  %v788 = vunpack.c.l.b16 %v88
  %v789 = vunpack.c.h.b16 %v88
  %v790 = vunpack.c.l.b16 %v89
  %v791 = vunpack.c.l.b16 %v90
  %v792 = vunpack.c.h.b16 %v90
  %v793 = vunpack.c.l.b16 %v91
  %v794 = vunpack.c.h.b16 %v91
  %v795 = vunpack.c.l.b16 %v92
  %v796 = vunpack.c.h.b16 %v92
  %v797 = vunpack.c.l.b16 %v93
  %v798 = vunpack.c.h.b16 %v93
  %v799 = vunpack.c.l.b16 %v94
  %v800 = vunpack.c.l.b16 %v95
  %v801 = vunpack.c.h.b16 %v95
  %v802 = vunpack.c.l.b16 %v96
  %v803 = vunpack.c.h.b16 %v96
  %v804 = vunpack.c.l.b16 %v97
  %v805 = vunpack.c.h.b16 %v97
  %v806 = vunpack.c.l.b16 %v98
  %v807 = vunpack.c.h.b16 %v98
  %v808 = vunpack.c.l.b16 %v99
  %v809 = vunpack.c.l.b16 %v100
  %v810 = vunpack.c.h.b16 %v100
  %v811 = vunpack.c.l.b16 %v101
  %v812 = vunpack.c.h.b16 %v101
  %v813 = vunpack.c.l.b16 %v102
  %v814 = vunpack.c.h.b16 %v102
  %v815 = vunpack.c.l.b16 %v103
  %v816 = vunpack.c.h.b16 %v103
  %v817 = vunpack.c.l.b16 %v104
  %v818 = vunpack.c.l.b16 %v105
  %v819 = vunpack.c.h.b16 %v105
  %v820 = vunpack.c.l.b16 %v106
  %v821 = vunpack.c.h.b16 %v106
  %v822 = vunpack.c.l.b16 %v107
  %v823 = vunpack.c.h.b16 %v107
  %v824 = vunpack.c.l.b16 %v108
  %v825 = vunpack.c.h.b16 %v108
  %v826 = vunpack.c.l.b16 %v109
  %v827 = vunpack.c.l.b16 %v110
  %v828 = vunpack.c.h.b16 %v110
  %v829 = vunpack.c.l.b16 %v111
  %v830 = vunpack.c.h.b16 %v111
  %v831 = vunpack.c.l.b16 %v112
  %v832 = vunpack.c.h.b16 %v112
  %v833 = vunpack.c.l.b16 %v113
  %v834 = vunpack.c.h.b16 %v113
  %v835 = vunpack.c.l.b16 %v114
  %v836 = vunpack.c.l.b16 %v115
  %v837 = vunpack.c.h.b16 %v115
  %v838 = vunpack.c.l.b16 %v116
  %v839 = vunpack.c.h.b16 %v116
  %v840 = vunpack.c.l.b16 %v117
  %v841 = vunpack.c.h.b16 %v117
  %v842 = vunpack.c.l.b16 %v118
  %v843 = vunpack.c.h.b16 %v118
  %v844 = vunpack.c.l.b16 %v119
  %v845 = vunpack.c.l.b16 %v120
  %v846 = vunpack.c.h.b16 %v120
  %v847 = vunpack.c.l.b16 %v121
  %v848 = vunpack.c.h.b16 %v121
  %v849 = vunpack.c.l.b16 %v122
  %v850 = vunpack.c.h.b16 %v122
  %v851 = vunpack.c.l.b16 %v123
  %v852 = vunpack.c.h.b16 %v123
  %v853 = vunpack.c.l.b16 %v124
  %v854 = vunpack.c.l.b16 %v125
  %v855 = vunpack.c.h.b16 %v125
  %v856 = vunpack.c.l.b16 %v126
  %v857 = vunpack.c.h.b16 %v126
  %v858 = vunpack.c.l.b16 %v127
  %v859 = vunpack.c.h.b16 %v127
  %v860 = vunpack.c.l.b16 %v128
  %v861 = vunpack.c.h.b16 %v128
  %v862 = vunpack.c.l.b16 %v129
  %v863 = vunpack.c.l.b16 %v130
  %v864 = vunpack.c.h.b16 %v130
  %v865 = vunpack.c.l.b16 %v131
  %v866 = vunpack.c.h.b16 %v131
  %v867 = vunpack.c.l.b16 %v132
  %v868 = vunpack.c.h.b16 %v132
  %v869 = vunpack.c.l.b16 %v133
  %v870 = vunpack.c.h.b16 %v133
  %v871 = vunpack.c.l.b16 %v134
  %v872 = vunpack.c.l.b16 %v135
  %v873 = vunpack.c.h.b16 %v135
  %v874 = vunpack.c.l.b16 %v136
  %v875 = vunpack.c.h.b16 %v136
  %v876 = vunpack.c.l.b16 %v137
  %v877 = vunpack.c.h.b16 %v137
  %v878 = vunpack.c.l.b16 %v138
  %v879 = vunpack.c.h.b16 %v138
  %v880 = vunpack.c.l.b16 %v139
  %v881 = vunpack.c.l.b16 %v140
  %v882 = vunpack.c.h.b16 %v140
  %v883 = vunpack.c.l.b16 %v141
  %v884 = vunpack.c.h.b16 %v141
  %v885 = vunpack.c.l.b16 %v142
  %v886 = vunpack.c.h.b16 %v142
  %v887 = vunpack.c.l.b16 %v143
  %v888 = vunpack.c.h.b16 %v143
  %v889 = vunpack.c.l.b16 %v144
  %v890 = vunpack.c.l.b16 %v145
  %v891 = vunpack.c.h.b16 %v145
  %v892 = vunpack.c.l.b16 %v146
  %v893 = vunpack.c.h.b16 %v146
  %v894 = vunpack.c.l.b16 %v147
  %v895 = vunpack.c.h.b16 %v147
  %v896 = vunpack.c.l.b16 %v148
  %v897 = vunpack.c.h.b16 %v148
  %v898 = vunpack.c.l.b16 %v149
  %v899 = vunpack.c.l.b16 %v150
  %v900 = vunpack.c.h.b16 %v150
  %v901 = vunpack.c.l.b16 %v151
  %v902 = vunpack.c.h.b16 %v151
  %v903 = vunpack.c.l.b16 %v152
  %v904 = vunpack.c.h.b16 %v152
  %v905 = vunpack.c.l.b16 %v153
  %v906 = vunpack.c.h.b16 %v153
  %v907 = vunpack.c.l.b16 %v154
  %v908 = vunpack.c.l.b16 %v155
  %v909 = vunpack.c.h.b16 %v155
  %v910 = vunpack.c.l.b16 %v156
  %v911 = vunpack.c.h.b16 %v156
  %v912 = vunpack.c.l.b16 %v157
  %v913 = vunpack.c.h.b16 %v157
  %v914 = vunpack.c.l.b16 %v158
  %v915 = vunpack.c.h.b16 %v158
  %v916 = vunpack.c.l.b16 %v159
  %v917 = vunpack.c.l.b16 %v160
  %v918 = vunpack.c.h.b16 %v160
  %v919 = vunpack.c.l.b16 %v161
  %v920 = vunpack.c.h.b16 %v161
  %v921 = vunpack.c.l.b16 %v162
  %v922 = vunpack.c.h.b16 %v162
  %v923 = vunpack.c.l.b16 %v163
  %v924 = vunpack.c.h.b16 %v163
  %v925 = vunpack.c.l.b16 %v164
  %v926 = vunpack.c.l.b16 %v165
  %v927 = vunpack.c.h.b16 %v165
  %v928 = vunpack.c.l.b16 %v166
  %v929 = vunpack.c.h.b16 %v166
  %v930 = vunpack.c.l.b16 %v167
  %v931 = vunpack.c.h.b16 %v167
  %v932 = vunpack.c.l.b16 %v168
  %v933 = vunpack.c.h.b16 %v168
  %v934 = vunpack.c.l.b16 %v169
  %v935 = vunpack.c.l.b16 %v170
  %v936 = vunpack.c.h.b16 %v170
  %v937 = vunpack.c.l.b16 %v171
  %v938 = vunpack.c.h.b16 %v171
  %v939 = vunpack.c.l.b16 %v172
  %v940 = vunpack.c.h.b16 %v172
  %v941 = vunpack.c.l.b16 %v173
  %v942 = vunpack.c.h.b16 %v173
  %v943 = vunpack.c.l.b16 %v174
  %v944 = vunpack.c.l.b16 %v175
  %v945 = vunpack.c.h.b16 %v175
  %v946 = vunpack.c.l.b16 %v176
  %v947 = vunpack.c.h.b16 %v176
  %v948 = vunpack.c.l.b16 %v177
  %v949 = vunpack.c.h.b16 %v177
  %v950 = vunpack.c.l.b16 %v178
  %v951 = vunpack.c.h.b16 %v178
  %v952 = vunpack.c.l.b16 %v179
  %v953 = vunpack.c.l.b16 %v180
  %v954 = vunpack.c.h.b16 %v180
  %v955 = vunpack.c.l.b16 %v181
  %v956 = vunpack.c.h.b16 %v181
  %v957 = vunpack.c.l.b16 %v182
  %v958 = vunpack.c.h.b16 %v182
  %v959 = vunpack.c.l.b16 %v183
  %v960 = vunpack.c.h.b16 %v183
  %v961 = vunpack.c.l.b16 %v184
  %v962 = vunpack.c.l.b16 %v185
  %v963 = vunpack.c.h.b16 %v185
  %v964 = vunpack.c.l.b16 %v186
  %v965 = vunpack.c.h.b16 %v186
  %v966 = vunpack.c.l.b16 %v187
  %v967 = vunpack.c.h.b16 %v187
  %v968 = vunpack.c.l.b16 %v188
  %v969 = vunpack.c.h.b16 %v188
  %v970 = vunpack.c.l.b16 %v189
  %v971 = vunpack.c.l.b16 %v190
  %v972 = vunpack.c.h.b16 %v190
  %v973 = vunpack.c.l.b16 %v191
  %v974 = vunpack.c.h.b16 %v191
  %v975 = vunpack.c.l.b16 %v192
  %v976 = vunpack.c.h.b16 %v192
  %v977 = vunpack.c.l.b16 %v193
  %v978 = vunpack.c.h.b16 %v193
  %v979 = vunpack.c.l.b16 %v194
  %v980 = vunpack.c.l.b16 %v195
  %v981 = vunpack.c.h.b16 %v195
  %v982 = vunpack.c.l.b16 %v196
  %v983 = vunpack.c.h.b16 %v196
  %v984 = vunpack.c.l.b16 %v197
  %v985 = vunpack.c.h.b16 %v197
  %v986 = vunpack.c.l.b16 %v198
  %v987 = vunpack.c.h.b16 %v198
  %v988 = vunpack.c.l.b16 %v199
  %v989 = vunpack.c.l.b16 %v200
  %v990 = vunpack.c.h.b16 %v200
  %v991 = vunpack.c.l.b16 %v201
  %v992 = vunpack.c.h.b16 %v201
  %v993 = vunpack.c.l.b16 %v202
  %v994 = vunpack.c.h.b16 %v202
  %v995 = vunpack.c.l.b16 %v203
  %v996 = vunpack.c.h.b16 %v203
  %v997 = vunpack.c.l.b16 %v204
  %v998 = vunpack.c.l.b16 %v205
  %v999 = vunpack.c.h.b16 %v205
  %v1000 = vunpack.c.l.b16 %v206
  %v1001 = vunpack.c.h.b16 %v206
  %v1002 = vunpack.c.l.b16 %v207
  %v1003 = vunpack.c.h.b16 %v207
  %v1004 = vunpack.c.l.b16 %v208
  %v1005 = vunpack.c.h.b16 %v208
  %v1006 = vunpack.c.l.b16 %v209
  %v1007 = vunpack.c.l.b16 %v210
  %v1008 = vunpack.c.h.b16 %v210
  %v1009 = vunpack.c.l.b16 %v211
  %v1010 = vunpack.c.h.b16 %v211
  %v1011 = vunpack.c.l.b16 %v212
  %v1012 = vunpack.c.h.b16 %v212
  %v1013 = vunpack.c.l.b16 %v213
  %v1014 = vunpack.c.h.b16 %v213
  %v1015 = vunpack.c.l.b16 %v214
  %v1016 = vunpack.c.l.b16 %v215
  %v1017 = vunpack.c.h.b16 %v215
  %v1018 = vunpack.c.l.b16 %v216
  %v1019 = vunpack.c.h.b16 %v216
  %v1020 = vunpack.c.l.b16 %v217
  %v1021 = vunpack.c.h.b16 %v217
  %v1022 = vunpack.c.l.b16 %v218
  %v1023 = vunpack.c.h.b16 %v218
  %v1024 = vunpack.c.l.b16 %v219
  %v1025 = vunpack.c.l.b16 %v220
  %v1026 = vunpack.c.h.b16 %v220
  %v1027 = vunpack.c.l.b16 %v221
  %v1028 = vunpack.c.h.b16 %v221
  %v1029 = vunpack.c.l.b16 %v222
  %v1030 = vunpack.c.h.b16 %v222
  %v1031 = vunpack.c.l.b16 %v223
  %v1032 = vunpack.c.h.b16 %v223
  %v1033 = vunpack.c.l.b16 %v224
  %v1034 = vunpack.c.l.b16 %v225
  %v1035 = vunpack.c.h.b16 %v225
  %v1036 = vunpack.c.l.b16 %v226
  %v1037 = vunpack.c.h.b16 %v226
  %v1038 = vunpack.c.l.b16 %v227
  %v1039 = vunpack.c.h.b16 %v227
  %v1040 = vunpack.c.l.b16 %v228
  %v1041 = vunpack.c.h.b16 %v228
  %v1042 = vunpack.c.l.b16 %v229
  %v1043 = vunpack.c.l.b16 %v230
  %v1044 = vunpack.c.h.b16 %v230
  %v1045 = vunpack.c.l.b16 %v231
  %v1046 = vunpack.c.h.b16 %v231
  %v1047 = vunpack.c.l.b16 %v232
  %v1048 = vunpack.c.h.b16 %v232
  %v1049 = vunpack.c.l.b16 %v233
  %v1050 = vunpack.c.h.b16 %v233
  %v1051 = vunpack.c.l.b16 %v234
  %v1052 = vunpack.c.l.b16 %v235
  %v1053 = vunpack.c.h.b16 %v235
  %v1054 = vunpack.c.l.b16 %v236
  %v1055 = vunpack.c.h.b16 %v236
  %v1056 = vunpack.c.l.b16 %v237
  %v1057 = vunpack.c.h.b16 %v237
  %v1058 = vunpack.c.l.b16 %v238
  %v1059 = vunpack.c.h.b16 %v238
  %v1060 = vunpack.c.l.b16 %v239
  %v1061 = vunpack.c.l.b16 %v240
  %v1062 = vunpack.c.h.b16 %v240
  %v1063 = vunpack.c.l.b16 %v241
  %v1064 = vunpack.c.h.b16 %v241
  %v1065 = vunpack.c.l.b16 %v242
  %v1066 = vunpack.c.h.b16 %v242
  %v1067 = vunpack.c.l.b16 %v243
  %v1068 = vunpack.c.h.b16 %v243
  %v1069 = vunpack.c.l.b16 %v244
  %v1070 = vunpack.c.l.b16 %v245
  %v1071 = vunpack.c.h.b16 %v245
  %v1072 = vunpack.c.l.b16 %v246
  %v1073 = vunpack.c.h.b16 %v246
  %v1074 = vunpack.c.l.b16 %v247
  %v1075 = vunpack.c.h.b16 %v247
  %v1076 = vunpack.c.l.b16 %v248
  %v1077 = vunpack.c.h.b16 %v248
  %v1078 = vunpack.c.l.b16 %v249
  %v1079 = vunpack.c.l.b16 %v250
  %v1080 = vunpack.c.h.b16 %v250
  %v1081 = vunpack.c.l.b16 %v251
  %v1082 = vunpack.c.h.b16 %v251
  %v1083 = vunpack.c.l.b16 %v252
  %v1084 = vunpack.c.h.b16 %v252
  %v1085 = vunpack.c.l.b16 %v253
  %v1086 = vunpack.c.h.b16 %v253
  %v1087 = vunpack.c.l.b16 %v254
  %v1088 = vunpack.c.l.b16 %v255
  %v1089 = vunpack.c.h.b16 %v255
  %v1090 = vunpack.c.l.b16 %v256
  %v1091 = vunpack.c.h.b16 %v256
  %v1092 = vunpack.c.l.b16 %v257
  %v1093 = vunpack.c.h.b16 %v257
  %v1094 = vunpack.c.l.b16 %v258
  %v1095 = vunpack.c.h.b16 %v258
  %v1096 = vunpack.c.l.b16 %v259
  %v1097 = vpack.c.b16 %v665, %v656
  %v1098 = vpack.c.b16 %v666, %v657
  %v1099 = vpack.c.b16 %v667, %v658
  %v1100 = vpack.c.b16 %v668, %v659
  %v1101 = vpack.c.b16 %v669, %v660
  %v1102 = vpack.c.b16 %v670, %v661
  %v1103 = vpack.c.b16 %v671, %v662
  %v1104 = vpack.c.b16 %v672, %v663
  %v1105 = vpack.c.b16 %v673, %v664
  %v1106 = vpack.c.b16 %v683, %v674
  %v1107 = vpack.c.b16 %v684, %v675
  %v1108 = vpack.c.b16 %v685, %v676
  %v1109 = vpack.c.b16 %v686, %v677
  %v1110 = vpack.c.b16 %v687, %v678
  %v1111 = vpack.c.b16 %v688, %v679
  %v1112 = vpack.c.b16 %v689, %v680
  %v1113 = vpack.c.b16 %v690, %v681
  %v1114 = vpack.c.b16 %v691, %v682
  %v1115 = vpack.c.b16 %v701, %v692
  %v1116 = vpack.c.b16 %v702, %v693
  %v1117 = vpack.c.b16 %v703, %v694
  %v1118 = vpack.c.b16 %v704, %v695
  %v1119 = vpack.c.b16 %v705, %v696
  %v1120 = vpack.c.b16 %v706, %v697
  %v1121 = vpack.c.b16 %v707, %v698
  %v1122 = vpack.c.b16 %v708, %v699
  %v1123 = vpack.c.b16 %v709, %v700
  %v1124 = vpack.c.b16 %v719, %v710
  %v1125 = vpack.c.b16 %v720, %v711
  %v1126 = vpack.c.b16 %v721, %v712
  %v1127 = vpack.c.b16 %v722, %v713
  %v1128 = vpack.c.b16 %v723, %v714
  %v1129 = vpack.c.b16 %v724, %v715
  %v1130 = vpack.c.b16 %v725, %v716
  %v1131 = vpack.c.b16 %v726, %v717
  %v1132 = vpack.c.b16 %v727, %v718
  %v1133 = vpack.c.b16 %v737, %v728
  %v1134 = vpack.c.b16 %v738, %v729
  %v1135 = vpack.c.b16 %v739, %v730
  %v1136 = vpack.c.b16 %v740, %v731
  %v1137 = vpack.c.b16 %v741, %v732
  %v1138 = vpack.c.b16 %v742, %v733
  %v1139 = vpack.c.b16 %v743, %v734
  %v1140 = vpack.c.b16 %v744, %v735
  %v1141 = vpack.c.b16 %v745, %v736
  %v1142 = vpack.c.b16 %v755, %v746
  %v1143 = vpack.c.b16 %v756, %v747
  %v1144 = vpack.c.b16 %v757, %v748
  %v1145 = vpack.c.b16 %v758, %v749
  %v1146 = vpack.c.b16 %v759, %v750
  %v1147 = vpack.c.b16 %v760, %v751
  %v1148 = vpack.c.b16 %v761, %v752
  %v1149 = vpack.c.b16 %v762, %v753
  %v1150 = vpack.c.b16 %v763, %v754
  %v1151 = vpack.c.b16 %v773, %v764
  %v1152 = vpack.c.b16 %v774, %v765
  %v1153 = vpack.c.b16 %v775, %v766
  %v1154 = vpack.c.b16 %v776, %v767
  %v1155 = vpack.c.b16 %v777, %v768
  %v1156 = vpack.c.b16 %v778, %v769
  %v1157 = vpack.c.b16 %v779, %v770
  %v1158 = vpack.c.b16 %v780, %v771
  %v1159 = vpack.c.b16 %v781, %v772
  %v1160 = vpack.c.b16 %v791, %v782
  %v1161 = vpack.c.b16 %v792, %v783
  %v1162 = vpack.c.b16 %v793, %v784
  %v1163 = vpack.c.b16 %v794, %v785
  %v1164 = vpack.c.b16 %v795, %v786
  %v1165 = vpack.c.b16 %v796, %v787
  %v1166 = vpack.c.b16 %v797, %v788
  %v1167 = vpack.c.b16 %v798, %v789
  %v1168 = vpack.c.b16 %v799, %v790
  %v1169 = vpack.c.b16 %v809, %v800
  %v1170 = vpack.c.b16 %v810, %v801
  %v1171 = vpack.c.b16 %v811, %v802
  %v1172 = vpack.c.b16 %v812, %v803
  %v1173 = vpack.c.b16 %v813, %v804
  %v1174 = vpack.c.b16 %v814, %v805
  %v1175 = vpack.c.b16 %v815, %v806
  %v1176 = vpack.c.b16 %v816, %v807
  %v1177 = vpack.c.b16 %v817, %v808
  %v1178 = vpack.c.b16 %v827, %v818
  %v1179 = vpack.c.b16 %v828, %v819
  %v1180 = vpack.c.b16 %v829, %v820
  %v1181 = vpack.c.b16 %v830, %v821
  %v1182 = vpack.c.b16 %v831, %v822
  %v1183 = vpack.c.b16 %v832, %v823
  %v1184 = vpack.c.b16 %v833, %v824
  %v1185 = vpack.c.b16 %v834, %v825
  %v1186 = vpack.c.b16 %v835, %v826
  %v1187 = vpack.c.b16 %v845, %v836
  %v1188 = vpack.c.b16 %v846, %v837
  %v1189 = vpack.c.b16 %v847, %v838
  %v1190 = vpack.c.b16 %v848, %v839
  %v1191 = vpack.c.b16 %v849, %v840
  %v1192 = vpack.c.b16 %v850, %v841
  %v1193 = vpack.c.b16 %v851, %v842
  %v1194 = vpack.c.b16 %v852, %v843
  %v1195 = vpack.c.b16 %v853, %v844
  %v1196 = vpack.c.b16 %v863, %v854
  %v1197 = vpack.c.b16 %v864, %v855
  %v1198 = vpack.c.b16 %v865, %v856
  %v1199 = vpack.c.b16 %v866, %v857
  %v1200 = vpack.c.b16 %v867, %v858
  %v1201 = vpack.c.b16 %v868, %v859
  %v1202 = vpack.c.b16 %v869, %v860
  %v1203 = vpack.c.b16 %v870, %v861
  %v1204 = vpack.c.b16 %v871, %v862
  %v1205 = vpack.c.b16 %v881, %v872
  %v1206 = vpack.c.b16 %v882, %v873
  %v1207 = vpack.c.b16 %v883, %v874
  %v1208 = vpack.c.b16 %v884, %v875
  %v1209 = vpack.c.b16 %v885, %v876
  %v1210 = vpack.c.b16 %v886, %v877
  %v1211 = vpack.c.b16 %v887, %v878
  %v1212 = vpack.c.b16 %v888, %v879
  %v1213 = vpack.c.b16 %v889, %v880
  %v1214 = vpack.c.b16 %v899, %v890
  %v1215 = vpack.c.b16 %v900, %v891
  %v1216 = vpack.c.b16 %v901, %v892
  %v1217 = vpack.c.b16 %v902, %v893
  %v1218 = vpack.c.b16 %v903, %v894
  %v1219 = vpack.c.b16 %v904, %v895
  %v1220 = vpack.c.b16 %v905, %v896
  %v1221 = vpack.c.b16 %v906, %v897
  %v1222 = vpack.c.b16 %v907, %v898
  %v1223 = vpack.c.b16 %v917, %v908
  %v1224 = vpack.c.b16 %v918, %v909
  %v1225 = vpack.c.b16 %v919, %v910
  %v1226 = vpack.c.b16 %v920, %v911
  %v1227 = vpack.c.b16 %v921, %v912
  %v1228 = vpack.c.b16 %v922, %v913
  %v1229 = vpack.c.b16 %v923, %v914
  %v1230 = vpack.c.b16 %v924, %v915
  %v1231 = vpack.c.b16 %v925, %v916
  %v1232 = vpack.c.b16 %v935, %v926
  %v1233 = vpack.c.b16 %v936, %v927
  %v1234 = vpack.c.b16 %v937, %v928
  %v1235 = vpack.c.b16 %v938, %v929
  %v1236 = vpack.c.b16 %v939, %v930
  %v1237 = vpack.c.b16 %v940, %v931
  %v1238 = vpack.c.b16 %v941, %v932
  %v1239 = vpack.c.b16 %v942, %v933
  %v1240 = vpack.c.b16 %v943, %v934
  %v1241 = vpack.c.b16 %v953, %v944
  %v1242 = vpack.c.b16 %v954, %v945
  %v1243 = vpack.c.b16 %v955, %v946
  %v1244 = vpack.c.b16 %v956, %v947
  %v1245 = vpack.c.b16 %v957, %v948
  %v1246 = vpack.c.b16 %v958, %v949
  %v1247 = vpack.c.b16 %v959, %v950
  %v1248 = vpack.c.b16 %v960, %v951
  %v1249 = vpack.c.b16 %v961, %v952
  %v1250 = vpack.c.b16 %v971, %v962
  %v1251 = vpack.c.b16 %v972, %v963
  %v1252 = vpack.c.b16 %v973, %v964
  %v1253 = vpack.c.b16 %v974, %v965
  %v1254 = vpack.c.b16 %v975, %v966
  %v1255 = vpack.c.b16 %v976, %v967
  %v1256 = vpack.c.b16 %v977, %v968
  %v1257 = vpack.c.b16 %v978, %v969
  %v1258 = vpack.c.b16 %v979, %v970
  %v1259 = vpack.c.b16 %v989, %v980
  %v1260 = vpack.c.b16 %v990, %v981
  %v1261 = vpack.c.b16 %v991, %v982
  %v1262 = vpack.c.b16 %v992, %v983
  %v1263 = vpack.c.b16 %v993, %v984
  %v1264 = vpack.c.b16 %v994, %v985
  %v1265 = vpack.c.b16 %v995, %v986
  %v1266 = vpack.c.b16 %v996, %v987
  %v1267 = vpack.c.b16 %v997, %v988
  %v1268 = vpack.c.b16 %v1007, %v998
  %v1269 = vpack.c.b16 %v1008, %v999
  %v1270 = vpack.c.b16 %v1009, %v1000
  %v1271 = vpack.c.b16 %v1010, %v1001
  %v1272 = vpack.c.b16 %v1011, %v1002
  %v1273 = vpack.c.b16 %v1012, %v1003
  %v1274 = vpack.c.b16 %v1013, %v1004
  %v1275 = vpack.c.b16 %v1014, %v1005
  %v1276 = vpack.c.b16 %v1015, %v1006
  %v1277 = vpack.c.b16 %v1025, %v1016
  %v1278 = vpack.c.b16 %v1026, %v1017
  %v1279 = vpack.c.b16 %v1027, %v1018
  %v1280 = vpack.c.b16 %v1028, %v1019
  %v1281 = vpack.c.b16 %v1029, %v1020
  %v1282 = vpack.c.b16 %v1030, %v1021
  %v1283 = vpack.c.b16 %v1031, %v1022
  %v1284 = vpack.c.b16 %v1032, %v1023
  %v1285 = vpack.c.b16 %v1033, %v1024
  %v1286 = vpack.c.b16 %v1043, %v1034
  %v1287 = vpack.c.b16 %v1044, %v1035
  %v1288 = vpack.c.b16 %v1045, %v1036
  %v1289 = vpack.c.b16 %v1046, %v1037
  %v1290 = vpack.c.b16 %v1047, %v1038
  %v1291 = vpack.c.b16 %v1048, %v1039
  %v1292 = vpack.c.b16 %v1049, %v1040
  %v1293 = vpack.c.b16 %v1050, %v1041
  %v1294 = vpack.c.b16 %v1051, %v1042
  %v1295 = vpack.c.b16 %v1061, %v1052
  %v1296 = vpack.c.b16 %v1062, %v1053
  %v1297 = vpack.c.b16 %v1063, %v1054
  %v1298 = vpack.c.b16 %v1064, %v1055
  %v1299 = vpack.c.b16 %v1065, %v1056
  %v1300 = vpack.c.b16 %v1066, %v1057
  %v1301 = vpack.c.b16 %v1067, %v1058
  %v1302 = vpack.c.b16 %v1068, %v1059
  %v1303 = vpack.c.b16 %v1069, %v1060
  %v1304 = vpack.c.b16 %v1079, %v1070
  %v1305 = vpack.c.b16 %v1080, %v1071
  %v1306 = vpack.c.b16 %v1081, %v1072
  %v1307 = vpack.c.b16 %v1082, %v1073
  %v1308 = vpack.c.b16 %v1083, %v1074
  %v1309 = vpack.c.b16 %v1084, %v1075
  %v1310 = vpack.c.b16 %v1085, %v1076
  %v1311 = vpack.c.b16 %v1086, %v1077
  %v1312 = vpack.c.b16 %v1087, %v1078
  %v1313 = vpack.c.b16 %v1088, %v1088
  %v1314 = vpack.c.b16 %v1089, %v1089
  %v1315 = vpack.c.b16 %v1090, %v1090
  %v1316 = vpack.c.b16 %v1091, %v1091
  %v1317 = vpack.c.b16 %v1092, %v1092
  %v1318 = vpack.c.b16 %v1093, %v1093
  %v1319 = vpack.c.b16 %v1094, %v1094
  %v1320 = vpack.c.b16 %v1095, %v1095
  %v1321 = vpack.c.b16 %v1096, %v1096
  %v1691 = vunpack.c.l.b16 %v260
  %v1692 = vunpack.c.l.b16 %v261
  %v1693 = vunpack.c.l.b16 %v262
  %v1694 = vunpack.c.l.b16 %v263
  %v1695 = vunpack.c.l.b16 %v264
  %v1696 = vunpack.c.l.b16 %v265
  %v1697 = vunpack.c.l.b16 %v266
  %v1698 = vunpack.c.l.b16 %v267
  %v1699 = vunpack.c.l.b16 %v268
  %v1700 = vunpack.c.l.b16 %v269
  %v1701 = vunpack.c.l.b16 %v270
  %v1702 = vunpack.c.l.b16 %v271
  %v1703 = vunpack.c.l.b16 %v272
  %v1704 = vunpack.c.l.b16 %v273
  %v1705 = vunpack.c.l.b16 %v274
  %v1706 = vunpack.c.l.b16 %v275
  %v1707 = vunpack.c.l.b16 %v276
  %v1708 = vunpack.c.l.b16 %v277
  %v1709 = vunpack.c.l.b16 %v278
  %v1710 = vunpack.c.l.b16 %v279
  %v1711 = vunpack.c.l.b16 %v280
  %v1712 = vunpack.c.l.b16 %v281
  %v1713 = vunpack.c.l.b16 %v282
  %v1714 = vunpack.c.l.b16 %v283
  %v1715 = vunpack.c.l.b16 %v284
  %v1716 = vunpack.c.l.b16 %v285
  %v1717 = vunpack.c.l.b16 %v286
  %v1718 = vunpack.c.l.b16 %v287
  %v1719 = vunpack.c.l.b16 %v288
  %v1720 = vunpack.c.l.b16 %v289
  %v1721 = vunpack.c.l.b16 %v290
  %v1722 = vunpack.c.l.b16 %v291
  %v1723 = vunpack.c.l.b16 %v292
  %v1724 = vunpack.c.l.b16 %v293
  %v1725 = vunpack.c.l.b16 %v294
  %v1726 = vunpack.c.l.b16 %v295
  %v1727 = vunpack.c.l.b16 %v296
  %v1728 = vunpack.c.l.b16 %v297
  %v1729 = vunpack.c.l.b16 %v298
  %v1730 = vunpack.c.l.b16 %v299
  %v1731 = vunpack.c.l.b16 %v300
  %v1732 = vunpack.c.l.b16 %v301
  %v1733 = vunpack.c.l.b16 %v302
  %v1734 = vunpack.c.l.b16 %v303
  %v1735 = vunpack.c.l.b16 %v304
  %v1736 = vunpack.c.l.b16 %v305
  %v1737 = vunpack.c.l.b16 %v306
  %v1738 = vunpack.c.l.b16 %v307
  %v1739 = vunpack.c.l.b16 %v308
  %v1740 = vunpack.c.l.b16 %v309
  %v1741 = vunpack.c.l.b16 %v310
  %v1742 = vunpack.c.l.b16 %v311
  %v1743 = vunpack.c.l.b16 %v312
  %v1744 = vunpack.c.l.b16 %v313
  %v1745 = vunpack.c.l.b16 %v314
  %v1746 = vunpack.c.l.b16 %v315
  %v1747 = vunpack.c.l.b16 %v316
  %v1748 = vunpack.c.l.b16 %v317
  %v1749 = vunpack.c.l.b16 %v318
  %v1750 = vunpack.c.l.b16 %v319
  %v1751 = vunpack.c.l.b16 %v320
  %v1752 = vunpack.c.l.b16 %v321
  %v1753 = vunpack.c.l.b16 %v322
  %v1754 = vunpack.c.l.b16 %v323
  %v1755 = vunpack.c.l.b16 %v324
  %v1756 = vunpack.c.l.b16 %v325
  %v1757 = vunpack.c.l.b16 %v326
  %v1758 = vunpack.c.l.b16 %v327
  %v1759 = vunpack.c.l.b16 %v328
  %v1760 = vunpack.c.l.b16 %v329
  %v1761 = vunpack.c.l.b16 %v330
  %v1762 = vunpack.c.l.b16 %v331
  %v1763 = vunpack.c.l.b16 %v332
  %v1764 = vunpack.c.l.b16 %v333
  %v1765 = vunpack.c.l.b16 %v334
  %v1766 = vunpack.c.l.b16 %v335
  %v1767 = vunpack.c.l.b16 %v336
  %v1768 = vunpack.c.l.b16 %v337
  %v1769 = vunpack.c.l.b16 %v338
  %v1770 = vunpack.c.l.b16 %v339
  %v1771 = vunpack.c.l.b16 %v340
  %v1772 = vunpack.c.l.b16 %v341
  %v1773 = vunpack.c.l.b16 %v342
  %v1774 = vunpack.c.l.b16 %v343
  %v1775 = vunpack.c.l.b16 %v344
  %v1776 = vunpack.c.l.b16 %v345
  %v1777 = vunpack.c.l.b16 %v346
  %v1778 = vunpack.c.l.b16 %v347
  %v1779 = vunpack.c.l.b16 %v348
  %v1780 = vunpack.c.l.b16 %v349
  %v1781 = vunpack.c.l.b16 %v350
  %v1782 = vunpack.c.l.b16 %v351
  %v1783 = vunpack.c.l.b16 %v352
  %v1784 = vunpack.c.l.b16 %v353
  %v1785 = vunpack.c.l.b16 %v354
  %v1786 = vunpack.c.l.b16 %v355
  %v1787 = vunpack.c.l.b16 %v356
  %v1788 = vunpack.c.l.b16 %v357
  %v1789 = vunpack.c.l.b16 %v358
  %v1790 = vunpack.c.l.b16 %v359
  %v1791 = vunpack.c.l.b16 %v360
  %v1792 = vunpack.c.l.b16 %v361
  %v1793 = vunpack.c.l.b16 %v362
  %v1794 = vunpack.c.l.b16 %v363
  %v1795 = vunpack.c.l.b16 %v364
  %v1796 = vunpack.c.l.b16 %v365
  %v1797 = vunpack.c.l.b16 %v366
  %v1798 = vunpack.c.l.b16 %v367
  %v1799 = vunpack.c.l.b16 %v368
  %v1800 = vunpack.c.l.b16 %v369
  %v1801 = vunpack.c.l.b16 %v370
  %v1802 = vunpack.c.l.b16 %v371
  %v1803 = vunpack.c.l.b16 %v372
  %v1804 = vunpack.c.l.b16 %v373
  %v1805 = vunpack.c.l.b16 %v374
  %v1806 = vunpack.c.l.b16 %v375
  %v1807 = vunpack.c.l.b16 %v376
  %v1808 = vunpack.c.l.b16 %v377
  %v1809 = vunpack.c.l.b16 %v378
  %v1810 = vunpack.c.l.b16 %v379
  %v1811 = vunpack.c.l.b16 %v380
  %v1812 = vunpack.c.l.b16 %v381
  %v1813 = vunpack.c.l.b16 %v382
  %v1814 = vunpack.c.l.b16 %v383
  %v1815 = vunpack.c.l.b16 %v384
  %v1816 = vunpack.c.l.b16 %v385
  %v1817 = vunpack.c.l.b16 %v386
  %v1818 = vunpack.c.l.b16 %v387
  %v1819 = vunpack.c.l.b16 %v388
  %v1820 = vunpack.c.l.b16 %v389
  %v1821 = vunpack.c.l.b16 %v390
  %v1822 = vunpack.c.l.b16 %v391
  %v1823 = vunpack.c.l.b16 %v392
  %v1824 = vunpack.c.l.b16 %v393
  %v1825 = vunpack.c.l.b16 %v394
  %v1826 = vunpack.c.l.b16 %v395
  %v1827 = vunpack.c.l.b16 %v396
  %v1828 = vunpack.c.l.b16 %v397
  %v1829 = vunpack.c.l.b16 %v398
  %v1830 = vunpack.c.l.b16 %v399
  %v1831 = vunpack.c.l.b16 %v400
  %v1832 = vunpack.c.l.b16 %v401
  %v1833 = vunpack.c.l.b16 %v402
  %v1834 = vunpack.c.l.b16 %v403
  %v1835 = vpack.c.b16 %v1692, %v1691
  %v1836 = vpack.c.b16 %v1694, %v1693
  %v1837 = vpack.c.b16 %v1696, %v1695
  %v1838 = vpack.c.b16 %v1698, %v1697
  %v1839 = vpack.c.b16 %v1700, %v1699
  %v1840 = vpack.c.b16 %v1702, %v1701
  %v1841 = vpack.c.b16 %v1704, %v1703
  %v1842 = vpack.c.b16 %v1706, %v1705
  %v1843 = vpack.c.b16 %v1708, %v1707
  %v1844 = vpack.c.b16 %v1710, %v1709
  %v1845 = vpack.c.b16 %v1712, %v1711
  %v1846 = vpack.c.b16 %v1714, %v1713
  %v1847 = vpack.c.b16 %v1716, %v1715
  %v1848 = vpack.c.b16 %v1718, %v1717
  %v1849 = vpack.c.b16 %v1720, %v1719
  %v1850 = vpack.c.b16 %v1722, %v1721
  %v1851 = vpack.c.b16 %v1724, %v1723
  %v1852 = vpack.c.b16 %v1726, %v1725
  %v1853 = vpack.c.b16 %v1728, %v1727
  %v1854 = vpack.c.b16 %v1730, %v1729
  %v1855 = vpack.c.b16 %v1732, %v1731
  %v1856 = vpack.c.b16 %v1734, %v1733
  %v1857 = vpack.c.b16 %v1736, %v1735
  %v1858 = vpack.c.b16 %v1738, %v1737
  %v1859 = vpack.c.b16 %v1740, %v1739
  %v1860 = vpack.c.b16 %v1742, %v1741
  %v1861 = vpack.c.b16 %v1744, %v1743
  %v1862 = vpack.c.b16 %v1746, %v1745
  %v1863 = vpack.c.b16 %v1748, %v1747
  %v1864 = vpack.c.b16 %v1750, %v1749
  %v1865 = vpack.c.b16 %v1752, %v1751
  %v1866 = vpack.c.b16 %v1754, %v1753
  %v1867 = vpack.c.b16 %v1756, %v1755
  %v1868 = vpack.c.b16 %v1758, %v1757
  %v1869 = vpack.c.b16 %v1760, %v1759
  %v1870 = vpack.c.b16 %v1762, %v1761
  %v1871 = vpack.c.b16 %v1764, %v1763
  %v1872 = vpack.c.b16 %v1766, %v1765
  %v1873 = vpack.c.b16 %v1768, %v1767
  %v1874 = vpack.c.b16 %v1770, %v1769
  %v1875 = vpack.c.b16 %v1772, %v1771
  %v1876 = vpack.c.b16 %v1774, %v1773
  %v1877 = vpack.c.b16 %v1776, %v1775
  %v1878 = vpack.c.b16 %v1778, %v1777
  %v1879 = vpack.c.b16 %v1780, %v1779
  %v1880 = vpack.c.b16 %v1782, %v1781
  %v1881 = vpack.c.b16 %v1784, %v1783
  %v1882 = vpack.c.b16 %v1786, %v1785
  %v1883 = vpack.c.b16 %v1788, %v1787
  %v1884 = vpack.c.b16 %v1790, %v1789
  %v1885 = vpack.c.b16 %v1792, %v1791
  %v1886 = vpack.c.b16 %v1794, %v1793
  %v1887 = vpack.c.b16 %v1796, %v1795
  %v1888 = vpack.c.b16 %v1798, %v1797
  %v1889 = vpack.c.b16 %v1800, %v1799
  %v1890 = vpack.c.b16 %v1802, %v1801
  %v1891 = vpack.c.b16 %v1804, %v1803
  %v1892 = vpack.c.b16 %v1806, %v1805
  %v1893 = vpack.c.b16 %v1808, %v1807
  %v1894 = vpack.c.b16 %v1810, %v1809
  %v1895 = vpack.c.b16 %v1812, %v1811
  %v1896 = vpack.c.b16 %v1814, %v1813
  %v1897 = vpack.c.b16 %v1816, %v1815
  %v1898 = vpack.c.b16 %v1818, %v1817
  %v1899 = vpack.c.b16 %v1820, %v1819
  %v1900 = vpack.c.b16 %v1822, %v1821
  %v1901 = vpack.c.b16 %v1824, %v1823
  %v1902 = vpack.c.b16 %v1826, %v1825
  %v1903 = vpack.c.b16 %v1828, %v1827
  %v1904 = vpack.c.b16 %v1830, %v1829
  %v1905 = vpack.c.b16 %v1832, %v1831
  %v1906 = vpack.c.b16 %v1834, %v1833
  %1979 = vmatprep.subr.bf16.mxu0 0
  %1980 = vmatpush1.bf16.msra.mxu0 %v1842
  %1981 = vmatprep.subr.bf16.mxu0 0
  %1982 = vmatpush1.bf16.msra.mxu0 %v1841
  %1983 = vmatprep.subr.bf16.mxu0 0
  %1984 = vmatpush1.bf16.msra.mxu0 %v1840
  %1985 = vmatprep.subr.bf16.mxu0 0
  %1986 = vmatpush1.bf16.msra.mxu0 %v1839
  %1987 = vmatprep.subr.bf16.mxu0 0
  %1988 = vmatpush1.bf16.msra.mxu0 %v1838
  %1989 = vmatprep.subr.bf16.mxu0 0
  %1990 = vmatpush1.bf16.msra.mxu0 %v1837
  %1991 = vmatprep.subr.bf16.mxu0 0
  %1992 = vmatpush1.bf16.msra.mxu0 %v1836
  %1993 = vmatprep.subr.bf16.mxu0 0
  %1994 = vmatpush1.bf16.msra.mxu0 %v1835
  %1995 = vmatprep.subr.bf16.mxu0 0
  %1996 = vmatpush2.bf16.msra.mxu0 %v1850
  %1997 = vmatprep.subr.bf16.mxu0 0
  %1998 = vmatpush2.bf16.msra.mxu0 %v1849
  %1999 = vmatprep.subr.bf16.mxu0 0
  %2000 = vmatpush2.bf16.msra.mxu0 %v1848
  %2001 = vmatprep.subr.bf16.mxu0 0
  %2002 = vmatpush2.bf16.msra.mxu0 %v1847
  %2003 = vmatprep.subr.bf16.mxu0 0
  %2004 = vmatpush2.bf16.msra.mxu0 %v1846
  %2005 = vmatprep.subr.bf16.mxu0 0
  %2006 = vmatpush2.bf16.msra.mxu0 %v1845
  %2007 = vmatprep.subr.bf16.mxu0 0
  %2008 = vmatpush2.bf16.msra.mxu0 %v1844
  %2009 = vmatprep.subr.bf16.mxu0 0
  %2010 = vmatpush2.bf16.msra.mxu0 %v1843
  %2011 = vmatprep.mubr.bf16.mxu0 %v1098
  %2012 = vmatmul.mubr.bf16.gmra.mxu0 %v1097
  %v2013 = vpop.f32.mrf.mxu0
  %v2014 = vadd.f32 %v409, %v2013
  %v2015 = vpop.f32.mrf.mxu0
  %v2016 = vpop.f32.mrf.mxu0
  %v2017 = vadd.f32 %v409, %v2016
  %v2018 = vpop.f32.mrf.mxu0
  %2019 = vmatprep.mubr.bf16.mxu0 %v1107
  %2020 = vmatmul.mubr.bf16.gmra.mxu0 %v1106
  %v2021 = vpop.f32.mrf.mxu0
  %v2022 = vadd.f32 %v409, %v2021
  %v2023 = vpop.f32.mrf.mxu0
  %v2024 = vpop.f32.mrf.mxu0
  %v2025 = vadd.f32 %v409, %v2024
  %v2026 = vpop.f32.mrf.mxu0
  %2027 = vmatprep.mubr.bf16.mxu0 %v1116
  %2028 = vmatmul.mubr.bf16.gmra.mxu0 %v1115
  %v2029 = vpop.f32.mrf.mxu0
  %v2030 = vadd.f32 %v409, %v2029
  %v2031 = vpop.f32.mrf.mxu0
  %v2032 = vpop.f32.mrf.mxu0
  %v2033 = vadd.f32 %v409, %v2032
  %v2034 = vpop.f32.mrf.mxu0
  %2035 = vmatprep.mubr.bf16.mxu0 %v1125
  %2036 = vmatmul.mubr.bf16.gmra.mxu0 %v1124
  %v2037 = vpop.f32.mrf.mxu0
  %v2038 = vadd.f32 %v409, %v2037
  %v2039 = vpop.f32.mrf.mxu0
  %v2040 = vpop.f32.mrf.mxu0
  %v2041 = vadd.f32 %v409, %v2040
  %v2042 = vpop.f32.mrf.mxu0
  %2043 = vmatprep.mubr.bf16.mxu0 %v1134
  %2044 = vmatmul.mubr.bf16.gmra.mxu0 %v1133
  %v2045 = vpop.f32.mrf.mxu0
  %v2046 = vadd.f32 %v409, %v2045
  %v2047 = vpop.f32.mrf.mxu0
  %v2048 = vpop.f32.mrf.mxu0
  %v2049 = vadd.f32 %v409, %v2048
  %v2050 = vpop.f32.mrf.mxu0
  %2051 = vmatprep.mubr.bf16.mxu0 %v1143
  %2052 = vmatmul.mubr.bf16.gmra.mxu0 %v1142
  %v2053 = vpop.f32.mrf.mxu0
  %v2054 = vadd.f32 %v409, %v2053
  %v2055 = vpop.f32.mrf.mxu0
  %v2056 = vpop.f32.mrf.mxu0
  %v2057 = vadd.f32 %v409, %v2056
  %v2058 = vpop.f32.mrf.mxu0
  %2059 = vmatprep.mubr.bf16.mxu0 %v1152
  %2060 = vmatmul.mubr.bf16.gmra.mxu0 %v1151
  %v2061 = vpop.f32.mrf.mxu0
  %v2062 = vadd.f32 %v409, %v2061
  %v2063 = vpop.f32.mrf.mxu0
  %v2064 = vpop.f32.mrf.mxu0
  %v2065 = vadd.f32 %v409, %v2064
  %v2066 = vpop.f32.mrf.mxu0
  %2067 = vmatprep.mubr.bf16.mxu0 %v1161
  %2068 = vmatmul.mubr.bf16.gmra.mxu0 %v1160
  %v2069 = vpop.f32.mrf.mxu0
  %v2070 = vadd.f32 %v409, %v2069
  %v2071 = vpop.f32.mrf.mxu0
  %v2072 = vpop.f32.mrf.mxu0
  %v2073 = vadd.f32 %v409, %v2072
  %v2074 = vpop.f32.mrf.mxu0
  %2075 = vmatprep.mubr.bf16.mxu0 %v1170
  %2076 = vmatmul.mubr.bf16.gmra.mxu0 %v1169
  %v2077 = vpop.f32.mrf.mxu0
  %v2078 = vadd.f32 %v409, %v2077
  %v2079 = vpop.f32.mrf.mxu0
  %v2080 = vpop.f32.mrf.mxu0
  %v2081 = vadd.f32 %v409, %v2080
  %v2082 = vpop.f32.mrf.mxu0
  %2083 = vmatprep.mubr.bf16.mxu0 %v1179
  %2084 = vmatmul.mubr.bf16.gmra.mxu0 %v1178
  %v2085 = vpop.f32.mrf.mxu0
  %v2086 = vadd.f32 %v409, %v2085
  %v2087 = vpop.f32.mrf.mxu0
  %v2088 = vpop.f32.mrf.mxu0
  %v2089 = vadd.f32 %v409, %v2088
  %v2090 = vpop.f32.mrf.mxu0
  %2091 = vmatprep.mubr.bf16.mxu0 %v1188
  %2092 = vmatmul.mubr.bf16.gmra.mxu0 %v1187
  %v2093 = vpop.f32.mrf.mxu0
  %v2094 = vadd.f32 %v409, %v2093
  %v2095 = vpop.f32.mrf.mxu0
  %v2096 = vpop.f32.mrf.mxu0
  %v2097 = vadd.f32 %v409, %v2096
  %v2098 = vpop.f32.mrf.mxu0
  %2099 = vmatprep.mubr.bf16.mxu0 %v1197
  %2100 = vmatmul.mubr.bf16.gmra.mxu0 %v1196
  %v2101 = vpop.f32.mrf.mxu0
  %v2102 = vadd.f32 %v409, %v2101
  %v2103 = vpop.f32.mrf.mxu0
  %v2104 = vpop.f32.mrf.mxu0
  %v2105 = vadd.f32 %v409, %v2104
  %v2106 = vpop.f32.mrf.mxu0
  %2107 = vmatprep.mubr.bf16.mxu0 %v1206
  %2108 = vmatmul.mubr.bf16.gmra.mxu0 %v1205
  %v2109 = vpop.f32.mrf.mxu0
  %v2110 = vadd.f32 %v409, %v2109
  %v2111 = vpop.f32.mrf.mxu0
  %v2112 = vpop.f32.mrf.mxu0
  %v2113 = vadd.f32 %v409, %v2112
  %v2114 = vpop.f32.mrf.mxu0
  %2115 = vmatprep.mubr.bf16.mxu0 %v1215
  %2116 = vmatmul.mubr.bf16.gmra.mxu0 %v1214
  %v2117 = vpop.f32.mrf.mxu0
  %v2118 = vadd.f32 %v409, %v2117
  %v2119 = vpop.f32.mrf.mxu0
  %v2120 = vpop.f32.mrf.mxu0
  %v2121 = vadd.f32 %v409, %v2120
  %v2122 = vpop.f32.mrf.mxu0
  %2123 = vmatprep.mubr.bf16.mxu0 %v1224
  %2124 = vmatmul.mubr.bf16.gmra.mxu0 %v1223
  %v2125 = vpop.f32.mrf.mxu0
  %v2126 = vadd.f32 %v409, %v2125
  %v2127 = vpop.f32.mrf.mxu0
  %v2128 = vpop.f32.mrf.mxu0
  %v2129 = vadd.f32 %v409, %v2128
  %v2130 = vpop.f32.mrf.mxu0
  %2131 = vmatprep.mubr.bf16.mxu0 %v1233
  %2132 = vmatmul.mubr.bf16.gmra.mxu0 %v1232
  %v2133 = vpop.f32.mrf.mxu0
  %v2134 = vadd.f32 %v409, %v2133
  %v2135 = vpop.f32.mrf.mxu0
  %v2136 = vpop.f32.mrf.mxu0
  %v2137 = vadd.f32 %v409, %v2136
  %v2138 = vpop.f32.mrf.mxu0
  %2139 = vmatprep.mubr.bf16.mxu0 %v1242
  %2140 = vmatmul.mubr.bf16.gmra.mxu0 %v1241
  %v2141 = vpop.f32.mrf.mxu0
  %v2142 = vadd.f32 %v409, %v2141
  %v2143 = vpop.f32.mrf.mxu0
  %v2144 = vpop.f32.mrf.mxu0
  %v2145 = vadd.f32 %v409, %v2144
  %v2146 = vpop.f32.mrf.mxu0
  %2147 = vmatprep.mubr.bf16.mxu0 %v1251
  %2148 = vmatmul.mubr.bf16.gmra.mxu0 %v1250
  %v2149 = vpop.f32.mrf.mxu0
  %v2150 = vadd.f32 %v409, %v2149
  %v2151 = vpop.f32.mrf.mxu0
  %v2152 = vpop.f32.mrf.mxu0
  %v2153 = vadd.f32 %v409, %v2152
  %v2154 = vpop.f32.mrf.mxu0
  %2155 = vmatprep.mubr.bf16.mxu0 %v1260
  %2156 = vmatmul.mubr.bf16.gmra.mxu0 %v1259
  %v2157 = vpop.f32.mrf.mxu0
  %v2158 = vadd.f32 %v409, %v2157
  %v2159 = vpop.f32.mrf.mxu0
  %v2160 = vpop.f32.mrf.mxu0
  %v2161 = vadd.f32 %v409, %v2160
  %v2162 = vpop.f32.mrf.mxu0
  %2163 = vmatprep.mubr.bf16.mxu0 %v1269
  %2164 = vmatmul.mubr.bf16.gmra.mxu0 %v1268
  %v2165 = vpop.f32.mrf.mxu0
  %v2166 = vadd.f32 %v409, %v2165
  %v2167 = vpop.f32.mrf.mxu0
  %v2168 = vpop.f32.mrf.mxu0
  %v2169 = vadd.f32 %v409, %v2168
  %v2170 = vpop.f32.mrf.mxu0
  %2171 = vmatprep.mubr.bf16.mxu0 %v1278
  %2172 = vmatmul.mubr.bf16.gmra.mxu0 %v1277
  %v2173 = vpop.f32.mrf.mxu0
  %v2174 = vadd.f32 %v409, %v2173
  %v2175 = vpop.f32.mrf.mxu0
  %v2176 = vpop.f32.mrf.mxu0
  %v2177 = vadd.f32 %v409, %v2176
  %v2178 = vpop.f32.mrf.mxu0
  %2179 = vmatprep.mubr.bf16.mxu0 %v1287
  %2180 = vmatmul.mubr.bf16.gmra.mxu0 %v1286
  %v2181 = vpop.f32.mrf.mxu0
  %v2182 = vadd.f32 %v409, %v2181
  %v2183 = vpop.f32.mrf.mxu0
  %v2184 = vpop.f32.mrf.mxu0
  %v2185 = vadd.f32 %v409, %v2184
  %v2186 = vpop.f32.mrf.mxu0
  %2187 = vmatprep.mubr.bf16.mxu0 %v1296
  %2188 = vmatmul.mubr.bf16.gmra.mxu0 %v1295
  %v2189 = vpop.f32.mrf.mxu0
  %v2190 = vadd.f32 %v409, %v2189
  %v2191 = vpop.f32.mrf.mxu0
  %v2192 = vpop.f32.mrf.mxu0
  %v2193 = vadd.f32 %v409, %v2192
  %v2194 = vpop.f32.mrf.mxu0
  %2195 = vmatprep.mubr.bf16.mxu0 %v1305
  %2196 = vmatmul.mubr.bf16.gmra.mxu0 %v1304
  %v2197 = vpop.f32.mrf.mxu0
  %v2198 = vadd.f32 %v409, %v2197
  %v2199 = vpop.f32.mrf.mxu0
  %v2200 = vpop.f32.mrf.mxu0
  %v2201 = vadd.f32 %v409, %v2200
  %v2202 = vpop.f32.mrf.mxu0
  %2203 = vmatprep.mubr.bf16.mxu0 %v1314
  %2204 = vmatmul.mubr.bf16.gmra.mxu0 %v1313
  %v2205 = vpop.f32.mrf.mxu0
  %v2206 = vadd.f32 %v409, %v2205
  %v2207 = vpop.f32.mrf.mxu0
  %v2208 = vpop.f32.mrf.mxu0
  %v2209 = vpop.f32.mrf.mxu0
  %2210 = vdwg.mxu0
  %2211 = vmatprep.subr.bf16.mxu0 0
  %2212 = vmatpush1.bf16.msra.mxu0 %v1858
  %2213 = vmatprep.subr.bf16.mxu0 0
  %2214 = vmatpush1.bf16.msra.mxu0 %v1857
  %2215 = vmatprep.subr.bf16.mxu0 0
  %2216 = vmatpush1.bf16.msra.mxu0 %v1856
  %2217 = vmatprep.subr.bf16.mxu0 0
  %2218 = vmatpush1.bf16.msra.mxu0 %v1855
  %2219 = vmatprep.subr.bf16.mxu0 0
  %2220 = vmatpush1.bf16.msra.mxu0 %v1854
  %2221 = vmatprep.subr.bf16.mxu0 0
  %2222 = vmatpush1.bf16.msra.mxu0 %v1853
  %2223 = vmatprep.subr.bf16.mxu0 0
  %2224 = vmatpush1.bf16.msra.mxu0 %v1852
  %2225 = vmatprep.subr.bf16.mxu0 0
  %2226 = vmatpush1.bf16.msra.mxu0 %v1851
  %2227 = vmatprep.subr.bf16.mxu0 0
  %2228 = vmatpush2.bf16.msra.mxu0 %v1866
  %2229 = vmatprep.subr.bf16.mxu0 0
  %2230 = vmatpush2.bf16.msra.mxu0 %v1865
  %2231 = vmatprep.subr.bf16.mxu0 0
  %2232 = vmatpush2.bf16.msra.mxu0 %v1864
  %2233 = vmatprep.subr.bf16.mxu0 0
  %2234 = vmatpush2.bf16.msra.mxu0 %v1863
  %2235 = vmatprep.subr.bf16.mxu0 0
  %2236 = vmatpush2.bf16.msra.mxu0 %v1862
  %2237 = vmatprep.subr.bf16.mxu0 0
  %2238 = vmatpush2.bf16.msra.mxu0 %v1861
  %2239 = vmatprep.subr.bf16.mxu0 0
  %2240 = vmatpush2.bf16.msra.mxu0 %v1860
  %2241 = vmatprep.subr.bf16.mxu0 0
  %2242 = vmatpush2.bf16.msra.mxu0 %v1859
  %2243 = vmatprep.mubr.bf16.mxu0 %v1100
  %2244 = vmatmul.mubr.bf16.gmra.mxu0 %v1099
  %v2245 = vpop.f32.mrf.mxu0
  %v2246 = vadd.f32 %v2014, %v2245
  %v2247 = vpop.f32.mrf.mxu0
  %v2248 = vpop.f32.mrf.mxu0
  %v2249 = vadd.f32 %v2017, %v2248
  %v2250 = vpop.f32.mrf.mxu0
  %2251 = vmatprep.mubr.bf16.mxu0 %v1109
  %2252 = vmatmul.mubr.bf16.gmra.mxu0 %v1108
  %v2253 = vpop.f32.mrf.mxu0
  %v2254 = vadd.f32 %v2022, %v2253
  %v2255 = vpop.f32.mrf.mxu0
  %v2256 = vpop.f32.mrf.mxu0
  %v2257 = vadd.f32 %v2025, %v2256
  %v2258 = vpop.f32.mrf.mxu0
  %2259 = vmatprep.mubr.bf16.mxu0 %v1118
  %2260 = vmatmul.mubr.bf16.gmra.mxu0 %v1117
  %v2261 = vpop.f32.mrf.mxu0
  %v2262 = vadd.f32 %v2030, %v2261
  %v2263 = vpop.f32.mrf.mxu0
  %v2264 = vpop.f32.mrf.mxu0
  %v2265 = vadd.f32 %v2033, %v2264
  %v2266 = vpop.f32.mrf.mxu0
  %2267 = vmatprep.mubr.bf16.mxu0 %v1127
  %2268 = vmatmul.mubr.bf16.gmra.mxu0 %v1126
  %v2269 = vpop.f32.mrf.mxu0
  %v2270 = vadd.f32 %v2038, %v2269
  %v2271 = vpop.f32.mrf.mxu0
  %v2272 = vpop.f32.mrf.mxu0
  %v2273 = vadd.f32 %v2041, %v2272
  %v2274 = vpop.f32.mrf.mxu0
  %2275 = vmatprep.mubr.bf16.mxu0 %v1136
  %2276 = vmatmul.mubr.bf16.gmra.mxu0 %v1135
  %v2277 = vpop.f32.mrf.mxu0
  %v2278 = vadd.f32 %v2046, %v2277
  %v2279 = vpop.f32.mrf.mxu0
  %v2280 = vpop.f32.mrf.mxu0
  %v2281 = vadd.f32 %v2049, %v2280
  %v2282 = vpop.f32.mrf.mxu0
  %2283 = vmatprep.mubr.bf16.mxu0 %v1145
  %2284 = vmatmul.mubr.bf16.gmra.mxu0 %v1144
  %v2285 = vpop.f32.mrf.mxu0
  %v2286 = vadd.f32 %v2054, %v2285
  %v2287 = vpop.f32.mrf.mxu0
  %v2288 = vpop.f32.mrf.mxu0
  %v2289 = vadd.f32 %v2057, %v2288
  %v2290 = vpop.f32.mrf.mxu0
  %2291 = vmatprep.mubr.bf16.mxu0 %v1154
  %2292 = vmatmul.mubr.bf16.gmra.mxu0 %v1153
  %v2293 = vpop.f32.mrf.mxu0
  %v2294 = vadd.f32 %v2062, %v2293
  %v2295 = vpop.f32.mrf.mxu0
  %v2296 = vpop.f32.mrf.mxu0
  %v2297 = vadd.f32 %v2065, %v2296
  %v2298 = vpop.f32.mrf.mxu0
  %2299 = vmatprep.mubr.bf16.mxu0 %v1163
  %2300 = vmatmul.mubr.bf16.gmra.mxu0 %v1162
  %v2301 = vpop.f32.mrf.mxu0
  %v2302 = vadd.f32 %v2070, %v2301
  %v2303 = vpop.f32.mrf.mxu0
  %v2304 = vpop.f32.mrf.mxu0
  %v2305 = vadd.f32 %v2073, %v2304
  %v2306 = vpop.f32.mrf.mxu0
  %2307 = vmatprep.mubr.bf16.mxu0 %v1172
  %2308 = vmatmul.mubr.bf16.gmra.mxu0 %v1171
  %v2309 = vpop.f32.mrf.mxu0
  %v2310 = vadd.f32 %v2078, %v2309
  %v2311 = vpop.f32.mrf.mxu0
  %v2312 = vpop.f32.mrf.mxu0
  %v2313 = vadd.f32 %v2081, %v2312
  %v2314 = vpop.f32.mrf.mxu0
  %2315 = vmatprep.mubr.bf16.mxu0 %v1181
  %2316 = vmatmul.mubr.bf16.gmra.mxu0 %v1180
  %v2317 = vpop.f32.mrf.mxu0
  %v2318 = vadd.f32 %v2086, %v2317
  %v2319 = vpop.f32.mrf.mxu0
  %v2320 = vpop.f32.mrf.mxu0
  %v2321 = vadd.f32 %v2089, %v2320
  %v2322 = vpop.f32.mrf.mxu0
  %2323 = vmatprep.mubr.bf16.mxu0 %v1190
  %2324 = vmatmul.mubr.bf16.gmra.mxu0 %v1189
  %v2325 = vpop.f32.mrf.mxu0
  %v2326 = vadd.f32 %v2094, %v2325
  %v2327 = vpop.f32.mrf.mxu0
  %v2328 = vpop.f32.mrf.mxu0
  %v2329 = vadd.f32 %v2097, %v2328
  %v2330 = vpop.f32.mrf.mxu0
  %2331 = vmatprep.mubr.bf16.mxu0 %v1199
  %2332 = vmatmul.mubr.bf16.gmra.mxu0 %v1198
  %v2333 = vpop.f32.mrf.mxu0
  %v2334 = vadd.f32 %v2102, %v2333
  %v2335 = vpop.f32.mrf.mxu0
  %v2336 = vpop.f32.mrf.mxu0
  %v2337 = vadd.f32 %v2105, %v2336
  %v2338 = vpop.f32.mrf.mxu0
  %2339 = vmatprep.mubr.bf16.mxu0 %v1208
  %2340 = vmatmul.mubr.bf16.gmra.mxu0 %v1207
  %v2341 = vpop.f32.mrf.mxu0
  %v2342 = vadd.f32 %v2110, %v2341
  %v2343 = vpop.f32.mrf.mxu0
  %v2344 = vpop.f32.mrf.mxu0
  %v2345 = vadd.f32 %v2113, %v2344
  %v2346 = vpop.f32.mrf.mxu0
  %2347 = vmatprep.mubr.bf16.mxu0 %v1217
  %2348 = vmatmul.mubr.bf16.gmra.mxu0 %v1216
  %v2349 = vpop.f32.mrf.mxu0
  %v2350 = vadd.f32 %v2118, %v2349
  %v2351 = vpop.f32.mrf.mxu0
  %v2352 = vpop.f32.mrf.mxu0
  %v2353 = vadd.f32 %v2121, %v2352
  %v2354 = vpop.f32.mrf.mxu0
  %2355 = vmatprep.mubr.bf16.mxu0 %v1226
  %2356 = vmatmul.mubr.bf16.gmra.mxu0 %v1225
  %v2357 = vpop.f32.mrf.mxu0
  %v2358 = vadd.f32 %v2126, %v2357
  %v2359 = vpop.f32.mrf.mxu0
  %v2360 = vpop.f32.mrf.mxu0
  %v2361 = vadd.f32 %v2129, %v2360
  %v2362 = vpop.f32.mrf.mxu0
  %2363 = vmatprep.mubr.bf16.mxu0 %v1235
  %2364 = vmatmul.mubr.bf16.gmra.mxu0 %v1234
  %v2365 = vpop.f32.mrf.mxu0
  %v2366 = vadd.f32 %v2134, %v2365
  %v2367 = vpop.f32.mrf.mxu0
  %v2368 = vpop.f32.mrf.mxu0
  %v2369 = vadd.f32 %v2137, %v2368
  %v2370 = vpop.f32.mrf.mxu0
  %2371 = vmatprep.mubr.bf16.mxu0 %v1244
  %2372 = vmatmul.mubr.bf16.gmra.mxu0 %v1243
  %v2373 = vpop.f32.mrf.mxu0
  %v2374 = vadd.f32 %v2142, %v2373
  %v2375 = vpop.f32.mrf.mxu0
  %v2376 = vpop.f32.mrf.mxu0
  %v2377 = vadd.f32 %v2145, %v2376
  %v2378 = vpop.f32.mrf.mxu0
  %2379 = vmatprep.mubr.bf16.mxu0 %v1253
  %2380 = vmatmul.mubr.bf16.gmra.mxu0 %v1252
  %v2381 = vpop.f32.mrf.mxu0
  %v2382 = vadd.f32 %v2150, %v2381
  %v2383 = vpop.f32.mrf.mxu0
  %v2384 = vpop.f32.mrf.mxu0
  %v2385 = vadd.f32 %v2153, %v2384
  %v2386 = vpop.f32.mrf.mxu0
  %2387 = vmatprep.mubr.bf16.mxu0 %v1262
  %2388 = vmatmul.mubr.bf16.gmra.mxu0 %v1261
  %v2389 = vpop.f32.mrf.mxu0
  %v2390 = vadd.f32 %v2158, %v2389
  %v2391 = vpop.f32.mrf.mxu0
  %v2392 = vpop.f32.mrf.mxu0
  %v2393 = vadd.f32 %v2161, %v2392
  %v2394 = vpop.f32.mrf.mxu0
  %2395 = vmatprep.mubr.bf16.mxu0 %v1271
  %2396 = vmatmul.mubr.bf16.gmra.mxu0 %v1270
  %v2397 = vpop.f32.mrf.mxu0
  %v2398 = vadd.f32 %v2166, %v2397
  %v2399 = vpop.f32.mrf.mxu0
  %v2400 = vpop.f32.mrf.mxu0
  %v2401 = vadd.f32 %v2169, %v2400
  %v2402 = vpop.f32.mrf.mxu0
  %2403 = vmatprep.mubr.bf16.mxu0 %v1280
  %2404 = vmatmul.mubr.bf16.gmra.mxu0 %v1279
  %v2405 = vpop.f32.mrf.mxu0
  %v2406 = vadd.f32 %v2174, %v2405
  %v2407 = vpop.f32.mrf.mxu0
  %v2408 = vpop.f32.mrf.mxu0
  %v2409 = vadd.f32 %v2177, %v2408
  %v2410 = vpop.f32.mrf.mxu0
  %2411 = vmatprep.mubr.bf16.mxu0 %v1289
  %2412 = vmatmul.mubr.bf16.gmra.mxu0 %v1288
  %v2413 = vpop.f32.mrf.mxu0
  %v2414 = vadd.f32 %v2182, %v2413
  %v2415 = vpop.f32.mrf.mxu0
  %v2416 = vpop.f32.mrf.mxu0
  %v2417 = vadd.f32 %v2185, %v2416
  %v2418 = vpop.f32.mrf.mxu0
  %2419 = vmatprep.mubr.bf16.mxu0 %v1298
  %2420 = vmatmul.mubr.bf16.gmra.mxu0 %v1297
  %v2421 = vpop.f32.mrf.mxu0
  %v2422 = vadd.f32 %v2190, %v2421
  %v2423 = vpop.f32.mrf.mxu0
  %v2424 = vpop.f32.mrf.mxu0
  %v2425 = vadd.f32 %v2193, %v2424
  %v2426 = vpop.f32.mrf.mxu0
  %2427 = vmatprep.mubr.bf16.mxu0 %v1307
  %2428 = vmatmul.mubr.bf16.gmra.mxu0 %v1306
  %v2429 = vpop.f32.mrf.mxu0
  %v2430 = vadd.f32 %v2198, %v2429
  %v2431 = vpop.f32.mrf.mxu0
  %v2432 = vpop.f32.mrf.mxu0
  %v2433 = vadd.f32 %v2201, %v2432
  %v2434 = vpop.f32.mrf.mxu0
  %2435 = vmatprep.mubr.bf16.mxu0 %v1316
  %2436 = vmatmul.mubr.bf16.gmra.mxu0 %v1315
  %v2437 = vpop.f32.mrf.mxu0
  %v2438 = vadd.f32 %v2206, %v2437
  %v2439 = vpop.f32.mrf.mxu0
  %v2440 = vpop.f32.mrf.mxu0
  %v2441 = vpop.f32.mrf.mxu0
  %2442 = vdwg.mxu0
  %2443 = vmatprep.subr.bf16.mxu0 0
  %2444 = vmatpush1.bf16.msra.mxu0 %v1874
  %2445 = vmatprep.subr.bf16.mxu0 0
  %2446 = vmatpush1.bf16.msra.mxu0 %v1873
  %2447 = vmatprep.subr.bf16.mxu0 0
  %2448 = vmatpush1.bf16.msra.mxu0 %v1872
  %2449 = vmatprep.subr.bf16.mxu0 0
  %2450 = vmatpush1.bf16.msra.mxu0 %v1871
  %2451 = vmatprep.subr.bf16.mxu0 0
  %2452 = vmatpush1.bf16.msra.mxu0 %v1870
  %2453 = vmatprep.subr.bf16.mxu0 0
  %2454 = vmatpush1.bf16.msra.mxu0 %v1869
  %2455 = vmatprep.subr.bf16.mxu0 0
  %2456 = vmatpush1.bf16.msra.mxu0 %v1868
  %2457 = vmatprep.subr.bf16.mxu0 0
  %2458 = vmatpush1.bf16.msra.mxu0 %v1867
  %2459 = vmatprep.subr.bf16.mxu0 0
  %2460 = vmatpush2.bf16.msra.mxu0 %v1882
  %2461 = vmatprep.subr.bf16.mxu0 0
  %2462 = vmatpush2.bf16.msra.mxu0 %v1881
  %2463 = vmatprep.subr.bf16.mxu0 0
  %2464 = vmatpush2.bf16.msra.mxu0 %v1880
  %2465 = vmatprep.subr.bf16.mxu0 0
  %2466 = vmatpush2.bf16.msra.mxu0 %v1879
  %2467 = vmatprep.subr.bf16.mxu0 0
  %2468 = vmatpush2.bf16.msra.mxu0 %v1878
  %2469 = vmatprep.subr.bf16.mxu0 0
  %2470 = vmatpush2.bf16.msra.mxu0 %v1877
  %2471 = vmatprep.subr.bf16.mxu0 0
  %2472 = vmatpush2.bf16.msra.mxu0 %v1876
  %2473 = vmatprep.subr.bf16.mxu0 0
  %2474 = vmatpush2.bf16.msra.mxu0 %v1875
  %2475 = vmatprep.mubr.bf16.mxu0 %v1102
  %2476 = vmatmul.mubr.bf16.gmra.mxu0 %v1101
  %v2477 = vpop.f32.mrf.mxu0
  %v2478 = vadd.f32 %v2246, %v2477
  %v2479 = vpop.f32.mrf.mxu0
  %v2480 = vpop.f32.mrf.mxu0
  %v2481 = vadd.f32 %v2249, %v2480
  %v2482 = vpop.f32.mrf.mxu0
  %2483 = vmatprep.mubr.bf16.mxu0 %v1111
  %2484 = vmatmul.mubr.bf16.gmra.mxu0 %v1110
  %v2485 = vpop.f32.mrf.mxu0
  %v2486 = vadd.f32 %v2254, %v2485
  %v2487 = vpop.f32.mrf.mxu0
  %v2488 = vpop.f32.mrf.mxu0
  %v2489 = vadd.f32 %v2257, %v2488
  %v2490 = vpop.f32.mrf.mxu0
  %2491 = vmatprep.mubr.bf16.mxu0 %v1120
  %2492 = vmatmul.mubr.bf16.gmra.mxu0 %v1119
  %v2493 = vpop.f32.mrf.mxu0
  %v2494 = vadd.f32 %v2262, %v2493
  %v2495 = vpop.f32.mrf.mxu0
  %v2496 = vpop.f32.mrf.mxu0
  %v2497 = vadd.f32 %v2265, %v2496
  %v2498 = vpop.f32.mrf.mxu0
  %2499 = vmatprep.mubr.bf16.mxu0 %v1129
  %2500 = vmatmul.mubr.bf16.gmra.mxu0 %v1128
  %v2501 = vpop.f32.mrf.mxu0
  %v2502 = vadd.f32 %v2270, %v2501
  %v2503 = vpop.f32.mrf.mxu0
  %v2504 = vpop.f32.mrf.mxu0
  %v2505 = vadd.f32 %v2273, %v2504
  %v2506 = vpop.f32.mrf.mxu0
  %2507 = vmatprep.mubr.bf16.mxu0 %v1138
  %2508 = vmatmul.mubr.bf16.gmra.mxu0 %v1137
  %v2509 = vpop.f32.mrf.mxu0
  %v2510 = vadd.f32 %v2278, %v2509
  %v2511 = vpop.f32.mrf.mxu0
  %v2512 = vpop.f32.mrf.mxu0
  %v2513 = vadd.f32 %v2281, %v2512
  %v2514 = vpop.f32.mrf.mxu0
  %2515 = vmatprep.mubr.bf16.mxu0 %v1147
  %2516 = vmatmul.mubr.bf16.gmra.mxu0 %v1146
  %v2517 = vpop.f32.mrf.mxu0
  %v2518 = vadd.f32 %v2286, %v2517
  %v2519 = vpop.f32.mrf.mxu0
  %v2520 = vpop.f32.mrf.mxu0
  %v2521 = vadd.f32 %v2289, %v2520
  %v2522 = vpop.f32.mrf.mxu0
  %2523 = vmatprep.mubr.bf16.mxu0 %v1156
  %2524 = vmatmul.mubr.bf16.gmra.mxu0 %v1155
  %v2525 = vpop.f32.mrf.mxu0
  %v2526 = vadd.f32 %v2294, %v2525
  %v2527 = vpop.f32.mrf.mxu0
  %v2528 = vpop.f32.mrf.mxu0
  %v2529 = vadd.f32 %v2297, %v2528
  %v2530 = vpop.f32.mrf.mxu0
  %2531 = vmatprep.mubr.bf16.mxu0 %v1165
  %2532 = vmatmul.mubr.bf16.gmra.mxu0 %v1164
  %v2533 = vpop.f32.mrf.mxu0
  %v2534 = vadd.f32 %v2302, %v2533
  %v2535 = vpop.f32.mrf.mxu0
  %v2536 = vpop.f32.mrf.mxu0
  %v2537 = vadd.f32 %v2305, %v2536
  %v2538 = vpop.f32.mrf.mxu0
  %2539 = vmatprep.mubr.bf16.mxu0 %v1174
  %2540 = vmatmul.mubr.bf16.gmra.mxu0 %v1173
  %v2541 = vpop.f32.mrf.mxu0
  %v2542 = vadd.f32 %v2310, %v2541
  %v2543 = vpop.f32.mrf.mxu0
  %v2544 = vpop.f32.mrf.mxu0
  %v2545 = vadd.f32 %v2313, %v2544
  %v2546 = vpop.f32.mrf.mxu0
  %2547 = vmatprep.mubr.bf16.mxu0 %v1183
  %2548 = vmatmul.mubr.bf16.gmra.mxu0 %v1182
  %v2549 = vpop.f32.mrf.mxu0
  %v2550 = vadd.f32 %v2318, %v2549
  %v2551 = vpop.f32.mrf.mxu0
  %v2552 = vpop.f32.mrf.mxu0
  %v2553 = vadd.f32 %v2321, %v2552
  %v2554 = vpop.f32.mrf.mxu0
  %2555 = vmatprep.mubr.bf16.mxu0 %v1192
  %2556 = vmatmul.mubr.bf16.gmra.mxu0 %v1191
  %v2557 = vpop.f32.mrf.mxu0
  %v2558 = vadd.f32 %v2326, %v2557
  %v2559 = vpop.f32.mrf.mxu0
  %v2560 = vpop.f32.mrf.mxu0
  %v2561 = vadd.f32 %v2329, %v2560
  %v2562 = vpop.f32.mrf.mxu0
  %2563 = vmatprep.mubr.bf16.mxu0 %v1201
  %2564 = vmatmul.mubr.bf16.gmra.mxu0 %v1200
  %v2565 = vpop.f32.mrf.mxu0
  %v2566 = vadd.f32 %v2334, %v2565
  %v2567 = vpop.f32.mrf.mxu0
  %v2568 = vpop.f32.mrf.mxu0
  %v2569 = vadd.f32 %v2337, %v2568
  %v2570 = vpop.f32.mrf.mxu0
  %2571 = vmatprep.mubr.bf16.mxu0 %v1210
  %2572 = vmatmul.mubr.bf16.gmra.mxu0 %v1209
  %v2573 = vpop.f32.mrf.mxu0
  %v2574 = vadd.f32 %v2342, %v2573
  %v2575 = vpop.f32.mrf.mxu0
  %v2576 = vpop.f32.mrf.mxu0
  %v2577 = vadd.f32 %v2345, %v2576
  %v2578 = vpop.f32.mrf.mxu0
  %2579 = vmatprep.mubr.bf16.mxu0 %v1219
  %2580 = vmatmul.mubr.bf16.gmra.mxu0 %v1218
  %v2581 = vpop.f32.mrf.mxu0
  %v2582 = vadd.f32 %v2350, %v2581
  %v2583 = vpop.f32.mrf.mxu0
  %v2584 = vpop.f32.mrf.mxu0
  %v2585 = vadd.f32 %v2353, %v2584
  %v2586 = vpop.f32.mrf.mxu0
  %2587 = vmatprep.mubr.bf16.mxu0 %v1228
  %2588 = vmatmul.mubr.bf16.gmra.mxu0 %v1227
  %v2589 = vpop.f32.mrf.mxu0
  %v2590 = vadd.f32 %v2358, %v2589
  %v2591 = vpop.f32.mrf.mxu0
  %v2592 = vpop.f32.mrf.mxu0
  %v2593 = vadd.f32 %v2361, %v2592
  %v2594 = vpop.f32.mrf.mxu0
  %2595 = vmatprep.mubr.bf16.mxu0 %v1237
  %2596 = vmatmul.mubr.bf16.gmra.mxu0 %v1236
  %v2597 = vpop.f32.mrf.mxu0
  %v2598 = vadd.f32 %v2366, %v2597
  %v2599 = vpop.f32.mrf.mxu0
  %v2600 = vpop.f32.mrf.mxu0
  %v2601 = vadd.f32 %v2369, %v2600
  %v2602 = vpop.f32.mrf.mxu0
  %2603 = vmatprep.mubr.bf16.mxu0 %v1246
  %2604 = vmatmul.mubr.bf16.gmra.mxu0 %v1245
  %v2605 = vpop.f32.mrf.mxu0
  %v2606 = vadd.f32 %v2374, %v2605
  %v2607 = vpop.f32.mrf.mxu0
  %v2608 = vpop.f32.mrf.mxu0
  %v2609 = vadd.f32 %v2377, %v2608
  %v2610 = vpop.f32.mrf.mxu0
  %2611 = vmatprep.mubr.bf16.mxu0 %v1255
  %2612 = vmatmul.mubr.bf16.gmra.mxu0 %v1254
  %v2613 = vpop.f32.mrf.mxu0
  %v2614 = vadd.f32 %v2382, %v2613
  %v2615 = vpop.f32.mrf.mxu0
  %v2616 = vpop.f32.mrf.mxu0
  %v2617 = vadd.f32 %v2385, %v2616
  %v2618 = vpop.f32.mrf.mxu0
  %2619 = vmatprep.mubr.bf16.mxu0 %v1264
  %2620 = vmatmul.mubr.bf16.gmra.mxu0 %v1263
  %v2621 = vpop.f32.mrf.mxu0
  %v2622 = vadd.f32 %v2390, %v2621
  %v2623 = vpop.f32.mrf.mxu0
  %v2624 = vpop.f32.mrf.mxu0
  %v2625 = vadd.f32 %v2393, %v2624
  %v2626 = vpop.f32.mrf.mxu0
  %2627 = vmatprep.mubr.bf16.mxu0 %v1273
  %2628 = vmatmul.mubr.bf16.gmra.mxu0 %v1272
  %v2629 = vpop.f32.mrf.mxu0
  %v2630 = vadd.f32 %v2398, %v2629
  %v2631 = vpop.f32.mrf.mxu0
  %v2632 = vpop.f32.mrf.mxu0
  %v2633 = vadd.f32 %v2401, %v2632
  %v2634 = vpop.f32.mrf.mxu0
  %2635 = vmatprep.mubr.bf16.mxu0 %v1282
  %2636 = vmatmul.mubr.bf16.gmra.mxu0 %v1281
  %v2637 = vpop.f32.mrf.mxu0
  %v2638 = vadd.f32 %v2406, %v2637
  %v2639 = vpop.f32.mrf.mxu0
  %v2640 = vpop.f32.mrf.mxu0
  %v2641 = vadd.f32 %v2409, %v2640
  %v2642 = vpop.f32.mrf.mxu0
  %2643 = vmatprep.mubr.bf16.mxu0 %v1291
  %2644 = vmatmul.mubr.bf16.gmra.mxu0 %v1290
  %v2645 = vpop.f32.mrf.mxu0
  %v2646 = vadd.f32 %v2414, %v2645
  %v2647 = vpop.f32.mrf.mxu0
  %v2648 = vpop.f32.mrf.mxu0
  %v2649 = vadd.f32 %v2417, %v2648
  %v2650 = vpop.f32.mrf.mxu0
  %2651 = vmatprep.mubr.bf16.mxu0 %v1300
  %2652 = vmatmul.mubr.bf16.gmra.mxu0 %v1299
  %v2653 = vpop.f32.mrf.mxu0
  %v2654 = vadd.f32 %v2422, %v2653
  %v2655 = vpop.f32.mrf.mxu0
  %v2656 = vpop.f32.mrf.mxu0
  %v2657 = vadd.f32 %v2425, %v2656
  %v2658 = vpop.f32.mrf.mxu0
  %2659 = vmatprep.mubr.bf16.mxu0 %v1309
  %2660 = vmatmul.mubr.bf16.gmra.mxu0 %v1308
  %v2661 = vpop.f32.mrf.mxu0
  %v2662 = vadd.f32 %v2430, %v2661
  %v2663 = vpop.f32.mrf.mxu0
  %v2664 = vpop.f32.mrf.mxu0
  %v2665 = vadd.f32 %v2433, %v2664
  %v2666 = vpop.f32.mrf.mxu0
  %2667 = vmatprep.mubr.bf16.mxu0 %v1318
  %2668 = vmatmul.mubr.bf16.gmra.mxu0 %v1317
  %v2669 = vpop.f32.mrf.mxu0
  %v2670 = vadd.f32 %v2438, %v2669
  %v2671 = vpop.f32.mrf.mxu0
  %v2672 = vpop.f32.mrf.mxu0
  %v2673 = vpop.f32.mrf.mxu0
  %2674 = vdwg.mxu0
  %2675 = vmatprep.subr.bf16.mxu0 0
  %2676 = vmatpush1.bf16.msra.mxu0 %v1890
  %2677 = vmatprep.subr.bf16.mxu0 0
  %2678 = vmatpush1.bf16.msra.mxu0 %v1889
  %2679 = vmatprep.subr.bf16.mxu0 0
  %2680 = vmatpush1.bf16.msra.mxu0 %v1888
  %2681 = vmatprep.subr.bf16.mxu0 0
  %2682 = vmatpush1.bf16.msra.mxu0 %v1887
  %2683 = vmatprep.subr.bf16.mxu0 0
  %2684 = vmatpush1.bf16.msra.mxu0 %v1886
  %2685 = vmatprep.subr.bf16.mxu0 0
  %2686 = vmatpush1.bf16.msra.mxu0 %v1885
  %2687 = vmatprep.subr.bf16.mxu0 0
  %2688 = vmatpush1.bf16.msra.mxu0 %v1884
  %2689 = vmatprep.subr.bf16.mxu0 0
  %2690 = vmatpush1.bf16.msra.mxu0 %v1883
  %2691 = vmatprep.subr.bf16.mxu0 0
  %2692 = vmatpush2.bf16.msra.mxu0 %v1898
  %2693 = vmatprep.subr.bf16.mxu0 0
  %2694 = vmatpush2.bf16.msra.mxu0 %v1897
  %2695 = vmatprep.subr.bf16.mxu0 0
  %2696 = vmatpush2.bf16.msra.mxu0 %v1896
  %2697 = vmatprep.subr.bf16.mxu0 0
  %2698 = vmatpush2.bf16.msra.mxu0 %v1895
  %2699 = vmatprep.subr.bf16.mxu0 0
  %2700 = vmatpush2.bf16.msra.mxu0 %v1894
  %2701 = vmatprep.subr.bf16.mxu0 0
  %2702 = vmatpush2.bf16.msra.mxu0 %v1893
  %2703 = vmatprep.subr.bf16.mxu0 0
  %2704 = vmatpush2.bf16.msra.mxu0 %v1892
  %2705 = vmatprep.subr.bf16.mxu0 0
  %2706 = vmatpush2.bf16.msra.mxu0 %v1891
  %2707 = vmatprep.mubr.bf16.mxu0 %v1104
  %2708 = vmatmul.mubr.bf16.gmra.mxu0 %v1103
  %v2709 = vpop.f32.mrf.mxu0
  %v2710 = vadd.f32 %v2478, %v2709
  %v2711 = vpop.f32.mrf.mxu0
  %v2712 = vpop.f32.mrf.mxu0
  %v2713 = vadd.f32 %v2481, %v2712
  %v2714 = vpop.f32.mrf.mxu0
  %2715 = vmatprep.mubr.bf16.mxu0 %v1113
  %2716 = vmatmul.mubr.bf16.gmra.mxu0 %v1112
  %v2717 = vpop.f32.mrf.mxu0
  %v2718 = vadd.f32 %v2486, %v2717
  %v2719 = vpop.f32.mrf.mxu0
  %v2720 = vpop.f32.mrf.mxu0
  %v2721 = vadd.f32 %v2489, %v2720
  %v2722 = vpop.f32.mrf.mxu0
  %2723 = vmatprep.mubr.bf16.mxu0 %v1122
  %2724 = vmatmul.mubr.bf16.gmra.mxu0 %v1121
  %v2725 = vpop.f32.mrf.mxu0
  %v2726 = vadd.f32 %v2494, %v2725
  %v2727 = vpop.f32.mrf.mxu0
  %v2728 = vpop.f32.mrf.mxu0
  %v2729 = vadd.f32 %v2497, %v2728
  %v2730 = vpop.f32.mrf.mxu0
  %2731 = vmatprep.mubr.bf16.mxu0 %v1131
  %2732 = vmatmul.mubr.bf16.gmra.mxu0 %v1130
  %v2733 = vpop.f32.mrf.mxu0
  %v2734 = vadd.f32 %v2502, %v2733
  %v2735 = vpop.f32.mrf.mxu0
  %v2736 = vpop.f32.mrf.mxu0
  %v2737 = vadd.f32 %v2505, %v2736
  %v2738 = vpop.f32.mrf.mxu0
  %2739 = vmatprep.mubr.bf16.mxu0 %v1140
  %2740 = vmatmul.mubr.bf16.gmra.mxu0 %v1139
  %v2741 = vpop.f32.mrf.mxu0
  %v2742 = vadd.f32 %v2510, %v2741
  %v2743 = vpop.f32.mrf.mxu0
  %v2744 = vpop.f32.mrf.mxu0
  %v2745 = vadd.f32 %v2513, %v2744
  %v2746 = vpop.f32.mrf.mxu0
  %2747 = vmatprep.mubr.bf16.mxu0 %v1149
  %2748 = vmatmul.mubr.bf16.gmra.mxu0 %v1148
  %v2749 = vpop.f32.mrf.mxu0
  %v2750 = vadd.f32 %v2518, %v2749
  %v2751 = vpop.f32.mrf.mxu0
  %v2752 = vpop.f32.mrf.mxu0
  %v2753 = vadd.f32 %v2521, %v2752
  %v2754 = vpop.f32.mrf.mxu0
  %2755 = vmatprep.mubr.bf16.mxu0 %v1158
  %2756 = vmatmul.mubr.bf16.gmra.mxu0 %v1157
  %v2757 = vpop.f32.mrf.mxu0
  %v2758 = vadd.f32 %v2526, %v2757
  %v2759 = vpop.f32.mrf.mxu0
  %v2760 = vpop.f32.mrf.mxu0
  %v2761 = vadd.f32 %v2529, %v2760
  %v2762 = vpop.f32.mrf.mxu0
  %2763 = vmatprep.mubr.bf16.mxu0 %v1167
  %2764 = vmatmul.mubr.bf16.gmra.mxu0 %v1166
  %v2765 = vpop.f32.mrf.mxu0
  %v2766 = vadd.f32 %v2534, %v2765
  %v2767 = vpop.f32.mrf.mxu0
  %v2768 = vpop.f32.mrf.mxu0
  %v2769 = vadd.f32 %v2537, %v2768
  %v2770 = vpop.f32.mrf.mxu0
  %2771 = vmatprep.mubr.bf16.mxu0 %v1176
  %2772 = vmatmul.mubr.bf16.gmra.mxu0 %v1175
  %v2773 = vpop.f32.mrf.mxu0
  %v2774 = vadd.f32 %v2542, %v2773
  %v2775 = vpop.f32.mrf.mxu0
  %v2776 = vpop.f32.mrf.mxu0
  %v2777 = vadd.f32 %v2545, %v2776
  %v2778 = vpop.f32.mrf.mxu0
  %2779 = vmatprep.mubr.bf16.mxu0 %v1185
  %2780 = vmatmul.mubr.bf16.gmra.mxu0 %v1184
  %v2781 = vpop.f32.mrf.mxu0
  %v2782 = vadd.f32 %v2550, %v2781
  %v2783 = vpop.f32.mrf.mxu0
  %v2784 = vpop.f32.mrf.mxu0
  %v2785 = vadd.f32 %v2553, %v2784
  %v2786 = vpop.f32.mrf.mxu0
  %2787 = vmatprep.mubr.bf16.mxu0 %v1194
  %2788 = vmatmul.mubr.bf16.gmra.mxu0 %v1193
  %v2789 = vpop.f32.mrf.mxu0
  %v2790 = vadd.f32 %v2558, %v2789
  %v2791 = vpop.f32.mrf.mxu0
  %v2792 = vpop.f32.mrf.mxu0
  %v2793 = vadd.f32 %v2561, %v2792
  %v2794 = vpop.f32.mrf.mxu0
  %2795 = vmatprep.mubr.bf16.mxu0 %v1203
  %2796 = vmatmul.mubr.bf16.gmra.mxu0 %v1202
  %v2797 = vpop.f32.mrf.mxu0
  %v2798 = vadd.f32 %v2566, %v2797
  %v2799 = vpop.f32.mrf.mxu0
  %v2800 = vpop.f32.mrf.mxu0
  %v2801 = vadd.f32 %v2569, %v2800
  %v2802 = vpop.f32.mrf.mxu0
  %2803 = vmatprep.mubr.bf16.mxu0 %v1212
  %2804 = vmatmul.mubr.bf16.gmra.mxu0 %v1211
  %v2805 = vpop.f32.mrf.mxu0
  %v2806 = vadd.f32 %v2574, %v2805
  %v2807 = vpop.f32.mrf.mxu0
  %v2808 = vpop.f32.mrf.mxu0
  %v2809 = vadd.f32 %v2577, %v2808
  %v2810 = vpop.f32.mrf.mxu0
  %2811 = vmatprep.mubr.bf16.mxu0 %v1221
  %2812 = vmatmul.mubr.bf16.gmra.mxu0 %v1220
  %v2813 = vpop.f32.mrf.mxu0
  %v2814 = vadd.f32 %v2582, %v2813
  %v2815 = vpop.f32.mrf.mxu0
  %v2816 = vpop.f32.mrf.mxu0
  %v2817 = vadd.f32 %v2585, %v2816
  %v2818 = vpop.f32.mrf.mxu0
  %2819 = vmatprep.mubr.bf16.mxu0 %v1230
  %2820 = vmatmul.mubr.bf16.gmra.mxu0 %v1229
  %v2821 = vpop.f32.mrf.mxu0
  %v2822 = vadd.f32 %v2590, %v2821
  %v2823 = vpop.f32.mrf.mxu0
  %v2824 = vpop.f32.mrf.mxu0
  %v2825 = vadd.f32 %v2593, %v2824
  %v2826 = vpop.f32.mrf.mxu0
  %2827 = vmatprep.mubr.bf16.mxu0 %v1239
  %2828 = vmatmul.mubr.bf16.gmra.mxu0 %v1238
  %v2829 = vpop.f32.mrf.mxu0
  %v2830 = vadd.f32 %v2598, %v2829
  %v2831 = vpop.f32.mrf.mxu0
  %v2832 = vpop.f32.mrf.mxu0
  %v2833 = vadd.f32 %v2601, %v2832
  %v2834 = vpop.f32.mrf.mxu0
  %2835 = vmatprep.mubr.bf16.mxu0 %v1248
  %2836 = vmatmul.mubr.bf16.gmra.mxu0 %v1247
  %v2837 = vpop.f32.mrf.mxu0
  %v2838 = vadd.f32 %v2606, %v2837
  %v2839 = vpop.f32.mrf.mxu0
  %v2840 = vpop.f32.mrf.mxu0
  %v2841 = vadd.f32 %v2609, %v2840
  %v2842 = vpop.f32.mrf.mxu0
  %2843 = vmatprep.mubr.bf16.mxu0 %v1257
  %2844 = vmatmul.mubr.bf16.gmra.mxu0 %v1256
  %v2845 = vpop.f32.mrf.mxu0
  %v2846 = vadd.f32 %v2614, %v2845
  %v2847 = vpop.f32.mrf.mxu0
  %v2848 = vpop.f32.mrf.mxu0
  %v2849 = vadd.f32 %v2617, %v2848
  %v2850 = vpop.f32.mrf.mxu0
  %2851 = vmatprep.mubr.bf16.mxu0 %v1266
  %2852 = vmatmul.mubr.bf16.gmra.mxu0 %v1265
  %v2853 = vpop.f32.mrf.mxu0
  %v2854 = vadd.f32 %v2622, %v2853
  %v2855 = vpop.f32.mrf.mxu0
  %v2856 = vpop.f32.mrf.mxu0
  %v2857 = vadd.f32 %v2625, %v2856
  %v2858 = vpop.f32.mrf.mxu0
  %2859 = vmatprep.mubr.bf16.mxu0 %v1275
  %2860 = vmatmul.mubr.bf16.gmra.mxu0 %v1274
  %v2861 = vpop.f32.mrf.mxu0
  %v2862 = vadd.f32 %v2630, %v2861
  %v2863 = vpop.f32.mrf.mxu0
  %v2864 = vpop.f32.mrf.mxu0
  %v2865 = vadd.f32 %v2633, %v2864
  %v2866 = vpop.f32.mrf.mxu0
  %2867 = vmatprep.mubr.bf16.mxu0 %v1284
  %2868 = vmatmul.mubr.bf16.gmra.mxu0 %v1283
  %v2869 = vpop.f32.mrf.mxu0
  %v2870 = vadd.f32 %v2638, %v2869
  %v2871 = vpop.f32.mrf.mxu0
  %v2872 = vpop.f32.mrf.mxu0
  %v2873 = vadd.f32 %v2641, %v2872
  %v2874 = vpop.f32.mrf.mxu0
  %2875 = vmatprep.mubr.bf16.mxu0 %v1293
  %2876 = vmatmul.mubr.bf16.gmra.mxu0 %v1292
  %v2877 = vpop.f32.mrf.mxu0
  %v2878 = vadd.f32 %v2646, %v2877
  %v2879 = vpop.f32.mrf.mxu0
  %v2880 = vpop.f32.mrf.mxu0
  %v2881 = vadd.f32 %v2649, %v2880
  %v2882 = vpop.f32.mrf.mxu0
  %2883 = vmatprep.mubr.bf16.mxu0 %v1302
  %2884 = vmatmul.mubr.bf16.gmra.mxu0 %v1301
  %v2885 = vpop.f32.mrf.mxu0
  %v2886 = vadd.f32 %v2654, %v2885
  %v2887 = vpop.f32.mrf.mxu0
  %v2888 = vpop.f32.mrf.mxu0
  %v2889 = vadd.f32 %v2657, %v2888
  %v2890 = vpop.f32.mrf.mxu0
  %2891 = vmatprep.mubr.bf16.mxu0 %v1311
  %2892 = vmatmul.mubr.bf16.gmra.mxu0 %v1310
  %v2893 = vpop.f32.mrf.mxu0
  %v2894 = vadd.f32 %v2662, %v2893
  %v2895 = vpop.f32.mrf.mxu0
  %v2896 = vpop.f32.mrf.mxu0
  %v2897 = vadd.f32 %v2665, %v2896
  %v2898 = vpop.f32.mrf.mxu0
  %2899 = vmatprep.mubr.bf16.mxu0 %v1320
  %2900 = vmatmul.mubr.bf16.gmra.mxu0 %v1319
  %v2901 = vpop.f32.mrf.mxu0
  %v2902 = vadd.f32 %v2670, %v2901
  %v2903 = vpop.f32.mrf.mxu0
  %v2904 = vpop.f32.mrf.mxu0
  %v2905 = vpop.f32.mrf.mxu0
  %2906 = vdwg.mxu0
  %2907 = vmatprep.subr.bf16.mxu0 0
  %2908 = vmatpush1.bf16.msra.mxu0 %v1906
  %2909 = vmatprep.subr.bf16.mxu0 0
  %2910 = vmatpush1.bf16.msra.mxu0 %v1905
  %2911 = vmatprep.subr.bf16.mxu0 0
  %2912 = vmatpush1.bf16.msra.mxu0 %v1904
  %2913 = vmatprep.subr.bf16.mxu0 0
  %2914 = vmatpush1.bf16.msra.mxu0 %v1903
  %2915 = vmatprep.subr.bf16.mxu0 0
  %2916 = vmatpush1.bf16.msra.mxu0 %v1902
  %2917 = vmatprep.subr.bf16.mxu0 0
  %2918 = vmatpush1.bf16.msra.mxu0 %v1901
  %2919 = vmatprep.subr.bf16.mxu0 0
  %2920 = vmatpush1.bf16.msra.mxu0 %v1900
  %2921 = vmatprep.subr.bf16.mxu0 0
  %2922 = vmatpush1.bf16.msra.mxu0 %v1899
  %2923 = vmatprep.subr.bf16.mxu0 0
  %2924 = vmatpush2.bf16.msra.mxu0 0
  %2925 = vmatprep.subr.bf16.mxu0 0
  %2926 = vmatpush2.bf16.msra.mxu0 0
  %2927 = vmatprep.subr.bf16.mxu0 0
  %2928 = vmatpush2.bf16.msra.mxu0 0
  %2929 = vmatprep.subr.bf16.mxu0 0
  %2930 = vmatpush2.bf16.msra.mxu0 0
  %2931 = vmatprep.subr.bf16.mxu0 0
  %2932 = vmatpush2.bf16.msra.mxu0 0
  %2933 = vmatprep.subr.bf16.mxu0 0
  %2934 = vmatpush2.bf16.msra.mxu0 0
  %2935 = vmatprep.subr.bf16.mxu0 0
  %2936 = vmatpush2.bf16.msra.mxu0 0
  %2937 = vmatprep.subr.bf16.mxu0 0
  %2938 = vmatpush2.bf16.msra.mxu0 0
  %2939 = vmatprep.mubr.bf16.mxu0 0
  %2940 = vmatmul.mubr.bf16.gmra.mxu0 %v1105
  %v2941 = vpop.f32.mrf.mxu0
  %v2942 = vadd.f32 %v2710, %v2941
  %v2943 = vpop.f32.mrf.mxu0
  %v2944 = vpop.f32.mrf.mxu0
  %v2945 = vadd.f32 %v2713, %v2944
  %v2946 = vpop.f32.mrf.mxu0
  %2947 = vmatprep.mubr.bf16.mxu0 0
  %2948 = vmatmul.mubr.bf16.gmra.mxu0 %v1114
  %v2949 = vpop.f32.mrf.mxu0
  %v2950 = vadd.f32 %v2718, %v2949
  %v2951 = vpop.f32.mrf.mxu0
  %v2952 = vpop.f32.mrf.mxu0
  %v2953 = vadd.f32 %v2721, %v2952
  %v2954 = vpop.f32.mrf.mxu0
  %2955 = vmatprep.mubr.bf16.mxu0 0
  %2956 = vmatmul.mubr.bf16.gmra.mxu0 %v1123
  %v2957 = vpop.f32.mrf.mxu0
  %v2958 = vadd.f32 %v2726, %v2957
  %v2959 = vpop.f32.mrf.mxu0
  %v2960 = vpop.f32.mrf.mxu0
  %v2961 = vadd.f32 %v2729, %v2960
  %v2962 = vpop.f32.mrf.mxu0
  %2963 = vmatprep.mubr.bf16.mxu0 0
  %2964 = vmatmul.mubr.bf16.gmra.mxu0 %v1132
  %v2965 = vpop.f32.mrf.mxu0
  %v2966 = vadd.f32 %v2734, %v2965
  %v2967 = vpop.f32.mrf.mxu0
  %v2968 = vpop.f32.mrf.mxu0
  %v2969 = vadd.f32 %v2737, %v2968
  %v2970 = vpop.f32.mrf.mxu0
  %2971 = vmatprep.mubr.bf16.mxu0 0
  %2972 = vmatmul.mubr.bf16.gmra.mxu0 %v1141
  %v2973 = vpop.f32.mrf.mxu0
  %v2974 = vadd.f32 %v2742, %v2973
  %v2975 = vpop.f32.mrf.mxu0
  %v2976 = vpop.f32.mrf.mxu0
  %v2977 = vadd.f32 %v2745, %v2976
  %v2978 = vpop.f32.mrf.mxu0
  %2979 = vmatprep.mubr.bf16.mxu0 0
  %2980 = vmatmul.mubr.bf16.gmra.mxu0 %v1150
  %v2981 = vpop.f32.mrf.mxu0
  %v2982 = vadd.f32 %v2750, %v2981
  %v2983 = vpop.f32.mrf.mxu0
  %v2984 = vpop.f32.mrf.mxu0
  %v2985 = vadd.f32 %v2753, %v2984
  %v2986 = vpop.f32.mrf.mxu0
  %2987 = vmatprep.mubr.bf16.mxu0 0
  %2988 = vmatmul.mubr.bf16.gmra.mxu0 %v1159
  %v2989 = vpop.f32.mrf.mxu0
  %v2990 = vadd.f32 %v2758, %v2989
  %v2991 = vpop.f32.mrf.mxu0
  %v2992 = vpop.f32.mrf.mxu0
  %v2993 = vadd.f32 %v2761, %v2992
  %v2994 = vpop.f32.mrf.mxu0
  %2995 = vmatprep.mubr.bf16.mxu0 0
  %2996 = vmatmul.mubr.bf16.gmra.mxu0 %v1168
  %v2997 = vpop.f32.mrf.mxu0
  %v2998 = vadd.f32 %v2766, %v2997
  %v2999 = vpop.f32.mrf.mxu0
  %v3000 = vpop.f32.mrf.mxu0
  %v3001 = vadd.f32 %v2769, %v3000
  %v3002 = vpop.f32.mrf.mxu0
  %3003 = vmatprep.mubr.bf16.mxu0 0
  %3004 = vmatmul.mubr.bf16.gmra.mxu0 %v1177
  %v3005 = vpop.f32.mrf.mxu0
  %v3006 = vadd.f32 %v2774, %v3005
  %v3007 = vpop.f32.mrf.mxu0
  %v3008 = vpop.f32.mrf.mxu0
  %v3009 = vadd.f32 %v2777, %v3008
  %v3010 = vpop.f32.mrf.mxu0
  %3011 = vmatprep.mubr.bf16.mxu0 0
  %3012 = vmatmul.mubr.bf16.gmra.mxu0 %v1186
  %v3013 = vpop.f32.mrf.mxu0
  %v3014 = vadd.f32 %v2782, %v3013
  %v3015 = vpop.f32.mrf.mxu0
  %v3016 = vpop.f32.mrf.mxu0
  %v3017 = vadd.f32 %v2785, %v3016
  %v3018 = vpop.f32.mrf.mxu0
  %3019 = vmatprep.mubr.bf16.mxu0 0
  %3020 = vmatmul.mubr.bf16.gmra.mxu0 %v1195
  %v3021 = vpop.f32.mrf.mxu0
  %v3022 = vadd.f32 %v2790, %v3021
  %v3023 = vpop.f32.mrf.mxu0
  %v3024 = vpop.f32.mrf.mxu0
  %v3025 = vadd.f32 %v2793, %v3024
  %v3026 = vpop.f32.mrf.mxu0
  %3027 = vmatprep.mubr.bf16.mxu0 0
  %3028 = vmatmul.mubr.bf16.gmra.mxu0 %v1204
  %v3029 = vpop.f32.mrf.mxu0
  %v3030 = vadd.f32 %v2798, %v3029
  %v3031 = vpop.f32.mrf.mxu0
  %v3032 = vpop.f32.mrf.mxu0
  %v3033 = vadd.f32 %v2801, %v3032
  %v3034 = vpop.f32.mrf.mxu0
  %3035 = vmatprep.mubr.bf16.mxu0 0
  %3036 = vmatmul.mubr.bf16.gmra.mxu0 %v1213
  %v3037 = vpop.f32.mrf.mxu0
  %v3038 = vadd.f32 %v2806, %v3037
  %v3039 = vpop.f32.mrf.mxu0
  %v3040 = vpop.f32.mrf.mxu0
  %v3041 = vadd.f32 %v2809, %v3040
  %v3042 = vpop.f32.mrf.mxu0
  %3043 = vmatprep.mubr.bf16.mxu0 0
  %3044 = vmatmul.mubr.bf16.gmra.mxu0 %v1222
  %v3045 = vpop.f32.mrf.mxu0
  %v3046 = vadd.f32 %v2814, %v3045
  %v3047 = vpop.f32.mrf.mxu0
  %v3048 = vpop.f32.mrf.mxu0
  %v3049 = vadd.f32 %v2817, %v3048
  %v3050 = vpop.f32.mrf.mxu0
  %3051 = vmatprep.mubr.bf16.mxu0 0
  %3052 = vmatmul.mubr.bf16.gmra.mxu0 %v1231
  %v3053 = vpop.f32.mrf.mxu0
  %v3054 = vadd.f32 %v2822, %v3053
  %v3055 = vpop.f32.mrf.mxu0
  %v3056 = vpop.f32.mrf.mxu0
  %v3057 = vadd.f32 %v2825, %v3056
  %v3058 = vpop.f32.mrf.mxu0
  %3059 = vmatprep.mubr.bf16.mxu0 0
  %3060 = vmatmul.mubr.bf16.gmra.mxu0 %v1240
  %v3061 = vpop.f32.mrf.mxu0
  %v3062 = vadd.f32 %v2830, %v3061
  %v3063 = vpop.f32.mrf.mxu0
  %v3064 = vpop.f32.mrf.mxu0
  %v3065 = vadd.f32 %v2833, %v3064
  %v3066 = vpop.f32.mrf.mxu0
  %3067 = vmatprep.mubr.bf16.mxu0 0
  %3068 = vmatmul.mubr.bf16.gmra.mxu0 %v1249
  %v3069 = vpop.f32.mrf.mxu0
  %v3070 = vadd.f32 %v2838, %v3069
  %v3071 = vpop.f32.mrf.mxu0
  %v3072 = vpop.f32.mrf.mxu0
  %v3073 = vadd.f32 %v2841, %v3072
  %v3074 = vpop.f32.mrf.mxu0
  %3075 = vmatprep.mubr.bf16.mxu0 0
  %3076 = vmatmul.mubr.bf16.gmra.mxu0 %v1258
  %v3077 = vpop.f32.mrf.mxu0
  %v3078 = vadd.f32 %v2846, %v3077
  %v3079 = vpop.f32.mrf.mxu0
  %v3080 = vpop.f32.mrf.mxu0
  %v3081 = vadd.f32 %v2849, %v3080
  %v3082 = vpop.f32.mrf.mxu0
  %3083 = vmatprep.mubr.bf16.mxu0 0
  %3084 = vmatmul.mubr.bf16.gmra.mxu0 %v1267
  %v3085 = vpop.f32.mrf.mxu0
  %v3086 = vadd.f32 %v2854, %v3085
  %v3087 = vpop.f32.mrf.mxu0
  %v3088 = vpop.f32.mrf.mxu0
  %v3089 = vadd.f32 %v2857, %v3088
  %v3090 = vpop.f32.mrf.mxu0
  %3091 = vmatprep.mubr.bf16.mxu0 0
  %3092 = vmatmul.mubr.bf16.gmra.mxu0 %v1276
  %v3093 = vpop.f32.mrf.mxu0
  %v3094 = vadd.f32 %v2862, %v3093
  %v3095 = vpop.f32.mrf.mxu0
  %v3096 = vpop.f32.mrf.mxu0
  %v3097 = vadd.f32 %v2865, %v3096
  %v3098 = vpop.f32.mrf.mxu0
  %3099 = vmatprep.mubr.bf16.mxu0 0
  %3100 = vmatmul.mubr.bf16.gmra.mxu0 %v1285
  %v3101 = vpop.f32.mrf.mxu0
  %v3102 = vadd.f32 %v2870, %v3101
  %v3103 = vpop.f32.mrf.mxu0
  %v3104 = vpop.f32.mrf.mxu0
  %v3105 = vadd.f32 %v2873, %v3104
  %v3106 = vpop.f32.mrf.mxu0
  %3107 = vmatprep.mubr.bf16.mxu0 0
  %3108 = vmatmul.mubr.bf16.gmra.mxu0 %v1294
  %v3109 = vpop.f32.mrf.mxu0
  %v3110 = vadd.f32 %v2878, %v3109
  %v3111 = vpop.f32.mrf.mxu0
  %v3112 = vpop.f32.mrf.mxu0
  %v3113 = vadd.f32 %v2881, %v3112
  %v3114 = vpop.f32.mrf.mxu0
  %3115 = vmatprep.mubr.bf16.mxu0 0
  %3116 = vmatmul.mubr.bf16.gmra.mxu0 %v1303
  %v3117 = vpop.f32.mrf.mxu0
  %v3118 = vadd.f32 %v2886, %v3117
  %v3119 = vpop.f32.mrf.mxu0
  %v3120 = vpop.f32.mrf.mxu0
  %v3121 = vadd.f32 %v2889, %v3120
  %v3122 = vpop.f32.mrf.mxu0
  %3123 = vmatprep.mubr.bf16.mxu0 0
  %3124 = vmatmul.mubr.bf16.gmra.mxu0 %v1312
  %v3125 = vpop.f32.mrf.mxu0
  %v3126 = vadd.f32 %v2894, %v3125
  %v3127 = vpop.f32.mrf.mxu0
  %v3128 = vpop.f32.mrf.mxu0
  %v3129 = vadd.f32 %v2897, %v3128
  %v3130 = vpop.f32.mrf.mxu0
  %3131 = vmatprep.mubr.bf16.mxu0 0
  %3132 = vmatmul.mubr.bf16.gmra.mxu0 %v1321
  %v3133 = vpop.f32.mrf.mxu0
  %v3134 = vadd.f32 %v2902, %v3133
  %v3135 = vpop.f32.mrf.mxu0
  %v3136 = vpop.f32.mrf.mxu0
  %v3137 = vpop.f32.mrf.mxu0
  %3138 = vdwg.mxu0
  %v3139 = vmax.f32 %v2942, 0.0
  %v3140 = vmax.f32 %v2945, 0.0
  %v3141 = vmax.f32 %v2950, 0.0
  %v3142 = vmax.f32 %v2953, 0.0
  %v3143 = vmax.f32 %v2958, 0.0
  %v3144 = vmax.f32 %v2961, 0.0
  %v3145 = vmax.f32 %v2966, 0.0
  %v3146 = vmax.f32 %v2969, 0.0
  %v3147 = vmax.f32 %v2974, 0.0
  %v3148 = vmax.f32 %v2977, 0.0
  %v3149 = vmax.f32 %v2982, 0.0
  %v3150 = vmax.f32 %v2985, 0.0
  %v3151 = vmax.f32 %v2990, 0.0
  %v3152 = vmax.f32 %v2993, 0.0
  %v3153 = vmax.f32 %v2998, 0.0
  %v3154 = vmax.f32 %v3001, 0.0
  %v3155 = vmax.f32 %v3006, 0.0
  %v3156 = vmax.f32 %v3009, 0.0
  %v3157 = vmax.f32 %v3014, 0.0
  %v3158 = vmax.f32 %v3017, 0.0
  %v3159 = vmax.f32 %v3022, 0.0
  %v3160 = vmax.f32 %v3025, 0.0
  %v3161 = vmax.f32 %v3030, 0.0
  %v3162 = vmax.f32 %v3033, 0.0
  %v3163 = vmax.f32 %v3038, 0.0
  %v3164 = vmax.f32 %v3041, 0.0
  %v3165 = vmax.f32 %v3046, 0.0
  %v3166 = vmax.f32 %v3049, 0.0
  %v3167 = vmax.f32 %v3054, 0.0
  %v3168 = vmax.f32 %v3057, 0.0
  %v3169 = vmax.f32 %v3062, 0.0
  %v3170 = vmax.f32 %v3065, 0.0
  %v3171 = vmax.f32 %v3070, 0.0
  %v3172 = vmax.f32 %v3073, 0.0
  %v3173 = vmax.f32 %v3078, 0.0
  %v3174 = vmax.f32 %v3081, 0.0
  %v3175 = vmax.f32 %v3086, 0.0
  %v3176 = vmax.f32 %v3089, 0.0
  %v3177 = vmax.f32 %v3094, 0.0
  %v3178 = vmax.f32 %v3097, 0.0
  %v3179 = vmax.f32 %v3102, 0.0
  %v3180 = vmax.f32 %v3105, 0.0
  %v3181 = vmax.f32 %v3110, 0.0
  %v3182 = vmax.f32 %v3113, 0.0
  %v3183 = vmax.f32 %v3118, 0.0
  %v3184 = vmax.f32 %v3121, 0.0
  %v3185 = vmax.f32 %v3126, 0.0
  %v3186 = vmax.f32 %v3129, 0.0
  %v3187 = vmax.f32 %v3134, 0.0
  %v3188 = vpack.c.bf16 %v3140, %v3139
  %v3189 = vpack.c.bf16 %v3142, %v3141
  %v3190 = vpack.c.bf16 %v3144, %v3143
  %v3191 = vpack.c.bf16 %v3146, %v3145
  %v3192 = vpack.c.bf16 %v3148, %v3147
  %v3193 = vpack.c.bf16 %v3150, %v3149
  %v3194 = vpack.c.bf16 %v3152, %v3151
  %v3195 = vpack.c.bf16 %v3154, %v3153
  %v3196 = vpack.c.bf16 %v3156, %v3155
  %v3197 = vpack.c.bf16 %v3158, %v3157
  %v3198 = vpack.c.bf16 %v3160, %v3159
  %v3199 = vpack.c.bf16 %v3162, %v3161
  %v3200 = vpack.c.bf16 %v3164, %v3163
  %v3201 = vpack.c.bf16 %v3166, %v3165
  %v3202 = vpack.c.bf16 %v3168, %v3167
  %v3203 = vpack.c.bf16 %v3170, %v3169
  %v3204 = vpack.c.bf16 %v3172, %v3171
  %v3205 = vpack.c.bf16 %v3174, %v3173
  %v3206 = vpack.c.bf16 %v3176, %v3175
  %v3207 = vpack.c.bf16 %v3178, %v3177
  %v3208 = vpack.c.bf16 %v3180, %v3179
  %v3209 = vpack.c.bf16 %v3182, %v3181
  %v3210 = vpack.c.bf16 %v3184, %v3183
  %v3211 = vpack.c.bf16 %v3186, %v3185
  %v3212 = vpack.c.bf16 %v3187, %v3187
  %v3238 = vunpack.c.l.b16 %v3188
  %v3239 = vunpack.c.h.b16 %v3188
  %v3240 = vunpack.c.l.b16 %v3189
  %v3241 = vunpack.c.h.b16 %v3189
  %v3242 = vunpack.c.l.b16 %v3190
  %v3243 = vunpack.c.h.b16 %v3190
  %v3244 = vunpack.c.l.b16 %v3191
  %v3245 = vunpack.c.h.b16 %v3191
  %v3246 = vunpack.c.l.b16 %v3192
  %v3247 = vunpack.c.h.b16 %v3192
  %v3248 = vunpack.c.l.b16 %v3193
  %v3249 = vunpack.c.h.b16 %v3193
  %v3250 = vunpack.c.l.b16 %v3194
  %v3251 = vunpack.c.h.b16 %v3194
  %v3252 = vunpack.c.l.b16 %v3195
  %v3253 = vunpack.c.h.b16 %v3195
  %v3254 = vunpack.c.l.b16 %v3196
  %v3255 = vunpack.c.h.b16 %v3196
  %v3256 = vunpack.c.l.b16 %v3197
  %v3257 = vunpack.c.h.b16 %v3197
  %v3258 = vunpack.c.l.b16 %v3198
  %v3259 = vunpack.c.h.b16 %v3198
  %v3260 = vunpack.c.l.b16 %v3199
  %v3261 = vunpack.c.h.b16 %v3199
  %v3262 = vunpack.c.l.b16 %v3200
  %v3263 = vunpack.c.h.b16 %v3200
  %v3264 = vunpack.c.l.b16 %v3201
  %v3265 = vunpack.c.h.b16 %v3201
  %v3266 = vunpack.c.l.b16 %v3202
  %v3267 = vunpack.c.h.b16 %v3202
  %v3268 = vunpack.c.l.b16 %v3203
  %v3269 = vunpack.c.h.b16 %v3203
  %v3270 = vunpack.c.l.b16 %v3204
  %v3271 = vunpack.c.h.b16 %v3204
  %v3272 = vunpack.c.l.b16 %v3205
  %v3273 = vunpack.c.h.b16 %v3205
  %v3274 = vunpack.c.l.b16 %v3206
  %v3275 = vunpack.c.h.b16 %v3206
  %v3276 = vunpack.c.l.b16 %v3207
  %v3277 = vunpack.c.h.b16 %v3207
  %v3278 = vunpack.c.l.b16 %v3208
  %v3279 = vunpack.c.h.b16 %v3208
  %v3280 = vunpack.c.l.b16 %v3209
  %v3281 = vunpack.c.h.b16 %v3209
  %v3282 = vunpack.c.l.b16 %v3210
  %v3283 = vunpack.c.h.b16 %v3210
  %v3284 = vunpack.c.l.b16 %v3211
  %v3285 = vunpack.c.h.b16 %v3211
  %v3286 = vunpack.c.l.b16 %v3212
  %v3287 = vpack.c.b16 %v3238, %v3238
  %v3288 = vpack.c.b16 %v3239, %v3239
  %v3289 = vpack.c.b16 %v3240, %v3240
  %v3290 = vpack.c.b16 %v3241, %v3241
  %v3291 = vpack.c.b16 %v3242, %v3242
  %v3292 = vpack.c.b16 %v3243, %v3243
  %v3293 = vpack.c.b16 %v3244, %v3244
  %v3294 = vpack.c.b16 %v3245, %v3245
  %v3295 = vpack.c.b16 %v3246, %v3246
  %v3296 = vpack.c.b16 %v3247, %v3247
  %v3297 = vpack.c.b16 %v3248, %v3248
  %v3298 = vpack.c.b16 %v3249, %v3249
  %v3299 = vpack.c.b16 %v3250, %v3250
  %v3300 = vpack.c.b16 %v3251, %v3251
  %v3301 = vpack.c.b16 %v3252, %v3252
  %v3302 = vpack.c.b16 %v3253, %v3253
  %v3303 = vpack.c.b16 %v3254, %v3254
  %v3304 = vpack.c.b16 %v3255, %v3255
  %v3305 = vpack.c.b16 %v3256, %v3256
  %v3306 = vpack.c.b16 %v3257, %v3257
  %v3307 = vpack.c.b16 %v3258, %v3258
  %v3308 = vpack.c.b16 %v3259, %v3259
  %v3309 = vpack.c.b16 %v3260, %v3260
  %v3310 = vpack.c.b16 %v3261, %v3261
  %v3311 = vpack.c.b16 %v3262, %v3262
  %v3312 = vpack.c.b16 %v3263, %v3263
  %v3313 = vpack.c.b16 %v3264, %v3264
  %v3314 = vpack.c.b16 %v3265, %v3265
  %v3315 = vpack.c.b16 %v3266, %v3266
  %v3316 = vpack.c.b16 %v3267, %v3267
  %v3317 = vpack.c.b16 %v3268, %v3268
  %v3318 = vpack.c.b16 %v3269, %v3269
  %v3319 = vpack.c.b16 %v3270, %v3270
  %v3320 = vpack.c.b16 %v3271, %v3271
  %v3321 = vpack.c.b16 %v3272, %v3272
  %v3322 = vpack.c.b16 %v3273, %v3273
  %v3323 = vpack.c.b16 %v3274, %v3274
  %v3324 = vpack.c.b16 %v3275, %v3275
  %v3325 = vpack.c.b16 %v3276, %v3276
  %v3326 = vpack.c.b16 %v3277, %v3277
  %v3327 = vpack.c.b16 %v3278, %v3278
  %v3328 = vpack.c.b16 %v3279, %v3279
  %v3329 = vpack.c.b16 %v3280, %v3280
  %v3330 = vpack.c.b16 %v3281, %v3281
  %v3331 = vpack.c.b16 %v3282, %v3282
  %v3332 = vpack.c.b16 %v3283, %v3283
  %v3333 = vpack.c.b16 %v3284, %v3284
  %v3334 = vpack.c.b16 %v3285, %v3285
  %v3335 = vpack.c.b16 %v3286, %v3286
  %3385 = vst [vmem:[%s3] sm:$0xf] %v3287
  %3386 = vst [vmem:[%s3 + $0x4] sm:$0xf] %v3288
  %3387 = vst [vmem:[%s3 + $0x8] sm:$0xf] %v3289
  %3388 = vst [vmem:[%s3 + $0xc] sm:$0xf] %v3290
  %3389 = vst [vmem:[%s3 + $0x10] sm:$0xf] %v3291
  %3390 = vst [vmem:[%s3 + $0x14] sm:$0xf] %v3292
  %3391 = vst [vmem:[%s3 + $0x18] sm:$0xf] %v3293
  %3392 = vst [vmem:[%s3 + $0x1c] sm:$0xf] %v3294
  %3393 = vst [vmem:[%s3 + $0x20] sm:$0xf] %v3295
  %3394 = vst [vmem:[%s3 + $0x24] sm:$0xf] %v3296
  %3395 = vst [vmem:[%s3 + $0x28] sm:$0xf] %v3297
  %3396 = vst [vmem:[%s3 + $0x2c] sm:$0xf] %v3298
  %3397 = vst [vmem:[%s3 + $0x30] sm:$0xf] %v3299
  %3398 = vst [vmem:[%s3 + $0x34] sm:$0xf] %v3300
  %3399 = vst [vmem:[%s3 + $0x38] sm:$0xf] %v3301
  %3400 = vst [vmem:[%s3 + $0x3c] sm:$0xf] %v3302
  %3401 = vst [vmem:[%s3 + $0x40] sm:$0xf] %v3303
  %3402 = vst [vmem:[%s3 + $0x44] sm:$0xf] %v3304
  %3403 = vst [vmem:[%s3 + $0x48] sm:$0xf] %v3305
  %3404 = vst [vmem:[%s3 + $0x4c] sm:$0xf] %v3306
  %3405 = vst [vmem:[%s3 + $0x50] sm:$0xf] %v3307
  %3406 = vst [vmem:[%s3 + $0x54] sm:$0xf] %v3308
  %3407 = vst [vmem:[%s3 + $0x58] sm:$0xf] %v3309
  %3408 = vst [vmem:[%s3 + $0x5c] sm:$0xf] %v3310
  %3409 = vst [vmem:[%s3 + $0x60] sm:$0xf] %v3311
  %3410 = vst [vmem:[%s3 + $0x64] sm:$0xf] %v3312
  %3411 = vst [vmem:[%s3 + $0x68] sm:$0xf] %v3313
  %3412 = vst [vmem:[%s3 + $0x6c] sm:$0xf] %v3314
  %3413 = vst [vmem:[%s3 + $0x70] sm:$0xf] %v3315
  %3414 = vst [vmem:[%s3 + $0x74] sm:$0xf] %v3316
  %3415 = vst [vmem:[%s3 + $0x78] sm:$0xf] %v3317
  %3416 = vst [vmem:[%s3 + $0x7c] sm:$0xf] %v3318
  %3417 = vst [vmem:[%s3 + $0x80] sm:$0xf] %v3319
  %3418 = vst [vmem:[%s3 + $0x84] sm:$0xf] %v3320
  %3419 = vst [vmem:[%s3 + $0x88] sm:$0xf] %v3321
  %3420 = vst [vmem:[%s3 + $0x8c] sm:$0xf] %v3322
  %3421 = vst [vmem:[%s3 + $0x90] sm:$0xf] %v3323
  %3422 = vst [vmem:[%s3 + $0x94] sm:$0xf] %v3324
  %3423 = vst [vmem:[%s3 + $0x98] sm:$0xf] %v3325
  %3424 = vst [vmem:[%s3 + $0x9c] sm:$0xf] %v3326
  %3425 = vst [vmem:[%s3 + $0xa0] sm:$0xf] %v3327
  %3426 = vst [vmem:[%s3 + $0xa4] sm:$0xf] %v3328
  %3427 = vst [vmem:[%s3 + $0xa8] sm:$0xf] %v3329
  %3428 = vst [vmem:[%s3 + $0xac] sm:$0xf] %v3330
  %3429 = vst [vmem:[%s3 + $0xb0] sm:$0xf] %v3331
  %3430 = vst [vmem:[%s3 + $0xb4] sm:$0xf] %v3332
  %3431 = vst [vmem:[%s3 + $0xb8] sm:$0xf] %v3333
  %3432 = vst [vmem:[%s3 + $0xbc] sm:$0xf] %v3334
  %3433 = vst [vmem:[%s3 + $0xc0] sm:$0xf] %v3335
  // Predicated region
  $region14: #{a_convnet_forward.12} parent=0 // pred_check
    _
  $region15: #{a_convnet_forward.12} parent=0 // pred_check_branch
    %3435 = sbr.rel (0) target = $region17
  $region16: #{a_convnet_forward.12} parent=0 // pred_region
    _
  $region17: #{a_convnet_forward.12} parent=0 // pred_fallthru
    _
  // Predicated region
  $region18: #{a_convnet_forward.12} parent=0 // pred_check
    _
  $region19: #{a_convnet_forward.12} parent=0 // pred_check_branch
    %3437 = sbr.rel (0) target = $region21
  $region20: #{a_convnet_forward.12} parent=0 // pred_region
    _
  $region21: #{a_convnet_forward.12} parent=0 // pred_fallthru
    _

// kernel: a_convnet_forward.14
$region0: #{a_convnet_forward.14}
  #allocation0 [shape = 'u32[]', space=smem, size = 0x4, offset = 0x4, fixed_abs, tag = 'smem constant byte address 0x4 - core index']
  #allocation1 [shape = 'u32[144,128]{1,0:T(1,128)}', space=vmem, size = 0x12000, scoped, tag = 'internal scratch']
  %s0 = inlined_call_operand.vmem [shape: bf16[24,1664], index: 0, kind: input, shape index: {}]
  %s1 = inlined_call_operand.vmem [shape: bf16[1664,128], index: 1, kind: input, shape index: {}]
  %s2 = inlined_call_operand.vmem [shape: f32[1,128], index: 2, kind: input, shape index: {}]
  %s3 = inlined_call_operand.vmem [shape: bf16[24,128], index: 3, kind: output, shape index: {}]
  %s4 = sld [smem:[#allocation0]]
  $region22: #{a_convnet_forward.14} parent=0
    _
  %s6 = ssub.s32 1, %s4
  %s7 = scalar_select 0, %s6, %s4
  // Predicated region
  $region2: #{a_convnet_forward.14} parent=0 // pred_check
    _
  $region3: #{a_convnet_forward.14} parent=0 // pred_check_branch
    %9 = sbr.rel (0) target = $region5
  $region4: #{a_convnet_forward.14} parent=0 // pred_region
    _
  $region5: #{a_convnet_forward.14} parent=0 // pred_fallthru
    _
  // Predicated region
  $region6: #{a_convnet_forward.14} parent=0 // pred_check
    _
  $region7: #{a_convnet_forward.14} parent=0 // pred_check_branch
    %11 = sbr.rel (0) target = $region9
  $region8: #{a_convnet_forward.14} parent=0 // pred_region
    _
  $region9: #{a_convnet_forward.14} parent=0 // pred_fallthru
    _
  // Predicated region
  $region10: #{a_convnet_forward.14} parent=0 // pred_check
    _
  $region11: #{a_convnet_forward.14} parent=0 // pred_check_branch
    %13 = sbr.rel (0) target = $region13
  $region12: #{a_convnet_forward.14} parent=0 // pred_region
    _
  $region13: #{a_convnet_forward.14} parent=0 // pred_fallthru
    _
  %v15 = vld [vmem:[%s0] sm:$0xff]
  %v16 = vld [vmem:[%s0 + $0x8] sm:$0xff]
  %v17 = vld [vmem:[%s0 + $0x10] sm:$0xff]
  %v18 = vld [vmem:[%s0 + $0x18] sm:$0xff]
  %v19 = vld [vmem:[%s0 + $0x20] sm:$0xff]
  %v20 = vld [vmem:[%s0 + $0x28] sm:$0xff]
  %v21 = vld [vmem:[%s0 + $0x30] sm:$0xf]
  %v22 = vld [vmem:[%s0 + $0x34] sm:$0xff]
  %v23 = vld [vmem:[%s0 + $0x3c] sm:$0xff]
  %v24 = vld [vmem:[%s0 + $0x44] sm:$0xff]
  %v25 = vld [vmem:[%s0 + $0x4c] sm:$0xff]
  %v26 = vld [vmem:[%s0 + $0x54] sm:$0xff]
  %v27 = vld [vmem:[%s0 + $0x5c] sm:$0xff]
  %v28 = vld [vmem:[%s0 + $0x64] sm:$0xf]
  %v29 = vld [vmem:[%s0 + $0x68] sm:$0xff]
  %v30 = vld [vmem:[%s0 + $0x70] sm:$0xff]
  %v31 = vld [vmem:[%s0 + $0x78] sm:$0xff]
  %v32 = vld [vmem:[%s0 + $0x80] sm:$0xff]
  %v33 = vld [vmem:[%s0 + $0x88] sm:$0xff]
  %v34 = vld [vmem:[%s0 + $0x90] sm:$0xff]
  %v35 = vld [vmem:[%s0 + $0x98] sm:$0xf]
  %v36 = vld [vmem:[%s1] sm:$0xf]
  %v37 = vld [vmem:[%s1 + $0x4] sm:$0xf]
  %v38 = vld [vmem:[%s1 + $0x8] sm:$0xf]
  %v39 = vld [vmem:[%s1 + $0xc] sm:$0xf]
  %v40 = vld [vmem:[%s1 + $0x10] sm:$0xf]
  %v41 = vld [vmem:[%s1 + $0x14] sm:$0xf]
  %v42 = vld [vmem:[%s1 + $0x18] sm:$0xf]
  %v43 = vld [vmem:[%s1 + $0x1c] sm:$0xf]
  %v44 = vld [vmem:[%s1 + $0x20] sm:$0xf]
  %v45 = vld [vmem:[%s1 + $0x24] sm:$0xf]
  %v46 = vld [vmem:[%s1 + $0x28] sm:$0xf]
  %v47 = vld [vmem:[%s1 + $0x2c] sm:$0xf]
  %v48 = vld [vmem:[%s1 + $0x30] sm:$0xf]
  %v49 = vld [vmem:[%s1 + $0x34] sm:$0xf]
  %v50 = vld [vmem:[%s1 + $0x38] sm:$0xf]
  %v51 = vld [vmem:[%s1 + $0x3c] sm:$0xf]
  %v52 = vld [vmem:[%s1 + $0x40] sm:$0xf]
  %v53 = vld [vmem:[%s1 + $0x44] sm:$0xf]
  %v54 = vld [vmem:[%s1 + $0x48] sm:$0xf]
  %v55 = vld [vmem:[%s1 + $0x4c] sm:$0xf]
  %v56 = vld [vmem:[%s1 + $0x50] sm:$0xf]
  %v57 = vld [vmem:[%s1 + $0x54] sm:$0xf]
  %v58 = vld [vmem:[%s1 + $0x58] sm:$0xf]
  %v59 = vld [vmem:[%s1 + $0x5c] sm:$0xf]
  %v60 = vld [vmem:[%s1 + $0x60] sm:$0xf]
  %v61 = vld [vmem:[%s1 + $0x64] sm:$0xf]
  %v62 = vld [vmem:[%s1 + $0x68] sm:$0xf]
  %v63 = vld [vmem:[%s1 + $0x6c] sm:$0xf]
  %v64 = vld [vmem:[%s1 + $0x70] sm:$0xf]
  %v65 = vld [vmem:[%s1 + $0x74] sm:$0xf]
  %v66 = vld [vmem:[%s1 + $0x78] sm:$0xf]
  %v67 = vld [vmem:[%s1 + $0x7c] sm:$0xf]
  %v68 = vld [vmem:[%s1 + $0x80] sm:$0xf]
  %v69 = vld [vmem:[%s1 + $0x84] sm:$0xf]
  %v70 = vld [vmem:[%s1 + $0x88] sm:$0xf]
  %v71 = vld [vmem:[%s1 + $0x8c] sm:$0xf]
  %v72 = vld [vmem:[%s1 + $0x90] sm:$0xf]
  %v73 = vld [vmem:[%s1 + $0x94] sm:$0xf]
  %v74 = vld [vmem:[%s1 + $0x98] sm:$0xf]
  %v75 = vld [vmem:[%s1 + $0x9c] sm:$0xf]
  %v76 = vld [vmem:[%s1 + $0xa0] sm:$0xf]
  %v77 = vld [vmem:[%s1 + $0xa4] sm:$0xf]
  %v78 = vld [vmem:[%s1 + $0xa8] sm:$0xf]
  %v79 = vld [vmem:[%s1 + $0xac] sm:$0xf]
  %v80 = vld [vmem:[%s1 + $0xb0] sm:$0xf]
  %v81 = vld [vmem:[%s1 + $0xb4] sm:$0xf]
  %v82 = vld [vmem:[%s1 + $0xb8] sm:$0xf]
  %v83 = vld [vmem:[%s1 + $0xbc] sm:$0xf]
  %v84 = vld [vmem:[%s1 + $0xc0] sm:$0xf]
  %v85 = vld [vmem:[%s1 + $0xc4] sm:$0xf]
  %v86 = vld [vmem:[%s1 + $0xc8] sm:$0xf]
  %v87 = vld [vmem:[%s1 + $0xcc] sm:$0xf]
  %v88 = vld [vmem:[%s1 + $0xd0] sm:$0xf]
  %v89 = vld [vmem:[%s1 + $0xd4] sm:$0xf]
  %v90 = vld [vmem:[%s1 + $0xd8] sm:$0xf]
  %v91 = vld [vmem:[%s1 + $0xdc] sm:$0xf]
  %v92 = vld [vmem:[%s1 + $0xe0] sm:$0xf]
  %v93 = vld [vmem:[%s1 + $0xe4] sm:$0xf]
  %v94 = vld [vmem:[%s1 + $0xe8] sm:$0xf]
  %v95 = vld [vmem:[%s1 + $0xec] sm:$0xf]
  %v96 = vld [vmem:[%s1 + $0xf0] sm:$0xf]
  %v97 = vld [vmem:[%s1 + $0xf4] sm:$0xf]
  %v98 = vld [vmem:[%s1 + $0xf8] sm:$0xf]
  %v99 = vld [vmem:[%s1 + $0xfc] sm:$0xf]
  %v100 = vld [vmem:[%s1 + $0x100] sm:$0xf]
  %v101 = vld [vmem:[%s1 + $0x104] sm:$0xf]
  %v102 = vld [vmem:[%s1 + $0x108] sm:$0xf]
  %v103 = vld [vmem:[%s1 + $0x10c] sm:$0xf]
  %v104 = vld [vmem:[%s1 + $0x110] sm:$0xf]
  %v105 = vld [vmem:[%s1 + $0x114] sm:$0xf]
  %v106 = vld [vmem:[%s1 + $0x118] sm:$0xf]
  %v107 = vld [vmem:[%s1 + $0x11c] sm:$0xf]
  %v108 = vld [vmem:[%s1 + $0x120] sm:$0xf]
  %v109 = vld [vmem:[%s1 + $0x124] sm:$0xf]
  %v110 = vld [vmem:[%s1 + $0x128] sm:$0xf]
  %v111 = vld [vmem:[%s1 + $0x12c] sm:$0xf]
  %v112 = vld [vmem:[%s1 + $0x130] sm:$0xf]
  %v113 = vld [vmem:[%s1 + $0x134] sm:$0xf]
  %v114 = vld [vmem:[%s1 + $0x138] sm:$0xf]
  %v115 = vld [vmem:[%s1 + $0x13c] sm:$0xf]
  %v116 = vld [vmem:[%s1 + $0x140] sm:$0xf]
  %v117 = vld [vmem:[%s1 + $0x144] sm:$0xf]
  %v118 = vld [vmem:[%s1 + $0x148] sm:$0xf]
  %v119 = vld [vmem:[%s1 + $0x14c] sm:$0xf]
  %v120 = vld [vmem:[%s1 + $0x150] sm:$0xf]
  %v121 = vld [vmem:[%s1 + $0x154] sm:$0xf]
  %v122 = vld [vmem:[%s1 + $0x158] sm:$0xf]
  %v123 = vld [vmem:[%s1 + $0x15c] sm:$0xf]
  %v124 = vld [vmem:[%s1 + $0x160] sm:$0xf]
  %v125 = vld [vmem:[%s1 + $0x164] sm:$0xf]
  %v126 = vld [vmem:[%s1 + $0x168] sm:$0xf]
  %v127 = vld [vmem:[%s1 + $0x16c] sm:$0xf]
  %v128 = vld [vmem:[%s1 + $0x170] sm:$0xf]
  %v129 = vld [vmem:[%s1 + $0x174] sm:$0xf]
  %v130 = vld [vmem:[%s1 + $0x178] sm:$0xf]
  %v131 = vld [vmem:[%s1 + $0x17c] sm:$0xf]
  %v132 = vld [vmem:[%s1 + $0x180] sm:$0xf]
  %v133 = vld [vmem:[%s1 + $0x184] sm:$0xf]
  %v134 = vld [vmem:[%s1 + $0x188] sm:$0xf]
  %v135 = vld [vmem:[%s1 + $0x18c] sm:$0xf]
  %v136 = vld [vmem:[%s1 + $0x190] sm:$0xf]
  %v137 = vld [vmem:[%s1 + $0x194] sm:$0xf]
  %v138 = vld [vmem:[%s1 + $0x198] sm:$0xf]
  %v139 = vld [vmem:[%s1 + $0x19c] sm:$0xf]
  %v140 = vld [vmem:[%s1 + $0x1a0] sm:$0xf]
  %v141 = vld [vmem:[%s1 + $0x1a4] sm:$0xf]
  %v142 = vld [vmem:[%s1 + $0x1a8] sm:$0xf]
  %v143 = vld [vmem:[%s1 + $0x1ac] sm:$0xf]
  %v144 = vld [vmem:[%s1 + $0x1b0] sm:$0xf]
  %v145 = vld [vmem:[%s1 + $0x1b4] sm:$0xf]
  %v146 = vld [vmem:[%s1 + $0x1b8] sm:$0xf]
  %v147 = vld [vmem:[%s1 + $0x1bc] sm:$0xf]
  %v148 = vld [vmem:[%s1 + $0x1c0] sm:$0xf]
  %v149 = vld [vmem:[%s1 + $0x1c4] sm:$0xf]
  %v150 = vld [vmem:[%s1 + $0x1c8] sm:$0xf]
  %v151 = vld [vmem:[%s1 + $0x1cc] sm:$0xf]
  %v152 = vld [vmem:[%s1 + $0x1d0] sm:$0xf]
  %v153 = vld [vmem:[%s1 + $0x1d4] sm:$0xf]
  %v154 = vld [vmem:[%s1 + $0x1d8] sm:$0xf]
  %v155 = vld [vmem:[%s1 + $0x1dc] sm:$0xf]
  %v156 = vld [vmem:[%s1 + $0x1e0] sm:$0xf]
  %v157 = vld [vmem:[%s1 + $0x1e4] sm:$0xf]
  %v158 = vld [vmem:[%s1 + $0x1e8] sm:$0xf]
  %v159 = vld [vmem:[%s1 + $0x1ec] sm:$0xf]
  %v160 = vld [vmem:[%s1 + $0x1f0] sm:$0xf]
  %v161 = vld [vmem:[%s1 + $0x1f4] sm:$0xf]
  %v162 = vld [vmem:[%s1 + $0x1f8] sm:$0xf]
  %v163 = vld [vmem:[%s1 + $0x1fc] sm:$0xf]
  %v164 = vld [vmem:[%s1 + $0x200] sm:$0xf]
  %v165 = vld [vmem:[%s1 + $0x204] sm:$0xf]
  %v166 = vld [vmem:[%s1 + $0x208] sm:$0xf]
  %v167 = vld [vmem:[%s1 + $0x20c] sm:$0xf]
  %v168 = vld [vmem:[%s1 + $0x210] sm:$0xf]
  %v169 = vld [vmem:[%s1 + $0x214] sm:$0xf]
  %v170 = vld [vmem:[%s1 + $0x218] sm:$0xf]
  %v171 = vld [vmem:[%s1 + $0x21c] sm:$0xf]
  %v172 = vld [vmem:[%s1 + $0x220] sm:$0xf]
  %v173 = vld [vmem:[%s1 + $0x224] sm:$0xf]
  %v174 = vld [vmem:[%s1 + $0x228] sm:$0xf]
  %v175 = vld [vmem:[%s1 + $0x22c] sm:$0xf]
  %v176 = vld [vmem:[%s1 + $0x230] sm:$0xf]
  %v177 = vld [vmem:[%s1 + $0x234] sm:$0xf]
  %v178 = vld [vmem:[%s1 + $0x238] sm:$0xf]
  %v179 = vld [vmem:[%s1 + $0x23c] sm:$0xf]
  %v180 = vld [vmem:[%s1 + $0x240] sm:$0xf]
  %v181 = vld [vmem:[%s1 + $0x244] sm:$0xf]
  %v182 = vld [vmem:[%s1 + $0x248] sm:$0xf]
  %v183 = vld [vmem:[%s1 + $0x24c] sm:$0xf]
  %v184 = vld [vmem:[%s1 + $0x250] sm:$0xf]
  %v185 = vld [vmem:[%s1 + $0x254] sm:$0xf]
  %v186 = vld [vmem:[%s1 + $0x258] sm:$0xf]
  %v187 = vld [vmem:[%s1 + $0x25c] sm:$0xf]
  %v188 = vld [vmem:[%s1 + $0x260] sm:$0xf]
  %v189 = vld [vmem:[%s1 + $0x264] sm:$0xf]
  %v190 = vld [vmem:[%s1 + $0x268] sm:$0xf]
  %v191 = vld [vmem:[%s1 + $0x26c] sm:$0xf]
  %v192 = vld [vmem:[%s1 + $0x270] sm:$0xf]
  %v193 = vld [vmem:[%s1 + $0x274] sm:$0xf]
  %v194 = vld [vmem:[%s1 + $0x278] sm:$0xf]
  %v195 = vld [vmem:[%s1 + $0x27c] sm:$0xf]
  %v196 = vld [vmem:[%s1 + $0x280] sm:$0xf]
  %v197 = vld [vmem:[%s1 + $0x284] sm:$0xf]
  %v198 = vld [vmem:[%s1 + $0x288] sm:$0xf]
  %v199 = vld [vmem:[%s1 + $0x28c] sm:$0xf]
  %v200 = vld [vmem:[%s1 + $0x290] sm:$0xf]
  %v201 = vld [vmem:[%s1 + $0x294] sm:$0xf]
  %v202 = vld [vmem:[%s1 + $0x298] sm:$0xf]
  %v203 = vld [vmem:[%s1 + $0x29c] sm:$0xf]
  %v204 = vld [vmem:[%s1 + $0x2a0] sm:$0xf]
  %v205 = vld [vmem:[%s1 + $0x2a4] sm:$0xf]
  %v206 = vld [vmem:[%s1 + $0x2a8] sm:$0xf]
  %v207 = vld [vmem:[%s1 + $0x2ac] sm:$0xf]
  %v208 = vld [vmem:[%s1 + $0x2b0] sm:$0xf]
  %v209 = vld [vmem:[%s1 + $0x2b4] sm:$0xf]
  %v210 = vld [vmem:[%s1 + $0x2b8] sm:$0xf]
  %v211 = vld [vmem:[%s1 + $0x2bc] sm:$0xf]
  %v212 = vld [vmem:[%s1 + $0x2c0] sm:$0xf]
  %v213 = vld [vmem:[%s1 + $0x2c4] sm:$0xf]
  %v214 = vld [vmem:[%s1 + $0x2c8] sm:$0xf]
  %v215 = vld [vmem:[%s1 + $0x2cc] sm:$0xf]
  %v216 = vld [vmem:[%s1 + $0x2d0] sm:$0xf]
  %v217 = vld [vmem:[%s1 + $0x2d4] sm:$0xf]
  %v218 = vld [vmem:[%s1 + $0x2d8] sm:$0xf]
  %v219 = vld [vmem:[%s1 + $0x2dc] sm:$0xf]
  %v220 = vld [vmem:[%s1 + $0x2e0] sm:$0xf]
  %v221 = vld [vmem:[%s1 + $0x2e4] sm:$0xf]
  %v222 = vld [vmem:[%s1 + $0x2e8] sm:$0xf]
  %v223 = vld [vmem:[%s1 + $0x2ec] sm:$0xf]
  %v224 = vld [vmem:[%s1 + $0x2f0] sm:$0xf]
  %v225 = vld [vmem:[%s1 + $0x2f4] sm:$0xf]
  %v226 = vld [vmem:[%s1 + $0x2f8] sm:$0xf]
  %v227 = vld [vmem:[%s1 + $0x2fc] sm:$0xf]
  %v228 = vld [vmem:[%s1 + $0x300] sm:$0xf]
  %v229 = vld [vmem:[%s1 + $0x304] sm:$0xf]
  %v230 = vld [vmem:[%s1 + $0x308] sm:$0xf]
  %v231 = vld [vmem:[%s1 + $0x30c] sm:$0xf]
  %v232 = vld [vmem:[%s1 + $0x310] sm:$0xf]
  %v233 = vld [vmem:[%s1 + $0x314] sm:$0xf]
  %v234 = vld [vmem:[%s1 + $0x318] sm:$0xf]
  %v235 = vld [vmem:[%s1 + $0x31c] sm:$0xf]
  %v236 = vld [vmem:[%s1 + $0x320] sm:$0xf]
  %v237 = vld [vmem:[%s1 + $0x324] sm:$0xf]
  %v238 = vld [vmem:[%s1 + $0x328] sm:$0xf]
  %v239 = vld [vmem:[%s1 + $0x32c] sm:$0xf]
  %v240 = vld [vmem:[%s1 + $0x330] sm:$0xf]
  %v241 = vld [vmem:[%s1 + $0x334] sm:$0xf]
  %v242 = vld [vmem:[%s1 + $0x338] sm:$0xf]
  %v243 = vld [vmem:[%s1 + $0x33c] sm:$0xf]
  %v244 = vld [vmem:[%s2] sm:$0x1]
  %v246 = vlaneseq
  %v247 = vshrl.u32 %v246, 7
  %v248 = vsub.s32 0, %v247
  %v249 = vrot.slane %v244, %v248
  %v272 = vunpack.c.l.b16 %v15
  %v273 = vunpack.c.h.b16 %v15
  %v274 = vunpack.c.l.b16 %v16
  %v275 = vunpack.c.h.b16 %v16
  %v276 = vunpack.c.l.b16 %v17
  %v277 = vunpack.c.h.b16 %v17
  %v278 = vunpack.c.l.b16 %v18
  %v279 = vunpack.c.h.b16 %v18
  %v280 = vunpack.c.l.b16 %v19
  %v281 = vunpack.c.h.b16 %v19
  %v282 = vunpack.c.l.b16 %v20
  %v283 = vunpack.c.h.b16 %v20
  %v284 = vunpack.c.l.b16 %v21
  %v285 = vunpack.c.l.b16 %v22
  %v286 = vunpack.c.h.b16 %v22
  %v287 = vunpack.c.l.b16 %v23
  %v288 = vunpack.c.h.b16 %v23
  %v289 = vunpack.c.l.b16 %v24
  %v290 = vunpack.c.h.b16 %v24
  %v291 = vunpack.c.l.b16 %v25
  %v292 = vunpack.c.h.b16 %v25
  %v293 = vunpack.c.l.b16 %v26
  %v294 = vunpack.c.h.b16 %v26
  %v295 = vunpack.c.l.b16 %v27
  %v296 = vunpack.c.h.b16 %v27
  %v297 = vunpack.c.l.b16 %v28
  %v298 = vunpack.c.l.b16 %v29
  %v299 = vunpack.c.h.b16 %v29
  %v300 = vunpack.c.l.b16 %v30
  %v301 = vunpack.c.h.b16 %v30
  %v302 = vunpack.c.l.b16 %v31
  %v303 = vunpack.c.h.b16 %v31
  %v304 = vunpack.c.l.b16 %v32
  %v305 = vunpack.c.h.b16 %v32
  %v306 = vunpack.c.l.b16 %v33
  %v307 = vunpack.c.h.b16 %v33
  %v308 = vunpack.c.l.b16 %v34
  %v309 = vunpack.c.h.b16 %v34
  %v310 = vunpack.c.l.b16 %v35
  %v311 = vpack.c.b16 %v285, %v272
  %v312 = vpack.c.b16 %v286, %v273
  %v313 = vpack.c.b16 %v287, %v274
  %v314 = vpack.c.b16 %v288, %v275
  %v315 = vpack.c.b16 %v289, %v276
  %v316 = vpack.c.b16 %v290, %v277
  %v317 = vpack.c.b16 %v291, %v278
  %v318 = vpack.c.b16 %v292, %v279
  %v319 = vpack.c.b16 %v293, %v280
  %v320 = vpack.c.b16 %v294, %v281
  %v321 = vpack.c.b16 %v295, %v282
  %v322 = vpack.c.b16 %v296, %v283
  %v323 = vpack.c.b16 %v297, %v284
  %v324 = vpack.c.b16 %v298, %v298
  %v325 = vpack.c.b16 %v299, %v299
  %v326 = vpack.c.b16 %v300, %v300
  %v327 = vpack.c.b16 %v301, %v301
  %v328 = vpack.c.b16 %v302, %v302
  %v329 = vpack.c.b16 %v303, %v303
  %v330 = vpack.c.b16 %v304, %v304
  %v331 = vpack.c.b16 %v305, %v305
  %v332 = vpack.c.b16 %v306, %v306
  %v333 = vpack.c.b16 %v307, %v307
  %v334 = vpack.c.b16 %v308, %v308
  %v335 = vpack.c.b16 %v309, %v309
  %v336 = vpack.c.b16 %v310, %v310
  %v571 = vunpack.c.l.b16 %v36
  %v572 = vunpack.c.l.b16 %v37
  %v573 = vunpack.c.l.b16 %v38
  %v574 = vunpack.c.l.b16 %v39
  %v575 = vunpack.c.l.b16 %v40
  %v576 = vunpack.c.l.b16 %v41
  %v577 = vunpack.c.l.b16 %v42
  %v578 = vunpack.c.l.b16 %v43
  %v579 = vunpack.c.l.b16 %v44
  %v580 = vunpack.c.l.b16 %v45
  %v581 = vunpack.c.l.b16 %v46
  %v582 = vunpack.c.l.b16 %v47
  %v583 = vunpack.c.l.b16 %v48
  %v584 = vunpack.c.l.b16 %v49
  %v585 = vunpack.c.l.b16 %v50
  %v586 = vunpack.c.l.b16 %v51
  %v587 = vunpack.c.l.b16 %v52
  %v588 = vunpack.c.l.b16 %v53
  %v589 = vunpack.c.l.b16 %v54
  %v590 = vunpack.c.l.b16 %v55
  %v591 = vunpack.c.l.b16 %v56
  %v592 = vunpack.c.l.b16 %v57
  %v593 = vunpack.c.l.b16 %v58
  %v594 = vunpack.c.l.b16 %v59
  %v595 = vunpack.c.l.b16 %v60
  %v596 = vunpack.c.l.b16 %v61
  %v597 = vunpack.c.l.b16 %v62
  %v598 = vunpack.c.l.b16 %v63
  %v599 = vunpack.c.l.b16 %v64
  %v600 = vunpack.c.l.b16 %v65
  %v601 = vunpack.c.l.b16 %v66
  %v602 = vunpack.c.l.b16 %v67
  %v603 = vunpack.c.l.b16 %v68
  %v604 = vunpack.c.l.b16 %v69
  %v605 = vunpack.c.l.b16 %v70
  %v606 = vunpack.c.l.b16 %v71
  %v607 = vunpack.c.l.b16 %v72
  %v608 = vunpack.c.l.b16 %v73
  %v609 = vunpack.c.l.b16 %v74
  %v610 = vunpack.c.l.b16 %v75
  %v611 = vunpack.c.l.b16 %v76
  %v612 = vunpack.c.l.b16 %v77
  %v613 = vunpack.c.l.b16 %v78
  %v614 = vunpack.c.l.b16 %v79
  %v615 = vunpack.c.l.b16 %v80
  %v616 = vunpack.c.l.b16 %v81
  %v617 = vunpack.c.l.b16 %v82
  %v618 = vunpack.c.l.b16 %v83
  %v619 = vunpack.c.l.b16 %v84
  %v620 = vunpack.c.l.b16 %v85
  %v621 = vunpack.c.l.b16 %v86
  %v622 = vunpack.c.l.b16 %v87
  %v623 = vunpack.c.l.b16 %v88
  %v624 = vunpack.c.l.b16 %v89
  %v625 = vunpack.c.l.b16 %v90
  %v626 = vunpack.c.l.b16 %v91
  %v627 = vunpack.c.l.b16 %v92
  %v628 = vunpack.c.l.b16 %v93
  %v629 = vunpack.c.l.b16 %v94
  %v630 = vunpack.c.l.b16 %v95
  %v631 = vunpack.c.l.b16 %v96
  %v632 = vunpack.c.l.b16 %v97
  %v633 = vunpack.c.l.b16 %v98
  %v634 = vunpack.c.l.b16 %v99
  %v635 = vunpack.c.l.b16 %v100
  %v636 = vunpack.c.l.b16 %v101
  %v637 = vunpack.c.l.b16 %v102
  %v638 = vunpack.c.l.b16 %v103
  %v639 = vunpack.c.l.b16 %v104
  %v640 = vunpack.c.l.b16 %v105
  %v641 = vunpack.c.l.b16 %v106
  %v642 = vunpack.c.l.b16 %v107
  %v643 = vunpack.c.l.b16 %v108
  %v644 = vunpack.c.l.b16 %v109
  %v645 = vunpack.c.l.b16 %v110
  %v646 = vunpack.c.l.b16 %v111
  %v647 = vunpack.c.l.b16 %v112
  %v648 = vunpack.c.l.b16 %v113
  %v649 = vunpack.c.l.b16 %v114
  %v650 = vunpack.c.l.b16 %v115
  %v651 = vunpack.c.l.b16 %v116
  %v652 = vunpack.c.l.b16 %v117
  %v653 = vunpack.c.l.b16 %v118
  %v654 = vunpack.c.l.b16 %v119
  %v655 = vunpack.c.l.b16 %v120
  %v656 = vunpack.c.l.b16 %v121
  %v657 = vunpack.c.l.b16 %v122
  %v658 = vunpack.c.l.b16 %v123
  %v659 = vunpack.c.l.b16 %v124
  %v660 = vunpack.c.l.b16 %v125
  %v661 = vunpack.c.l.b16 %v126
  %v662 = vunpack.c.l.b16 %v127
  %v663 = vunpack.c.l.b16 %v128
  %v664 = vunpack.c.l.b16 %v129
  %v665 = vunpack.c.l.b16 %v130
  %v666 = vunpack.c.l.b16 %v131
  %v667 = vunpack.c.l.b16 %v132
  %v668 = vunpack.c.l.b16 %v133
  %v669 = vunpack.c.l.b16 %v134
  %v670 = vunpack.c.l.b16 %v135
  %v671 = vunpack.c.l.b16 %v136
  %v672 = vunpack.c.l.b16 %v137
  %v673 = vunpack.c.l.b16 %v138
  %v674 = vunpack.c.l.b16 %v139
  %v675 = vunpack.c.l.b16 %v140
  %v676 = vunpack.c.l.b16 %v141
  %v677 = vunpack.c.l.b16 %v142
  %v678 = vunpack.c.l.b16 %v143
  %v679 = vunpack.c.l.b16 %v144
  %v680 = vunpack.c.l.b16 %v145
  %v681 = vunpack.c.l.b16 %v146
  %v682 = vunpack.c.l.b16 %v147
  %v683 = vunpack.c.l.b16 %v148
  %v684 = vunpack.c.l.b16 %v149
  %v685 = vunpack.c.l.b16 %v150
  %v686 = vunpack.c.l.b16 %v151
  %v687 = vunpack.c.l.b16 %v152
  %v688 = vunpack.c.l.b16 %v153
  %v689 = vunpack.c.l.b16 %v154
  %v690 = vunpack.c.l.b16 %v155
  %v691 = vunpack.c.l.b16 %v156
  %v692 = vunpack.c.l.b16 %v157
  %v693 = vunpack.c.l.b16 %v158
  %v694 = vunpack.c.l.b16 %v159
  %v695 = vunpack.c.l.b16 %v160
  %v696 = vunpack.c.l.b16 %v161
  %v697 = vunpack.c.l.b16 %v162
  %v698 = vunpack.c.l.b16 %v163
  %v699 = vunpack.c.l.b16 %v164
  %v700 = vunpack.c.l.b16 %v165
  %v701 = vunpack.c.l.b16 %v166
  %v702 = vunpack.c.l.b16 %v167
  %v703 = vunpack.c.l.b16 %v168
  %v704 = vunpack.c.l.b16 %v169
  %v705 = vunpack.c.l.b16 %v170
  %v706 = vunpack.c.l.b16 %v171
  %v707 = vunpack.c.l.b16 %v172
  %v708 = vunpack.c.l.b16 %v173
  %v709 = vunpack.c.l.b16 %v174
  %v710 = vunpack.c.l.b16 %v175
  %v711 = vunpack.c.l.b16 %v176
  %v712 = vunpack.c.l.b16 %v177
  %v713 = vunpack.c.l.b16 %v178
  %v714 = vunpack.c.l.b16 %v179
  %v715 = vunpack.c.l.b16 %v180
  %v716 = vunpack.c.l.b16 %v181
  %v717 = vunpack.c.l.b16 %v182
  %v718 = vunpack.c.l.b16 %v183
  %v719 = vunpack.c.l.b16 %v184
  %v720 = vunpack.c.l.b16 %v185
  %v721 = vunpack.c.l.b16 %v186
  %v722 = vunpack.c.l.b16 %v187
  %v723 = vunpack.c.l.b16 %v188
  %v724 = vunpack.c.l.b16 %v189
  %v725 = vunpack.c.l.b16 %v190
  %v726 = vunpack.c.l.b16 %v191
  %v727 = vunpack.c.l.b16 %v192
  %v728 = vunpack.c.l.b16 %v193
  %v729 = vunpack.c.l.b16 %v194
  %v730 = vunpack.c.l.b16 %v195
  %v731 = vunpack.c.l.b16 %v196
  %v732 = vunpack.c.l.b16 %v197
  %v733 = vunpack.c.l.b16 %v198
  %v734 = vunpack.c.l.b16 %v199
  %v735 = vunpack.c.l.b16 %v200
  %v736 = vunpack.c.l.b16 %v201
  %v737 = vunpack.c.l.b16 %v202
  %v738 = vunpack.c.l.b16 %v203
  %v739 = vunpack.c.l.b16 %v204
  %v740 = vunpack.c.l.b16 %v205
  %v741 = vunpack.c.l.b16 %v206
  %v742 = vunpack.c.l.b16 %v207
  %v743 = vunpack.c.l.b16 %v208
  %v744 = vunpack.c.l.b16 %v209
  %v745 = vunpack.c.l.b16 %v210
  %v746 = vunpack.c.l.b16 %v211
  %v747 = vunpack.c.l.b16 %v212
  %v748 = vunpack.c.l.b16 %v213
  %v749 = vunpack.c.l.b16 %v214
  %v750 = vunpack.c.l.b16 %v215
  %v751 = vunpack.c.l.b16 %v216
  %v752 = vunpack.c.l.b16 %v217
  %v753 = vunpack.c.l.b16 %v218
  %v754 = vunpack.c.l.b16 %v219
  %v755 = vunpack.c.l.b16 %v220
  %v756 = vunpack.c.l.b16 %v221
  %v757 = vunpack.c.l.b16 %v222
  %v758 = vunpack.c.l.b16 %v223
  %v759 = vunpack.c.l.b16 %v224
  %v760 = vunpack.c.l.b16 %v225
  %v761 = vunpack.c.l.b16 %v226
  %v762 = vunpack.c.l.b16 %v227
  %v763 = vunpack.c.l.b16 %v228
  %v764 = vunpack.c.l.b16 %v229
  %v765 = vunpack.c.l.b16 %v230
  %v766 = vunpack.c.l.b16 %v231
  %v767 = vunpack.c.l.b16 %v232
  %v768 = vunpack.c.l.b16 %v233
  %v769 = vunpack.c.l.b16 %v234
  %v770 = vunpack.c.l.b16 %v235
  %v771 = vunpack.c.l.b16 %v236
  %v772 = vunpack.c.l.b16 %v237
  %v773 = vunpack.c.l.b16 %v238
  %v774 = vunpack.c.l.b16 %v239
  %v775 = vunpack.c.l.b16 %v240
  %v776 = vunpack.c.l.b16 %v241
  %v777 = vunpack.c.l.b16 %v242
  %v778 = vunpack.c.l.b16 %v243
  %v779 = vpack.c.b16 %v572, %v571
  %v780 = vpack.c.b16 %v574, %v573
  %v781 = vpack.c.b16 %v576, %v575
  %v782 = vpack.c.b16 %v578, %v577
  %v783 = vpack.c.b16 %v580, %v579
  %v784 = vpack.c.b16 %v582, %v581
  %v785 = vpack.c.b16 %v584, %v583
  %v786 = vpack.c.b16 %v586, %v585
  %v787 = vpack.c.b16 %v588, %v587
  %v788 = vpack.c.b16 %v590, %v589
  %v789 = vpack.c.b16 %v592, %v591
  %v790 = vpack.c.b16 %v594, %v593
  %v791 = vpack.c.b16 %v596, %v595
  %v792 = vpack.c.b16 %v598, %v597
  %v793 = vpack.c.b16 %v600, %v599
  %v794 = vpack.c.b16 %v602, %v601
  %v795 = vpack.c.b16 %v604, %v603
  %v796 = vpack.c.b16 %v606, %v605
  %v797 = vpack.c.b16 %v608, %v607
  %v798 = vpack.c.b16 %v610, %v609
  %v799 = vpack.c.b16 %v612, %v611
  %v800 = vpack.c.b16 %v614, %v613
  %v801 = vpack.c.b16 %v616, %v615
  %v802 = vpack.c.b16 %v618, %v617
  %v803 = vpack.c.b16 %v620, %v619
  %v804 = vpack.c.b16 %v622, %v621
  %v805 = vpack.c.b16 %v624, %v623
  %v806 = vpack.c.b16 %v626, %v625
  %v807 = vpack.c.b16 %v628, %v627
  %v808 = vpack.c.b16 %v630, %v629
  %v809 = vpack.c.b16 %v632, %v631
  %v810 = vpack.c.b16 %v634, %v633
  %v811 = vpack.c.b16 %v636, %v635
  %v812 = vpack.c.b16 %v638, %v637
  %v813 = vpack.c.b16 %v640, %v639
  %v814 = vpack.c.b16 %v642, %v641
  %v815 = vpack.c.b16 %v644, %v643
  %v816 = vpack.c.b16 %v646, %v645
  %v817 = vpack.c.b16 %v648, %v647
  %v818 = vpack.c.b16 %v650, %v649
  %v819 = vpack.c.b16 %v652, %v651
  %v820 = vpack.c.b16 %v654, %v653
  %v821 = vpack.c.b16 %v656, %v655
  %v822 = vpack.c.b16 %v658, %v657
  %v823 = vpack.c.b16 %v660, %v659
  %v824 = vpack.c.b16 %v662, %v661
  %v825 = vpack.c.b16 %v664, %v663
  %v826 = vpack.c.b16 %v666, %v665
  %v827 = vpack.c.b16 %v668, %v667
  %v828 = vpack.c.b16 %v670, %v669
  %v829 = vpack.c.b16 %v672, %v671
  %v830 = vpack.c.b16 %v674, %v673
  %v831 = vpack.c.b16 %v676, %v675
  %v832 = vpack.c.b16 %v678, %v677
  %v833 = vpack.c.b16 %v680, %v679
  %v834 = vpack.c.b16 %v682, %v681
  %v835 = vpack.c.b16 %v684, %v683
  %v836 = vpack.c.b16 %v686, %v685
  %v837 = vpack.c.b16 %v688, %v687
  %v838 = vpack.c.b16 %v690, %v689
  %v839 = vpack.c.b16 %v692, %v691
  %v840 = vpack.c.b16 %v694, %v693
  %v841 = vpack.c.b16 %v696, %v695
  %v842 = vpack.c.b16 %v698, %v697
  %v843 = vpack.c.b16 %v700, %v699
  %v844 = vpack.c.b16 %v702, %v701
  %v845 = vpack.c.b16 %v704, %v703
  %v846 = vpack.c.b16 %v706, %v705
  %v847 = vpack.c.b16 %v708, %v707
  %v848 = vpack.c.b16 %v710, %v709
  %v849 = vpack.c.b16 %v712, %v711
  %v850 = vpack.c.b16 %v714, %v713
  %v851 = vpack.c.b16 %v716, %v715
  %v852 = vpack.c.b16 %v718, %v717
  %v853 = vpack.c.b16 %v720, %v719
  %v854 = vpack.c.b16 %v722, %v721
  %v855 = vpack.c.b16 %v724, %v723
  %v856 = vpack.c.b16 %v726, %v725
  %v857 = vpack.c.b16 %v728, %v727
  %v858 = vpack.c.b16 %v730, %v729
  %v859 = vpack.c.b16 %v732, %v731
  %v860 = vpack.c.b16 %v734, %v733
  %v861 = vpack.c.b16 %v736, %v735
  %v862 = vpack.c.b16 %v738, %v737
  %v863 = vpack.c.b16 %v740, %v739
  %v864 = vpack.c.b16 %v742, %v741
  %v865 = vpack.c.b16 %v744, %v743
  %v866 = vpack.c.b16 %v746, %v745
  %v867 = vpack.c.b16 %v748, %v747
  %v868 = vpack.c.b16 %v750, %v749
  %v869 = vpack.c.b16 %v752, %v751
  %v870 = vpack.c.b16 %v754, %v753
  %v871 = vpack.c.b16 %v756, %v755
  %v872 = vpack.c.b16 %v758, %v757
  %v873 = vpack.c.b16 %v760, %v759
  %v874 = vpack.c.b16 %v762, %v761
  %v875 = vpack.c.b16 %v764, %v763
  %v876 = vpack.c.b16 %v766, %v765
  %v877 = vpack.c.b16 %v768, %v767
  %v878 = vpack.c.b16 %v770, %v769
  %v879 = vpack.c.b16 %v772, %v771
  %v880 = vpack.c.b16 %v774, %v773
  %v881 = vpack.c.b16 %v776, %v775
  %v882 = vpack.c.b16 %v778, %v777
  %987 = vmatprep.subr.bf16.mxu0 0
  %988 = vmatpush1.bf16.msra.mxu0 %v786
  %989 = vmatprep.subr.bf16.mxu0 0
  %990 = vmatpush1.bf16.msra.mxu0 %v785
  %991 = vmatprep.subr.bf16.mxu0 0
  %992 = vmatpush1.bf16.msra.mxu0 %v784
  %993 = vmatprep.subr.bf16.mxu0 0
  %994 = vmatpush1.bf16.msra.mxu0 %v783
  %995 = vmatprep.subr.bf16.mxu0 0
  %996 = vmatpush1.bf16.msra.mxu0 %v782
  %997 = vmatprep.subr.bf16.mxu0 0
  %998 = vmatpush1.bf16.msra.mxu0 %v781
  %999 = vmatprep.subr.bf16.mxu0 0
  %1000 = vmatpush1.bf16.msra.mxu0 %v780
  %1001 = vmatprep.subr.bf16.mxu0 0
  %1002 = vmatpush1.bf16.msra.mxu0 %v779
  %1003 = vmatprep.subr.bf16.mxu0 0
  %1004 = vmatpush2.bf16.msra.mxu0 %v794
  %1005 = vmatprep.subr.bf16.mxu0 0
  %1006 = vmatpush2.bf16.msra.mxu0 %v793
  %1007 = vmatprep.subr.bf16.mxu0 0
  %1008 = vmatpush2.bf16.msra.mxu0 %v792
  %1009 = vmatprep.subr.bf16.mxu0 0
  %1010 = vmatpush2.bf16.msra.mxu0 %v791
  %1011 = vmatprep.subr.bf16.mxu0 0
  %1012 = vmatpush2.bf16.msra.mxu0 %v790
  %1013 = vmatprep.subr.bf16.mxu0 0
  %1014 = vmatpush2.bf16.msra.mxu0 %v789
  %1015 = vmatprep.subr.bf16.mxu0 0
  %1016 = vmatpush2.bf16.msra.mxu0 %v788
  %1017 = vmatprep.subr.bf16.mxu0 0
  %1018 = vmatpush2.bf16.msra.mxu0 %v787
  %1019 = vmatprep.mubr.bf16.mxu0 %v312
  %1020 = vmatmul.mubr.bf16.gmra.mxu0 %v311
  %v1021 = vpop.f32.mrf.mxu0
  %v1022 = vadd.f32 %v249, %v1021
  %v1023 = vpop.f32.mrf.mxu0
  %v1024 = vpop.f32.mrf.mxu0
  %v1025 = vadd.f32 %v249, %v1024
  %v1026 = vpop.f32.mrf.mxu0
  %1027 = vmatprep.mubr.bf16.mxu0 %v325
  %1028 = vmatmul.mubr.bf16.gmra.mxu0 %v324
  %v1029 = vpop.f32.mrf.mxu0
  %v1030 = vadd.f32 %v249, %v1029
  %v1031 = vpop.f32.mrf.mxu0
  %v1032 = vpop.f32.mrf.mxu0
  %v1033 = vpop.f32.mrf.mxu0
  %1034 = vdwg.mxu0
  %1035 = vmatprep.subr.bf16.mxu0 0
  %1036 = vmatpush1.bf16.msra.mxu0 %v802
  %1037 = vmatprep.subr.bf16.mxu0 0
  %1038 = vmatpush1.bf16.msra.mxu0 %v801
  %1039 = vmatprep.subr.bf16.mxu0 0
  %1040 = vmatpush1.bf16.msra.mxu0 %v800
  %1041 = vmatprep.subr.bf16.mxu0 0
  %1042 = vmatpush1.bf16.msra.mxu0 %v799
  %1043 = vmatprep.subr.bf16.mxu0 0
  %1044 = vmatpush1.bf16.msra.mxu0 %v798
  %1045 = vmatprep.subr.bf16.mxu0 0
  %1046 = vmatpush1.bf16.msra.mxu0 %v797
  %1047 = vmatprep.subr.bf16.mxu0 0
  %1048 = vmatpush1.bf16.msra.mxu0 %v796
  %1049 = vmatprep.subr.bf16.mxu0 0
  %1050 = vmatpush1.bf16.msra.mxu0 %v795
  %1051 = vmatprep.subr.bf16.mxu0 0
  %1052 = vmatpush2.bf16.msra.mxu0 %v810
  %1053 = vmatprep.subr.bf16.mxu0 0
  %1054 = vmatpush2.bf16.msra.mxu0 %v809
  %1055 = vmatprep.subr.bf16.mxu0 0
  %1056 = vmatpush2.bf16.msra.mxu0 %v808
  %1057 = vmatprep.subr.bf16.mxu0 0
  %1058 = vmatpush2.bf16.msra.mxu0 %v807
  %1059 = vmatprep.subr.bf16.mxu0 0
  %1060 = vmatpush2.bf16.msra.mxu0 %v806
  %1061 = vmatprep.subr.bf16.mxu0 0
  %1062 = vmatpush2.bf16.msra.mxu0 %v805
  %1063 = vmatprep.subr.bf16.mxu0 0
  %1064 = vmatpush2.bf16.msra.mxu0 %v804
  %1065 = vmatprep.subr.bf16.mxu0 0
  %1066 = vmatpush2.bf16.msra.mxu0 %v803
  %1067 = vmatprep.mubr.bf16.mxu0 %v314
  %1068 = vmatmul.mubr.bf16.gmra.mxu0 %v313
  %v1069 = vpop.f32.mrf.mxu0
  %v1070 = vadd.f32 %v1022, %v1069
  %v1071 = vpop.f32.mrf.mxu0
  %v1072 = vpop.f32.mrf.mxu0
  %v1073 = vadd.f32 %v1025, %v1072
  %v1074 = vpop.f32.mrf.mxu0
  %1075 = vmatprep.mubr.bf16.mxu0 %v327
  %1076 = vmatmul.mubr.bf16.gmra.mxu0 %v326
  %v1077 = vpop.f32.mrf.mxu0
  %v1078 = vadd.f32 %v1030, %v1077
  %v1079 = vpop.f32.mrf.mxu0
  %v1080 = vpop.f32.mrf.mxu0
  %v1081 = vpop.f32.mrf.mxu0
  %1082 = vdwg.mxu0
  %1083 = vmatprep.subr.bf16.mxu0 0
  %1084 = vmatpush1.bf16.msra.mxu0 %v818
  %1085 = vmatprep.subr.bf16.mxu0 0
  %1086 = vmatpush1.bf16.msra.mxu0 %v817
  %1087 = vmatprep.subr.bf16.mxu0 0
  %1088 = vmatpush1.bf16.msra.mxu0 %v816
  %1089 = vmatprep.subr.bf16.mxu0 0
  %1090 = vmatpush1.bf16.msra.mxu0 %v815
  %1091 = vmatprep.subr.bf16.mxu0 0
  %1092 = vmatpush1.bf16.msra.mxu0 %v814
  %1093 = vmatprep.subr.bf16.mxu0 0
  %1094 = vmatpush1.bf16.msra.mxu0 %v813
  %1095 = vmatprep.subr.bf16.mxu0 0
  %1096 = vmatpush1.bf16.msra.mxu0 %v812
  %1097 = vmatprep.subr.bf16.mxu0 0
  %1098 = vmatpush1.bf16.msra.mxu0 %v811
  %1099 = vmatprep.subr.bf16.mxu0 0
  %1100 = vmatpush2.bf16.msra.mxu0 %v826
  %1101 = vmatprep.subr.bf16.mxu0 0
  %1102 = vmatpush2.bf16.msra.mxu0 %v825
  %1103 = vmatprep.subr.bf16.mxu0 0
  %1104 = vmatpush2.bf16.msra.mxu0 %v824
  %1105 = vmatprep.subr.bf16.mxu0 0
  %1106 = vmatpush2.bf16.msra.mxu0 %v823
  %1107 = vmatprep.subr.bf16.mxu0 0
  %1108 = vmatpush2.bf16.msra.mxu0 %v822
  %1109 = vmatprep.subr.bf16.mxu0 0
  %1110 = vmatpush2.bf16.msra.mxu0 %v821
  %1111 = vmatprep.subr.bf16.mxu0 0
  %1112 = vmatpush2.bf16.msra.mxu0 %v820
  %1113 = vmatprep.subr.bf16.mxu0 0
  %1114 = vmatpush2.bf16.msra.mxu0 %v819
  %1115 = vmatprep.mubr.bf16.mxu0 %v316
  %1116 = vmatmul.mubr.bf16.gmra.mxu0 %v315
  %v1117 = vpop.f32.mrf.mxu0
  %v1118 = vadd.f32 %v1070, %v1117
  %v1119 = vpop.f32.mrf.mxu0
  %v1120 = vpop.f32.mrf.mxu0
  %v1121 = vadd.f32 %v1073, %v1120
  %v1122 = vpop.f32.mrf.mxu0
  %1123 = vmatprep.mubr.bf16.mxu0 %v329
  %1124 = vmatmul.mubr.bf16.gmra.mxu0 %v328
  %v1125 = vpop.f32.mrf.mxu0
  %v1126 = vadd.f32 %v1078, %v1125
  %v1127 = vpop.f32.mrf.mxu0
  %v1128 = vpop.f32.mrf.mxu0
  %v1129 = vpop.f32.mrf.mxu0
  %1130 = vdwg.mxu0
  %1131 = vmatprep.subr.bf16.mxu0 0
  %1132 = vmatpush1.bf16.msra.mxu0 %v834
  %1133 = vmatprep.subr.bf16.mxu0 0
  %1134 = vmatpush1.bf16.msra.mxu0 %v833
  %1135 = vmatprep.subr.bf16.mxu0 0
  %1136 = vmatpush1.bf16.msra.mxu0 %v832
  %1137 = vmatprep.subr.bf16.mxu0 0
  %1138 = vmatpush1.bf16.msra.mxu0 %v831
  %1139 = vmatprep.subr.bf16.mxu0 0
  %1140 = vmatpush1.bf16.msra.mxu0 %v830
  %1141 = vmatprep.subr.bf16.mxu0 0
  %1142 = vmatpush1.bf16.msra.mxu0 %v829
  %1143 = vmatprep.subr.bf16.mxu0 0
  %1144 = vmatpush1.bf16.msra.mxu0 %v828
  %1145 = vmatprep.subr.bf16.mxu0 0
  %1146 = vmatpush1.bf16.msra.mxu0 %v827
  %1147 = vmatprep.subr.bf16.mxu0 0
  %1148 = vmatpush2.bf16.msra.mxu0 %v842
  %1149 = vmatprep.subr.bf16.mxu0 0
  %1150 = vmatpush2.bf16.msra.mxu0 %v841
  %1151 = vmatprep.subr.bf16.mxu0 0
  %1152 = vmatpush2.bf16.msra.mxu0 %v840
  %1153 = vmatprep.subr.bf16.mxu0 0
  %1154 = vmatpush2.bf16.msra.mxu0 %v839
  %1155 = vmatprep.subr.bf16.mxu0 0
  %1156 = vmatpush2.bf16.msra.mxu0 %v838
  %1157 = vmatprep.subr.bf16.mxu0 0
  %1158 = vmatpush2.bf16.msra.mxu0 %v837
  %1159 = vmatprep.subr.bf16.mxu0 0
  %1160 = vmatpush2.bf16.msra.mxu0 %v836
  %1161 = vmatprep.subr.bf16.mxu0 0
  %1162 = vmatpush2.bf16.msra.mxu0 %v835
  %1163 = vmatprep.mubr.bf16.mxu0 %v318
  %1164 = vmatmul.mubr.bf16.gmra.mxu0 %v317
  %v1165 = vpop.f32.mrf.mxu0
  %v1166 = vadd.f32 %v1118, %v1165
  %v1167 = vpop.f32.mrf.mxu0
  %v1168 = vpop.f32.mrf.mxu0
  %v1169 = vadd.f32 %v1121, %v1168
  %v1170 = vpop.f32.mrf.mxu0
  %1171 = vmatprep.mubr.bf16.mxu0 %v331
  %1172 = vmatmul.mubr.bf16.gmra.mxu0 %v330
  %v1173 = vpop.f32.mrf.mxu0
  %v1174 = vadd.f32 %v1126, %v1173
  %v1175 = vpop.f32.mrf.mxu0
  %v1176 = vpop.f32.mrf.mxu0
  %v1177 = vpop.f32.mrf.mxu0
  %1178 = vdwg.mxu0
  %1179 = vmatprep.subr.bf16.mxu0 0
  %1180 = vmatpush1.bf16.msra.mxu0 %v850
  %1181 = vmatprep.subr.bf16.mxu0 0
  %1182 = vmatpush1.bf16.msra.mxu0 %v849
  %1183 = vmatprep.subr.bf16.mxu0 0
  %1184 = vmatpush1.bf16.msra.mxu0 %v848
  %1185 = vmatprep.subr.bf16.mxu0 0
  %1186 = vmatpush1.bf16.msra.mxu0 %v847
  %1187 = vmatprep.subr.bf16.mxu0 0
  %1188 = vmatpush1.bf16.msra.mxu0 %v846
  %1189 = vmatprep.subr.bf16.mxu0 0
  %1190 = vmatpush1.bf16.msra.mxu0 %v845
  %1191 = vmatprep.subr.bf16.mxu0 0
  %1192 = vmatpush1.bf16.msra.mxu0 %v844
  %1193 = vmatprep.subr.bf16.mxu0 0
  %1194 = vmatpush1.bf16.msra.mxu0 %v843
  %1195 = vmatprep.subr.bf16.mxu0 0
  %1196 = vmatpush2.bf16.msra.mxu0 %v858
  %1197 = vmatprep.subr.bf16.mxu0 0
  %1198 = vmatpush2.bf16.msra.mxu0 %v857
  %1199 = vmatprep.subr.bf16.mxu0 0
  %1200 = vmatpush2.bf16.msra.mxu0 %v856
  %1201 = vmatprep.subr.bf16.mxu0 0
  %1202 = vmatpush2.bf16.msra.mxu0 %v855
  %1203 = vmatprep.subr.bf16.mxu0 0
  %1204 = vmatpush2.bf16.msra.mxu0 %v854
  %1205 = vmatprep.subr.bf16.mxu0 0
  %1206 = vmatpush2.bf16.msra.mxu0 %v853
  %1207 = vmatprep.subr.bf16.mxu0 0
  %1208 = vmatpush2.bf16.msra.mxu0 %v852
  %1209 = vmatprep.subr.bf16.mxu0 0
  %1210 = vmatpush2.bf16.msra.mxu0 %v851
  %1211 = vmatprep.mubr.bf16.mxu0 %v320
  %1212 = vmatmul.mubr.bf16.gmra.mxu0 %v319
  %v1213 = vpop.f32.mrf.mxu0
  %v1214 = vadd.f32 %v1166, %v1213
  %v1215 = vpop.f32.mrf.mxu0
  %v1216 = vpop.f32.mrf.mxu0
  %v1217 = vadd.f32 %v1169, %v1216
  %v1218 = vpop.f32.mrf.mxu0
  %1219 = vmatprep.mubr.bf16.mxu0 %v333
  %1220 = vmatmul.mubr.bf16.gmra.mxu0 %v332
  %v1221 = vpop.f32.mrf.mxu0
  %v1222 = vadd.f32 %v1174, %v1221
  %v1223 = vpop.f32.mrf.mxu0
  %v1224 = vpop.f32.mrf.mxu0
  %v1225 = vpop.f32.mrf.mxu0
  %1226 = vdwg.mxu0
  %1227 = vmatprep.subr.bf16.mxu0 0
  %1228 = vmatpush1.bf16.msra.mxu0 %v866
  %1229 = vmatprep.subr.bf16.mxu0 0
  %1230 = vmatpush1.bf16.msra.mxu0 %v865
  %1231 = vmatprep.subr.bf16.mxu0 0
  %1232 = vmatpush1.bf16.msra.mxu0 %v864
  %1233 = vmatprep.subr.bf16.mxu0 0
  %1234 = vmatpush1.bf16.msra.mxu0 %v863
  %1235 = vmatprep.subr.bf16.mxu0 0
  %1236 = vmatpush1.bf16.msra.mxu0 %v862
  %1237 = vmatprep.subr.bf16.mxu0 0
  %1238 = vmatpush1.bf16.msra.mxu0 %v861
  %1239 = vmatprep.subr.bf16.mxu0 0
  %1240 = vmatpush1.bf16.msra.mxu0 %v860
  %1241 = vmatprep.subr.bf16.mxu0 0
  %1242 = vmatpush1.bf16.msra.mxu0 %v859
  %1243 = vmatprep.subr.bf16.mxu0 0
  %1244 = vmatpush2.bf16.msra.mxu0 %v874
  %1245 = vmatprep.subr.bf16.mxu0 0
  %1246 = vmatpush2.bf16.msra.mxu0 %v873
  %1247 = vmatprep.subr.bf16.mxu0 0
  %1248 = vmatpush2.bf16.msra.mxu0 %v872
  %1249 = vmatprep.subr.bf16.mxu0 0
  %1250 = vmatpush2.bf16.msra.mxu0 %v871
  %1251 = vmatprep.subr.bf16.mxu0 0
  %1252 = vmatpush2.bf16.msra.mxu0 %v870
  %1253 = vmatprep.subr.bf16.mxu0 0
  %1254 = vmatpush2.bf16.msra.mxu0 %v869
  %1255 = vmatprep.subr.bf16.mxu0 0
  %1256 = vmatpush2.bf16.msra.mxu0 %v868
  %1257 = vmatprep.subr.bf16.mxu0 0
  %1258 = vmatpush2.bf16.msra.mxu0 %v867
  %1259 = vmatprep.mubr.bf16.mxu0 %v322
  %1260 = vmatmul.mubr.bf16.gmra.mxu0 %v321
  %v1261 = vpop.f32.mrf.mxu0
  %v1262 = vadd.f32 %v1214, %v1261
  %v1263 = vpop.f32.mrf.mxu0
  %v1264 = vpop.f32.mrf.mxu0
  %v1265 = vadd.f32 %v1217, %v1264
  %v1266 = vpop.f32.mrf.mxu0
  %1267 = vmatprep.mubr.bf16.mxu0 %v335
  %1268 = vmatmul.mubr.bf16.gmra.mxu0 %v334
  %v1269 = vpop.f32.mrf.mxu0
  %v1270 = vadd.f32 %v1222, %v1269
  %v1271 = vpop.f32.mrf.mxu0
  %v1272 = vpop.f32.mrf.mxu0
  %v1273 = vpop.f32.mrf.mxu0
  %1274 = vdwg.mxu0
  %1275 = vmatprep.subr.bf16.mxu0 0
  %1276 = vmatpush1.bf16.msra.mxu0 %v882
  %1277 = vmatprep.subr.bf16.mxu0 0
  %1278 = vmatpush1.bf16.msra.mxu0 %v881
  %1279 = vmatprep.subr.bf16.mxu0 0
  %1280 = vmatpush1.bf16.msra.mxu0 %v880
  %1281 = vmatprep.subr.bf16.mxu0 0
  %1282 = vmatpush1.bf16.msra.mxu0 %v879
  %1283 = vmatprep.subr.bf16.mxu0 0
  %1284 = vmatpush1.bf16.msra.mxu0 %v878
  %1285 = vmatprep.subr.bf16.mxu0 0
  %1286 = vmatpush1.bf16.msra.mxu0 %v877
  %1287 = vmatprep.subr.bf16.mxu0 0
  %1288 = vmatpush1.bf16.msra.mxu0 %v876
  %1289 = vmatprep.subr.bf16.mxu0 0
  %1290 = vmatpush1.bf16.msra.mxu0 %v875
  %1291 = vmatprep.subr.bf16.mxu0 0
  %1292 = vmatpush2.bf16.msra.mxu0 0
  %1293 = vmatprep.subr.bf16.mxu0 0
  %1294 = vmatpush2.bf16.msra.mxu0 0
  %1295 = vmatprep.subr.bf16.mxu0 0
  %1296 = vmatpush2.bf16.msra.mxu0 0
  %1297 = vmatprep.subr.bf16.mxu0 0
  %1298 = vmatpush2.bf16.msra.mxu0 0
  %1299 = vmatprep.subr.bf16.mxu0 0
  %1300 = vmatpush2.bf16.msra.mxu0 0
  %1301 = vmatprep.subr.bf16.mxu0 0
  %1302 = vmatpush2.bf16.msra.mxu0 0
  %1303 = vmatprep.subr.bf16.mxu0 0
  %1304 = vmatpush2.bf16.msra.mxu0 0
  %1305 = vmatprep.subr.bf16.mxu0 0
  %1306 = vmatpush2.bf16.msra.mxu0 0
  %1307 = vmatprep.mubr.bf16.mxu0 0
  %1308 = vmatmul.mubr.bf16.gmra.mxu0 %v323
  %v1309 = vpop.f32.mrf.mxu0
  %v1310 = vadd.f32 %v1262, %v1309
  %v1311 = vpop.f32.mrf.mxu0
  %v1312 = vpop.f32.mrf.mxu0
  %v1313 = vadd.f32 %v1265, %v1312
  %v1314 = vpop.f32.mrf.mxu0
  %1315 = vmatprep.mubr.bf16.mxu0 0
  %1316 = vmatmul.mubr.bf16.gmra.mxu0 %v336
  %v1317 = vpop.f32.mrf.mxu0
  %v1318 = vadd.f32 %v1270, %v1317
  %v1319 = vpop.f32.mrf.mxu0
  %v1320 = vpop.f32.mrf.mxu0
  %v1321 = vpop.f32.mrf.mxu0
  %1322 = vdwg.mxu0
  %v1323 = vmax.f32 %v1310, 0.0
  %v1324 = vmax.f32 %v1313, 0.0
  %v1325 = vmax.f32 %v1318, 0.0
  %v1326 = vpack.c.bf16 %v1324, %v1323
  %v1327 = vpack.c.bf16 %v1325, %v1325
  %v1330 = vunpack.c.l.b16 %v1326
  %v1331 = vunpack.c.h.b16 %v1326
  %v1332 = vunpack.c.l.b16 %v1327
  %v1333 = vpack.c.b16 %v1330, %v1330
  %v1334 = vpack.c.b16 %v1331, %v1331
  %v1335 = vpack.c.b16 %v1332, %v1332
  %1339 = vst [vmem:[%s3] sm:$0xf] %v1333
  %1340 = vst [vmem:[%s3 + $0x4] sm:$0xf] %v1334
  %1341 = vst [vmem:[%s3 + $0x8] sm:$0xf] %v1335
  // Predicated region
  $region14: #{a_convnet_forward.14} parent=0 // pred_check
    _
  $region15: #{a_convnet_forward.14} parent=0 // pred_check_branch
    %1343 = sbr.rel (0) target = $region17
  $region16: #{a_convnet_forward.14} parent=0 // pred_region
    _
  $region17: #{a_convnet_forward.14} parent=0 // pred_fallthru
    _
  // Predicated region
  $region18: #{a_convnet_forward.14} parent=0 // pred_check
    _
  $region19: #{a_convnet_forward.14} parent=0 // pred_check_branch
    %1345 = sbr.rel (0) target = $region21
  $region20: #{a_convnet_forward.14} parent=0 // pred_region
    _
  $region21: #{a_convnet_forward.14} parent=0 // pred_fallthru
    _

// kernel: a_convnet_forward.15
$region0: #{a_convnet_forward.15}
  #allocation0 [shape = 'u32[]', space=smem, size = 0x4, offset = 0x4, fixed_abs, tag = 'smem constant byte address 0x4 - core index']
  #allocation1 [shape = 'u32[144,128]{1,0:T(1,128)}', space=vmem, size = 0x12000, scoped, tag = 'internal scratch']
  %s0 = inlined_call_operand.vmem [shape: bf16[8,1152], index: 0, kind: input, shape index: {}]
  %s1 = inlined_call_operand.vmem [shape: bf16[1152,128], index: 1, kind: input, shape index: {}]
  %s2 = inlined_call_operand.vmem [shape: f32[1,128], index: 2, kind: input, shape index: {}]
  %s3 = inlined_call_operand.vmem [shape: f32[8,128], index: 3, kind: output, shape index: {}]
  %s4 = sld [smem:[#allocation0]]
  $region22: #{a_convnet_forward.15} parent=0
    _
  %s6 = ssub.s32 1, %s4
  %s7 = scalar_select 0, %s6, %s4
  // Predicated region
  $region2: #{a_convnet_forward.15} parent=0 // pred_check
    _
  $region3: #{a_convnet_forward.15} parent=0 // pred_check_branch
    %9 = sbr.rel (0) target = $region5
  $region4: #{a_convnet_forward.15} parent=0 // pred_region
    _
  $region5: #{a_convnet_forward.15} parent=0 // pred_fallthru
    _
  // Predicated region
  $region6: #{a_convnet_forward.15} parent=0 // pred_check
    _
  $region7: #{a_convnet_forward.15} parent=0 // pred_check_branch
    %11 = sbr.rel (0) target = $region9
  $region8: #{a_convnet_forward.15} parent=0 // pred_region
    _
  $region9: #{a_convnet_forward.15} parent=0 // pred_fallthru
    _
  // Predicated region
  $region10: #{a_convnet_forward.15} parent=0 // pred_check
    _
  $region11: #{a_convnet_forward.15} parent=0 // pred_check_branch
    %13 = sbr.rel (0) target = $region13
  $region12: #{a_convnet_forward.15} parent=0 // pred_region
    _
  $region13: #{a_convnet_forward.15} parent=0 // pred_fallthru
    _
  %v15 = vld [vmem:[%s0] sm:$0xff]
  %v16 = vld [vmem:[%s0 + $0x8] sm:$0xff]
  %v17 = vld [vmem:[%s0 + $0x10] sm:$0xff]
  %v18 = vld [vmem:[%s0 + $0x18] sm:$0xff]
  %v19 = vld [vmem:[%s0 + $0x20] sm:$0xf]
  %v20 = vld [vmem:[%s1] sm:$0xf]
  %v21 = vld [vmem:[%s1 + $0x4] sm:$0xf]
  %v22 = vld [vmem:[%s1 + $0x8] sm:$0xf]
  %v23 = vld [vmem:[%s1 + $0xc] sm:$0xf]
  %v24 = vld [vmem:[%s1 + $0x10] sm:$0xf]
  %v25 = vld [vmem:[%s1 + $0x14] sm:$0xf]
  %v26 = vld [vmem:[%s1 + $0x18] sm:$0xf]
  %v27 = vld [vmem:[%s1 + $0x1c] sm:$0xf]
  %v28 = vld [vmem:[%s1 + $0x20] sm:$0xf]
  %v29 = vld [vmem:[%s1 + $0x24] sm:$0xf]
  %v30 = vld [vmem:[%s1 + $0x28] sm:$0xf]
  %v31 = vld [vmem:[%s1 + $0x2c] sm:$0xf]
  %v32 = vld [vmem:[%s1 + $0x30] sm:$0xf]
  %v33 = vld [vmem:[%s1 + $0x34] sm:$0xf]
  %v34 = vld [vmem:[%s1 + $0x38] sm:$0xf]
  %v35 = vld [vmem:[%s1 + $0x3c] sm:$0xf]
  %v36 = vld [vmem:[%s1 + $0x40] sm:$0xf]
  %v37 = vld [vmem:[%s1 + $0x44] sm:$0xf]
  %v38 = vld [vmem:[%s1 + $0x48] sm:$0xf]
  %v39 = vld [vmem:[%s1 + $0x4c] sm:$0xf]
  %v40 = vld [vmem:[%s1 + $0x50] sm:$0xf]
  %v41 = vld [vmem:[%s1 + $0x54] sm:$0xf]
  %v42 = vld [vmem:[%s1 + $0x58] sm:$0xf]
  %v43 = vld [vmem:[%s1 + $0x5c] sm:$0xf]
  %v44 = vld [vmem:[%s1 + $0x60] sm:$0xf]
  %v45 = vld [vmem:[%s1 + $0x64] sm:$0xf]
  %v46 = vld [vmem:[%s1 + $0x68] sm:$0xf]
  %v47 = vld [vmem:[%s1 + $0x6c] sm:$0xf]
  %v48 = vld [vmem:[%s1 + $0x70] sm:$0xf]
  %v49 = vld [vmem:[%s1 + $0x74] sm:$0xf]
  %v50 = vld [vmem:[%s1 + $0x78] sm:$0xf]
  %v51 = vld [vmem:[%s1 + $0x7c] sm:$0xf]
  %v52 = vld [vmem:[%s1 + $0x80] sm:$0xf]
  %v53 = vld [vmem:[%s1 + $0x84] sm:$0xf]
  %v54 = vld [vmem:[%s1 + $0x88] sm:$0xf]
  %v55 = vld [vmem:[%s1 + $0x8c] sm:$0xf]
  %v56 = vld [vmem:[%s1 + $0x90] sm:$0xf]
  %v57 = vld [vmem:[%s1 + $0x94] sm:$0xf]
  %v58 = vld [vmem:[%s1 + $0x98] sm:$0xf]
  %v59 = vld [vmem:[%s1 + $0x9c] sm:$0xf]
  %v60 = vld [vmem:[%s1 + $0xa0] sm:$0xf]
  %v61 = vld [vmem:[%s1 + $0xa4] sm:$0xf]
  %v62 = vld [vmem:[%s1 + $0xa8] sm:$0xf]
  %v63 = vld [vmem:[%s1 + $0xac] sm:$0xf]
  %v64 = vld [vmem:[%s1 + $0xb0] sm:$0xf]
  %v65 = vld [vmem:[%s1 + $0xb4] sm:$0xf]
  %v66 = vld [vmem:[%s1 + $0xb8] sm:$0xf]
  %v67 = vld [vmem:[%s1 + $0xbc] sm:$0xf]
  %v68 = vld [vmem:[%s1 + $0xc0] sm:$0xf]
  %v69 = vld [vmem:[%s1 + $0xc4] sm:$0xf]
  %v70 = vld [vmem:[%s1 + $0xc8] sm:$0xf]
  %v71 = vld [vmem:[%s1 + $0xcc] sm:$0xf]
  %v72 = vld [vmem:[%s1 + $0xd0] sm:$0xf]
  %v73 = vld [vmem:[%s1 + $0xd4] sm:$0xf]
  %v74 = vld [vmem:[%s1 + $0xd8] sm:$0xf]
  %v75 = vld [vmem:[%s1 + $0xdc] sm:$0xf]
  %v76 = vld [vmem:[%s1 + $0xe0] sm:$0xf]
  %v77 = vld [vmem:[%s1 + $0xe4] sm:$0xf]
  %v78 = vld [vmem:[%s1 + $0xe8] sm:$0xf]
  %v79 = vld [vmem:[%s1 + $0xec] sm:$0xf]
  %v80 = vld [vmem:[%s1 + $0xf0] sm:$0xf]
  %v81 = vld [vmem:[%s1 + $0xf4] sm:$0xf]
  %v82 = vld [vmem:[%s1 + $0xf8] sm:$0xf]
  %v83 = vld [vmem:[%s1 + $0xfc] sm:$0xf]
  %v84 = vld [vmem:[%s1 + $0x100] sm:$0xf]
  %v85 = vld [vmem:[%s1 + $0x104] sm:$0xf]
  %v86 = vld [vmem:[%s1 + $0x108] sm:$0xf]
  %v87 = vld [vmem:[%s1 + $0x10c] sm:$0xf]
  %v88 = vld [vmem:[%s1 + $0x110] sm:$0xf]
  %v89 = vld [vmem:[%s1 + $0x114] sm:$0xf]
  %v90 = vld [vmem:[%s1 + $0x118] sm:$0xf]
  %v91 = vld [vmem:[%s1 + $0x11c] sm:$0xf]
  %v92 = vld [vmem:[%s1 + $0x120] sm:$0xf]
  %v93 = vld [vmem:[%s1 + $0x124] sm:$0xf]
  %v94 = vld [vmem:[%s1 + $0x128] sm:$0xf]
  %v95 = vld [vmem:[%s1 + $0x12c] sm:$0xf]
  %v96 = vld [vmem:[%s1 + $0x130] sm:$0xf]
  %v97 = vld [vmem:[%s1 + $0x134] sm:$0xf]
  %v98 = vld [vmem:[%s1 + $0x138] sm:$0xf]
  %v99 = vld [vmem:[%s1 + $0x13c] sm:$0xf]
  %v100 = vld [vmem:[%s1 + $0x140] sm:$0xf]
  %v101 = vld [vmem:[%s1 + $0x144] sm:$0xf]
  %v102 = vld [vmem:[%s1 + $0x148] sm:$0xf]
  %v103 = vld [vmem:[%s1 + $0x14c] sm:$0xf]
  %v104 = vld [vmem:[%s1 + $0x150] sm:$0xf]
  %v105 = vld [vmem:[%s1 + $0x154] sm:$0xf]
  %v106 = vld [vmem:[%s1 + $0x158] sm:$0xf]
  %v107 = vld [vmem:[%s1 + $0x15c] sm:$0xf]
  %v108 = vld [vmem:[%s1 + $0x160] sm:$0xf]
  %v109 = vld [vmem:[%s1 + $0x164] sm:$0xf]
  %v110 = vld [vmem:[%s1 + $0x168] sm:$0xf]
  %v111 = vld [vmem:[%s1 + $0x16c] sm:$0xf]
  %v112 = vld [vmem:[%s1 + $0x170] sm:$0xf]
  %v113 = vld [vmem:[%s1 + $0x174] sm:$0xf]
  %v114 = vld [vmem:[%s1 + $0x178] sm:$0xf]
  %v115 = vld [vmem:[%s1 + $0x17c] sm:$0xf]
  %v116 = vld [vmem:[%s1 + $0x180] sm:$0xf]
  %v117 = vld [vmem:[%s1 + $0x184] sm:$0xf]
  %v118 = vld [vmem:[%s1 + $0x188] sm:$0xf]
  %v119 = vld [vmem:[%s1 + $0x18c] sm:$0xf]
  %v120 = vld [vmem:[%s1 + $0x190] sm:$0xf]
  %v121 = vld [vmem:[%s1 + $0x194] sm:$0xf]
  %v122 = vld [vmem:[%s1 + $0x198] sm:$0xf]
  %v123 = vld [vmem:[%s1 + $0x19c] sm:$0xf]
  %v124 = vld [vmem:[%s1 + $0x1a0] sm:$0xf]
  %v125 = vld [vmem:[%s1 + $0x1a4] sm:$0xf]
  %v126 = vld [vmem:[%s1 + $0x1a8] sm:$0xf]
  %v127 = vld [vmem:[%s1 + $0x1ac] sm:$0xf]
  %v128 = vld [vmem:[%s1 + $0x1b0] sm:$0xf]
  %v129 = vld [vmem:[%s1 + $0x1b4] sm:$0xf]
  %v130 = vld [vmem:[%s1 + $0x1b8] sm:$0xf]
  %v131 = vld [vmem:[%s1 + $0x1bc] sm:$0xf]
  %v132 = vld [vmem:[%s1 + $0x1c0] sm:$0xf]
  %v133 = vld [vmem:[%s1 + $0x1c4] sm:$0xf]
  %v134 = vld [vmem:[%s1 + $0x1c8] sm:$0xf]
  %v135 = vld [vmem:[%s1 + $0x1cc] sm:$0xf]
  %v136 = vld [vmem:[%s1 + $0x1d0] sm:$0xf]
  %v137 = vld [vmem:[%s1 + $0x1d4] sm:$0xf]
  %v138 = vld [vmem:[%s1 + $0x1d8] sm:$0xf]
  %v139 = vld [vmem:[%s1 + $0x1dc] sm:$0xf]
  %v140 = vld [vmem:[%s1 + $0x1e0] sm:$0xf]
  %v141 = vld [vmem:[%s1 + $0x1e4] sm:$0xf]
  %v142 = vld [vmem:[%s1 + $0x1e8] sm:$0xf]
  %v143 = vld [vmem:[%s1 + $0x1ec] sm:$0xf]
  %v144 = vld [vmem:[%s1 + $0x1f0] sm:$0xf]
  %v145 = vld [vmem:[%s1 + $0x1f4] sm:$0xf]
  %v146 = vld [vmem:[%s1 + $0x1f8] sm:$0xf]
  %v147 = vld [vmem:[%s1 + $0x1fc] sm:$0xf]
  %v148 = vld [vmem:[%s1 + $0x200] sm:$0xf]
  %v149 = vld [vmem:[%s1 + $0x204] sm:$0xf]
  %v150 = vld [vmem:[%s1 + $0x208] sm:$0xf]
  %v151 = vld [vmem:[%s1 + $0x20c] sm:$0xf]
  %v152 = vld [vmem:[%s1 + $0x210] sm:$0xf]
  %v153 = vld [vmem:[%s1 + $0x214] sm:$0xf]
  %v154 = vld [vmem:[%s1 + $0x218] sm:$0xf]
  %v155 = vld [vmem:[%s1 + $0x21c] sm:$0xf]
  %v156 = vld [vmem:[%s1 + $0x220] sm:$0xf]
  %v157 = vld [vmem:[%s1 + $0x224] sm:$0xf]
  %v158 = vld [vmem:[%s1 + $0x228] sm:$0xf]
  %v159 = vld [vmem:[%s1 + $0x22c] sm:$0xf]
  %v160 = vld [vmem:[%s1 + $0x230] sm:$0xf]
  %v161 = vld [vmem:[%s1 + $0x234] sm:$0xf]
  %v162 = vld [vmem:[%s1 + $0x238] sm:$0xf]
  %v163 = vld [vmem:[%s1 + $0x23c] sm:$0xf]
  %v164 = vld [vmem:[%s2] sm:$0x1]
  %v166 = vlaneseq
  %v167 = vshrl.u32 %v166, 7
  %v168 = vsub.s32 0, %v167
  %v169 = vrot.slane %v164, %v168
  %v176 = vunpack.c.l.b16 %v15
  %v177 = vunpack.c.h.b16 %v15
  %v178 = vunpack.c.l.b16 %v16
  %v179 = vunpack.c.h.b16 %v16
  %v180 = vunpack.c.l.b16 %v17
  %v181 = vunpack.c.h.b16 %v17
  %v182 = vunpack.c.l.b16 %v18
  %v183 = vunpack.c.h.b16 %v18
  %v184 = vunpack.c.l.b16 %v19
  %v185 = vpack.c.b16 %v176, %v176
  %v186 = vpack.c.b16 %v177, %v177
  %v187 = vpack.c.b16 %v178, %v178
  %v188 = vpack.c.b16 %v179, %v179
  %v189 = vpack.c.b16 %v180, %v180
  %v190 = vpack.c.b16 %v181, %v181
  %v191 = vpack.c.b16 %v182, %v182
  %v192 = vpack.c.b16 %v183, %v183
  %v193 = vpack.c.b16 %v184, %v184
  %v347 = vunpack.c.l.b16 %v20
  %v348 = vunpack.c.l.b16 %v21
  %v349 = vunpack.c.l.b16 %v22
  %v350 = vunpack.c.l.b16 %v23
  %v351 = vunpack.c.l.b16 %v24
  %v352 = vunpack.c.l.b16 %v25
  %v353 = vunpack.c.l.b16 %v26
  %v354 = vunpack.c.l.b16 %v27
  %v355 = vunpack.c.l.b16 %v28
  %v356 = vunpack.c.l.b16 %v29
  %v357 = vunpack.c.l.b16 %v30
  %v358 = vunpack.c.l.b16 %v31
  %v359 = vunpack.c.l.b16 %v32
  %v360 = vunpack.c.l.b16 %v33
  %v361 = vunpack.c.l.b16 %v34
  %v362 = vunpack.c.l.b16 %v35
  %v363 = vunpack.c.l.b16 %v36
  %v364 = vunpack.c.l.b16 %v37
  %v365 = vunpack.c.l.b16 %v38
  %v366 = vunpack.c.l.b16 %v39
  %v367 = vunpack.c.l.b16 %v40
  %v368 = vunpack.c.l.b16 %v41
  %v369 = vunpack.c.l.b16 %v42
  %v370 = vunpack.c.l.b16 %v43
  %v371 = vunpack.c.l.b16 %v44
  %v372 = vunpack.c.l.b16 %v45
  %v373 = vunpack.c.l.b16 %v46
  %v374 = vunpack.c.l.b16 %v47
  %v375 = vunpack.c.l.b16 %v48
  %v376 = vunpack.c.l.b16 %v49
  %v377 = vunpack.c.l.b16 %v50
  %v378 = vunpack.c.l.b16 %v51
  %v379 = vunpack.c.l.b16 %v52
  %v380 = vunpack.c.l.b16 %v53
  %v381 = vunpack.c.l.b16 %v54
  %v382 = vunpack.c.l.b16 %v55
  %v383 = vunpack.c.l.b16 %v56
  %v384 = vunpack.c.l.b16 %v57
  %v385 = vunpack.c.l.b16 %v58
  %v386 = vunpack.c.l.b16 %v59
  %v387 = vunpack.c.l.b16 %v60
  %v388 = vunpack.c.l.b16 %v61
  %v389 = vunpack.c.l.b16 %v62
  %v390 = vunpack.c.l.b16 %v63
  %v391 = vunpack.c.l.b16 %v64
  %v392 = vunpack.c.l.b16 %v65
  %v393 = vunpack.c.l.b16 %v66
  %v394 = vunpack.c.l.b16 %v67
  %v395 = vunpack.c.l.b16 %v68
  %v396 = vunpack.c.l.b16 %v69
  %v397 = vunpack.c.l.b16 %v70
  %v398 = vunpack.c.l.b16 %v71
  %v399 = vunpack.c.l.b16 %v72
  %v400 = vunpack.c.l.b16 %v73
  %v401 = vunpack.c.l.b16 %v74
  %v402 = vunpack.c.l.b16 %v75
  %v403 = vunpack.c.l.b16 %v76
  %v404 = vunpack.c.l.b16 %v77
  %v405 = vunpack.c.l.b16 %v78
  %v406 = vunpack.c.l.b16 %v79
  %v407 = vunpack.c.l.b16 %v80
  %v408 = vunpack.c.l.b16 %v81
  %v409 = vunpack.c.l.b16 %v82
  %v410 = vunpack.c.l.b16 %v83
  %v411 = vunpack.c.l.b16 %v84
  %v412 = vunpack.c.l.b16 %v85
  %v413 = vunpack.c.l.b16 %v86
  %v414 = vunpack.c.l.b16 %v87
  %v415 = vunpack.c.l.b16 %v88
  %v416 = vunpack.c.l.b16 %v89
  %v417 = vunpack.c.l.b16 %v90
  %v418 = vunpack.c.l.b16 %v91
  %v419 = vunpack.c.l.b16 %v92
  %v420 = vunpack.c.l.b16 %v93
  %v421 = vunpack.c.l.b16 %v94
  %v422 = vunpack.c.l.b16 %v95
  %v423 = vunpack.c.l.b16 %v96
  %v424 = vunpack.c.l.b16 %v97
  %v425 = vunpack.c.l.b16 %v98
  %v426 = vunpack.c.l.b16 %v99
  %v427 = vunpack.c.l.b16 %v100
  %v428 = vunpack.c.l.b16 %v101
  %v429 = vunpack.c.l.b16 %v102
  %v430 = vunpack.c.l.b16 %v103
  %v431 = vunpack.c.l.b16 %v104
  %v432 = vunpack.c.l.b16 %v105
  %v433 = vunpack.c.l.b16 %v106
  %v434 = vunpack.c.l.b16 %v107
  %v435 = vunpack.c.l.b16 %v108
  %v436 = vunpack.c.l.b16 %v109
  %v437 = vunpack.c.l.b16 %v110
  %v438 = vunpack.c.l.b16 %v111
  %v439 = vunpack.c.l.b16 %v112
  %v440 = vunpack.c.l.b16 %v113
  %v441 = vunpack.c.l.b16 %v114
  %v442 = vunpack.c.l.b16 %v115
  %v443 = vunpack.c.l.b16 %v116
  %v444 = vunpack.c.l.b16 %v117
  %v445 = vunpack.c.l.b16 %v118
  %v446 = vunpack.c.l.b16 %v119
  %v447 = vunpack.c.l.b16 %v120
  %v448 = vunpack.c.l.b16 %v121
  %v449 = vunpack.c.l.b16 %v122
  %v450 = vunpack.c.l.b16 %v123
  %v451 = vunpack.c.l.b16 %v124
  %v452 = vunpack.c.l.b16 %v125
  %v453 = vunpack.c.l.b16 %v126
  %v454 = vunpack.c.l.b16 %v127
  %v455 = vunpack.c.l.b16 %v128
  %v456 = vunpack.c.l.b16 %v129
  %v457 = vunpack.c.l.b16 %v130
  %v458 = vunpack.c.l.b16 %v131
  %v459 = vunpack.c.l.b16 %v132
  %v460 = vunpack.c.l.b16 %v133
  %v461 = vunpack.c.l.b16 %v134
  %v462 = vunpack.c.l.b16 %v135
  %v463 = vunpack.c.l.b16 %v136
  %v464 = vunpack.c.l.b16 %v137
  %v465 = vunpack.c.l.b16 %v138
  %v466 = vunpack.c.l.b16 %v139
  %v467 = vunpack.c.l.b16 %v140
  %v468 = vunpack.c.l.b16 %v141
  %v469 = vunpack.c.l.b16 %v142
  %v470 = vunpack.c.l.b16 %v143
  %v471 = vunpack.c.l.b16 %v144
  %v472 = vunpack.c.l.b16 %v145
  %v473 = vunpack.c.l.b16 %v146
  %v474 = vunpack.c.l.b16 %v147
  %v475 = vunpack.c.l.b16 %v148
  %v476 = vunpack.c.l.b16 %v149
  %v477 = vunpack.c.l.b16 %v150
  %v478 = vunpack.c.l.b16 %v151
  %v479 = vunpack.c.l.b16 %v152
  %v480 = vunpack.c.l.b16 %v153
  %v481 = vunpack.c.l.b16 %v154
  %v482 = vunpack.c.l.b16 %v155
  %v483 = vunpack.c.l.b16 %v156
  %v484 = vunpack.c.l.b16 %v157
  %v485 = vunpack.c.l.b16 %v158
  %v486 = vunpack.c.l.b16 %v159
  %v487 = vunpack.c.l.b16 %v160
  %v488 = vunpack.c.l.b16 %v161
  %v489 = vunpack.c.l.b16 %v162
  %v490 = vunpack.c.l.b16 %v163
  %v491 = vpack.c.b16 %v348, %v347
  %v492 = vpack.c.b16 %v350, %v349
  %v493 = vpack.c.b16 %v352, %v351
  %v494 = vpack.c.b16 %v354, %v353
  %v495 = vpack.c.b16 %v356, %v355
  %v496 = vpack.c.b16 %v358, %v357
  %v497 = vpack.c.b16 %v360, %v359
  %v498 = vpack.c.b16 %v362, %v361
  %v499 = vpack.c.b16 %v364, %v363
  %v500 = vpack.c.b16 %v366, %v365
  %v501 = vpack.c.b16 %v368, %v367
  %v502 = vpack.c.b16 %v370, %v369
  %v503 = vpack.c.b16 %v372, %v371
  %v504 = vpack.c.b16 %v374, %v373
  %v505 = vpack.c.b16 %v376, %v375
  %v506 = vpack.c.b16 %v378, %v377
  %v507 = vpack.c.b16 %v380, %v379
  %v508 = vpack.c.b16 %v382, %v381
  %v509 = vpack.c.b16 %v384, %v383
  %v510 = vpack.c.b16 %v386, %v385
  %v511 = vpack.c.b16 %v388, %v387
  %v512 = vpack.c.b16 %v390, %v389
  %v513 = vpack.c.b16 %v392, %v391
  %v514 = vpack.c.b16 %v394, %v393
  %v515 = vpack.c.b16 %v396, %v395
  %v516 = vpack.c.b16 %v398, %v397
  %v517 = vpack.c.b16 %v400, %v399
  %v518 = vpack.c.b16 %v402, %v401
  %v519 = vpack.c.b16 %v404, %v403
  %v520 = vpack.c.b16 %v406, %v405
  %v521 = vpack.c.b16 %v408, %v407
  %v522 = vpack.c.b16 %v410, %v409
  %v523 = vpack.c.b16 %v412, %v411
  %v524 = vpack.c.b16 %v414, %v413
  %v525 = vpack.c.b16 %v416, %v415
  %v526 = vpack.c.b16 %v418, %v417
  %v527 = vpack.c.b16 %v420, %v419
  %v528 = vpack.c.b16 %v422, %v421
  %v529 = vpack.c.b16 %v424, %v423
  %v530 = vpack.c.b16 %v426, %v425
  %v531 = vpack.c.b16 %v428, %v427
  %v532 = vpack.c.b16 %v430, %v429
  %v533 = vpack.c.b16 %v432, %v431
  %v534 = vpack.c.b16 %v434, %v433
  %v535 = vpack.c.b16 %v436, %v435
  %v536 = vpack.c.b16 %v438, %v437
  %v537 = vpack.c.b16 %v440, %v439
  %v538 = vpack.c.b16 %v442, %v441
  %v539 = vpack.c.b16 %v444, %v443
  %v540 = vpack.c.b16 %v446, %v445
  %v541 = vpack.c.b16 %v448, %v447
  %v542 = vpack.c.b16 %v450, %v449
  %v543 = vpack.c.b16 %v452, %v451
  %v544 = vpack.c.b16 %v454, %v453
  %v545 = vpack.c.b16 %v456, %v455
  %v546 = vpack.c.b16 %v458, %v457
  %v547 = vpack.c.b16 %v460, %v459
  %v548 = vpack.c.b16 %v462, %v461
  %v549 = vpack.c.b16 %v464, %v463
  %v550 = vpack.c.b16 %v466, %v465
  %v551 = vpack.c.b16 %v468, %v467
  %v552 = vpack.c.b16 %v470, %v469
  %v553 = vpack.c.b16 %v472, %v471
  %v554 = vpack.c.b16 %v474, %v473
  %v555 = vpack.c.b16 %v476, %v475
  %v556 = vpack.c.b16 %v478, %v477
  %v557 = vpack.c.b16 %v480, %v479
  %v558 = vpack.c.b16 %v482, %v481
  %v559 = vpack.c.b16 %v484, %v483
  %v560 = vpack.c.b16 %v486, %v485
  %v561 = vpack.c.b16 %v488, %v487
  %v562 = vpack.c.b16 %v490, %v489
  %635 = vmatprep.subr.bf16.mxu0 0
  %636 = vmatpush1.bf16.msra.mxu0 %v498
  %637 = vmatprep.subr.bf16.mxu0 0
  %638 = vmatpush1.bf16.msra.mxu0 %v497
  %639 = vmatprep.subr.bf16.mxu0 0
  %640 = vmatpush1.bf16.msra.mxu0 %v496
  %641 = vmatprep.subr.bf16.mxu0 0
  %642 = vmatpush1.bf16.msra.mxu0 %v495
  %643 = vmatprep.subr.bf16.mxu0 0
  %644 = vmatpush1.bf16.msra.mxu0 %v494
  %645 = vmatprep.subr.bf16.mxu0 0
  %646 = vmatpush1.bf16.msra.mxu0 %v493
  %647 = vmatprep.subr.bf16.mxu0 0
  %648 = vmatpush1.bf16.msra.mxu0 %v492
  %649 = vmatprep.subr.bf16.mxu0 0
  %650 = vmatpush1.bf16.msra.mxu0 %v491
  %651 = vmatprep.subr.bf16.mxu0 0
  %652 = vmatpush2.bf16.msra.mxu0 %v506
  %653 = vmatprep.subr.bf16.mxu0 0
  %654 = vmatpush2.bf16.msra.mxu0 %v505
  %655 = vmatprep.subr.bf16.mxu0 0
  %656 = vmatpush2.bf16.msra.mxu0 %v504
  %657 = vmatprep.subr.bf16.mxu0 0
  %658 = vmatpush2.bf16.msra.mxu0 %v503
  %659 = vmatprep.subr.bf16.mxu0 0
  %660 = vmatpush2.bf16.msra.mxu0 %v502
  %661 = vmatprep.subr.bf16.mxu0 0
  %662 = vmatpush2.bf16.msra.mxu0 %v501
  %663 = vmatprep.subr.bf16.mxu0 0
  %664 = vmatpush2.bf16.msra.mxu0 %v500
  %665 = vmatprep.subr.bf16.mxu0 0
  %666 = vmatpush2.bf16.msra.mxu0 %v499
  %667 = vmatprep.mubr.bf16.mxu0 %v186
  %668 = vmatmul.mubr.bf16.gmra.mxu0 %v185
  %v669 = vpop.f32.mrf.mxu0
  %v670 = vadd.f32 %v169, %v669
  %v671 = vpop.f32.mrf.mxu0
  %v672 = vpop.f32.mrf.mxu0
  %v673 = vpop.f32.mrf.mxu0
  %674 = vdwg.mxu0
  %675 = vmatprep.subr.bf16.mxu0 0
  %676 = vmatpush1.bf16.msra.mxu0 %v514
  %677 = vmatprep.subr.bf16.mxu0 0
  %678 = vmatpush1.bf16.msra.mxu0 %v513
  %679 = vmatprep.subr.bf16.mxu0 0
  %680 = vmatpush1.bf16.msra.mxu0 %v512
  %681 = vmatprep.subr.bf16.mxu0 0
  %682 = vmatpush1.bf16.msra.mxu0 %v511
  %683 = vmatprep.subr.bf16.mxu0 0
  %684 = vmatpush1.bf16.msra.mxu0 %v510
  %685 = vmatprep.subr.bf16.mxu0 0
  %686 = vmatpush1.bf16.msra.mxu0 %v509
  %687 = vmatprep.subr.bf16.mxu0 0
  %688 = vmatpush1.bf16.msra.mxu0 %v508
  %689 = vmatprep.subr.bf16.mxu0 0
  %690 = vmatpush1.bf16.msra.mxu0 %v507
  %691 = vmatprep.subr.bf16.mxu0 0
  %692 = vmatpush2.bf16.msra.mxu0 %v522
  %693 = vmatprep.subr.bf16.mxu0 0
  %694 = vmatpush2.bf16.msra.mxu0 %v521
  %695 = vmatprep.subr.bf16.mxu0 0
  %696 = vmatpush2.bf16.msra.mxu0 %v520
  %697 = vmatprep.subr.bf16.mxu0 0
  %698 = vmatpush2.bf16.msra.mxu0 %v519
  %699 = vmatprep.subr.bf16.mxu0 0
  %700 = vmatpush2.bf16.msra.mxu0 %v518
  %701 = vmatprep.subr.bf16.mxu0 0
  %702 = vmatpush2.bf16.msra.mxu0 %v517
  %703 = vmatprep.subr.bf16.mxu0 0
  %704 = vmatpush2.bf16.msra.mxu0 %v516
  %705 = vmatprep.subr.bf16.mxu0 0
  %706 = vmatpush2.bf16.msra.mxu0 %v515
  %707 = vmatprep.mubr.bf16.mxu0 %v188
  %708 = vmatmul.mubr.bf16.gmra.mxu0 %v187
  %v709 = vpop.f32.mrf.mxu0
  %v710 = vadd.f32 %v670, %v709
  %v711 = vpop.f32.mrf.mxu0
  %v712 = vpop.f32.mrf.mxu0
  %v713 = vpop.f32.mrf.mxu0
  %714 = vdwg.mxu0
  %715 = vmatprep.subr.bf16.mxu0 0
  %716 = vmatpush1.bf16.msra.mxu0 %v530
  %717 = vmatprep.subr.bf16.mxu0 0
  %718 = vmatpush1.bf16.msra.mxu0 %v529
  %719 = vmatprep.subr.bf16.mxu0 0
  %720 = vmatpush1.bf16.msra.mxu0 %v528
  %721 = vmatprep.subr.bf16.mxu0 0
  %722 = vmatpush1.bf16.msra.mxu0 %v527
  %723 = vmatprep.subr.bf16.mxu0 0
  %724 = vmatpush1.bf16.msra.mxu0 %v526
  %725 = vmatprep.subr.bf16.mxu0 0
  %726 = vmatpush1.bf16.msra.mxu0 %v525
  %727 = vmatprep.subr.bf16.mxu0 0
  %728 = vmatpush1.bf16.msra.mxu0 %v524
  %729 = vmatprep.subr.bf16.mxu0 0
  %730 = vmatpush1.bf16.msra.mxu0 %v523
  %731 = vmatprep.subr.bf16.mxu0 0
  %732 = vmatpush2.bf16.msra.mxu0 %v538
  %733 = vmatprep.subr.bf16.mxu0 0
  %734 = vmatpush2.bf16.msra.mxu0 %v537
  %735 = vmatprep.subr.bf16.mxu0 0
  %736 = vmatpush2.bf16.msra.mxu0 %v536
  %737 = vmatprep.subr.bf16.mxu0 0
  %738 = vmatpush2.bf16.msra.mxu0 %v535
  %739 = vmatprep.subr.bf16.mxu0 0
  %740 = vmatpush2.bf16.msra.mxu0 %v534
  %741 = vmatprep.subr.bf16.mxu0 0
  %742 = vmatpush2.bf16.msra.mxu0 %v533
  %743 = vmatprep.subr.bf16.mxu0 0
  %744 = vmatpush2.bf16.msra.mxu0 %v532
  %745 = vmatprep.subr.bf16.mxu0 0
  %746 = vmatpush2.bf16.msra.mxu0 %v531
  %747 = vmatprep.mubr.bf16.mxu0 %v190
  %748 = vmatmul.mubr.bf16.gmra.mxu0 %v189
  %v749 = vpop.f32.mrf.mxu0
  %v750 = vadd.f32 %v710, %v749
  %v751 = vpop.f32.mrf.mxu0
  %v752 = vpop.f32.mrf.mxu0
  %v753 = vpop.f32.mrf.mxu0
  %754 = vdwg.mxu0
  %755 = vmatprep.subr.bf16.mxu0 0
  %756 = vmatpush1.bf16.msra.mxu0 %v546
  %757 = vmatprep.subr.bf16.mxu0 0
  %758 = vmatpush1.bf16.msra.mxu0 %v545
  %759 = vmatprep.subr.bf16.mxu0 0
  %760 = vmatpush1.bf16.msra.mxu0 %v544
  %761 = vmatprep.subr.bf16.mxu0 0
  %762 = vmatpush1.bf16.msra.mxu0 %v543
  %763 = vmatprep.subr.bf16.mxu0 0
  %764 = vmatpush1.bf16.msra.mxu0 %v542
  %765 = vmatprep.subr.bf16.mxu0 0
  %766 = vmatpush1.bf16.msra.mxu0 %v541
  %767 = vmatprep.subr.bf16.mxu0 0
  %768 = vmatpush1.bf16.msra.mxu0 %v540
  %769 = vmatprep.subr.bf16.mxu0 0
  %770 = vmatpush1.bf16.msra.mxu0 %v539
  %771 = vmatprep.subr.bf16.mxu0 0
  %772 = vmatpush2.bf16.msra.mxu0 %v554
  %773 = vmatprep.subr.bf16.mxu0 0
  %774 = vmatpush2.bf16.msra.mxu0 %v553
  %775 = vmatprep.subr.bf16.mxu0 0
  %776 = vmatpush2.bf16.msra.mxu0 %v552
  %777 = vmatprep.subr.bf16.mxu0 0
  %778 = vmatpush2.bf16.msra.mxu0 %v551
  %779 = vmatprep.subr.bf16.mxu0 0
  %780 = vmatpush2.bf16.msra.mxu0 %v550
  %781 = vmatprep.subr.bf16.mxu0 0
  %782 = vmatpush2.bf16.msra.mxu0 %v549
  %783 = vmatprep.subr.bf16.mxu0 0
  %784 = vmatpush2.bf16.msra.mxu0 %v548
  %785 = vmatprep.subr.bf16.mxu0 0
  %786 = vmatpush2.bf16.msra.mxu0 %v547
  %787 = vmatprep.mubr.bf16.mxu0 %v192
  %788 = vmatmul.mubr.bf16.gmra.mxu0 %v191
  %v789 = vpop.f32.mrf.mxu0
  %v790 = vadd.f32 %v750, %v789
  %v791 = vpop.f32.mrf.mxu0
  %v792 = vpop.f32.mrf.mxu0
  %v793 = vpop.f32.mrf.mxu0
  %794 = vdwg.mxu0
  %795 = vmatprep.subr.bf16.mxu0 0
  %796 = vmatpush1.bf16.msra.mxu0 %v562
  %797 = vmatprep.subr.bf16.mxu0 0
  %798 = vmatpush1.bf16.msra.mxu0 %v561
  %799 = vmatprep.subr.bf16.mxu0 0
  %800 = vmatpush1.bf16.msra.mxu0 %v560
  %801 = vmatprep.subr.bf16.mxu0 0
  %802 = vmatpush1.bf16.msra.mxu0 %v559
  %803 = vmatprep.subr.bf16.mxu0 0
  %804 = vmatpush1.bf16.msra.mxu0 %v558
  %805 = vmatprep.subr.bf16.mxu0 0
  %806 = vmatpush1.bf16.msra.mxu0 %v557
  %807 = vmatprep.subr.bf16.mxu0 0
  %808 = vmatpush1.bf16.msra.mxu0 %v556
  %809 = vmatprep.subr.bf16.mxu0 0
  %810 = vmatpush1.bf16.msra.mxu0 %v555
  %811 = vmatprep.subr.bf16.mxu0 0
  %812 = vmatpush2.bf16.msra.mxu0 0
  %813 = vmatprep.subr.bf16.mxu0 0
  %814 = vmatpush2.bf16.msra.mxu0 0
  %815 = vmatprep.subr.bf16.mxu0 0
  %816 = vmatpush2.bf16.msra.mxu0 0
  %817 = vmatprep.subr.bf16.mxu0 0
  %818 = vmatpush2.bf16.msra.mxu0 0
  %819 = vmatprep.subr.bf16.mxu0 0
  %820 = vmatpush2.bf16.msra.mxu0 0
  %821 = vmatprep.subr.bf16.mxu0 0
  %822 = vmatpush2.bf16.msra.mxu0 0
  %823 = vmatprep.subr.bf16.mxu0 0
  %824 = vmatpush2.bf16.msra.mxu0 0
  %825 = vmatprep.subr.bf16.mxu0 0
  %826 = vmatpush2.bf16.msra.mxu0 0
  %827 = vmatprep.mubr.bf16.mxu0 0
  %828 = vmatmul.mubr.bf16.gmra.mxu0 %v193
  %v829 = vpop.f32.mrf.mxu0
  %v830 = vadd.f32 %v790, %v829
  %v831 = vpop.f32.mrf.mxu0
  %v832 = vpop.f32.mrf.mxu0
  %v833 = vpop.f32.mrf.mxu0
  %834 = vdwg.mxu0
  %835 = vst [vmem:[%s3] sm:$0xff] %v830
  // Predicated region
  $region14: #{a_convnet_forward.15} parent=0 // pred_check
    _
  $region15: #{a_convnet_forward.15} parent=0 // pred_check_branch
    %837 = sbr.rel (0) target = $region17
  $region16: #{a_convnet_forward.15} parent=0 // pred_region
    _
  $region17: #{a_convnet_forward.15} parent=0 // pred_fallthru
    _
  // Predicated region
  $region18: #{a_convnet_forward.15} parent=0 // pred_check
    _
  $region19: #{a_convnet_forward.15} parent=0 // pred_check_branch
    %839 = sbr.rel (0) target = $region21
  $region20: #{a_convnet_forward.15} parent=0 // pred_region
    _
  $region21: #{a_convnet_forward.15} parent=0 // pred_fallthru
    _

</llo_original>
